<compile_context>
chip_gen: v5e
topology: v5e:2x2
jax: 0.10.0
libtpu: 0.0.40
codegen_flags: <defaults>
</compile_context>

<pallas_src>
import jax
import jax.numpy as jnp
from jax import lax
from jax.experimental import pallas as pl
from jax.experimental.pallas import tpu as pltpu


# ----------------------------------------------------------------------------
# Pallas kernel: fused (dilated conv on zero-inserted input) + BatchNorm + act
# ----------------------------------------------------------------------------
def _make_layer_kernel(N, Cin, Cout, KH, KW, DH, DW, OH, OW, act, eps=1e-5):
    """Builds a kernel for one decoder layer (all shapes are static)."""
    TH = 8                                   # output-row tile height (sublanes)
    n_tiles = (OH + TH - 1) // TH            # static trip count

    def kernel(x_ref, w_ref, b_ref, g_ref, bt_ref, o_ref):
        # x_ref : (N, Cin, Hp, Wp)  VMEM   zero-inserted + edge-padded input
        # w_ref : (Cout*Cin*KH*KW,) SMEM   spatially flipped weights, flat
        # b_ref : (Cout,)           SMEM   conv bias
        # g_ref : (Cout,)           SMEM   BN gamma
        # bt_ref: (Cout,)           SMEM   BN beta
        # o_ref : (N, Cout, OH, OW) VMEM   layer output
        for co in range(Cout):
            bias = b_ref[co]

            # ---- conv tap loop, register-accumulated per 8-row output tile ----
            def tile_body(t, carry):
                # clamp the last tile so it ends exactly at OH (overlap-recompute)
                rstart = jnp.minimum(t * TH, OH - TH)
                acc = jnp.zeros((N, 1, TH, OW), jnp.float32) + bias
                for ci in range(Cin):
                    for i in range(KH):
                        # one wide row-tile load per (ci, kh); reuse for all kw
                        row = x_ref[:, ci:ci + 1,
                                    pl.ds(rstart + i * DH, TH), :]
                        for j in range(KW):
                            w = w_ref[((co * Cin + ci) * KH + i) * KW + j]
                            acc = acc + row[:, :, :, j * DW:j * DW + OW] * w
                # single store per tile (no per-tap read-modify-write of o_ref)
                o_ref[:, co:co + 1, pl.ds(rstart, TH), :] = acc
                return carry

            lax.fori_loop(0, n_tiles, tile_body, 0)

            # ---- BatchNorm2d (training-mode batch stats over N,H,W) + act ----
            z = o_ref[:, co:co + 1, :, :]
            mean = jnp.mean(z)
            zc = z - mean
            var = jnp.mean(zc * zc)
            scale = g_ref[co] * lax.rsqrt(var + eps)   # fold gamma into scale
            y = zc * scale + bt_ref[co]
            if act == "relu":
                y = jnp.maximum(y, 0.0)
            else:  # sigmoid on the EUP, numerically safe
                y = jax.nn.sigmoid(y)
            o_ref[:, co:co + 1, :, :] = y

    return kernel


# ----------------------------------------------------------------------------
# Per-layer wrapper: glue (zero-insert / pad / weight flip) + pallas_call
# ----------------------------------------------------------------------------
def conv_t_bn_act_pallas(x, W_pt, b, gamma, beta, stride, dilation, act):
    """x: (N, Cin, H, W) f32.  W_pt: (Cin, Cout, KH, KW) (PyTorch layout)."""
    N, Cin, H, Wd = x.shape
    _, Cout, KH, KW = W_pt.shape
    sh, sw = stride
    dh, dw = dilation

    OH = (H - 1) * sh + dh * (KH - 1) + 1
    OW = (Wd - 1) * sw + dw * (KW - 1) + 1

    # --- glue: zero insertion (stride) + padding (dilation * (K-1)) ---
    Hu = (H - 1) * sh + 1
    Wu = (Wd - 1) * sw + 1
    x_up = jnp.zeros((N, Cin, Hu, Wu), x.dtype).at[:, :, ::sh, ::sw].set(x)
    ph = dh * (KH - 1)
    pw = dw * (KW - 1)
    x_pad = jnp.pad(x_up, ((0, 0), (0, 0), (ph, ph), (pw, pw)))

    # --- glue: flip kernel spatially, swap (Cin, Cout) -> (Cout, Cin), flatten ---
    w_flip = jnp.transpose(W_pt[:, :, ::-1, ::-1], (1, 0, 2, 3)).reshape(-1)

    kernel = _make_layer_kernel(N, Cin, Cout, KH, KW, dh, dw, OH, OW, act)

    out = pl.pallas_call(
        kernel,
        out_shape=jax.ShapeDtypeStruct((N, Cout, OH, OW), jnp.float32),
        in_specs=[
            pl.BlockSpec(memory_space=pltpu.MemorySpace.VMEM),  # x_pad
            pl.BlockSpec(memory_space=pltpu.MemorySpace.SMEM),  # weights (flat)
            pl.BlockSpec(memory_space=pltpu.MemorySpace.SMEM),  # bias
            pl.BlockSpec(memory_space=pltpu.MemorySpace.SMEM),  # gamma
            pl.BlockSpec(memory_space=pltpu.MemorySpace.SMEM),  # beta
        ],
        out_specs=pl.BlockSpec(memory_space=pltpu.MemorySpace.VMEM),
    )(x_pad, w_flip, b, gamma, beta)
    return out


# ----------------------------------------------------------------------------
# Decoder_Block configuration + deterministic parameter init
# ----------------------------------------------------------------------------
_LAYER_CFGS = [
    dict(cin=4, cout=4, k=(5, 5), s=(1, 1), d=(1, 1), act="relu"),
    dict(cin=4, cout=2, k=(4, 5), s=(1, 2), d=(5, 5), act="relu"),
    dict(cin=2, cout=1, k=(4, 6), s=(1, 2), d=(3, 3), act="relu"),
    dict(cin=1, cout=1, k=(5, 6), s=(2, 2), d=(2, 2), act="relu"),
    dict(cin=1, cout=1, k=(5, 5), s=(2, 2), d=(1, 1), act="sigmoid"),
]


def init_params(key):
    params = []
    for cfg in _LAYER_CFGS:
        key, kw_, kb_ = jax.random.split(key, 3)
        cin, cout = cfg["cin"], cfg["cout"]
        kh, kw = cfg["k"]
        bound = float(1.0 / (cin * kh * kw) ** 0.5)
        W = jax.random.uniform(kw_, (cin, cout, kh, kw), jnp.float32, -bound, bound)
        b = jax.random.uniform(kb_, (cout,), jnp.float32, -bound, bound)
        gamma = jnp.ones((cout,), jnp.float32)   # BN affine init (PyTorch default)
        beta = jnp.zeros((cout,), jnp.float32)
        params.append((cfg, W, b, gamma, beta))
    return params


def decoder_block_forward(x, params):
    out = x
    for cfg, W, b, gamma, beta in params:
        out = conv_t_bn_act_pallas(out, W, b, gamma, beta,
                                   cfg["s"], cfg["d"], cfg["act"])
    return out


# ----------------------------------------------------------------------------
# Pure-JAX reference (for correctness check)
# ----------------------------------------------------------------------------
def reference_forward(x, params):
    out = x
    for cfg, W, b, gamma, beta in params:
        sh, sw = cfg["s"]
        dh, dw = cfg["d"]
        _, _, KH, KW = W.shape
        w_oihw = jnp.transpose(W[:, :, ::-1, ::-1], (1, 0, 2, 3))
        y = lax.conv_general_dilated(
            out, w_oihw, window_strides=(1, 1),
            padding=[(dh * (KH - 1), dh * (KH - 1)),
                     (dw * (KW - 1), dw * (KW - 1))],
            lhs_dilation=(sh, sw), rhs_dilation=(dh, dw),
            dimension_numbers=("NCHW", "OIHW", "NCHW"))
        y = y + b[None, :, None, None]
        mean = jnp.mean(y, axis=(0, 2, 3), keepdims=True)
        var = jnp.mean((y - mean) ** 2, axis=(0, 2, 3), keepdims=True)
        y = (y - mean) * lax.rsqrt(var + 1e-5)
        y = y * gamma[None, :, None, None] + beta[None, :, None, None]
        if cfg["act"] == "relu":
            y = jnp.maximum(y, 0.0)
        else:
            y = jax.nn.sigmoid(y)
        out = y
    return out


if __name__ == "__main__":
    key = jax.random.PRNGKey(0)
    k_x, k_p = jax.random.split(key)

    # Small input consistent with the module: NCHW, 4 input channels.
    x = jax.random.normal(k_x, (2, 4, 16, 16), jnp.float32)
    params = init_params(k_p)

    out = decoder_block_forward(x, params)
    out = jax.block_until_ready(out)

    # shape check: chained ConvTranspose2d output sizes
    assert out.shape == (2, 1, 193, 549), out.shape

    ref = jax.block_until_ready(reference_forward(x, params))
    assert jnp.allclose(out, ref, rtol=1e-3, atol=1e-3), (
        float(jnp.max(jnp.abs(out - ref))))

    print("KERNEL_OK")
</pallas_src>

<mosaic_0001>
module attributes {stable_mosaic.version = 11 : i64} {
  func.func @kernel(%arg0: memref<2x4x24x24xf32, #tpu.memory_space<vmem>>, %arg1: memref<400xf32, #tpu.memory_space<smem>>, %arg2: memref<4xf32, #tpu.memory_space<smem>>, %arg3: memref<4xf32, #tpu.memory_space<smem>>, %arg4: memref<4xf32, #tpu.memory_space<smem>>, %arg5: memref<2x4x20x20xf32, #tpu.memory_space<vmem>>) attributes {dimension_semantics = [], scalar_prefetch = 0 : i64, scratch_operands = 0 : i64, tpu.core_type = #tpu.core_type<tc>} {
    %c0 = arith.constant 0 : index
    %0 = memref.load %arg2[%c0] : memref<4xf32, #tpu.memory_space<smem>>
    %c0_i32 = arith.constant 0 : i32
    %c3_i32 = arith.constant 3 : i32
    %1 = arith.addi %c0_i32, %c3_i32 : i32
    %c1_i32 = arith.constant 1 : i32
    scf.for %arg6 = %c0_i32 to %1 step %c1_i32  : i32 {
      %c8_i32 = arith.constant 8 : i32
      %112 = arith.muli %arg6, %c8_i32 : i32
      %c12_i32 = arith.constant 12 : i32
      %113 = arith.minsi %112, %c12_i32 : i32
      %cst_76 = arith.constant 0.000000e+00 : f32
      %114 = vector.broadcast %cst_76 : f32 to vector<2x1x8x20xf32>
      %115 = vector.broadcast %0 : f32 to vector<2x1x8x20xf32>
      %116 = arith.addf %114, %115 : vector<2x1x8x20xf32>
      %c0_i32_77 = arith.constant 0 : i32
      %117 = arith.addi %113, %c0_i32_77 : i32
      %c0_78 = arith.constant 0 : index
      %c0_79 = arith.constant 0 : index
      %118 = arith.index_cast %117 : i32 to index
      %c0_80 = arith.constant 0 : index
      %119 = vector.load %arg0[%c0_78, %c0_79, %118, %c0_80] : memref<2x4x24x24xf32, #tpu.memory_space<vmem>>, vector<2x1x8x24xf32>
      %c0_81 = arith.constant 0 : index
      %120 = memref.load %arg1[%c0_81] : memref<400xf32, #tpu.memory_space<smem>>
      %121 = vector.extract_strided_slice %119 {offsets = [0, 0, 0, 0], sizes = [2, 1, 8, 20], strides = [1, 1, 1, 1]} : vector<2x1x8x24xf32> to vector<2x1x8x20xf32>
      %122 = vector.broadcast %120 : f32 to vector<2x1x8x20xf32>
      %123 = arith.mulf %121, %122 : vector<2x1x8x20xf32>
      %124 = arith.addf %116, %123 : vector<2x1x8x20xf32>
      %c1_82 = arith.constant 1 : index
      %125 = memref.load %arg1[%c1_82] : memref<400xf32, #tpu.memory_space<smem>>
      %126 = vector.extract_strided_slice %119 {offsets = [0, 0, 0, 1], sizes = [2, 1, 8, 20], strides = [1, 1, 1, 1]} : vector<2x1x8x24xf32> to vector<2x1x8x20xf32>
      %127 = vector.broadcast %125 : f32 to vector<2x1x8x20xf32>
      %128 = arith.mulf %126, %127 : vector<2x1x8x20xf32>
      %129 = arith.addf %124, %128 : vector<2x1x8x20xf32>
      %c2_83 = arith.constant 2 : index
      %130 = memref.load %arg1[%c2_83] : memref<400xf32, #tpu.memory_space<smem>>
      %131 = vector.extract_strided_slice %119 {offsets = [0, 0, 0, 2], sizes = [2, 1, 8, 20], strides = [1, 1, 1, 1]} : vector<2x1x8x24xf32> to vector<2x1x8x20xf32>
      %132 = vector.broadcast %130 : f32 to vector<2x1x8x20xf32>
      %133 = arith.mulf %131, %132 : vector<2x1x8x20xf32>
      %134 = arith.addf %129, %133 : vector<2x1x8x20xf32>
      %c3_84 = arith.constant 3 : index
      %135 = memref.load %arg1[%c3_84] : memref<400xf32, #tpu.memory_space<smem>>
      %136 = vector.extract_strided_slice %119 {offsets = [0, 0, 0, 3], sizes = [2, 1, 8, 20], strides = [1, 1, 1, 1]} : vector<2x1x8x24xf32> to vector<2x1x8x20xf32>
      %137 = vector.broadcast %135 : f32 to vector<2x1x8x20xf32>
      %138 = arith.mulf %136, %137 : vector<2x1x8x20xf32>
      %139 = arith.addf %134, %138 : vector<2x1x8x20xf32>
      %c4 = arith.constant 4 : index
      %140 = memref.load %arg1[%c4] : memref<400xf32, #tpu.memory_space<smem>>
      %141 = vector.extract_strided_slice %119 {offsets = [0, 0, 0, 4], sizes = [2, 1, 8, 20], strides = [1, 1, 1, 1]} : vector<2x1x8x24xf32> to vector<2x1x8x20xf32>
      %142 = vector.broadcast %140 : f32 to vector<2x1x8x20xf32>
      %143 = arith.mulf %141, %142 : vector<2x1x8x20xf32>
      %144 = arith.addf %139, %143 : vector<2x1x8x20xf32>
      %c1_i32_85 = arith.constant 1 : i32
      %145 = arith.addi %113, %c1_i32_85 : i32
      %c0_86 = arith.constant 0 : index
      %c0_87 = arith.constant 0 : index
      %146 = arith.index_cast %145 : i32 to index
      %c0_88 = arith.constant 0 : index
      %147 = vector.load %arg0[%c0_86, %c0_87, %146, %c0_88] : memref<2x4x24x24xf32, #tpu.memory_space<vmem>>, vector<2x1x8x24xf32>
      %c5 = arith.constant 5 : index
      %148 = memref.load %arg1[%c5] : memref<400xf32, #tpu.memory_space<smem>>
      %149 = vector.extract_strided_slice %147 {offsets = [0, 0, 0, 0], sizes = [2, 1, 8, 20], strides = [1, 1, 1, 1]} : vector<2x1x8x24xf32> to vector<2x1x8x20xf32>
      %150 = vector.broadcast %148 : f32 to vector<2x1x8x20xf32>
      %151 = arith.mulf %149, %150 : vector<2x1x8x20xf32>
      %152 = arith.addf %144, %151 : vector<2x1x8x20xf32>
      %c6 = arith.constant 6 : index
      %153 = memref.load %arg1[%c6] : memref<400xf32, #tpu.memory_space<smem>>
      %154 = vector.extract_strided_slice %147 {offsets = [0, 0, 0, 1], sizes = [2, 1, 8, 20], strides = [1, 1, 1, 1]} : vector<2x1x8x24xf32> to vector<2x1x8x20xf32>
      %155 = vector.broadcast %153 : f32 to vector<2x1x8x20xf32>
      %156 = arith.mulf %154, %155 : vector<2x1x8x20xf32>
      %157 = arith.addf %152, %156 : vector<2x1x8x20xf32>
      %c7 = arith.constant 7 : index
      %158 = memref.load %arg1[%c7] : memref<400xf32, #tpu.memory_space<smem>>
      %159 = vector.extract_strided_slice %147 {offsets = [0, 0, 0, 2], sizes = [2, 1, 8, 20], strides = [1, 1, 1, 1]} : vector<2x1x8x24xf32> to vector<2x1x8x20xf32>
      %160 = vector.broadcast %158 : f32 to vector<2x1x8x20xf32>
      %161 = arith.mulf %159, %160 : vector<2x1x8x20xf32>
      %162 = arith.addf %157, %161 : vector<2x1x8x20xf32>
      %c8 = arith.constant 8 : index
      %163 = memref.load %arg1[%c8] : memref<400xf32, #tpu.memory_space<smem>>
      %164 = vector.extract_strided_slice %147 {offsets = [0, 0, 0, 3], sizes = [2, 1, 8, 20], strides = [1, 1, 1, 1]} : vector<2x1x8x24xf32> to vector<2x1x8x20xf32>
      %165 = vector.broadcast %163 : f32 to vector<2x1x8x20xf32>
      %166 = arith.mulf %164, %165 : vector<2x1x8x20xf32>
      %167 = arith.addf %162, %166 : vector<2x1x8x20xf32>
      %c9 = arith.constant 9 : index
      %168 = memref.load %arg1[%c9] : memref<400xf32, #tpu.memory_space<smem>>
      %169 = vector.extract_strided_slice %147 {offsets = [0, 0, 0, 4], sizes = [2, 1, 8, 20], strides = [1, 1, 1, 1]} : vector<2x1x8x24xf32> to vector<2x1x8x20xf32>
      %170 = vector.broadcast %168 : f32 to vector<2x1x8x20xf32>
      %171 = arith.mulf %169, %170 : vector<2x1x8x20xf32>
      %172 = arith.addf %167, %171 : vector<2x1x8x20xf32>
      %c2_i32 = arith.constant 2 : i32
      %173 = arith.addi %113, %c2_i32 : i32
      %c0_89 = arith.constant 0 : index
      %c0_90 = arith.constant 0 : index
      %174 = arith.index_cast %173 : i32 to index
      %c0_91 = arith.constant 0 : index
      %175 = vector.load %arg0[%c0_89, %c0_90, %174, %c0_91] : memref<2x4x24x24xf32, #tpu.memory_space<vmem>>, vector<2x1x8x24xf32>
      %c10 = arith.constant 10 : index
      %176 = memref.load %arg1[%c10] : memref<400xf32, #tpu.memory_space<smem>>
      %177 = vector.extract_strided_slice %175 {offsets = [0, 0, 0, 0], sizes = [2, 1, 8, 20], strides = [1, 1, 1, 1]} : vector<2x1x8x24xf32> to vector<2x1x8x20xf32>
      %178 = vector.broadcast %176 : f32 to vector<2x1x8x20xf32>
      %179 = arith.mulf %177, %178 : vector<2x1x8x20xf32>
      %180 = arith.addf %172, %179 : vector<2x1x8x20xf32>
      %c11 = arith.constant 11 : index
      %181 = memref.load %arg1[%c11] : memref<400xf32, #tpu.memory_space<smem>>
      %182 = vector.extract_strided_slice %175 {offsets = [0, 0, 0, 1], sizes = [2, 1, 8, 20], strides = [1, 1, 1, 1]} : vector<2x1x8x24xf32> to vector<2x1x8x20xf32>
      %183 = vector.broadcast %181 : f32 to vector<2x1x8x20xf32>
      %184 = arith.mulf %182, %183 : vector<2x1x8x20xf32>
      %185 = arith.addf %180, %184 : vector<2x1x8x20xf32>
      %c12 = arith.constant 12 : index
      %186 = memref.load %arg1[%c12] : memref<400xf32, #tpu.memory_space<smem>>
      %187 = vector.extract_strided_slice %175 {offsets = [0, 0, 0, 2], sizes = [2, 1, 8, 20], strides = [1, 1, 1, 1]} : vector<2x1x8x24xf32> to vector<2x1x8x20xf32>
      %188 = vector.broadcast %186 : f32 to vector<2x1x8x20xf32>
      %189 = arith.mulf %187, %188 : vector<2x1x8x20xf32>
      %190 = arith.addf %185, %189 : vector<2x1x8x20xf32>
      %c13 = arith.constant 13 : index
      %191 = memref.load %arg1[%c13] : memref<400xf32, #tpu.memory_space<smem>>
      %192 = vector.extract_strided_slice %175 {offsets = [0, 0, 0, 3], sizes = [2, 1, 8, 20], strides = [1, 1, 1, 1]} : vector<2x1x8x24xf32> to vector<2x1x8x20xf32>
      %193 = vector.broadcast %191 : f32 to vector<2x1x8x20xf32>
      %194 = arith.mulf %192, %193 : vector<2x1x8x20xf32>
      %195 = arith.addf %190, %194 : vector<2x1x8x20xf32>
      %c14 = arith.constant 14 : index
      %196 = memref.load %arg1[%c14] : memref<400xf32, #tpu.memory_space<smem>>
      %197 = vector.extract_strided_slice %175 {offsets = [0, 0, 0, 4], sizes = [2, 1, 8, 20], strides = [1, 1, 1, 1]} : vector<2x1x8x24xf32> to vector<2x1x8x20xf32>
      %198 = vector.broadcast %196 : f32 to vector<2x1x8x20xf32>
      %199 = arith.mulf %197, %198 : vector<2x1x8x20xf32>
      %200 = arith.addf %195, %199 : vector<2x1x8x20xf32>
      %c3_i32_92 = arith.constant 3 : i32
      %201 = arith.addi %113, %c3_i32_92 : i32
      %c0_93 = arith.constant 0 : index
      %c0_94 = arith.constant 0 : index
      %202 = arith.index_cast %201 : i32 to index
      %c0_95 = arith.constant 0 : index
      %203 = vector.load %arg0[%c0_93, %c0_94, %202, %c0_95] : memref<2x4x24x24xf32, #tpu.memory_space<vmem>>, vector<2x1x8x24xf32>
      %c15 = arith.constant 15 : index
      %204 = memref.load %arg1[%c15] : memref<400xf32, #tpu.memory_space<smem>>
      %205 = vector.extract_strided_slice %203 {offsets = [0, 0, 0, 0], sizes = [2, 1, 8, 20], strides = [1, 1, 1, 1]} : vector<2x1x8x24xf32> to vector<2x1x8x20xf32>
      %206 = vector.broadcast %204 : f32 to vector<2x1x8x20xf32>
      %207 = arith.mulf %205, %206 : vector<2x1x8x20xf32>
      %208 = arith.addf %200, %207 : vector<2x1x8x20xf32>
      %c16 = arith.constant 16 : index
      %209 = memref.load %arg1[%c16] : memref<400xf32, #tpu.memory_space<smem>>
      %210 = vector.extract_strided_slice %203 {offsets = [0, 0, 0, 1], sizes = [2, 1, 8, 20], strides = [1, 1, 1, 1]} : vector<2x1x8x24xf32> to vector<2x1x8x20xf32>
      %211 = vector.broadcast %209 : f32 to vector<2x1x8x20xf32>
      %212 = arith.mulf %210, %211 : vector<2x1x8x20xf32>
      %213 = arith.addf %208, %212 : vector<2x1x8x20xf32>
      %c17 = arith.constant 17 : index
      %214 = memref.load %arg1[%c17] : memref<400xf32, #tpu.memory_space<smem>>
      %215 = vector.extract_strided_slice %203 {offsets = [0, 0, 0, 2], sizes = [2, 1, 8, 20], strides = [1, 1, 1, 1]} : vector<2x1x8x24xf32> to vector<2x1x8x20xf32>
      %216 = vector.broadcast %214 : f32 to vector<2x1x8x20xf32>
      %217 = arith.mulf %215, %216 : vector<2x1x8x20xf32>
      %218 = arith.addf %213, %217 : vector<2x1x8x20xf32>
      %c18 = arith.constant 18 : index
      %219 = memref.load %arg1[%c18] : memref<400xf32, #tpu.memory_space<smem>>
      %220 = vector.extract_strided_slice %203 {offsets = [0, 0, 0, 3], sizes = [2, 1, 8, 20], strides = [1, 1, 1, 1]} : vector<2x1x8x24xf32> to vector<2x1x8x20xf32>
      %221 = vector.broadcast %219 : f32 to vector<2x1x8x20xf32>
      %222 = arith.mulf %220, %221 : vector<2x1x8x20xf32>
      %223 = arith.addf %218, %222 : vector<2x1x8x20xf32>
      %c19 = arith.constant 19 : index
      %224 = memref.load %arg1[%c19] : memref<400xf32, #tpu.memory_space<smem>>
      %225 = vector.extract_strided_slice %203 {offsets = [0, 0, 0, 4], sizes = [2, 1, 8, 20], strides = [1, 1, 1, 1]} : vector<2x1x8x24xf32> to vector<2x1x8x20xf32>
      %226 = vector.broadcast %224 : f32 to vector<2x1x8x20xf32>
      %227 = arith.mulf %225, %226 : vector<2x1x8x20xf32>
      %228 = arith.addf %223, %227 : vector<2x1x8x20xf32>
      %c4_i32 = arith.constant 4 : i32
      %229 = arith.addi %113, %c4_i32 : i32
      %c0_96 = arith.constant 0 : index
      %c0_97 = arith.constant 0 : index
      %230 = arith.index_cast %229 : i32 to index
      %c0_98 = arith.constant 0 : index
      %231 = vector.load %arg0[%c0_96, %c0_97, %230, %c0_98] : memref<2x4x24x24xf32, #tpu.memory_space<vmem>>, vector<2x1x8x24xf32>
      %c20 = arith.constant 20 : index
      %232 = memref.load %arg1[%c20] : memref<400xf32, #tpu.memory_space<smem>>
      %233 = vector.extract_strided_slice %231 {offsets = [0, 0, 0, 0], sizes = [2, 1, 8, 20], strides = [1, 1, 1, 1]} : vector<2x1x8x24xf32> to vector<2x1x8x20xf32>
      %234 = vector.broadcast %232 : f32 to vector<2x1x8x20xf32>
      %235 = arith.mulf %233, %234 : vector<2x1x8x20xf32>
      %236 = arith.addf %228, %235 : vector<2x1x8x20xf32>
      %c21 = arith.constant 21 : index
      %237 = memref.load %arg1[%c21] : memref<400xf32, #tpu.memory_space<smem>>
      %238 = vector.extract_strided_slice %231 {offsets = [0, 0, 0, 1], sizes = [2, 1, 8, 20], strides = [1, 1, 1, 1]} : vector<2x1x8x24xf32> to vector<2x1x8x20xf32>
      %239 = vector.broadcast %237 : f32 to vector<2x1x8x20xf32>
      %240 = arith.mulf %238, %239 : vector<2x1x8x20xf32>
      %241 = arith.addf %236, %240 : vector<2x1x8x20xf32>
      %c22 = arith.constant 22 : index
      %242 = memref.load %arg1[%c22] : memref<400xf32, #tpu.memory_space<smem>>
      %243 = vector.extract_strided_slice %231 {offsets = [0, 0, 0, 2], sizes = [2, 1, 8, 20], strides = [1, 1, 1, 1]} : vector<2x1x8x24xf32> to vector<2x1x8x20xf32>
      %244 = vector.broadcast %242 : f32 to vector<2x1x8x20xf32>
      %245 = arith.mulf %243, %244 : vector<2x1x8x20xf32>
      %246 = arith.addf %241, %245 : vector<2x1x8x20xf32>
      %c23 = arith.constant 23 : index
      %247 = memref.load %arg1[%c23] : memref<400xf32, #tpu.memory_space<smem>>
      %248 = vector.extract_strided_slice %231 {offsets = [0, 0, 0, 3], sizes = [2, 1, 8, 20], strides = [1, 1, 1, 1]} : vector<2x1x8x24xf32> to vector<2x1x8x20xf32>
      %249 = vector.broadcast %247 : f32 to vector<2x1x8x20xf32>
      %250 = arith.mulf %248, %249 : vector<2x1x8x20xf32>
      %251 = arith.addf %246, %250 : vector<2x1x8x20xf32>
      %c24 = arith.constant 24 : index
      %252 = memref.load %arg1[%c24] : memref<400xf32, #tpu.memory_space<smem>>
      %253 = vector.extract_strided_slice %231 {offsets = [0, 0, 0, 4], sizes = [2, 1, 8, 20], strides = [1, 1, 1, 1]} : vector<2x1x8x24xf32> to vector<2x1x8x20xf32>
      %254 = vector.broadcast %252 : f32 to vector<2x1x8x20xf32>
      %255 = arith.mulf %253, %254 : vector<2x1x8x20xf32>
      %256 = arith.addf %251, %255 : vector<2x1x8x20xf32>
      %c0_i32_99 = arith.constant 0 : i32
      %257 = arith.addi %113, %c0_i32_99 : i32
      %c0_100 = arith.constant 0 : index
      %c1_101 = arith.constant 1 : index
      %258 = arith.index_cast %257 : i32 to index
      %c0_102 = arith.constant 0 : index
      %259 = vector.load %arg0[%c0_100, %c1_101, %258, %c0_102] : memref<2x4x24x24xf32, #tpu.memory_space<vmem>>, vector<2x1x8x24xf32>
      %c25 = arith.constant 25 : index
      %260 = memref.load %arg1[%c25] : memref<400xf32, #tpu.memory_space<smem>>
      %261 = vector.extract_strided_slice %259 {offsets = [0, 0, 0, 0], sizes = [2, 1, 8, 20], strides = [1, 1, 1, 1]} : vector<2x1x8x24xf32> to vector<2x1x8x20xf32>
      %262 = vector.broadcast %260 : f32 to vector<2x1x8x20xf32>
      %263 = arith.mulf %261, %262 : vector<2x1x8x20xf32>
      %264 = arith.addf %256, %263 : vector<2x1x8x20xf32>
      %c26 = arith.constant 26 : index
      %265 = memref.load %arg1[%c26] : memref<400xf32, #tpu.memory_space<smem>>
      %266 = vector.extract_strided_slice %259 {offsets = [0, 0, 0, 1], sizes = [2, 1, 8, 20], strides = [1, 1, 1, 1]} : vector<2x1x8x24xf32> to vector<2x1x8x20xf32>
      %267 = vector.broadcast %265 : f32 to vector<2x1x8x20xf32>
      %268 = arith.mulf %266, %267 : vector<2x1x8x20xf32>
      %269 = arith.addf %264, %268 : vector<2x1x8x20xf32>
      %c27 = arith.constant 27 : index
      %270 = memref.load %arg1[%c27] : memref<400xf32, #tpu.memory_space<smem>>
      %271 = vector.extract_strided_slice %259 {offsets = [0, 0, 0, 2], sizes = [2, 1, 8, 20], strides = [1, 1, 1, 1]} : vector<2x1x8x24xf32> to vector<2x1x8x20xf32>
      %272 = vector.broadcast %270 : f32 to vector<2x1x8x20xf32>
      %273 = arith.mulf %271, %272 : vector<2x1x8x20xf32>
      %274 = arith.addf %269, %273 : vector<2x1x8x20xf32>
      %c28 = arith.constant 28 : index
      %275 = memref.load %arg1[%c28] : memref<400xf32, #tpu.memory_space<smem>>
      %276 = vector.extract_strided_slice %259 {offsets = [0, 0, 0, 3], sizes = [2, 1, 8, 20], strides = [1, 1, 1, 1]} : vector<2x1x8x24xf32> to vector<2x1x8x20xf32>
      %277 = vector.broadcast %275 : f32 to vector<2x1x8x20xf32>
      %278 = arith.mulf %276, %277 : vector<2x1x8x20xf32>
      %279 = arith.addf %274, %278 : vector<2x1x8x20xf32>
      %c29 = arith.constant 29 : index
      %280 = memref.load %arg1[%c29] : memref<400xf32, #tpu.memory_space<smem>>
      %281 = vector.extract_strided_slice %259 {offsets = [0, 0, 0, 4], sizes = [2, 1, 8, 20], strides = [1, 1, 1, 1]} : vector<2x1x8x24xf32> to vector<2x1x8x20xf32>
      %282 = vector.broadcast %280 : f32 to vector<2x1x8x20xf32>
      %283 = arith.mulf %281, %282 : vector<2x1x8x20xf32>
      %284 = arith.addf %279, %283 : vector<2x1x8x20xf32>
      %c1_i32_103 = arith.constant 1 : i32
      %285 = arith.addi %113, %c1_i32_103 : i32
      %c0_104 = arith.constant 0 : index
      %c1_105 = arith.constant 1 : index
      %286 = arith.index_cast %285 : i32 to index
      %c0_106 = arith.constant 0 : index
      %287 = vector.load %arg0[%c0_104, %c1_105, %286, %c0_106] : memref<2x4x24x24xf32, #tpu.memory_space<vmem>>, vector<2x1x8x24xf32>
      %c30 = arith.constant 30 : index
      %288 = memref.load %arg1[%c30] : memref<400xf32, #tpu.memory_space<smem>>
      %289 = vector.extract_strided_slice %287 {offsets = [0, 0, 0, 0], sizes = [2, 1, 8, 20], strides = [1, 1, 1, 1]} : vector<2x1x8x24xf32> to vector<2x1x8x20xf32>
      %290 = vector.broadcast %288 : f32 to vector<2x1x8x20xf32>
      %291 = arith.mulf %289, %290 : vector<2x1x8x20xf32>
      %292 = arith.addf %284, %291 : vector<2x1x8x20xf32>
      %c31 = arith.constant 31 : index
      %293 = memref.load %arg1[%c31] : memref<400xf32, #tpu.memory_space<smem>>
      %294 = vector.extract_strided_slice %287 {offsets = [0, 0, 0, 1], sizes = [2, 1, 8, 20], strides = [1, 1, 1, 1]} : vector<2x1x8x24xf32> to vector<2x1x8x20xf32>
      %295 = vector.broadcast %293 : f32 to vector<2x1x8x20xf32>
      %296 = arith.mulf %294, %295 : vector<2x1x8x20xf32>
      %297 = arith.addf %292, %296 : vector<2x1x8x20xf32>
      %c32 = arith.constant 32 : index
      %298 = memref.load %arg1[%c32] : memref<400xf32, #tpu.memory_space<smem>>
      %299 = vector.extract_strided_slice %287 {offsets = [0, 0, 0, 2], sizes = [2, 1, 8, 20], strides = [1, 1, 1, 1]} : vector<2x1x8x24xf32> to vector<2x1x8x20xf32>
      %300 = vector.broadcast %298 : f32 to vector<2x1x8x20xf32>
      %301 = arith.mulf %299, %300 : vector<2x1x8x20xf32>
      %302 = arith.addf %297, %301 : vector<2x1x8x20xf32>
      %c33 = arith.constant 33 : index
      %303 = memref.load %arg1[%c33] : memref<400xf32, #tpu.memory_space<smem>>
      %304 = vector.extract_strided_slice %287 {offsets = [0, 0, 0, 3], sizes = [2, 1, 8, 20], strides = [1, 1, 1, 1]} : vector<2x1x8x24xf32> to vector<2x1x8x20xf32>
      %305 = vector.broadcast %303 : f32 to vector<2x1x8x20xf32>
      %306 = arith.mulf %304, %305 : vector<2x1x8x20xf32>
      %307 = arith.addf %302, %306 : vector<2x1x8x20xf32>
      %c34 = arith.constant 34 : index
      %308 = memref.load %arg1[%c34] : memref<400xf32, #tpu.memory_space<smem>>
      %309 = vector.extract_strided_slice %287 {offsets = [0, 0, 0, 4], sizes = [2, 1, 8, 20], strides = [1, 1, 1, 1]} : vector<2x1x8x24xf32> to vector<2x1x8x20xf32>
      %310 = vector.broadcast %308 : f32 to vector<2x1x8x20xf32>
      %311 = arith.mulf %309, %310 : vector<2x1x8x20xf32>
      %312 = arith.addf %307, %311 : vector<2x1x8x20xf32>
      %c2_i32_107 = arith.constant 2 : i32
      %313 = arith.addi %113, %c2_i32_107 : i32
      %c0_108 = arith.constant 0 : index
      %c1_109 = arith.constant 1 : index
      %314 = arith.index_cast %313 : i32 to index
      %c0_110 = arith.constant 0 : index
      %315 = vector.load %arg0[%c0_108, %c1_109, %314, %c0_110] : memref<2x4x24x24xf32, #tpu.memory_space<vmem>>, vector<2x1x8x24xf32>
      %c35 = arith.constant 35 : index
      %316 = memref.load %arg1[%c35] : memref<400xf32, #tpu.memory_space<smem>>
      %317 = vector.extract_strided_slice %315 {offsets = [0, 0, 0, 0], sizes = [2, 1, 8, 20], strides = [1, 1, 1, 1]} : vector<2x1x8x24xf32> to vector<2x1x8x20xf32>
      %318 = vector.broadcast %316 : f32 to vector<2x1x8x20xf32>
      %319 = arith.mulf %317, %318 : vector<2x1x8x20xf32>
      %320 = arith.addf %312, %319 : vector<2x1x8x20xf32>
      %c36 = arith.constant 36 : index
      %321 = memref.load %arg1[%c36] : memref<400xf32, #tpu.memory_space<smem>>
      %322 = vector.extract_strided_slice %315 {offsets = [0, 0, 0, 1], sizes = [2, 1, 8, 20], strides = [1, 1, 1, 1]} : vector<2x1x8x24xf32> to vector<2x1x8x20xf32>
      %323 = vector.broadcast %321 : f32 to vector<2x1x8x20xf32>
      %324 = arith.mulf %322, %323 : vector<2x1x8x20xf32>
      %325 = arith.addf %320, %324 : vector<2x1x8x20xf32>
      %c37 = arith.constant 37 : index
      %326 = memref.load %arg1[%c37] : memref<400xf32, #tpu.memory_space<smem>>
      %327 = vector.extract_strided_slice %315 {offsets = [0, 0, 0, 2], sizes = [2, 1, 8, 20], strides = [1, 1, 1, 1]} : vector<2x1x8x24xf32> to vector<2x1x8x20xf32>
      %328 = vector.broadcast %326 : f32 to vector<2x1x8x20xf32>
      %329 = arith.mulf %327, %328 : vector<2x1x8x20xf32>
      %330 = arith.addf %325, %329 : vector<2x1x8x20xf32>
      %c38 = arith.constant 38 : index
      %331 = memref.load %arg1[%c38] : memref<400xf32, #tpu.memory_space<smem>>
      %332 = vector.extract_strided_slice %315 {offsets = [0, 0, 0, 3], sizes = [2, 1, 8, 20], strides = [1, 1, 1, 1]} : vector<2x1x8x24xf32> to vector<2x1x8x20xf32>
      %333 = vector.broadcast %331 : f32 to vector<2x1x8x20xf32>
      %334 = arith.mulf %332, %333 : vector<2x1x8x20xf32>
      %335 = arith.addf %330, %334 : vector<2x1x8x20xf32>
      %c39 = arith.constant 39 : index
      %336 = memref.load %arg1[%c39] : memref<400xf32, #tpu.memory_space<smem>>
      %337 = vector.extract_strided_slice %315 {offsets = [0, 0, 0, 4], sizes = [2, 1, 8, 20], strides = [1, 1, 1, 1]} : vector<2x1x8x24xf32> to vector<2x1x8x20xf32>
      %338 = vector.broadcast %336 : f32 to vector<2x1x8x20xf32>
      %339 = arith.mulf %337, %338 : vector<2x1x8x20xf32>
      %340 = arith.addf %335, %339 : vector<2x1x8x20xf32>
      %c3_i32_111 = arith.constant 3 : i32
      %341 = arith.addi %113, %c3_i32_111 : i32
      %c0_112 = arith.constant 0 : index
      %c1_113 = arith.constant 1 : index
      %342 = arith.index_cast %341 : i32 to index
      %c0_114 = arith.constant 0 : index
      %343 = vector.load %arg0[%c0_112, %c1_113, %342, %c0_114] : memref<2x4x24x24xf32, #tpu.memory_space<vmem>>, vector<2x1x8x24xf32>
      %c40 = arith.constant 40 : index
      %344 = memref.load %arg1[%c40] : memref<400xf32, #tpu.memory_space<smem>>
      %345 = vector.extract_strided_slice %343 {offsets = [0, 0, 0, 0], sizes = [2, 1, 8, 20], strides = [1, 1, 1, 1]} : vector<2x1x8x24xf32> to vector<2x1x8x20xf32>
      %346 = vector.broadcast %344 : f32 to vector<2x1x8x20xf32>
      %347 = arith.mulf %345, %346 : vector<2x1x8x20xf32>
      %348 = arith.addf %340, %347 : vector<2x1x8x20xf32>
      %c41 = arith.constant 41 : index
      %349 = memref.load %arg1[%c41] : memref<400xf32, #tpu.memory_space<smem>>
      %350 = vector.extract_strided_slice %343 {offsets = [0, 0, 0, 1], sizes = [2, 1, 8, 20], strides = [1, 1, 1, 1]} : vector<2x1x8x24xf32> to vector<2x1x8x20xf32>
      %351 = vector.broadcast %349 : f32 to vector<2x1x8x20xf32>
      %352 = arith.mulf %350, %351 : vector<2x1x8x20xf32>
      %353 = arith.addf %348, %352 : vector<2x1x8x20xf32>
      %c42 = arith.constant 42 : index
      %354 = memref.load %arg1[%c42] : memref<400xf32, #tpu.memory_space<smem>>
      %355 = vector.extract_strided_slice %343 {offsets = [0, 0, 0, 2], sizes = [2, 1, 8, 20], strides = [1, 1, 1, 1]} : vector<2x1x8x24xf32> to vector<2x1x8x20xf32>
      %356 = vector.broadcast %354 : f32 to vector<2x1x8x20xf32>
      %357 = arith.mulf %355, %356 : vector<2x1x8x20xf32>
      %358 = arith.addf %353, %357 : vector<2x1x8x20xf32>
      %c43 = arith.constant 43 : index
      %359 = memref.load %arg1[%c43] : memref<400xf32, #tpu.memory_space<smem>>
      %360 = vector.extract_strided_slice %343 {offsets = [0, 0, 0, 3], sizes = [2, 1, 8, 20], strides = [1, 1, 1, 1]} : vector<2x1x8x24xf32> to vector<2x1x8x20xf32>
      %361 = vector.broadcast %359 : f32 to vector<2x1x8x20xf32>
      %362 = arith.mulf %360, %361 : vector<2x1x8x20xf32>
      %363 = arith.addf %358, %362 : vector<2x1x8x20xf32>
      %c44 = arith.constant 44 : index
      %364 = memref.load %arg1[%c44] : memref<400xf32, #tpu.memory_space<smem>>
      %365 = vector.extract_strided_slice %343 {offsets = [0, 0, 0, 4], sizes = [2, 1, 8, 20], strides = [1, 1, 1, 1]} : vector<2x1x8x24xf32> to vector<2x1x8x20xf32>
      %366 = vector.broadcast %364 : f32 to vector<2x1x8x20xf32>
      %367 = arith.mulf %365, %366 : vector<2x1x8x20xf32>
      %368 = arith.addf %363, %367 : vector<2x1x8x20xf32>
      %c4_i32_115 = arith.constant 4 : i32
      %369 = arith.addi %113, %c4_i32_115 : i32
      %c0_116 = arith.constant 0 : index
      %c1_117 = arith.constant 1 : index
      %370 = arith.index_cast %369 : i32 to index
      %c0_118 = arith.constant 0 : index
      %371 = vector.load %arg0[%c0_116, %c1_117, %370, %c0_118] : memref<2x4x24x24xf32, #tpu.memory_space<vmem>>, vector<2x1x8x24xf32>
      %c45 = arith.constant 45 : index
      %372 = memref.load %arg1[%c45] : memref<400xf32, #tpu.memory_space<smem>>
      %373 = vector.extract_strided_slice %371 {offsets = [0, 0, 0, 0], sizes = [2, 1, 8, 20], strides = [1, 1, 1, 1]} : vector<2x1x8x24xf32> to vector<2x1x8x20xf32>
      %374 = vector.broadcast %372 : f32 to vector<2x1x8x20xf32>
      %375 = arith.mulf %373, %374 : vector<2x1x8x20xf32>
      %376 = arith.addf %368, %375 : vector<2x1x8x20xf32>
      %c46 = arith.constant 46 : index
      %377 = memref.load %arg1[%c46] : memref<400xf32, #tpu.memory_space<smem>>
      %378 = vector.extract_strided_slice %371 {offsets = [0, 0, 0, 1], sizes = [2, 1, 8, 20], strides = [1, 1, 1, 1]} : vector<2x1x8x24xf32> to vector<2x1x8x20xf32>
      %379 = vector.broadcast %377 : f32 to vector<2x1x8x20xf32>
      %380 = arith.mulf %378, %379 : vector<2x1x8x20xf32>
      %381 = arith.addf %376, %380 : vector<2x1x8x20xf32>
      %c47 = arith.constant 47 : index
      %382 = memref.load %arg1[%c47] : memref<400xf32, #tpu.memory_space<smem>>
      %383 = vector.extract_strided_slice %371 {offsets = [0, 0, 0, 2], sizes = [2, 1, 8, 20], strides = [1, 1, 1, 1]} : vector<2x1x8x24xf32> to vector<2x1x8x20xf32>
      %384 = vector.broadcast %382 : f32 to vector<2x1x8x20xf32>
      %385 = arith.mulf %383, %384 : vector<2x1x8x20xf32>
      %386 = arith.addf %381, %385 : vector<2x1x8x20xf32>
      %c48 = arith.constant 48 : index
      %387 = memref.load %arg1[%c48] : memref<400xf32, #tpu.memory_space<smem>>
      %388 = vector.extract_strided_slice %371 {offsets = [0, 0, 0, 3], sizes = [2, 1, 8, 20], strides = [1, 1, 1, 1]} : vector<2x1x8x24xf32> to vector<2x1x8x20xf32>
      %389 = vector.broadcast %387 : f32 to vector<2x1x8x20xf32>
      %390 = arith.mulf %388, %389 : vector<2x1x8x20xf32>
      %391 = arith.addf %386, %390 : vector<2x1x8x20xf32>
      %c49 = arith.constant 49 : index
      %392 = memref.load %arg1[%c49] : memref<400xf32, #tpu.memory_space<smem>>
      %393 = vector.extract_strided_slice %371 {offsets = [0, 0, 0, 4], sizes = [2, 1, 8, 20], strides = [1, 1, 1, 1]} : vector<2x1x8x24xf32> to vector<2x1x8x20xf32>
      %394 = vector.broadcast %392 : f32 to vector<2x1x8x20xf32>
      %395 = arith.mulf %393, %394 : vector<2x1x8x20xf32>
      %396 = arith.addf %391, %395 : vector<2x1x8x20xf32>
      %c0_i32_119 = arith.constant 0 : i32
      %397 = arith.addi %113, %c0_i32_119 : i32
      %c0_120 = arith.constant 0 : index
      %c2_121 = arith.constant 2 : index
      %398 = arith.index_cast %397 : i32 to index
      %c0_122 = arith.constant 0 : index
      %399 = vector.load %arg0[%c0_120, %c2_121, %398, %c0_122] : memref<2x4x24x24xf32, #tpu.memory_space<vmem>>, vector<2x1x8x24xf32>
      %c50 = arith.constant 50 : index
      %400 = memref.load %arg1[%c50] : memref<400xf32, #tpu.memory_space<smem>>
      %401 = vector.extract_strided_slice %399 {offsets = [0, 0, 0, 0], sizes = [2, 1, 8, 20], strides = [1, 1, 1, 1]} : vector<2x1x8x24xf32> to vector<2x1x8x20xf32>
      %402 = vector.broadcast %400 : f32 to vector<2x1x8x20xf32>
      %403 = arith.mulf %401, %402 : vector<2x1x8x20xf32>
      %404 = arith.addf %396, %403 : vector<2x1x8x20xf32>
      %c51 = arith.constant 51 : index
      %405 = memref.load %arg1[%c51] : memref<400xf32, #tpu.memory_space<smem>>
      %406 = vector.extract_strided_slice %399 {offsets = [0, 0, 0, 1], sizes = [2, 1, 8, 20], strides = [1, 1, 1, 1]} : vector<2x1x8x24xf32> to vector<2x1x8x20xf32>
      %407 = vector.broadcast %405 : f32 to vector<2x1x8x20xf32>
      %408 = arith.mulf %406, %407 : vector<2x1x8x20xf32>
      %409 = arith.addf %404, %408 : vector<2x1x8x20xf32>
      %c52 = arith.constant 52 : index
      %410 = memref.load %arg1[%c52] : memref<400xf32, #tpu.memory_space<smem>>
      %411 = vector.extract_strided_slice %399 {offsets = [0, 0, 0, 2], sizes = [2, 1, 8, 20], strides = [1, 1, 1, 1]} : vector<2x1x8x24xf32> to vector<2x1x8x20xf32>
      %412 = vector.broadcast %410 : f32 to vector<2x1x8x20xf32>
      %413 = arith.mulf %411, %412 : vector<2x1x8x20xf32>
      %414 = arith.addf %409, %413 : vector<2x1x8x20xf32>
      %c53 = arith.constant 53 : index
      %415 = memref.load %arg1[%c53] : memref<400xf32, #tpu.memory_space<smem>>
      %416 = vector.extract_strided_slice %399 {offsets = [0, 0, 0, 3], sizes = [2, 1, 8, 20], strides = [1, 1, 1, 1]} : vector<2x1x8x24xf32> to vector<2x1x8x20xf32>
      %417 = vector.broadcast %415 : f32 to vector<2x1x8x20xf32>
      %418 = arith.mulf %416, %417 : vector<2x1x8x20xf32>
      %419 = arith.addf %414, %418 : vector<2x1x8x20xf32>
      %c54 = arith.constant 54 : index
      %420 = memref.load %arg1[%c54] : memref<400xf32, #tpu.memory_space<smem>>
      %421 = vector.extract_strided_slice %399 {offsets = [0, 0, 0, 4], sizes = [2, 1, 8, 20], strides = [1, 1, 1, 1]} : vector<2x1x8x24xf32> to vector<2x1x8x20xf32>
      %422 = vector.broadcast %420 : f32 to vector<2x1x8x20xf32>
      %423 = arith.mulf %421, %422 : vector<2x1x8x20xf32>
      %424 = arith.addf %419, %423 : vector<2x1x8x20xf32>
      %c1_i32_123 = arith.constant 1 : i32
      %425 = arith.addi %113, %c1_i32_123 : i32
      %c0_124 = arith.constant 0 : index
      %c2_125 = arith.constant 2 : index
      %426 = arith.index_cast %425 : i32 to index
      %c0_126 = arith.constant 0 : index
      %427 = vector.load %arg0[%c0_124, %c2_125, %426, %c0_126] : memref<2x4x24x24xf32, #tpu.memory_space<vmem>>, vector<2x1x8x24xf32>
      %c55 = arith.constant 55 : index
      %428 = memref.load %arg1[%c55] : memref<400xf32, #tpu.memory_space<smem>>
      %429 = vector.extract_strided_slice %427 {offsets = [0, 0, 0, 0], sizes = [2, 1, 8, 20], strides = [1, 1, 1, 1]} : vector<2x1x8x24xf32> to vector<2x1x8x20xf32>
      %430 = vector.broadcast %428 : f32 to vector<2x1x8x20xf32>
      %431 = arith.mulf %429, %430 : vector<2x1x8x20xf32>
      %432 = arith.addf %424, %431 : vector<2x1x8x20xf32>
      %c56 = arith.constant 56 : index
      %433 = memref.load %arg1[%c56] : memref<400xf32, #tpu.memory_space<smem>>
      %434 = vector.extract_strided_slice %427 {offsets = [0, 0, 0, 1], sizes = [2, 1, 8, 20], strides = [1, 1, 1, 1]} : vector<2x1x8x24xf32> to vector<2x1x8x20xf32>
      %435 = vector.broadcast %433 : f32 to vector<2x1x8x20xf32>
      %436 = arith.mulf %434, %435 : vector<2x1x8x20xf32>
      %437 = arith.addf %432, %436 : vector<2x1x8x20xf32>
      %c57 = arith.constant 57 : index
      %438 = memref.load %arg1[%c57] : memref<400xf32, #tpu.memory_space<smem>>
      %439 = vector.extract_strided_slice %427 {offsets = [0, 0, 0, 2], sizes = [2, 1, 8, 20], strides = [1, 1, 1, 1]} : vector<2x1x8x24xf32> to vector<2x1x8x20xf32>
      %440 = vector.broadcast %438 : f32 to vector<2x1x8x20xf32>
      %441 = arith.mulf %439, %440 : vector<2x1x8x20xf32>
      %442 = arith.addf %437, %441 : vector<2x1x8x20xf32>
      %c58 = arith.constant 58 : index
      %443 = memref.load %arg1[%c58] : memref<400xf32, #tpu.memory_space<smem>>
      %444 = vector.extract_strided_slice %427 {offsets = [0, 0, 0, 3], sizes = [2, 1, 8, 20], strides = [1, 1, 1, 1]} : vector<2x1x8x24xf32> to vector<2x1x8x20xf32>
      %445 = vector.broadcast %443 : f32 to vector<2x1x8x20xf32>
      %446 = arith.mulf %444, %445 : vector<2x1x8x20xf32>
      %447 = arith.addf %442, %446 : vector<2x1x8x20xf32>
      %c59 = arith.constant 59 : index
      %448 = memref.load %arg1[%c59] : memref<400xf32, #tpu.memory_space<smem>>
      %449 = vector.extract_strided_slice %427 {offsets = [0, 0, 0, 4], sizes = [2, 1, 8, 20], strides = [1, 1, 1, 1]} : vector<2x1x8x24xf32> to vector<2x1x8x20xf32>
      %450 = vector.broadcast %448 : f32 to vector<2x1x8x20xf32>
      %451 = arith.mulf %449, %450 : vector<2x1x8x20xf32>
      %452 = arith.addf %447, %451 : vector<2x1x8x20xf32>
      %c2_i32_127 = arith.constant 2 : i32
      %453 = arith.addi %113, %c2_i32_127 : i32
      %c0_128 = arith.constant 0 : index
      %c2_129 = arith.constant 2 : index
      %454 = arith.index_cast %453 : i32 to index
      %c0_130 = arith.constant 0 : index
      %455 = vector.load %arg0[%c0_128, %c2_129, %454, %c0_130] : memref<2x4x24x24xf32, #tpu.memory_space<vmem>>, vector<2x1x8x24xf32>
      %c60 = arith.constant 60 : index
      %456 = memref.load %arg1[%c60] : memref<400xf32, #tpu.memory_space<smem>>
      %457 = vector.extract_strided_slice %455 {offsets = [0, 0, 0, 0], sizes = [2, 1, 8, 20], strides = [1, 1, 1, 1]} : vector<2x1x8x24xf32> to vector<2x1x8x20xf32>
      %458 = vector.broadcast %456 : f32 to vector<2x1x8x20xf32>
      %459 = arith.mulf %457, %458 : vector<2x1x8x20xf32>
      %460 = arith.addf %452, %459 : vector<2x1x8x20xf32>
      %c61 = arith.constant 61 : index
      %461 = memref.load %arg1[%c61] : memref<400xf32, #tpu.memory_space<smem>>
      %462 = vector.extract_strided_slice %455 {offsets = [0, 0, 0, 1], sizes = [2, 1, 8, 20], strides = [1, 1, 1, 1]} : vector<2x1x8x24xf32> to vector<2x1x8x20xf32>
      %463 = vector.broadcast %461 : f32 to vector<2x1x8x20xf32>
      %464 = arith.mulf %462, %463 : vector<2x1x8x20xf32>
      %465 = arith.addf %460, %464 : vector<2x1x8x20xf32>
      %c62 = arith.constant 62 : index
      %466 = memref.load %arg1[%c62] : memref<400xf32, #tpu.memory_space<smem>>
      %467 = vector.extract_strided_slice %455 {offsets = [0, 0, 0, 2], sizes = [2, 1, 8, 20], strides = [1, 1, 1, 1]} : vector<2x1x8x24xf32> to vector<2x1x8x20xf32>
      %468 = vector.broadcast %466 : f32 to vector<2x1x8x20xf32>
      %469 = arith.mulf %467, %468 : vector<2x1x8x20xf32>
      %470 = arith.addf %465, %469 : vector<2x1x8x20xf32>
      %c63 = arith.constant 63 : index
      %471 = memref.load %arg1[%c63] : memref<400xf32, #tpu.memory_space<smem>>
      %472 = vector.extract_strided_slice %455 {offsets = [0, 0, 0, 3], sizes = [2, 1, 8, 20], strides = [1, 1, 1, 1]} : vector<2x1x8x24xf32> to vector<2x1x8x20xf32>
      %473 = vector.broadcast %471 : f32 to vector<2x1x8x20xf32>
      %474 = arith.mulf %472, %473 : vector<2x1x8x20xf32>
      %475 = arith.addf %470, %474 : vector<2x1x8x20xf32>
      %c64 = arith.constant 64 : index
      %476 = memref.load %arg1[%c64] : memref<400xf32, #tpu.memory_space<smem>>
      %477 = vector.extract_strided_slice %455 {offsets = [0, 0, 0, 4], sizes = [2, 1, 8, 20], strides = [1, 1, 1, 1]} : vector<2x1x8x24xf32> to vector<2x1x8x20xf32>
      %478 = vector.broadcast %476 : f32 to vector<2x1x8x20xf32>
      %479 = arith.mulf %477, %478 : vector<2x1x8x20xf32>
      %480 = arith.addf %475, %479 : vector<2x1x8x20xf32>
      %c3_i32_131 = arith.constant 3 : i32
      %481 = arith.addi %113, %c3_i32_131 : i32
      %c0_132 = arith.constant 0 : index
      %c2_133 = arith.constant 2 : index
      %482 = arith.index_cast %481 : i32 to index
      %c0_134 = arith.constant 0 : index
      %483 = vector.load %arg0[%c0_132, %c2_133, %482, %c0_134] : memref<2x4x24x24xf32, #tpu.memory_space<vmem>>, vector<2x1x8x24xf32>
      %c65 = arith.constant 65 : index
      %484 = memref.load %arg1[%c65] : memref<400xf32, #tpu.memory_space<smem>>
      %485 = vector.extract_strided_slice %483 {offsets = [0, 0, 0, 0], sizes = [2, 1, 8, 20], strides = [1, 1, 1, 1]} : vector<2x1x8x24xf32> to vector<2x1x8x20xf32>
      %486 = vector.broadcast %484 : f32 to vector<2x1x8x20xf32>
      %487 = arith.mulf %485, %486 : vector<2x1x8x20xf32>
      %488 = arith.addf %480, %487 : vector<2x1x8x20xf32>
      %c66 = arith.constant 66 : index
      %489 = memref.load %arg1[%c66] : memref<400xf32, #tpu.memory_space<smem>>
      %490 = vector.extract_strided_slice %483 {offsets = [0, 0, 0, 1], sizes = [2, 1, 8, 20], strides = [1, 1, 1, 1]} : vector<2x1x8x24xf32> to vector<2x1x8x20xf32>
      %491 = vector.broadcast %489 : f32 to vector<2x1x8x20xf32>
      %492 = arith.mulf %490, %491 : vector<2x1x8x20xf32>
      %493 = arith.addf %488, %492 : vector<2x1x8x20xf32>
      %c67 = arith.constant 67 : index
      %494 = memref.load %arg1[%c67] : memref<400xf32, #tpu.memory_space<smem>>
      %495 = vector.extract_strided_slice %483 {offsets = [0, 0, 0, 2], sizes = [2, 1, 8, 20], strides = [1, 1, 1, 1]} : vector<2x1x8x24xf32> to vector<2x1x8x20xf32>
      %496 = vector.broadcast %494 : f32 to vector<2x1x8x20xf32>
      %497 = arith.mulf %495, %496 : vector<2x1x8x20xf32>
      %498 = arith.addf %493, %497 : vector<2x1x8x20xf32>
      %c68 = arith.constant 68 : index
      %499 = memref.load %arg1[%c68] : memref<400xf32, #tpu.memory_space<smem>>
      %500 = vector.extract_strided_slice %483 {offsets = [0, 0, 0, 3], sizes = [2, 1, 8, 20], strides = [1, 1, 1, 1]} : vector<2x1x8x24xf32> to vector<2x1x8x20xf32>
      %501 = vector.broadcast %499 : f32 to vector<2x1x8x20xf32>
      %502 = arith.mulf %500, %501 : vector<2x1x8x20xf32>
      %503 = arith.addf %498, %502 : vector<2x1x8x20xf32>
      %c69 = arith.constant 69 : index
      %504 = memref.load %arg1[%c69] : memref<400xf32, #tpu.memory_space<smem>>
      %505 = vector.extract_strided_slice %483 {offsets = [0, 0, 0, 4], sizes = [2, 1, 8, 20], strides = [1, 1, 1, 1]} : vector<2x1x8x24xf32> to vector<2x1x8x20xf32>
      %506 = vector.broadcast %504 : f32 to vector<2x1x8x20xf32>
      %507 = arith.mulf %505, %506 : vector<2x1x8x20xf32>
      %508 = arith.addf %503, %507 : vector<2x1x8x20xf32>
      %c4_i32_135 = arith.constant 4 : i32
      %509 = arith.addi %113, %c4_i32_135 : i32
      %c0_136 = arith.constant 0 : index
      %c2_137 = arith.constant 2 : index
      %510 = arith.index_cast %509 : i32 to index
      %c0_138 = arith.constant 0 : index
      %511 = vector.load %arg0[%c0_136, %c2_137, %510, %c0_138] : memref<2x4x24x24xf32, #tpu.memory_space<vmem>>, vector<2x1x8x24xf32>
      %c70 = arith.constant 70 : index
      %512 = memref.load %arg1[%c70] : memref<400xf32, #tpu.memory_space<smem>>
      %513 = vector.extract_strided_slice %511 {offsets = [0, 0, 0, 0], sizes = [2, 1, 8, 20], strides = [1, 1, 1, 1]} : vector<2x1x8x24xf32> to vector<2x1x8x20xf32>
      %514 = vector.broadcast %512 : f32 to vector<2x1x8x20xf32>
      %515 = arith.mulf %513, %514 : vector<2x1x8x20xf32>
      %516 = arith.addf %508, %515 : vector<2x1x8x20xf32>
      %c71 = arith.constant 71 : index
      %517 = memref.load %arg1[%c71] : memref<400xf32, #tpu.memory_space<smem>>
      %518 = vector.extract_strided_slice %511 {offsets = [0, 0, 0, 1], sizes = [2, 1, 8, 20], strides = [1, 1, 1, 1]} : vector<2x1x8x24xf32> to vector<2x1x8x20xf32>
      %519 = vector.broadcast %517 : f32 to vector<2x1x8x20xf32>
      %520 = arith.mulf %518, %519 : vector<2x1x8x20xf32>
      %521 = arith.addf %516, %520 : vector<2x1x8x20xf32>
      %c72 = arith.constant 72 : index
      %522 = memref.load %arg1[%c72] : memref<400xf32, #tpu.memory_space<smem>>
      %523 = vector.extract_strided_slice %511 {offsets = [0, 0, 0, 2], sizes = [2, 1, 8, 20], strides = [1, 1, 1, 1]} : vector<2x1x8x24xf32> to vector<2x1x8x20xf32>
      %524 = vector.broadcast %522 : f32 to vector<2x1x8x20xf32>
      %525 = arith.mulf %523, %524 : vector<2x1x8x20xf32>
      %526 = arith.addf %521, %525 : vector<2x1x8x20xf32>
      %c73 = arith.constant 73 : index
      %527 = memref.load %arg1[%c73] : memref<400xf32, #tpu.memory_space<smem>>
      %528 = vector.extract_strided_slice %511 {offsets = [0, 0, 0, 3], sizes = [2, 1, 8, 20], strides = [1, 1, 1, 1]} : vector<2x1x8x24xf32> to vector<2x1x8x20xf32>
      %529 = vector.broadcast %527 : f32 to vector<2x1x8x20xf32>
      %530 = arith.mulf %528, %529 : vector<2x1x8x20xf32>
      %531 = arith.addf %526, %530 : vector<2x1x8x20xf32>
      %c74 = arith.constant 74 : index
      %532 = memref.load %arg1[%c74] : memref<400xf32, #tpu.memory_space<smem>>
      %533 = vector.extract_strided_slice %511 {offsets = [0, 0, 0, 4], sizes = [2, 1, 8, 20], strides = [1, 1, 1, 1]} : vector<2x1x8x24xf32> to vector<2x1x8x20xf32>
      %534 = vector.broadcast %532 : f32 to vector<2x1x8x20xf32>
      %535 = arith.mulf %533, %534 : vector<2x1x8x20xf32>
      %536 = arith.addf %531, %535 : vector<2x1x8x20xf32>
      %c0_i32_139 = arith.constant 0 : i32
      %537 = arith.addi %113, %c0_i32_139 : i32
      %c0_140 = arith.constant 0 : index
      %c3_141 = arith.constant 3 : index
      %538 = arith.index_cast %537 : i32 to index
      %c0_142 = arith.constant 0 : index
      %539 = vector.load %arg0[%c0_140, %c3_141, %538, %c0_142] : memref<2x4x24x24xf32, #tpu.memory_space<vmem>>, vector<2x1x8x24xf32>
      %c75 = arith.constant 75 : index
      %540 = memref.load %arg1[%c75] : memref<400xf32, #tpu.memory_space<smem>>
      %541 = vector.extract_strided_slice %539 {offsets = [0, 0, 0, 0], sizes = [2, 1, 8, 20], strides = [1, 1, 1, 1]} : vector<2x1x8x24xf32> to vector<2x1x8x20xf32>
      %542 = vector.broadcast %540 : f32 to vector<2x1x8x20xf32>
      %543 = arith.mulf %541, %542 : vector<2x1x8x20xf32>
      %544 = arith.addf %536, %543 : vector<2x1x8x20xf32>
      %c76 = arith.constant 76 : index
      %545 = memref.load %arg1[%c76] : memref<400xf32, #tpu.memory_space<smem>>
      %546 = vector.extract_strided_slice %539 {offsets = [0, 0, 0, 1], sizes = [2, 1, 8, 20], strides = [1, 1, 1, 1]} : vector<2x1x8x24xf32> to vector<2x1x8x20xf32>
      %547 = vector.broadcast %545 : f32 to vector<2x1x8x20xf32>
      %548 = arith.mulf %546, %547 : vector<2x1x8x20xf32>
      %549 = arith.addf %544, %548 : vector<2x1x8x20xf32>
      %c77 = arith.constant 77 : index
      %550 = memref.load %arg1[%c77] : memref<400xf32, #tpu.memory_space<smem>>
      %551 = vector.extract_strided_slice %539 {offsets = [0, 0, 0, 2], sizes = [2, 1, 8, 20], strides = [1, 1, 1, 1]} : vector<2x1x8x24xf32> to vector<2x1x8x20xf32>
      %552 = vector.broadcast %550 : f32 to vector<2x1x8x20xf32>
      %553 = arith.mulf %551, %552 : vector<2x1x8x20xf32>
      %554 = arith.addf %549, %553 : vector<2x1x8x20xf32>
      %c78 = arith.constant 78 : index
      %555 = memref.load %arg1[%c78] : memref<400xf32, #tpu.memory_space<smem>>
      %556 = vector.extract_strided_slice %539 {offsets = [0, 0, 0, 3], sizes = [2, 1, 8, 20], strides = [1, 1, 1, 1]} : vector<2x1x8x24xf32> to vector<2x1x8x20xf32>
      %557 = vector.broadcast %555 : f32 to vector<2x1x8x20xf32>
      %558 = arith.mulf %556, %557 : vector<2x1x8x20xf32>
      %559 = arith.addf %554, %558 : vector<2x1x8x20xf32>
      %c79 = arith.constant 79 : index
      %560 = memref.load %arg1[%c79] : memref<400xf32, #tpu.memory_space<smem>>
      %561 = vector.extract_strided_slice %539 {offsets = [0, 0, 0, 4], sizes = [2, 1, 8, 20], strides = [1, 1, 1, 1]} : vector<2x1x8x24xf32> to vector<2x1x8x20xf32>
      %562 = vector.broadcast %560 : f32 to vector<2x1x8x20xf32>
      %563 = arith.mulf %561, %562 : vector<2x1x8x20xf32>
      %564 = arith.addf %559, %563 : vector<2x1x8x20xf32>
      %c1_i32_143 = arith.constant 1 : i32
      %565 = arith.addi %113, %c1_i32_143 : i32
      %c0_144 = arith.constant 0 : index
      %c3_145 = arith.constant 3 : index
      %566 = arith.index_cast %565 : i32 to index
      %c0_146 = arith.constant 0 : index
      %567 = vector.load %arg0[%c0_144, %c3_145, %566, %c0_146] : memref<2x4x24x24xf32, #tpu.memory_space<vmem>>, vector<2x1x8x24xf32>
      %c80 = arith.constant 80 : index
      %568 = memref.load %arg1[%c80] : memref<400xf32, #tpu.memory_space<smem>>
      %569 = vector.extract_strided_slice %567 {offsets = [0, 0, 0, 0], sizes = [2, 1, 8, 20], strides = [1, 1, 1, 1]} : vector<2x1x8x24xf32> to vector<2x1x8x20xf32>
      %570 = vector.broadcast %568 : f32 to vector<2x1x8x20xf32>
      %571 = arith.mulf %569, %570 : vector<2x1x8x20xf32>
      %572 = arith.addf %564, %571 : vector<2x1x8x20xf32>
      %c81 = arith.constant 81 : index
      %573 = memref.load %arg1[%c81] : memref<400xf32, #tpu.memory_space<smem>>
      %574 = vector.extract_strided_slice %567 {offsets = [0, 0, 0, 1], sizes = [2, 1, 8, 20], strides = [1, 1, 1, 1]} : vector<2x1x8x24xf32> to vector<2x1x8x20xf32>
      %575 = vector.broadcast %573 : f32 to vector<2x1x8x20xf32>
      %576 = arith.mulf %574, %575 : vector<2x1x8x20xf32>
      %577 = arith.addf %572, %576 : vector<2x1x8x20xf32>
      %c82 = arith.constant 82 : index
      %578 = memref.load %arg1[%c82] : memref<400xf32, #tpu.memory_space<smem>>
      %579 = vector.extract_strided_slice %567 {offsets = [0, 0, 0, 2], sizes = [2, 1, 8, 20], strides = [1, 1, 1, 1]} : vector<2x1x8x24xf32> to vector<2x1x8x20xf32>
      %580 = vector.broadcast %578 : f32 to vector<2x1x8x20xf32>
      %581 = arith.mulf %579, %580 : vector<2x1x8x20xf32>
      %582 = arith.addf %577, %581 : vector<2x1x8x20xf32>
      %c83 = arith.constant 83 : index
      %583 = memref.load %arg1[%c83] : memref<400xf32, #tpu.memory_space<smem>>
      %584 = vector.extract_strided_slice %567 {offsets = [0, 0, 0, 3], sizes = [2, 1, 8, 20], strides = [1, 1, 1, 1]} : vector<2x1x8x24xf32> to vector<2x1x8x20xf32>
      %585 = vector.broadcast %583 : f32 to vector<2x1x8x20xf32>
      %586 = arith.mulf %584, %585 : vector<2x1x8x20xf32>
      %587 = arith.addf %582, %586 : vector<2x1x8x20xf32>
      %c84 = arith.constant 84 : index
      %588 = memref.load %arg1[%c84] : memref<400xf32, #tpu.memory_space<smem>>
      %589 = vector.extract_strided_slice %567 {offsets = [0, 0, 0, 4], sizes = [2, 1, 8, 20], strides = [1, 1, 1, 1]} : vector<2x1x8x24xf32> to vector<2x1x8x20xf32>
      %590 = vector.broadcast %588 : f32 to vector<2x1x8x20xf32>
      %591 = arith.mulf %589, %590 : vector<2x1x8x20xf32>
      %592 = arith.addf %587, %591 : vector<2x1x8x20xf32>
      %c2_i32_147 = arith.constant 2 : i32
      %593 = arith.addi %113, %c2_i32_147 : i32
      %c0_148 = arith.constant 0 : index
      %c3_149 = arith.constant 3 : index
      %594 = arith.index_cast %593 : i32 to index
      %c0_150 = arith.constant 0 : index
      %595 = vector.load %arg0[%c0_148, %c3_149, %594, %c0_150] : memref<2x4x24x24xf32, #tpu.memory_space<vmem>>, vector<2x1x8x24xf32>
      %c85 = arith.constant 85 : index
      %596 = memref.load %arg1[%c85] : memref<400xf32, #tpu.memory_space<smem>>
      %597 = vector.extract_strided_slice %595 {offsets = [0, 0, 0, 0], sizes = [2, 1, 8, 20], strides = [1, 1, 1, 1]} : vector<2x1x8x24xf32> to vector<2x1x8x20xf32>
      %598 = vector.broadcast %596 : f32 to vector<2x1x8x20xf32>
      %599 = arith.mulf %597, %598 : vector<2x1x8x20xf32>
      %600 = arith.addf %592, %599 : vector<2x1x8x20xf32>
      %c86 = arith.constant 86 : index
      %601 = memref.load %arg1[%c86] : memref<400xf32, #tpu.memory_space<smem>>
      %602 = vector.extract_strided_slice %595 {offsets = [0, 0, 0, 1], sizes = [2, 1, 8, 20], strides = [1, 1, 1, 1]} : vector<2x1x8x24xf32> to vector<2x1x8x20xf32>
      %603 = vector.broadcast %601 : f32 to vector<2x1x8x20xf32>
      %604 = arith.mulf %602, %603 : vector<2x1x8x20xf32>
      %605 = arith.addf %600, %604 : vector<2x1x8x20xf32>
      %c87 = arith.constant 87 : index
      %606 = memref.load %arg1[%c87] : memref<400xf32, #tpu.memory_space<smem>>
      %607 = vector.extract_strided_slice %595 {offsets = [0, 0, 0, 2], sizes = [2, 1, 8, 20], strides = [1, 1, 1, 1]} : vector<2x1x8x24xf32> to vector<2x1x8x20xf32>
      %608 = vector.broadcast %606 : f32 to vector<2x1x8x20xf32>
      %609 = arith.mulf %607, %608 : vector<2x1x8x20xf32>
      %610 = arith.addf %605, %609 : vector<2x1x8x20xf32>
      %c88 = arith.constant 88 : index
      %611 = memref.load %arg1[%c88] : memref<400xf32, #tpu.memory_space<smem>>
      %612 = vector.extract_strided_slice %595 {offsets = [0, 0, 0, 3], sizes = [2, 1, 8, 20], strides = [1, 1, 1, 1]} : vector<2x1x8x24xf32> to vector<2x1x8x20xf32>
      %613 = vector.broadcast %611 : f32 to vector<2x1x8x20xf32>
      %614 = arith.mulf %612, %613 : vector<2x1x8x20xf32>
      %615 = arith.addf %610, %614 : vector<2x1x8x20xf32>
      %c89 = arith.constant 89 : index
      %616 = memref.load %arg1[%c89] : memref<400xf32, #tpu.memory_space<smem>>
      %617 = vector.extract_strided_slice %595 {offsets = [0, 0, 0, 4], sizes = [2, 1, 8, 20], strides = [1, 1, 1, 1]} : vector<2x1x8x24xf32> to vector<2x1x8x20xf32>
      %618 = vector.broadcast %616 : f32 to vector<2x1x8x20xf32>
      %619 = arith.mulf %617, %618 : vector<2x1x8x20xf32>
      %620 = arith.addf %615, %619 : vector<2x1x8x20xf32>
      %c3_i32_151 = arith.constant 3 : i32
      %621 = arith.addi %113, %c3_i32_151 : i32
      %c0_152 = arith.constant 0 : index
      %c3_153 = arith.constant 3 : index
      %622 = arith.index_cast %621 : i32 to index
      %c0_154 = arith.constant 0 : index
      %623 = vector.load %arg0[%c0_152, %c3_153, %622, %c0_154] : memref<2x4x24x24xf32, #tpu.memory_space<vmem>>, vector<2x1x8x24xf32>
      %c90 = arith.constant 90 : index
      %624 = memref.load %arg1[%c90] : memref<400xf32, #tpu.memory_space<smem>>
      %625 = vector.extract_strided_slice %623 {offsets = [0, 0, 0, 0], sizes = [2, 1, 8, 20], strides = [1, 1, 1, 1]} : vector<2x1x8x24xf32> to vector<2x1x8x20xf32>
      %626 = vector.broadcast %624 : f32 to vector<2x1x8x20xf32>
      %627 = arith.mulf %625, %626 : vector<2x1x8x20xf32>
      %628 = arith.addf %620, %627 : vector<2x1x8x20xf32>
      %c91 = arith.constant 91 : index
      %629 = memref.load %arg1[%c91] : memref<400xf32, #tpu.memory_space<smem>>
      %630 = vector.extract_strided_slice %623 {offsets = [0, 0, 0, 1], sizes = [2, 1, 8, 20], strides = [1, 1, 1, 1]} : vector<2x1x8x24xf32> to vector<2x1x8x20xf32>
      %631 = vector.broadcast %629 : f32 to vector<2x1x8x20xf32>
      %632 = arith.mulf %630, %631 : vector<2x1x8x20xf32>
      %633 = arith.addf %628, %632 : vector<2x1x8x20xf32>
      %c92 = arith.constant 92 : index
      %634 = memref.load %arg1[%c92] : memref<400xf32, #tpu.memory_space<smem>>
      %635 = vector.extract_strided_slice %623 {offsets = [0, 0, 0, 2], sizes = [2, 1, 8, 20], strides = [1, 1, 1, 1]} : vector<2x1x8x24xf32> to vector<2x1x8x20xf32>
      %636 = vector.broadcast %634 : f32 to vector<2x1x8x20xf32>
      %637 = arith.mulf %635, %636 : vector<2x1x8x20xf32>
      %638 = arith.addf %633, %637 : vector<2x1x8x20xf32>
      %c93 = arith.constant 93 : index
      %639 = memref.load %arg1[%c93] : memref<400xf32, #tpu.memory_space<smem>>
      %640 = vector.extract_strided_slice %623 {offsets = [0, 0, 0, 3], sizes = [2, 1, 8, 20], strides = [1, 1, 1, 1]} : vector<2x1x8x24xf32> to vector<2x1x8x20xf32>
      %641 = vector.broadcast %639 : f32 to vector<2x1x8x20xf32>
      %642 = arith.mulf %640, %641 : vector<2x1x8x20xf32>
      %643 = arith.addf %638, %642 : vector<2x1x8x20xf32>
      %c94 = arith.constant 94 : index
      %644 = memref.load %arg1[%c94] : memref<400xf32, #tpu.memory_space<smem>>
      %645 = vector.extract_strided_slice %623 {offsets = [0, 0, 0, 4], sizes = [2, 1, 8, 20], strides = [1, 1, 1, 1]} : vector<2x1x8x24xf32> to vector<2x1x8x20xf32>
      %646 = vector.broadcast %644 : f32 to vector<2x1x8x20xf32>
      %647 = arith.mulf %645, %646 : vector<2x1x8x20xf32>
      %648 = arith.addf %643, %647 : vector<2x1x8x20xf32>
      %c4_i32_155 = arith.constant 4 : i32
      %649 = arith.addi %113, %c4_i32_155 : i32
      %c0_156 = arith.constant 0 : index
      %c3_157 = arith.constant 3 : index
      %650 = arith.index_cast %649 : i32 to index
      %c0_158 = arith.constant 0 : index
      %651 = vector.load %arg0[%c0_156, %c3_157, %650, %c0_158] : memref<2x4x24x24xf32, #tpu.memory_space<vmem>>, vector<2x1x8x24xf32>
      %c95 = arith.constant 95 : index
      %652 = memref.load %arg1[%c95] : memref<400xf32, #tpu.memory_space<smem>>
      %653 = vector.extract_strided_slice %651 {offsets = [0, 0, 0, 0], sizes = [2, 1, 8, 20], strides = [1, 1, 1, 1]} : vector<2x1x8x24xf32> to vector<2x1x8x20xf32>
      %654 = vector.broadcast %652 : f32 to vector<2x1x8x20xf32>
      %655 = arith.mulf %653, %654 : vector<2x1x8x20xf32>
      %656 = arith.addf %648, %655 : vector<2x1x8x20xf32>
      %c96 = arith.constant 96 : index
      %657 = memref.load %arg1[%c96] : memref<400xf32, #tpu.memory_space<smem>>
      %658 = vector.extract_strided_slice %651 {offsets = [0, 0, 0, 1], sizes = [2, 1, 8, 20], strides = [1, 1, 1, 1]} : vector<2x1x8x24xf32> to vector<2x1x8x20xf32>
      %659 = vector.broadcast %657 : f32 to vector<2x1x8x20xf32>
      %660 = arith.mulf %658, %659 : vector<2x1x8x20xf32>
      %661 = arith.addf %656, %660 : vector<2x1x8x20xf32>
      %c97 = arith.constant 97 : index
      %662 = memref.load %arg1[%c97] : memref<400xf32, #tpu.memory_space<smem>>
      %663 = vector.extract_strided_slice %651 {offsets = [0, 0, 0, 2], sizes = [2, 1, 8, 20], strides = [1, 1, 1, 1]} : vector<2x1x8x24xf32> to vector<2x1x8x20xf32>
      %664 = vector.broadcast %662 : f32 to vector<2x1x8x20xf32>
      %665 = arith.mulf %663, %664 : vector<2x1x8x20xf32>
      %666 = arith.addf %661, %665 : vector<2x1x8x20xf32>
      %c98 = arith.constant 98 : index
      %667 = memref.load %arg1[%c98] : memref<400xf32, #tpu.memory_space<smem>>
      %668 = vector.extract_strided_slice %651 {offsets = [0, 0, 0, 3], sizes = [2, 1, 8, 20], strides = [1, 1, 1, 1]} : vector<2x1x8x24xf32> to vector<2x1x8x20xf32>
      %669 = vector.broadcast %667 : f32 to vector<2x1x8x20xf32>
      %670 = arith.mulf %668, %669 : vector<2x1x8x20xf32>
      %671 = arith.addf %666, %670 : vector<2x1x8x20xf32>
      %c99 = arith.constant 99 : index
      %672 = memref.load %arg1[%c99] : memref<400xf32, #tpu.memory_space<smem>>
      %673 = vector.extract_strided_slice %651 {offsets = [0, 0, 0, 4], sizes = [2, 1, 8, 20], strides = [1, 1, 1, 1]} : vector<2x1x8x24xf32> to vector<2x1x8x20xf32>
      %674 = vector.broadcast %672 : f32 to vector<2x1x8x20xf32>
      %675 = arith.mulf %673, %674 : vector<2x1x8x20xf32>
      %676 = arith.addf %671, %675 : vector<2x1x8x20xf32>
      %c0_159 = arith.constant 0 : index
      %c0_160 = arith.constant 0 : index
      %677 = arith.index_cast %113 : i32 to index
      %c0_161 = arith.constant 0 : index
      %678 = vector.load %arg5[%c0_159, %c0_160, %677, %c0_161] : memref<2x4x20x20xf32, #tpu.memory_space<vmem>>, vector<2x1x8x20xf32>
      tpu.vector_store %arg5[%c0_159, %c0_160, %677, %c0_161], %676 {strides = array<i32>} : memref<2x4x20x20xf32, #tpu.memory_space<vmem>>, vector<2x1x8x20xf32>,
    }
    %c3_i32_0 = arith.constant 3 : i32
    %c0_1 = arith.constant 0 : index
    %c0_2 = arith.constant 0 : index
    %c0_3 = arith.constant 0 : index
    %c0_4 = arith.constant 0 : index
    %2 = vector.load %arg5[%c0_1, %c0_2, %c0_3, %c0_4] : memref<2x4x20x20xf32, #tpu.memory_space<vmem>>, vector<2x1x20x20xf32>
    %3 = vector.shape_cast %2 : vector<2x1x20x20xf32> to vector<1x2x1x20x20xf32>
    %cst = arith.constant dense<0.000000e+00> : vector<1xf32>
    %4 = vector.multi_reduction <add>, %3, %cst [1, 2, 3, 4] : vector<1x2x1x20x20xf32> to vector<1xf32>
    %5 = vector.shape_cast %4 : vector<1xf32> to vector<1x1x1x1x1xf32>
    %6 = vector.extract %5[0, 0, 0, 0, 0] : f32 from vector<1x1x1x1x1xf32>
    %cst_5 = arith.constant 8.000000e+02 : f32
    %7 = arith.divf %6, %cst_5 : f32
    %8 = vector.broadcast %7 : f32 to vector<2x1x20x20xf32>
    %9 = arith.subf %2, %8 : vector<2x1x20x20xf32>
    %10 = arith.mulf %9, %9 : vector<2x1x20x20xf32>
    %11 = vector.shape_cast %10 : vector<2x1x20x20xf32> to vector<1x2x1x20x20xf32>
    %cst_6 = arith.constant dense<0.000000e+00> : vector<1xf32>
    %12 = vector.multi_reduction <add>, %11, %cst_6 [1, 2, 3, 4] : vector<1x2x1x20x20xf32> to vector<1xf32>
    %13 = vector.shape_cast %12 : vector<1xf32> to vector<1x1x1x1x1xf32>
    %14 = vector.extract %13[0, 0, 0, 0, 0] : f32 from vector<1x1x1x1x1xf32>
    %cst_7 = arith.constant 8.000000e+02 : f32
    %15 = arith.divf %14, %cst_7 : f32
    %c0_8 = arith.constant 0 : index
    %16 = memref.load %arg3[%c0_8] : memref<4xf32, #tpu.memory_space<smem>>
    %cst_9 = arith.constant 9.99999974E-6 : f32
    %17 = arith.addf %15, %cst_9 : f32
    %18 = math.rsqrt %17 : f32
    %19 = arith.mulf %16, %18 : f32
    %20 = vector.broadcast %19 : f32 to vector<2x1x20x20xf32>
    %21 = arith.mulf %9, %20 : vector<2x1x20x20xf32>
    %c0_10 = arith.constant 0 : index
    %22 = memref.load %arg4[%c0_10] : memref<4xf32, #tpu.memory_space<smem>>
    %23 = vector.broadcast %22 : f32 to vector<2x1x20x20xf32>
    %24 = arith.addf %21, %23 : vector<2x1x20x20xf32>
    %cst_11 = arith.constant 0.000000e+00 : f32
    %25 = vector.broadcast %cst_11 : f32 to vector<2x1x20x20xf32>
    %26 = arith.maximumf %24, %25 : vector<2x1x20x20xf32>
    %c0_12 = arith.constant 0 : index
    %c0_13 = arith.constant 0 : index
    %c0_14 = arith.constant 0 : index
    %c0_15 = arith.constant 0 : index
    %27 = vector.load %arg5[%c0_12, %c0_13, %c0_14, %c0_15] : memref<2x4x20x20xf32, #tpu.memory_space<vmem>>, vector<2x1x20x20xf32>
    tpu.vector_store %arg5[%c0_12, %c0_13, %c0_14, %c0_15], %26 {strides = array<i32>} : memref<2x4x20x20xf32, #tpu.memory_space<vmem>>, vector<2x1x20x20xf32>,
    %c1 = arith.constant 1 : index
    %28 = memref.load %arg2[%c1] : memref<4xf32, #tpu.memory_space<smem>>
    %c0_i32_16 = arith.constant 0 : i32
    %c3_i32_17 = arith.constant 3 : i32
    %29 = arith.addi %c0_i32_16, %c3_i32_17 : i32
    %c1_i32_18 = arith.constant 1 : i32
    scf.for %arg6 = %c0_i32_16 to %29 step %c1_i32_18  : i32 {
      %c8_i32 = arith.constant 8 : i32
      %112 = arith.muli %arg6, %c8_i32 : i32
      %c12_i32 = arith.constant 12 : i32
      %113 = arith.minsi %112, %c12_i32 : i32
      %cst_76 = arith.constant 0.000000e+00 : f32
      %114 = vector.broadcast %cst_76 : f32 to vector<2x1x8x20xf32>
      %115 = vector.broadcast %28 : f32 to vector<2x1x8x20xf32>
      %116 = arith.addf %114, %115 : vector<2x1x8x20xf32>
      %c0_i32_77 = arith.constant 0 : i32
      %117 = arith.addi %113, %c0_i32_77 : i32
      %c0_78 = arith.constant 0 : index
      %c0_79 = arith.constant 0 : index
      %118 = arith.index_cast %117 : i32 to index
      %c0_80 = arith.constant 0 : index
      %119 = vector.load %arg0[%c0_78, %c0_79, %118, %c0_80] : memref<2x4x24x24xf32, #tpu.memory_space<vmem>>, vector<2x1x8x24xf32>
      %c100 = arith.constant 100 : index
      %120 = memref.load %arg1[%c100] : memref<400xf32, #tpu.memory_space<smem>>
      %121 = vector.extract_strided_slice %119 {offsets = [0, 0, 0, 0], sizes = [2, 1, 8, 20], strides = [1, 1, 1, 1]} : vector<2x1x8x24xf32> to vector<2x1x8x20xf32>
      %122 = vector.broadcast %120 : f32 to vector<2x1x8x20xf32>
      %123 = arith.mulf %121, %122 : vector<2x1x8x20xf32>
      %124 = arith.addf %116, %123 : vector<2x1x8x20xf32>
      %c101 = arith.constant 101 : index
      %125 = memref.load %arg1[%c101] : memref<400xf32, #tpu.memory_space<smem>>
      %126 = vector.extract_strided_slice %119 {offsets = [0, 0, 0, 1], sizes = [2, 1, 8, 20], strides = [1, 1, 1, 1]} : vector<2x1x8x24xf32> to vector<2x1x8x20xf32>
      %127 = vector.broadcast %125 : f32 to vector<2x1x8x20xf32>
      %128 = arith.mulf %126, %127 : vector<2x1x8x20xf32>
      %129 = arith.addf %124, %128 : vector<2x1x8x20xf32>
      %c102 = arith.constant 102 : index
      %130 = memref.load %arg1[%c102] : memref<400xf32, #tpu.memory_space<smem>>
      %131 = vector.extract_strided_slice %119 {offsets = [0, 0, 0, 2], sizes = [2, 1, 8, 20], strides = [1, 1, 1, 1]} : vector<2x1x8x24xf32> to vector<2x1x8x20xf32>
      %132 = vector.broadcast %130 : f32 to vector<2x1x8x20xf32>
      %133 = arith.mulf %131, %132 : vector<2x1x8x20xf32>
      %134 = arith.addf %129, %133 : vector<2x1x8x20xf32>
      %c103 = arith.constant 103 : index
      %135 = memref.load %arg1[%c103] : memref<400xf32, #tpu.memory_space<smem>>
      %136 = vector.extract_strided_slice %119 {offsets = [0, 0, 0, 3], sizes = [2, 1, 8, 20], strides = [1, 1, 1, 1]} : vector<2x1x8x24xf32> to vector<2x1x8x20xf32>
      %137 = vector.broadcast %135 : f32 to vector<2x1x8x20xf32>
      %138 = arith.mulf %136, %137 : vector<2x1x8x20xf32>
      %139 = arith.addf %134, %138 : vector<2x1x8x20xf32>
      %c104 = arith.constant 104 : index
      %140 = memref.load %arg1[%c104] : memref<400xf32, #tpu.memory_space<smem>>
      %141 = vector.extract_strided_slice %119 {offsets = [0, 0, 0, 4], sizes = [2, 1, 8, 20], strides = [1, 1, 1, 1]} : vector<2x1x8x24xf32> to vector<2x1x8x20xf32>
      %142 = vector.broadcast %140 : f32 to vector<2x1x8x20xf32>
      %143 = arith.mulf %141, %142 : vector<2x1x8x20xf32>
      %144 = arith.addf %139, %143 : vector<2x1x8x20xf32>
      %c1_i32_81 = arith.constant 1 : i32
      %145 = arith.addi %113, %c1_i32_81 : i32
      %c0_82 = arith.constant 0 : index
      %c0_83 = arith.constant 0 : index
      %146 = arith.index_cast %145 : i32 to index
      %c0_84 = arith.constant 0 : index
      %147 = vector.load %arg0[%c0_82, %c0_83, %146, %c0_84] : memref<2x4x24x24xf32, #tpu.memory_space<vmem>>, vector<2x1x8x24xf32>
      %c105 = arith.constant 105 : index
      %148 = memref.load %arg1[%c105] : memref<400xf32, #tpu.memory_space<smem>>
      %149 = vector.extract_strided_slice %147 {offsets = [0, 0, 0, 0], sizes = [2, 1, 8, 20], strides = [1, 1, 1, 1]} : vector<2x1x8x24xf32> to vector<2x1x8x20xf32>
      %150 = vector.broadcast %148 : f32 to vector<2x1x8x20xf32>
      %151 = arith.mulf %149, %150 : vector<2x1x8x20xf32>
      %152 = arith.addf %144, %151 : vector<2x1x8x20xf32>
      %c106 = arith.constant 106 : index
      %153 = memref.load %arg1[%c106] : memref<400xf32, #tpu.memory_space<smem>>
      %154 = vector.extract_strided_slice %147 {offsets = [0, 0, 0, 1], sizes = [2, 1, 8, 20], strides = [1, 1, 1, 1]} : vector<2x1x8x24xf32> to vector<2x1x8x20xf32>
      %155 = vector.broadcast %153 : f32 to vector<2x1x8x20xf32>
      %156 = arith.mulf %154, %155 : vector<2x1x8x20xf32>
      %157 = arith.addf %152, %156 : vector<2x1x8x20xf32>
      %c107 = arith.constant 107 : index
      %158 = memref.load %arg1[%c107] : memref<400xf32, #tpu.memory_space<smem>>
      %159 = vector.extract_strided_slice %147 {offsets = [0, 0, 0, 2], sizes = [2, 1, 8, 20], strides = [1, 1, 1, 1]} : vector<2x1x8x24xf32> to vector<2x1x8x20xf32>
      %160 = vector.broadcast %158 : f32 to vector<2x1x8x20xf32>
      %161 = arith.mulf %159, %160 : vector<2x1x8x20xf32>
      %162 = arith.addf %157, %161 : vector<2x1x8x20xf32>
      %c108 = arith.constant 108 : index
      %163 = memref.load %arg1[%c108] : memref<400xf32, #tpu.memory_space<smem>>
      %164 = vector.extract_strided_slice %147 {offsets = [0, 0, 0, 3], sizes = [2, 1, 8, 20], strides = [1, 1, 1, 1]} : vector<2x1x8x24xf32> to vector<2x1x8x20xf32>
      %165 = vector.broadcast %163 : f32 to vector<2x1x8x20xf32>
      %166 = arith.mulf %164, %165 : vector<2x1x8x20xf32>
      %167 = arith.addf %162, %166 : vector<2x1x8x20xf32>
      %c109 = arith.constant 109 : index
      %168 = memref.load %arg1[%c109] : memref<400xf32, #tpu.memory_space<smem>>
      %169 = vector.extract_strided_slice %147 {offsets = [0, 0, 0, 4], sizes = [2, 1, 8, 20], strides = [1, 1, 1, 1]} : vector<2x1x8x24xf32> to vector<2x1x8x20xf32>
      %170 = vector.broadcast %168 : f32 to vector<2x1x8x20xf32>
      %171 = arith.mulf %169, %170 : vector<2x1x8x20xf32>
      %172 = arith.addf %167, %171 : vector<2x1x8x20xf32>
      %c2_i32 = arith.constant 2 : i32
      %173 = arith.addi %113, %c2_i32 : i32
      %c0_85 = arith.constant 0 : index
      %c0_86 = arith.constant 0 : index
      %174 = arith.index_cast %173 : i32 to index
      %c0_87 = arith.constant 0 : index
      %175 = vector.load %arg0[%c0_85, %c0_86, %174, %c0_87] : memref<2x4x24x24xf32, #tpu.memory_space<vmem>>, vector<2x1x8x24xf32>
      %c110 = arith.constant 110 : index
      %176 = memref.load %arg1[%c110] : memref<400xf32, #tpu.memory_space<smem>>
      %177 = vector.extract_strided_slice %175 {offsets = [0, 0, 0, 0], sizes = [2, 1, 8, 20], strides = [1, 1, 1, 1]} : vector<2x1x8x24xf32> to vector<2x1x8x20xf32>
      %178 = vector.broadcast %176 : f32 to vector<2x1x8x20xf32>
      %179 = arith.mulf %177, %178 : vector<2x1x8x20xf32>
      %180 = arith.addf %172, %179 : vector<2x1x8x20xf32>
      %c111 = arith.constant 111 : index
      %181 = memref.load %arg1[%c111] : memref<400xf32, #tpu.memory_space<smem>>
      %182 = vector.extract_strided_slice %175 {offsets = [0, 0, 0, 1], sizes = [2, 1, 8, 20], strides = [1, 1, 1, 1]} : vector<2x1x8x24xf32> to vector<2x1x8x20xf32>
      %183 = vector.broadcast %181 : f32 to vector<2x1x8x20xf32>
      %184 = arith.mulf %182, %183 : vector<2x1x8x20xf32>
      %185 = arith.addf %180, %184 : vector<2x1x8x20xf32>
      %c112 = arith.constant 112 : index
      %186 = memref.load %arg1[%c112] : memref<400xf32, #tpu.memory_space<smem>>
      %187 = vector.extract_strided_slice %175 {offsets = [0, 0, 0, 2], sizes = [2, 1, 8, 20], strides = [1, 1, 1, 1]} : vector<2x1x8x24xf32> to vector<2x1x8x20xf32>
      %188 = vector.broadcast %186 : f32 to vector<2x1x8x20xf32>
      %189 = arith.mulf %187, %188 : vector<2x1x8x20xf32>
      %190 = arith.addf %185, %189 : vector<2x1x8x20xf32>
      %c113 = arith.constant 113 : index
      %191 = memref.load %arg1[%c113] : memref<400xf32, #tpu.memory_space<smem>>
      %192 = vector.extract_strided_slice %175 {offsets = [0, 0, 0, 3], sizes = [2, 1, 8, 20], strides = [1, 1, 1, 1]} : vector<2x1x8x24xf32> to vector<2x1x8x20xf32>
      %193 = vector.broadcast %191 : f32 to vector<2x1x8x20xf32>
      %194 = arith.mulf %192, %193 : vector<2x1x8x20xf32>
      %195 = arith.addf %190, %194 : vector<2x1x8x20xf32>
      %c114 = arith.constant 114 : index
      %196 = memref.load %arg1[%c114] : memref<400xf32, #tpu.memory_space<smem>>
      %197 = vector.extract_strided_slice %175 {offsets = [0, 0, 0, 4], sizes = [2, 1, 8, 20], strides = [1, 1, 1, 1]} : vector<2x1x8x24xf32> to vector<2x1x8x20xf32>
      %198 = vector.broadcast %196 : f32 to vector<2x1x8x20xf32>
      %199 = arith.mulf %197, %198 : vector<2x1x8x20xf32>
      %200 = arith.addf %195, %199 : vector<2x1x8x20xf32>
      %c3_i32_88 = arith.constant 3 : i32
      %201 = arith.addi %113, %c3_i32_88 : i32
      %c0_89 = arith.constant 0 : index
      %c0_90 = arith.constant 0 : index
      %202 = arith.index_cast %201 : i32 to index
      %c0_91 = arith.constant 0 : index
      %203 = vector.load %arg0[%c0_89, %c0_90, %202, %c0_91] : memref<2x4x24x24xf32, #tpu.memory_space<vmem>>, vector<2x1x8x24xf32>
      %c115 = arith.constant 115 : index
      %204 = memref.load %arg1[%c115] : memref<400xf32, #tpu.memory_space<smem>>
      %205 = vector.extract_strided_slice %203 {offsets = [0, 0, 0, 0], sizes = [2, 1, 8, 20], strides = [1, 1, 1, 1]} : vector<2x1x8x24xf32> to vector<2x1x8x20xf32>
      %206 = vector.broadcast %204 : f32 to vector<2x1x8x20xf32>
      %207 = arith.mulf %205, %206 : vector<2x1x8x20xf32>
      %208 = arith.addf %200, %207 : vector<2x1x8x20xf32>
      %c116 = arith.constant 116 : index
      %209 = memref.load %arg1[%c116] : memref<400xf32, #tpu.memory_space<smem>>
      %210 = vector.extract_strided_slice %203 {offsets = [0, 0, 0, 1], sizes = [2, 1, 8, 20], strides = [1, 1, 1, 1]} : vector<2x1x8x24xf32> to vector<2x1x8x20xf32>
      %211 = vector.broadcast %209 : f32 to vector<2x1x8x20xf32>
      %212 = arith.mulf %210, %211 : vector<2x1x8x20xf32>
      %213 = arith.addf %208, %212 : vector<2x1x8x20xf32>
      %c117 = arith.constant 117 : index
      %214 = memref.load %arg1[%c117] : memref<400xf32, #tpu.memory_space<smem>>
      %215 = vector.extract_strided_slice %203 {offsets = [0, 0, 0, 2], sizes = [2, 1, 8, 20], strides = [1, 1, 1, 1]} : vector<2x1x8x24xf32> to vector<2x1x8x20xf32>
      %216 = vector.broadcast %214 : f32 to vector<2x1x8x20xf32>
      %217 = arith.mulf %215, %216 : vector<2x1x8x20xf32>
      %218 = arith.addf %213, %217 : vector<2x1x8x20xf32>
      %c118 = arith.constant 118 : index
      %219 = memref.load %arg1[%c118] : memref<400xf32, #tpu.memory_space<smem>>
      %220 = vector.extract_strided_slice %203 {offsets = [0, 0, 0, 3], sizes = [2, 1, 8, 20], strides = [1, 1, 1, 1]} : vector<2x1x8x24xf32> to vector<2x1x8x20xf32>
      %221 = vector.broadcast %219 : f32 to vector<2x1x8x20xf32>
      %222 = arith.mulf %220, %221 : vector<2x1x8x20xf32>
      %223 = arith.addf %218, %222 : vector<2x1x8x20xf32>
      %c119 = arith.constant 119 : index
      %224 = memref.load %arg1[%c119] : memref<400xf32, #tpu.memory_space<smem>>
      %225 = vector.extract_strided_slice %203 {offsets = [0, 0, 0, 4], sizes = [2, 1, 8, 20], strides = [1, 1, 1, 1]} : vector<2x1x8x24xf32> to vector<2x1x8x20xf32>
      %226 = vector.broadcast %224 : f32 to vector<2x1x8x20xf32>
      %227 = arith.mulf %225, %226 : vector<2x1x8x20xf32>
      %228 = arith.addf %223, %227 : vector<2x1x8x20xf32>
      %c4_i32 = arith.constant 4 : i32
      %229 = arith.addi %113, %c4_i32 : i32
      %c0_92 = arith.constant 0 : index
      %c0_93 = arith.constant 0 : index
      %230 = arith.index_cast %229 : i32 to index
      %c0_94 = arith.constant 0 : index
      %231 = vector.load %arg0[%c0_92, %c0_93, %230, %c0_94] : memref<2x4x24x24xf32, #tpu.memory_space<vmem>>, vector<2x1x8x24xf32>
      %c120 = arith.constant 120 : index
      %232 = memref.load %arg1[%c120] : memref<400xf32, #tpu.memory_space<smem>>
      %233 = vector.extract_strided_slice %231 {offsets = [0, 0, 0, 0], sizes = [2, 1, 8, 20], strides = [1, 1, 1, 1]} : vector<2x1x8x24xf32> to vector<2x1x8x20xf32>
      %234 = vector.broadcast %232 : f32 to vector<2x1x8x20xf32>
      %235 = arith.mulf %233, %234 : vector<2x1x8x20xf32>
      %236 = arith.addf %228, %235 : vector<2x1x8x20xf32>
      %c121 = arith.constant 121 : index
      %237 = memref.load %arg1[%c121] : memref<400xf32, #tpu.memory_space<smem>>
      %238 = vector.extract_strided_slice %231 {offsets = [0, 0, 0, 1], sizes = [2, 1, 8, 20], strides = [1, 1, 1, 1]} : vector<2x1x8x24xf32> to vector<2x1x8x20xf32>
      %239 = vector.broadcast %237 : f32 to vector<2x1x8x20xf32>
      %240 = arith.mulf %238, %239 : vector<2x1x8x20xf32>
      %241 = arith.addf %236, %240 : vector<2x1x8x20xf32>
      %c122 = arith.constant 122 : index
      %242 = memref.load %arg1[%c122] : memref<400xf32, #tpu.memory_space<smem>>
      %243 = vector.extract_strided_slice %231 {offsets = [0, 0, 0, 2], sizes = [2, 1, 8, 20], strides = [1, 1, 1, 1]} : vector<2x1x8x24xf32> to vector<2x1x8x20xf32>
      %244 = vector.broadcast %242 : f32 to vector<2x1x8x20xf32>
      %245 = arith.mulf %243, %244 : vector<2x1x8x20xf32>
      %246 = arith.addf %241, %245 : vector<2x1x8x20xf32>
      %c123 = arith.constant 123 : index
      %247 = memref.load %arg1[%c123] : memref<400xf32, #tpu.memory_space<smem>>
      %248 = vector.extract_strided_slice %231 {offsets = [0, 0, 0, 3], sizes = [2, 1, 8, 20], strides = [1, 1, 1, 1]} : vector<2x1x8x24xf32> to vector<2x1x8x20xf32>
      %249 = vector.broadcast %247 : f32 to vector<2x1x8x20xf32>
      %250 = arith.mulf %248, %249 : vector<2x1x8x20xf32>
      %251 = arith.addf %246, %250 : vector<2x1x8x20xf32>
      %c124 = arith.constant 124 : index
      %252 = memref.load %arg1[%c124] : memref<400xf32, #tpu.memory_space<smem>>
      %253 = vector.extract_strided_slice %231 {offsets = [0, 0, 0, 4], sizes = [2, 1, 8, 20], strides = [1, 1, 1, 1]} : vector<2x1x8x24xf32> to vector<2x1x8x20xf32>
      %254 = vector.broadcast %252 : f32 to vector<2x1x8x20xf32>
      %255 = arith.mulf %253, %254 : vector<2x1x8x20xf32>
      %256 = arith.addf %251, %255 : vector<2x1x8x20xf32>
      %c0_i32_95 = arith.constant 0 : i32
      %257 = arith.addi %113, %c0_i32_95 : i32
      %c0_96 = arith.constant 0 : index
      %c1_97 = arith.constant 1 : index
      %258 = arith.index_cast %257 : i32 to index
      %c0_98 = arith.constant 0 : index
      %259 = vector.load %arg0[%c0_96, %c1_97, %258, %c0_98] : memref<2x4x24x24xf32, #tpu.memory_space<vmem>>, vector<2x1x8x24xf32>
      %c125 = arith.constant 125 : index
      %260 = memref.load %arg1[%c125] : memref<400xf32, #tpu.memory_space<smem>>
      %261 = vector.extract_strided_slice %259 {offsets = [0, 0, 0, 0], sizes = [2, 1, 8, 20], strides = [1, 1, 1, 1]} : vector<2x1x8x24xf32> to vector<2x1x8x20xf32>
      %262 = vector.broadcast %260 : f32 to vector<2x1x8x20xf32>
      %263 = arith.mulf %261, %262 : vector<2x1x8x20xf32>
      %264 = arith.addf %256, %263 : vector<2x1x8x20xf32>
      %c126 = arith.constant 126 : index
      %265 = memref.load %arg1[%c126] : memref<400xf32, #tpu.memory_space<smem>>
      %266 = vector.extract_strided_slice %259 {offsets = [0, 0, 0, 1], sizes = [2, 1, 8, 20], strides = [1, 1, 1, 1]} : vector<2x1x8x24xf32> to vector<2x1x8x20xf32>
      %267 = vector.broadcast %265 : f32 to vector<2x1x8x20xf32>
      %268 = arith.mulf %266, %267 : vector<2x1x8x20xf32>
      %269 = arith.addf %264, %268 : vector<2x1x8x20xf32>
      %c127 = arith.constant 127 : index
      %270 = memref.load %arg1[%c127] : memref<400xf32, #tpu.memory_space<smem>>
      %271 = vector.extract_strided_slice %259 {offsets = [0, 0, 0, 2], sizes = [2, 1, 8, 20], strides = [1, 1, 1, 1]} : vector<2x1x8x24xf32> to vector<2x1x8x20xf32>
      %272 = vector.broadcast %270 : f32 to vector<2x1x8x20xf32>
      %273 = arith.mulf %271, %272 : vector<2x1x8x20xf32>
      %274 = arith.addf %269, %273 : vector<2x1x8x20xf32>
      %c128 = arith.constant 128 : index
      %275 = memref.load %arg1[%c128] : memref<400xf32, #tpu.memory_space<smem>>
      %276 = vector.extract_strided_slice %259 {offsets = [0, 0, 0, 3], sizes = [2, 1, 8, 20], strides = [1, 1, 1, 1]} : vector<2x1x8x24xf32> to vector<2x1x8x20xf32>
      %277 = vector.broadcast %275 : f32 to vector<2x1x8x20xf32>
      %278 = arith.mulf %276, %277 : vector<2x1x8x20xf32>
      %279 = arith.addf %274, %278 : vector<2x1x8x20xf32>
      %c129 = arith.constant 129 : index
      %280 = memref.load %arg1[%c129] : memref<400xf32, #tpu.memory_space<smem>>
      %281 = vector.extract_strided_slice %259 {offsets = [0, 0, 0, 4], sizes = [2, 1, 8, 20], strides = [1, 1, 1, 1]} : vector<2x1x8x24xf32> to vector<2x1x8x20xf32>
      %282 = vector.broadcast %280 : f32 to vector<2x1x8x20xf32>
      %283 = arith.mulf %281, %282 : vector<2x1x8x20xf32>
      %284 = arith.addf %279, %283 : vector<2x1x8x20xf32>
      %c1_i32_99 = arith.constant 1 : i32
      %285 = arith.addi %113, %c1_i32_99 : i32
      %c0_100 = arith.constant 0 : index
      %c1_101 = arith.constant 1 : index
      %286 = arith.index_cast %285 : i32 to index
      %c0_102 = arith.constant 0 : index
      %287 = vector.load %arg0[%c0_100, %c1_101, %286, %c0_102] : memref<2x4x24x24xf32, #tpu.memory_space<vmem>>, vector<2x1x8x24xf32>
      %c130 = arith.constant 130 : index
      %288 = memref.load %arg1[%c130] : memref<400xf32, #tpu.memory_space<smem>>
      %289 = vector.extract_strided_slice %287 {offsets = [0, 0, 0, 0], sizes = [2, 1, 8, 20], strides = [1, 1, 1, 1]} : vector<2x1x8x24xf32> to vector<2x1x8x20xf32>
      %290 = vector.broadcast %288 : f32 to vector<2x1x8x20xf32>
      %291 = arith.mulf %289, %290 : vector<2x1x8x20xf32>
      %292 = arith.addf %284, %291 : vector<2x1x8x20xf32>
      %c131 = arith.constant 131 : index
      %293 = memref.load %arg1[%c131] : memref<400xf32, #tpu.memory_space<smem>>
      %294 = vector.extract_strided_slice %287 {offsets = [0, 0, 0, 1], sizes = [2, 1, 8, 20], strides = [1, 1, 1, 1]} : vector<2x1x8x24xf32> to vector<2x1x8x20xf32>
      %295 = vector.broadcast %293 : f32 to vector<2x1x8x20xf32>
      %296 = arith.mulf %294, %295 : vector<2x1x8x20xf32>
      %297 = arith.addf %292, %296 : vector<2x1x8x20xf32>
      %c132 = arith.constant 132 : index
      %298 = memref.load %arg1[%c132] : memref<400xf32, #tpu.memory_space<smem>>
      %299 = vector.extract_strided_slice %287 {offsets = [0, 0, 0, 2], sizes = [2, 1, 8, 20], strides = [1, 1, 1, 1]} : vector<2x1x8x24xf32> to vector<2x1x8x20xf32>
      %300 = vector.broadcast %298 : f32 to vector<2x1x8x20xf32>
      %301 = arith.mulf %299, %300 : vector<2x1x8x20xf32>
      %302 = arith.addf %297, %301 : vector<2x1x8x20xf32>
      %c133 = arith.constant 133 : index
      %303 = memref.load %arg1[%c133] : memref<400xf32, #tpu.memory_space<smem>>
      %304 = vector.extract_strided_slice %287 {offsets = [0, 0, 0, 3], sizes = [2, 1, 8, 20], strides = [1, 1, 1, 1]} : vector<2x1x8x24xf32> to vector<2x1x8x20xf32>
      %305 = vector.broadcast %303 : f32 to vector<2x1x8x20xf32>
      %306 = arith.mulf %304, %305 : vector<2x1x8x20xf32>
      %307 = arith.addf %302, %306 : vector<2x1x8x20xf32>
      %c134 = arith.constant 134 : index
      %308 = memref.load %arg1[%c134] : memref<400xf32, #tpu.memory_space<smem>>
      %309 = vector.extract_strided_slice %287 {offsets = [0, 0, 0, 4], sizes = [2, 1, 8, 20], strides = [1, 1, 1, 1]} : vector<2x1x8x24xf32> to vector<2x1x8x20xf32>
      %310 = vector.broadcast %308 : f32 to vector<2x1x8x20xf32>
      %311 = arith.mulf %309, %310 : vector<2x1x8x20xf32>
      %312 = arith.addf %307, %311 : vector<2x1x8x20xf32>
      %c2_i32_103 = arith.constant 2 : i32
      %313 = arith.addi %113, %c2_i32_103 : i32
      %c0_104 = arith.constant 0 : index
      %c1_105 = arith.constant 1 : index
      %314 = arith.index_cast %313 : i32 to index
      %c0_106 = arith.constant 0 : index
      %315 = vector.load %arg0[%c0_104, %c1_105, %314, %c0_106] : memref<2x4x24x24xf32, #tpu.memory_space<vmem>>, vector<2x1x8x24xf32>
      %c135 = arith.constant 135 : index
      %316 = memref.load %arg1[%c135] : memref<400xf32, #tpu.memory_space<smem>>
      %317 = vector.extract_strided_slice %315 {offsets = [0, 0, 0, 0], sizes = [2, 1, 8, 20], strides = [1, 1, 1, 1]} : vector<2x1x8x24xf32> to vector<2x1x8x20xf32>
      %318 = vector.broadcast %316 : f32 to vector<2x1x8x20xf32>
      %319 = arith.mulf %317, %318 : vector<2x1x8x20xf32>
      %320 = arith.addf %312, %319 : vector<2x1x8x20xf32>
      %c136 = arith.constant 136 : index
      %321 = memref.load %arg1[%c136] : memref<400xf32, #tpu.memory_space<smem>>
      %322 = vector.extract_strided_slice %315 {offsets = [0, 0, 0, 1], sizes = [2, 1, 8, 20], strides = [1, 1, 1, 1]} : vector<2x1x8x24xf32> to vector<2x1x8x20xf32>
      %323 = vector.broadcast %321 : f32 to vector<2x1x8x20xf32>
      %324 = arith.mulf %322, %323 : vector<2x1x8x20xf32>
      %325 = arith.addf %320, %324 : vector<2x1x8x20xf32>
      %c137 = arith.constant 137 : index
      %326 = memref.load %arg1[%c137] : memref<400xf32, #tpu.memory_space<smem>>
      %327 = vector.extract_strided_slice %315 {offsets = [0, 0, 0, 2], sizes = [2, 1, 8, 20], strides = [1, 1, 1, 1]} : vector<2x1x8x24xf32> to vector<2x1x8x20xf32>
      %328 = vector.broadcast %326 : f32 to vector<2x1x8x20xf32>
      %329 = arith.mulf %327, %328 : vector<2x1x8x20xf32>
      %330 = arith.addf %325, %329 : vector<2x1x8x20xf32>
      %c138 = arith.constant 138 : index
      %331 = memref.load %arg1[%c138] : memref<400xf32, #tpu.memory_space<smem>>
      %332 = vector.extract_strided_slice %315 {offsets = [0, 0, 0, 3], sizes = [2, 1, 8, 20], strides = [1, 1, 1, 1]} : vector<2x1x8x24xf32> to vector<2x1x8x20xf32>
      %333 = vector.broadcast %331 : f32 to vector<2x1x8x20xf32>
      %334 = arith.mulf %332, %333 : vector<2x1x8x20xf32>
      %335 = arith.addf %330, %334 : vector<2x1x8x20xf32>
      %c139 = arith.constant 139 : index
      %336 = memref.load %arg1[%c139] : memref<400xf32, #tpu.memory_space<smem>>
      %337 = vector.extract_strided_slice %315 {offsets = [0, 0, 0, 4], sizes = [2, 1, 8, 20], strides = [1, 1, 1, 1]} : vector<2x1x8x24xf32> to vector<2x1x8x20xf32>
      %338 = vector.broadcast %336 : f32 to vector<2x1x8x20xf32>
      %339 = arith.mulf %337, %338 : vector<2x1x8x20xf32>
      %340 = arith.addf %335, %339 : vector<2x1x8x20xf32>
      %c3_i32_107 = arith.constant 3 : i32
      %341 = arith.addi %113, %c3_i32_107 : i32
      %c0_108 = arith.constant 0 : index
      %c1_109 = arith.constant 1 : index
      %342 = arith.index_cast %341 : i32 to index
      %c0_110 = arith.constant 0 : index
      %343 = vector.load %arg0[%c0_108, %c1_109, %342, %c0_110] : memref<2x4x24x24xf32, #tpu.memory_space<vmem>>, vector<2x1x8x24xf32>
      %c140 = arith.constant 140 : index
      %344 = memref.load %arg1[%c140] : memref<400xf32, #tpu.memory_space<smem>>
      %345 = vector.extract_strided_slice %343 {offsets = [0, 0, 0, 0], sizes = [2, 1, 8, 20], strides = [1, 1, 1, 1]} : vector<2x1x8x24xf32> to vector<2x1x8x20xf32>
      %346 = vector.broadcast %344 : f32 to vector<2x1x8x20xf32>
      %347 = arith.mulf %345, %346 : vector<2x1x8x20xf32>
      %348 = arith.addf %340, %347 : vector<2x1x8x20xf32>
      %c141 = arith.constant 141 : index
      %349 = memref.load %arg1[%c141] : memref<400xf32, #tpu.memory_space<smem>>
      %350 = vector.extract_strided_slice %343 {offsets = [0, 0, 0, 1], sizes = [2, 1, 8, 20], strides = [1, 1, 1, 1]} : vector<2x1x8x24xf32> to vector<2x1x8x20xf32>
      %351 = vector.broadcast %349 : f32 to vector<2x1x8x20xf32>
      %352 = arith.mulf %350, %351 : vector<2x1x8x20xf32>
      %353 = arith.addf %348, %352 : vector<2x1x8x20xf32>
      %c142 = arith.constant 142 : index
      %354 = memref.load %arg1[%c142] : memref<400xf32, #tpu.memory_space<smem>>
      %355 = vector.extract_strided_slice %343 {offsets = [0, 0, 0, 2], sizes = [2, 1, 8, 20], strides = [1, 1, 1, 1]} : vector<2x1x8x24xf32> to vector<2x1x8x20xf32>
      %356 = vector.broadcast %354 : f32 to vector<2x1x8x20xf32>
      %357 = arith.mulf %355, %356 : vector<2x1x8x20xf32>
      %358 = arith.addf %353, %357 : vector<2x1x8x20xf32>
      %c143 = arith.constant 143 : index
      %359 = memref.load %arg1[%c143] : memref<400xf32, #tpu.memory_space<smem>>
      %360 = vector.extract_strided_slice %343 {offsets = [0, 0, 0, 3], sizes = [2, 1, 8, 20], strides = [1, 1, 1, 1]} : vector<2x1x8x24xf32> to vector<2x1x8x20xf32>
      %361 = vector.broadcast %359 : f32 to vector<2x1x8x20xf32>
      %362 = arith.mulf %360, %361 : vector<2x1x8x20xf32>
      %363 = arith.addf %358, %362 : vector<2x1x8x20xf32>
      %c144 = arith.constant 144 : index
      %364 = memref.load %arg1[%c144] : memref<400xf32, #tpu.memory_space<smem>>
      %365 = vector.extract_strided_slice %343 {offsets = [0, 0, 0, 4], sizes = [2, 1, 8, 20], strides = [1, 1, 1, 1]} : vector<2x1x8x24xf32> to vector<2x1x8x20xf32>
      %366 = vector.broadcast %364 : f32 to vector<2x1x8x20xf32>
      %367 = arith.mulf %365, %366 : vector<2x1x8x20xf32>
      %368 = arith.addf %363, %367 : vector<2x1x8x20xf32>
      %c4_i32_111 = arith.constant 4 : i32
      %369 = arith.addi %113, %c4_i32_111 : i32
      %c0_112 = arith.constant 0 : index
      %c1_113 = arith.constant 1 : index
      %370 = arith.index_cast %369 : i32 to index
      %c0_114 = arith.constant 0 : index
      %371 = vector.load %arg0[%c0_112, %c1_113, %370, %c0_114] : memref<2x4x24x24xf32, #tpu.memory_space<vmem>>, vector<2x1x8x24xf32>
      %c145 = arith.constant 145 : index
      %372 = memref.load %arg1[%c145] : memref<400xf32, #tpu.memory_space<smem>>
      %373 = vector.extract_strided_slice %371 {offsets = [0, 0, 0, 0], sizes = [2, 1, 8, 20], strides = [1, 1, 1, 1]} : vector<2x1x8x24xf32> to vector<2x1x8x20xf32>
      %374 = vector.broadcast %372 : f32 to vector<2x1x8x20xf32>
      %375 = arith.mulf %373, %374 : vector<2x1x8x20xf32>
      %376 = arith.addf %368, %375 : vector<2x1x8x20xf32>
      %c146 = arith.constant 146 : index
      %377 = memref.load %arg1[%c146] : memref<400xf32, #tpu.memory_space<smem>>
      %378 = vector.extract_strided_slice %371 {offsets = [0, 0, 0, 1], sizes = [2, 1, 8, 20], strides = [1, 1, 1, 1]} : vector<2x1x8x24xf32> to vector<2x1x8x20xf32>
      %379 = vector.broadcast %377 : f32 to vector<2x1x8x20xf32>
      %380 = arith.mulf %378, %379 : vector<2x1x8x20xf32>
      %381 = arith.addf %376, %380 : vector<2x1x8x20xf32>
      %c147 = arith.constant 147 : index
      %382 = memref.load %arg1[%c147] : memref<400xf32, #tpu.memory_space<smem>>
      %383 = vector.extract_strided_slice %371 {offsets = [0, 0, 0, 2], sizes = [2, 1, 8, 20], strides = [1, 1, 1, 1]} : vector<2x1x8x24xf32> to vector<2x1x8x20xf32>
      %384 = vector.broadcast %382 : f32 to vector<2x1x8x20xf32>
      %385 = arith.mulf %383, %384 : vector<2x1x8x20xf32>
      %386 = arith.addf %381, %385 : vector<2x1x8x20xf32>
      %c148 = arith.constant 148 : index
      %387 = memref.load %arg1[%c148] : memref<400xf32, #tpu.memory_space<smem>>
      %388 = vector.extract_strided_slice %371 {offsets = [0, 0, 0, 3], sizes = [2, 1, 8, 20], strides = [1, 1, 1, 1]} : vector<2x1x8x24xf32> to vector<2x1x8x20xf32>
      %389 = vector.broadcast %387 : f32 to vector<2x1x8x20xf32>
      %390 = arith.mulf %388, %389 : vector<2x1x8x20xf32>
      %391 = arith.addf %386, %390 : vector<2x1x8x20xf32>
      %c149 = arith.constant 149 : index
      %392 = memref.load %arg1[%c149] : memref<400xf32, #tpu.memory_space<smem>>
      %393 = vector.extract_strided_slice %371 {offsets = [0, 0, 0, 4], sizes = [2, 1, 8, 20], strides = [1, 1, 1, 1]} : vector<2x1x8x24xf32> to vector<2x1x8x20xf32>
      %394 = vector.broadcast %392 : f32 to vector<2x1x8x20xf32>
      %395 = arith.mulf %393, %394 : vector<2x1x8x20xf32>
      %396 = arith.addf %391, %395 : vector<2x1x8x20xf32>
      %c0_i32_115 = arith.constant 0 : i32
      %397 = arith.addi %113, %c0_i32_115 : i32
      %c0_116 = arith.constant 0 : index
      %c2_117 = arith.constant 2 : index
      %398 = arith.index_cast %397 : i32 to index
      %c0_118 = arith.constant 0 : index
      %399 = vector.load %arg0[%c0_116, %c2_117, %398, %c0_118] : memref<2x4x24x24xf32, #tpu.memory_space<vmem>>, vector<2x1x8x24xf32>
      %c150 = arith.constant 150 : index
      %400 = memref.load %arg1[%c150] : memref<400xf32, #tpu.memory_space<smem>>
      %401 = vector.extract_strided_slice %399 {offsets = [0, 0, 0, 0], sizes = [2, 1, 8, 20], strides = [1, 1, 1, 1]} : vector<2x1x8x24xf32> to vector<2x1x8x20xf32>
      %402 = vector.broadcast %400 : f32 to vector<2x1x8x20xf32>
      %403 = arith.mulf %401, %402 : vector<2x1x8x20xf32>
      %404 = arith.addf %396, %403 : vector<2x1x8x20xf32>
      %c151 = arith.constant 151 : index
      %405 = memref.load %arg1[%c151] : memref<400xf32, #tpu.memory_space<smem>>
      %406 = vector.extract_strided_slice %399 {offsets = [0, 0, 0, 1], sizes = [2, 1, 8, 20], strides = [1, 1, 1, 1]} : vector<2x1x8x24xf32> to vector<2x1x8x20xf32>
      %407 = vector.broadcast %405 : f32 to vector<2x1x8x20xf32>
      %408 = arith.mulf %406, %407 : vector<2x1x8x20xf32>
      %409 = arith.addf %404, %408 : vector<2x1x8x20xf32>
      %c152 = arith.constant 152 : index
      %410 = memref.load %arg1[%c152] : memref<400xf32, #tpu.memory_space<smem>>
      %411 = vector.extract_strided_slice %399 {offsets = [0, 0, 0, 2], sizes = [2, 1, 8, 20], strides = [1, 1, 1, 1]} : vector<2x1x8x24xf32> to vector<2x1x8x20xf32>
      %412 = vector.broadcast %410 : f32 to vector<2x1x8x20xf32>
      %413 = arith.mulf %411, %412 : vector<2x1x8x20xf32>
      %414 = arith.addf %409, %413 : vector<2x1x8x20xf32>
      %c153 = arith.constant 153 : index
      %415 = memref.load %arg1[%c153] : memref<400xf32, #tpu.memory_space<smem>>
      %416 = vector.extract_strided_slice %399 {offsets = [0, 0, 0, 3], sizes = [2, 1, 8, 20], strides = [1, 1, 1, 1]} : vector<2x1x8x24xf32> to vector<2x1x8x20xf32>
      %417 = vector.broadcast %415 : f32 to vector<2x1x8x20xf32>
      %418 = arith.mulf %416, %417 : vector<2x1x8x20xf32>
      %419 = arith.addf %414, %418 : vector<2x1x8x20xf32>
      %c154 = arith.constant 154 : index
      %420 = memref.load %arg1[%c154] : memref<400xf32, #tpu.memory_space<smem>>
      %421 = vector.extract_strided_slice %399 {offsets = [0, 0, 0, 4], sizes = [2, 1, 8, 20], strides = [1, 1, 1, 1]} : vector<2x1x8x24xf32> to vector<2x1x8x20xf32>
      %422 = vector.broadcast %420 : f32 to vector<2x1x8x20xf32>
      %423 = arith.mulf %421, %422 : vector<2x1x8x20xf32>
      %424 = arith.addf %419, %423 : vector<2x1x8x20xf32>
      %c1_i32_119 = arith.constant 1 : i32
      %425 = arith.addi %113, %c1_i32_119 : i32
      %c0_120 = arith.constant 0 : index
      %c2_121 = arith.constant 2 : index
      %426 = arith.index_cast %425 : i32 to index
      %c0_122 = arith.constant 0 : index
      %427 = vector.load %arg0[%c0_120, %c2_121, %426, %c0_122] : memref<2x4x24x24xf32, #tpu.memory_space<vmem>>, vector<2x1x8x24xf32>
      %c155 = arith.constant 155 : index
      %428 = memref.load %arg1[%c155] : memref<400xf32, #tpu.memory_space<smem>>
      %429 = vector.extract_strided_slice %427 {offsets = [0, 0, 0, 0], sizes = [2, 1, 8, 20], strides = [1, 1, 1, 1]} : vector<2x1x8x24xf32> to vector<2x1x8x20xf32>
      %430 = vector.broadcast %428 : f32 to vector<2x1x8x20xf32>
      %431 = arith.mulf %429, %430 : vector<2x1x8x20xf32>
      %432 = arith.addf %424, %431 : vector<2x1x8x20xf32>
      %c156 = arith.constant 156 : index
      %433 = memref.load %arg1[%c156] : memref<400xf32, #tpu.memory_space<smem>>
      %434 = vector.extract_strided_slice %427 {offsets = [0, 0, 0, 1], sizes = [2, 1, 8, 20], strides = [1, 1, 1, 1]} : vector<2x1x8x24xf32> to vector<2x1x8x20xf32>
      %435 = vector.broadcast %433 : f32 to vector<2x1x8x20xf32>
      %436 = arith.mulf %434, %435 : vector<2x1x8x20xf32>
      %437 = arith.addf %432, %436 : vector<2x1x8x20xf32>
      %c157 = arith.constant 157 : index
      %438 = memref.load %arg1[%c157] : memref<400xf32, #tpu.memory_space<smem>>
      %439 = vector.extract_strided_slice %427 {offsets = [0, 0, 0, 2], sizes = [2, 1, 8, 20], strides = [1, 1, 1, 1]} : vector<2x1x8x24xf32> to vector<2x1x8x20xf32>
      %440 = vector.broadcast %438 : f32 to vector<2x1x8x20xf32>
      %441 = arith.mulf %439, %440 : vector<2x1x8x20xf32>
      %442 = arith.addf %437, %441 : vector<2x1x8x20xf32>
      %c158 = arith.constant 158 : index
      %443 = memref.load %arg1[%c158] : memref<400xf32, #tpu.memory_space<smem>>
      %444 = vector.extract_strided_slice %427 {offsets = [0, 0, 0, 3], sizes = [2, 1, 8, 20], strides = [1, 1, 1, 1]} : vector<2x1x8x24xf32> to vector<2x1x8x20xf32>
      %445 = vector.broadcast %443 : f32 to vector<2x1x8x20xf32>
      %446 = arith.mulf %444, %445 : vector<2x1x8x20xf32>
      %447 = arith.addf %442, %446 : vector<2x1x8x20xf32>
      %c159 = arith.constant 159 : index
      %448 = memref.load %arg1[%c159] : memref<400xf32, #tpu.memory_space<smem>>
      %449 = vector.extract_strided_slice %427 {offsets = [0, 0, 0, 4], sizes = [2, 1, 8, 20], strides = [1, 1, 1, 1]} : vector<2x1x8x24xf32> to vector<2x1x8x20xf32>
      %450 = vector.broadcast %448 : f32 to vector<2x1x8x20xf32>
      %451 = arith.mulf %449, %450 : vector<2x1x8x20xf32>
      %452 = arith.addf %447, %451 : vector<2x1x8x20xf32>
      %c2_i32_123 = arith.constant 2 : i32
      %453 = arith.addi %113, %c2_i32_123 : i32
      %c0_124 = arith.constant 0 : index
      %c2_125 = arith.constant 2 : index
      %454 = arith.index_cast %453 : i32 to index
      %c0_126 = arith.constant 0 : index
      %455 = vector.load %arg0[%c0_124, %c2_125, %454, %c0_126] : memref<2x4x24x24xf32, #tpu.memory_space<vmem>>, vector<2x1x8x24xf32>
      %c160 = arith.constant 160 : index
      %456 = memref.load %arg1[%c160] : memref<400xf32, #tpu.memory_space<smem>>
      %457 = vector.extract_strided_slice %455 {offsets = [0, 0, 0, 0], sizes = [2, 1, 8, 20], strides = [1, 1, 1, 1]} : vector<2x1x8x24xf32> to vector<2x1x8x20xf32>
      %458 = vector.broadcast %456 : f32 to vector<2x1x8x20xf32>
      %459 = arith.mulf %457, %458 : vector<2x1x8x20xf32>
      %460 = arith.addf %452, %459 : vector<2x1x8x20xf32>
      %c161 = arith.constant 161 : index
      %461 = memref.load %arg1[%c161] : memref<400xf32, #tpu.memory_space<smem>>
      %462 = vector.extract_strided_slice %455 {offsets = [0, 0, 0, 1], sizes = [2, 1, 8, 20], strides = [1, 1, 1, 1]} : vector<2x1x8x24xf32> to vector<2x1x8x20xf32>
      %463 = vector.broadcast %461 : f32 to vector<2x1x8x20xf32>
      %464 = arith.mulf %462, %463 : vector<2x1x8x20xf32>
      %465 = arith.addf %460, %464 : vector<2x1x8x20xf32>
      %c162 = arith.constant 162 : index
      %466 = memref.load %arg1[%c162] : memref<400xf32, #tpu.memory_space<smem>>
      %467 = vector.extract_strided_slice %455 {offsets = [0, 0, 0, 2], sizes = [2, 1, 8, 20], strides = [1, 1, 1, 1]} : vector<2x1x8x24xf32> to vector<2x1x8x20xf32>
      %468 = vector.broadcast %466 : f32 to vector<2x1x8x20xf32>
      %469 = arith.mulf %467, %468 : vector<2x1x8x20xf32>
      %470 = arith.addf %465, %469 : vector<2x1x8x20xf32>
      %c163 = arith.constant 163 : index
      %471 = memref.load %arg1[%c163] : memref<400xf32, #tpu.memory_space<smem>>
      %472 = vector.extract_strided_slice %455 {offsets = [0, 0, 0, 3], sizes = [2, 1, 8, 20], strides = [1, 1, 1, 1]} : vector<2x1x8x24xf32> to vector<2x1x8x20xf32>
      %473 = vector.broadcast %471 : f32 to vector<2x1x8x20xf32>
      %474 = arith.mulf %472, %473 : vector<2x1x8x20xf32>
      %475 = arith.addf %470, %474 : vector<2x1x8x20xf32>
      %c164 = arith.constant 164 : index
      %476 = memref.load %arg1[%c164] : memref<400xf32, #tpu.memory_space<smem>>
      %477 = vector.extract_strided_slice %455 {offsets = [0, 0, 0, 4], sizes = [2, 1, 8, 20], strides = [1, 1, 1, 1]} : vector<2x1x8x24xf32> to vector<2x1x8x20xf32>
      %478 = vector.broadcast %476 : f32 to vector<2x1x8x20xf32>
      %479 = arith.mulf %477, %478 : vector<2x1x8x20xf32>
      %480 = arith.addf %475, %479 : vector<2x1x8x20xf32>
      %c3_i32_127 = arith.constant 3 : i32
      %481 = arith.addi %113, %c3_i32_127 : i32
      %c0_128 = arith.constant 0 : index
      %c2_129 = arith.constant 2 : index
      %482 = arith.index_cast %481 : i32 to index
      %c0_130 = arith.constant 0 : index
      %483 = vector.load %arg0[%c0_128, %c2_129, %482, %c0_130] : memref<2x4x24x24xf32, #tpu.memory_space<vmem>>, vector<2x1x8x24xf32>
      %c165 = arith.constant 165 : index
      %484 = memref.load %arg1[%c165] : memref<400xf32, #tpu.memory_space<smem>>
      %485 = vector.extract_strided_slice %483 {offsets = [0, 0, 0, 0], sizes = [2, 1, 8, 20], strides = [1, 1, 1, 1]} : vector<2x1x8x24xf32> to vector<2x1x8x20xf32>
      %486 = vector.broadcast %484 : f32 to vector<2x1x8x20xf32>
      %487 = arith.mulf %485, %486 : vector<2x1x8x20xf32>
      %488 = arith.addf %480, %487 : vector<2x1x8x20xf32>
      %c166 = arith.constant 166 : index
      %489 = memref.load %arg1[%c166] : memref<400xf32, #tpu.memory_space<smem>>
      %490 = vector.extract_strided_slice %483 {offsets = [0, 0, 0, 1], sizes = [2, 1, 8, 20], strides = [1, 1, 1, 1]} : vector<2x1x8x24xf32> to vector<2x1x8x20xf32>
      %491 = vector.broadcast %489 : f32 to vector<2x1x8x20xf32>
      %492 = arith.mulf %490, %491 : vector<2x1x8x20xf32>
      %493 = arith.addf %488, %492 : vector<2x1x8x20xf32>
      %c167 = arith.constant 167 : index
      %494 = memref.load %arg1[%c167] : memref<400xf32, #tpu.memory_space<smem>>
      %495 = vector.extract_strided_slice %483 {offsets = [0, 0, 0, 2], sizes = [2, 1, 8, 20], strides = [1, 1, 1, 1]} : vector<2x1x8x24xf32> to vector<2x1x8x20xf32>
      %496 = vector.broadcast %494 : f32 to vector<2x1x8x20xf32>
      %497 = arith.mulf %495, %496 : vector<2x1x8x20xf32>
      %498 = arith.addf %493, %497 : vector<2x1x8x20xf32>
      %c168 = arith.constant 168 : index
      %499 = memref.load %arg1[%c168] : memref<400xf32, #tpu.memory_space<smem>>
      %500 = vector.extract_strided_slice %483 {offsets = [0, 0, 0, 3], sizes = [2, 1, 8, 20], strides = [1, 1, 1, 1]} : vector<2x1x8x24xf32> to vector<2x1x8x20xf32>
      %501 = vector.broadcast %499 : f32 to vector<2x1x8x20xf32>
      %502 = arith.mulf %500, %501 : vector<2x1x8x20xf32>
      %503 = arith.addf %498, %502 : vector<2x1x8x20xf32>
      %c169 = arith.constant 169 : index
      %504 = memref.load %arg1[%c169] : memref<400xf32, #tpu.memory_space<smem>>
      %505 = vector.extract_strided_slice %483 {offsets = [0, 0, 0, 4], sizes = [2, 1, 8, 20], strides = [1, 1, 1, 1]} : vector<2x1x8x24xf32> to vector<2x1x8x20xf32>
      %506 = vector.broadcast %504 : f32 to vector<2x1x8x20xf32>
      %507 = arith.mulf %505, %506 : vector<2x1x8x20xf32>
      %508 = arith.addf %503, %507 : vector<2x1x8x20xf32>
      %c4_i32_131 = arith.constant 4 : i32
      %509 = arith.addi %113, %c4_i32_131 : i32
      %c0_132 = arith.constant 0 : index
      %c2_133 = arith.constant 2 : index
      %510 = arith.index_cast %509 : i32 to index
      %c0_134 = arith.constant 0 : index
      %511 = vector.load %arg0[%c0_132, %c2_133, %510, %c0_134] : memref<2x4x24x24xf32, #tpu.memory_space<vmem>>, vector<2x1x8x24xf32>
      %c170 = arith.constant 170 : index
      %512 = memref.load %arg1[%c170] : memref<400xf32, #tpu.memory_space<smem>>
      %513 = vector.extract_strided_slice %511 {offsets = [0, 0, 0, 0], sizes = [2, 1, 8, 20], strides = [1, 1, 1, 1]} : vector<2x1x8x24xf32> to vector<2x1x8x20xf32>
      %514 = vector.broadcast %512 : f32 to vector<2x1x8x20xf32>
      %515 = arith.mulf %513, %514 : vector<2x1x8x20xf32>
      %516 = arith.addf %508, %515 : vector<2x1x8x20xf32>
      %c171 = arith.constant 171 : index
      %517 = memref.load %arg1[%c171] : memref<400xf32, #tpu.memory_space<smem>>
      %518 = vector.extract_strided_slice %511 {offsets = [0, 0, 0, 1], sizes = [2, 1, 8, 20], strides = [1, 1, 1, 1]} : vector<2x1x8x24xf32> to vector<2x1x8x20xf32>
      %519 = vector.broadcast %517 : f32 to vector<2x1x8x20xf32>
      %520 = arith.mulf %518, %519 : vector<2x1x8x20xf32>
      %521 = arith.addf %516, %520 : vector<2x1x8x20xf32>
      %c172 = arith.constant 172 : index
      %522 = memref.load %arg1[%c172] : memref<400xf32, #tpu.memory_space<smem>>
      %523 = vector.extract_strided_slice %511 {offsets = [0, 0, 0, 2], sizes = [2, 1, 8, 20], strides = [1, 1, 1, 1]} : vector<2x1x8x24xf32> to vector<2x1x8x20xf32>
      %524 = vector.broadcast %522 : f32 to vector<2x1x8x20xf32>
      %525 = arith.mulf %523, %524 : vector<2x1x8x20xf32>
      %526 = arith.addf %521, %525 : vector<2x1x8x20xf32>
      %c173 = arith.constant 173 : index
      %527 = memref.load %arg1[%c173] : memref<400xf32, #tpu.memory_space<smem>>
      %528 = vector.extract_strided_slice %511 {offsets = [0, 0, 0, 3], sizes = [2, 1, 8, 20], strides = [1, 1, 1, 1]} : vector<2x1x8x24xf32> to vector<2x1x8x20xf32>
      %529 = vector.broadcast %527 : f32 to vector<2x1x8x20xf32>
      %530 = arith.mulf %528, %529 : vector<2x1x8x20xf32>
      %531 = arith.addf %526, %530 : vector<2x1x8x20xf32>
      %c174 = arith.constant 174 : index
      %532 = memref.load %arg1[%c174] : memref<400xf32, #tpu.memory_space<smem>>
      %533 = vector.extract_strided_slice %511 {offsets = [0, 0, 0, 4], sizes = [2, 1, 8, 20], strides = [1, 1, 1, 1]} : vector<2x1x8x24xf32> to vector<2x1x8x20xf32>
      %534 = vector.broadcast %532 : f32 to vector<2x1x8x20xf32>
      %535 = arith.mulf %533, %534 : vector<2x1x8x20xf32>
      %536 = arith.addf %531, %535 : vector<2x1x8x20xf32>
      %c0_i32_135 = arith.constant 0 : i32
      %537 = arith.addi %113, %c0_i32_135 : i32
      %c0_136 = arith.constant 0 : index
      %c3_137 = arith.constant 3 : index
      %538 = arith.index_cast %537 : i32 to index
      %c0_138 = arith.constant 0 : index
      %539 = vector.load %arg0[%c0_136, %c3_137, %538, %c0_138] : memref<2x4x24x24xf32, #tpu.memory_space<vmem>>, vector<2x1x8x24xf32>
      %c175 = arith.constant 175 : index
      %540 = memref.load %arg1[%c175] : memref<400xf32, #tpu.memory_space<smem>>
      %541 = vector.extract_strided_slice %539 {offsets = [0, 0, 0, 0], sizes = [2, 1, 8, 20], strides = [1, 1, 1, 1]} : vector<2x1x8x24xf32> to vector<2x1x8x20xf32>
      %542 = vector.broadcast %540 : f32 to vector<2x1x8x20xf32>
      %543 = arith.mulf %541, %542 : vector<2x1x8x20xf32>
      %544 = arith.addf %536, %543 : vector<2x1x8x20xf32>
      %c176 = arith.constant 176 : index
      %545 = memref.load %arg1[%c176] : memref<400xf32, #tpu.memory_space<smem>>
      %546 = vector.extract_strided_slice %539 {offsets = [0, 0, 0, 1], sizes = [2, 1, 8, 20], strides = [1, 1, 1, 1]} : vector<2x1x8x24xf32> to vector<2x1x8x20xf32>
      %547 = vector.broadcast %545 : f32 to vector<2x1x8x20xf32>
      %548 = arith.mulf %546, %547 : vector<2x1x8x20xf32>
      %549 = arith.addf %544, %548 : vector<2x1x8x20xf32>
      %c177 = arith.constant 177 : index
      %550 = memref.load %arg1[%c177] : memref<400xf32, #tpu.memory_space<smem>>
      %551 = vector.extract_strided_slice %539 {offsets = [0, 0, 0, 2], sizes = [2, 1, 8, 20], strides = [1, 1, 1, 1]} : vector<2x1x8x24xf32> to vector<2x1x8x20xf32>
      %552 = vector.broadcast %550 : f32 to vector<2x1x8x20xf32>
      %553 = arith.mulf %551, %552 : vector<2x1x8x20xf32>
      %554 = arith.addf %549, %553 : vector<2x1x8x20xf32>
      %c178 = arith.constant 178 : index
      %555 = memref.load %arg1[%c178] : memref<400xf32, #tpu.memory_space<smem>>
      %556 = vector.extract_strided_slice %539 {offsets = [0, 0, 0, 3], sizes = [2, 1, 8, 20], strides = [1, 1, 1, 1]} : vector<2x1x8x24xf32> to vector<2x1x8x20xf32>
      %557 = vector.broadcast %555 : f32 to vector<2x1x8x20xf32>
      %558 = arith.mulf %556, %557 : vector<2x1x8x20xf32>
      %559 = arith.addf %554, %558 : vector<2x1x8x20xf32>
      %c179 = arith.constant 179 : index
      %560 = memref.load %arg1[%c179] : memref<400xf32, #tpu.memory_space<smem>>
      %561 = vector.extract_strided_slice %539 {offsets = [0, 0, 0, 4], sizes = [2, 1, 8, 20], strides = [1, 1, 1, 1]} : vector<2x1x8x24xf32> to vector<2x1x8x20xf32>
      %562 = vector.broadcast %560 : f32 to vector<2x1x8x20xf32>
      %563 = arith.mulf %561, %562 : vector<2x1x8x20xf32>
      %564 = arith.addf %559, %563 : vector<2x1x8x20xf32>
      %c1_i32_139 = arith.constant 1 : i32
      %565 = arith.addi %113, %c1_i32_139 : i32
      %c0_140 = arith.constant 0 : index
      %c3_141 = arith.constant 3 : index
      %566 = arith.index_cast %565 : i32 to index
      %c0_142 = arith.constant 0 : index
      %567 = vector.load %arg0[%c0_140, %c3_141, %566, %c0_142] : memref<2x4x24x24xf32, #tpu.memory_space<vmem>>, vector<2x1x8x24xf32>
      %c180 = arith.constant 180 : index
      %568 = memref.load %arg1[%c180] : memref<400xf32, #tpu.memory_space<smem>>
      %569 = vector.extract_strided_slice %567 {offsets = [0, 0, 0, 0], sizes = [2, 1, 8, 20], strides = [1, 1, 1, 1]} : vector<2x1x8x24xf32> to vector<2x1x8x20xf32>
      %570 = vector.broadcast %568 : f32 to vector<2x1x8x20xf32>
      %571 = arith.mulf %569, %570 : vector<2x1x8x20xf32>
      %572 = arith.addf %564, %571 : vector<2x1x8x20xf32>
      %c181 = arith.constant 181 : index
      %573 = memref.load %arg1[%c181] : memref<400xf32, #tpu.memory_space<smem>>
      %574 = vector.extract_strided_slice %567 {offsets = [0, 0, 0, 1], sizes = [2, 1, 8, 20], strides = [1, 1, 1, 1]} : vector<2x1x8x24xf32> to vector<2x1x8x20xf32>
      %575 = vector.broadcast %573 : f32 to vector<2x1x8x20xf32>
      %576 = arith.mulf %574, %575 : vector<2x1x8x20xf32>
      %577 = arith.addf %572, %576 : vector<2x1x8x20xf32>
      %c182 = arith.constant 182 : index
      %578 = memref.load %arg1[%c182] : memref<400xf32, #tpu.memory_space<smem>>
      %579 = vector.extract_strided_slice %567 {offsets = [0, 0, 0, 2], sizes = [2, 1, 8, 20], strides = [1, 1, 1, 1]} : vector<2x1x8x24xf32> to vector<2x1x8x20xf32>
      %580 = vector.broadcast %578 : f32 to vector<2x1x8x20xf32>
      %581 = arith.mulf %579, %580 : vector<2x1x8x20xf32>
      %582 = arith.addf %577, %581 : vector<2x1x8x20xf32>
      %c183 = arith.constant 183 : index
      %583 = memref.load %arg1[%c183] : memref<400xf32, #tpu.memory_space<smem>>
      %584 = vector.extract_strided_slice %567 {offsets = [0, 0, 0, 3], sizes = [2, 1, 8, 20], strides = [1, 1, 1, 1]} : vector<2x1x8x24xf32> to vector<2x1x8x20xf32>
      %585 = vector.broadcast %583 : f32 to vector<2x1x8x20xf32>
      %586 = arith.mulf %584, %585 : vector<2x1x8x20xf32>
      %587 = arith.addf %582, %586 : vector<2x1x8x20xf32>
      %c184 = arith.constant 184 : index
      %588 = memref.load %arg1[%c184] : memref<400xf32, #tpu.memory_space<smem>>
      %589 = vector.extract_strided_slice %567 {offsets = [0, 0, 0, 4], sizes = [2, 1, 8, 20], strides = [1, 1, 1, 1]} : vector<2x1x8x24xf32> to vector<2x1x8x20xf32>
      %590 = vector.broadcast %588 : f32 to vector<2x1x8x20xf32>
      %591 = arith.mulf %589, %590 : vector<2x1x8x20xf32>
      %592 = arith.addf %587, %591 : vector<2x1x8x20xf32>
      %c2_i32_143 = arith.constant 2 : i32
      %593 = arith.addi %113, %c2_i32_143 : i32
      %c0_144 = arith.constant 0 : index
      %c3_145 = arith.constant 3 : index
      %594 = arith.index_cast %593 : i32 to index
      %c0_146 = arith.constant 0 : index
      %595 = vector.load %arg0[%c0_144, %c3_145, %594, %c0_146] : memref<2x4x24x24xf32, #tpu.memory_space<vmem>>, vector<2x1x8x24xf32>
      %c185 = arith.constant 185 : index
      %596 = memref.load %arg1[%c185] : memref<400xf32, #tpu.memory_space<smem>>
      %597 = vector.extract_strided_slice %595 {offsets = [0, 0, 0, 0], sizes = [2, 1, 8, 20], strides = [1, 1, 1, 1]} : vector<2x1x8x24xf32> to vector<2x1x8x20xf32>
      %598 = vector.broadcast %596 : f32 to vector<2x1x8x20xf32>
      %599 = arith.mulf %597, %598 : vector<2x1x8x20xf32>
      %600 = arith.addf %592, %599 : vector<2x1x8x20xf32>
      %c186 = arith.constant 186 : index
      %601 = memref.load %arg1[%c186] : memref<400xf32, #tpu.memory_space<smem>>
      %602 = vector.extract_strided_slice %595 {offsets = [0, 0, 0, 1], sizes = [2, 1, 8, 20], strides = [1, 1, 1, 1]} : vector<2x1x8x24xf32> to vector<2x1x8x20xf32>
      %603 = vector.broadcast %601 : f32 to vector<2x1x8x20xf32>
      %604 = arith.mulf %602, %603 : vector<2x1x8x20xf32>
      %605 = arith.addf %600, %604 : vector<2x1x8x20xf32>
      %c187 = arith.constant 187 : index
      %606 = memref.load %arg1[%c187] : memref<400xf32, #tpu.memory_space<smem>>
      %607 = vector.extract_strided_slice %595 {offsets = [0, 0, 0, 2], sizes = [2, 1, 8, 20], strides = [1, 1, 1, 1]} : vector<2x1x8x24xf32> to vector<2x1x8x20xf32>
      %608 = vector.broadcast %606 : f32 to vector<2x1x8x20xf32>
      %609 = arith.mulf %607, %608 : vector<2x1x8x20xf32>
      %610 = arith.addf %605, %609 : vector<2x1x8x20xf32>
      %c188 = arith.constant 188 : index
      %611 = memref.load %arg1[%c188] : memref<400xf32, #tpu.memory_space<smem>>
      %612 = vector.extract_strided_slice %595 {offsets = [0, 0, 0, 3], sizes = [2, 1, 8, 20], strides = [1, 1, 1, 1]} : vector<2x1x8x24xf32> to vector<2x1x8x20xf32>
      %613 = vector.broadcast %611 : f32 to vector<2x1x8x20xf32>
      %614 = arith.mulf %612, %613 : vector<2x1x8x20xf32>
      %615 = arith.addf %610, %614 : vector<2x1x8x20xf32>
      %c189 = arith.constant 189 : index
      %616 = memref.load %arg1[%c189] : memref<400xf32, #tpu.memory_space<smem>>
      %617 = vector.extract_strided_slice %595 {offsets = [0, 0, 0, 4], sizes = [2, 1, 8, 20], strides = [1, 1, 1, 1]} : vector<2x1x8x24xf32> to vector<2x1x8x20xf32>
      %618 = vector.broadcast %616 : f32 to vector<2x1x8x20xf32>
      %619 = arith.mulf %617, %618 : vector<2x1x8x20xf32>
      %620 = arith.addf %615, %619 : vector<2x1x8x20xf32>
      %c3_i32_147 = arith.constant 3 : i32
      %621 = arith.addi %113, %c3_i32_147 : i32
      %c0_148 = arith.constant 0 : index
      %c3_149 = arith.constant 3 : index
      %622 = arith.index_cast %621 : i32 to index
      %c0_150 = arith.constant 0 : index
      %623 = vector.load %arg0[%c0_148, %c3_149, %622, %c0_150] : memref<2x4x24x24xf32, #tpu.memory_space<vmem>>, vector<2x1x8x24xf32>
      %c190 = arith.constant 190 : index
      %624 = memref.load %arg1[%c190] : memref<400xf32, #tpu.memory_space<smem>>
      %625 = vector.extract_strided_slice %623 {offsets = [0, 0, 0, 0], sizes = [2, 1, 8, 20], strides = [1, 1, 1, 1]} : vector<2x1x8x24xf32> to vector<2x1x8x20xf32>
      %626 = vector.broadcast %624 : f32 to vector<2x1x8x20xf32>
      %627 = arith.mulf %625, %626 : vector<2x1x8x20xf32>
      %628 = arith.addf %620, %627 : vector<2x1x8x20xf32>
      %c191 = arith.constant 191 : index
      %629 = memref.load %arg1[%c191] : memref<400xf32, #tpu.memory_space<smem>>
      %630 = vector.extract_strided_slice %623 {offsets = [0, 0, 0, 1], sizes = [2, 1, 8, 20], strides = [1, 1, 1, 1]} : vector<2x1x8x24xf32> to vector<2x1x8x20xf32>
      %631 = vector.broadcast %629 : f32 to vector<2x1x8x20xf32>
      %632 = arith.mulf %630, %631 : vector<2x1x8x20xf32>
      %633 = arith.addf %628, %632 : vector<2x1x8x20xf32>
      %c192 = arith.constant 192 : index
      %634 = memref.load %arg1[%c192] : memref<400xf32, #tpu.memory_space<smem>>
      %635 = vector.extract_strided_slice %623 {offsets = [0, 0, 0, 2], sizes = [2, 1, 8, 20], strides = [1, 1, 1, 1]} : vector<2x1x8x24xf32> to vector<2x1x8x20xf32>
      %636 = vector.broadcast %634 : f32 to vector<2x1x8x20xf32>
      %637 = arith.mulf %635, %636 : vector<2x1x8x20xf32>
      %638 = arith.addf %633, %637 : vector<2x1x8x20xf32>
      %c193 = arith.constant 193 : index
      %639 = memref.load %arg1[%c193] : memref<400xf32, #tpu.memory_space<smem>>
      %640 = vector.extract_strided_slice %623 {offsets = [0, 0, 0, 3], sizes = [2, 1, 8, 20], strides = [1, 1, 1, 1]} : vector<2x1x8x24xf32> to vector<2x1x8x20xf32>
      %641 = vector.broadcast %639 : f32 to vector<2x1x8x20xf32>
      %642 = arith.mulf %640, %641 : vector<2x1x8x20xf32>
      %643 = arith.addf %638, %642 : vector<2x1x8x20xf32>
      %c194 = arith.constant 194 : index
      %644 = memref.load %arg1[%c194] : memref<400xf32, #tpu.memory_space<smem>>
      %645 = vector.extract_strided_slice %623 {offsets = [0, 0, 0, 4], sizes = [2, 1, 8, 20], strides = [1, 1, 1, 1]} : vector<2x1x8x24xf32> to vector<2x1x8x20xf32>
      %646 = vector.broadcast %644 : f32 to vector<2x1x8x20xf32>
      %647 = arith.mulf %645, %646 : vector<2x1x8x20xf32>
      %648 = arith.addf %643, %647 : vector<2x1x8x20xf32>
      %c4_i32_151 = arith.constant 4 : i32
      %649 = arith.addi %113, %c4_i32_151 : i32
      %c0_152 = arith.constant 0 : index
      %c3_153 = arith.constant 3 : index
      %650 = arith.index_cast %649 : i32 to index
      %c0_154 = arith.constant 0 : index
      %651 = vector.load %arg0[%c0_152, %c3_153, %650, %c0_154] : memref<2x4x24x24xf32, #tpu.memory_space<vmem>>, vector<2x1x8x24xf32>
      %c195 = arith.constant 195 : index
      %652 = memref.load %arg1[%c195] : memref<400xf32, #tpu.memory_space<smem>>
      %653 = vector.extract_strided_slice %651 {offsets = [0, 0, 0, 0], sizes = [2, 1, 8, 20], strides = [1, 1, 1, 1]} : vector<2x1x8x24xf32> to vector<2x1x8x20xf32>
      %654 = vector.broadcast %652 : f32 to vector<2x1x8x20xf32>
      %655 = arith.mulf %653, %654 : vector<2x1x8x20xf32>
      %656 = arith.addf %648, %655 : vector<2x1x8x20xf32>
      %c196 = arith.constant 196 : index
      %657 = memref.load %arg1[%c196] : memref<400xf32, #tpu.memory_space<smem>>
      %658 = vector.extract_strided_slice %651 {offsets = [0, 0, 0, 1], sizes = [2, 1, 8, 20], strides = [1, 1, 1, 1]} : vector<2x1x8x24xf32> to vector<2x1x8x20xf32>
      %659 = vector.broadcast %657 : f32 to vector<2x1x8x20xf32>
      %660 = arith.mulf %658, %659 : vector<2x1x8x20xf32>
      %661 = arith.addf %656, %660 : vector<2x1x8x20xf32>
      %c197 = arith.constant 197 : index
      %662 = memref.load %arg1[%c197] : memref<400xf32, #tpu.memory_space<smem>>
      %663 = vector.extract_strided_slice %651 {offsets = [0, 0, 0, 2], sizes = [2, 1, 8, 20], strides = [1, 1, 1, 1]} : vector<2x1x8x24xf32> to vector<2x1x8x20xf32>
      %664 = vector.broadcast %662 : f32 to vector<2x1x8x20xf32>
      %665 = arith.mulf %663, %664 : vector<2x1x8x20xf32>
      %666 = arith.addf %661, %665 : vector<2x1x8x20xf32>
      %c198 = arith.constant 198 : index
      %667 = memref.load %arg1[%c198] : memref<400xf32, #tpu.memory_space<smem>>
      %668 = vector.extract_strided_slice %651 {offsets = [0, 0, 0, 3], sizes = [2, 1, 8, 20], strides = [1, 1, 1, 1]} : vector<2x1x8x24xf32> to vector<2x1x8x20xf32>
      %669 = vector.broadcast %667 : f32 to vector<2x1x8x20xf32>
      %670 = arith.mulf %668, %669 : vector<2x1x8x20xf32>
      %671 = arith.addf %666, %670 : vector<2x1x8x20xf32>
      %c199 = arith.constant 199 : index
      %672 = memref.load %arg1[%c199] : memref<400xf32, #tpu.memory_space<smem>>
      %673 = vector.extract_strided_slice %651 {offsets = [0, 0, 0, 4], sizes = [2, 1, 8, 20], strides = [1, 1, 1, 1]} : vector<2x1x8x24xf32> to vector<2x1x8x20xf32>
      %674 = vector.broadcast %672 : f32 to vector<2x1x8x20xf32>
      %675 = arith.mulf %673, %674 : vector<2x1x8x20xf32>
      %676 = arith.addf %671, %675 : vector<2x1x8x20xf32>
      %c0_155 = arith.constant 0 : index
      %c1_156 = arith.constant 1 : index
      %677 = arith.index_cast %113 : i32 to index
      %c0_157 = arith.constant 0 : index
      %678 = vector.load %arg5[%c0_155, %c1_156, %677, %c0_157] : memref<2x4x20x20xf32, #tpu.memory_space<vmem>>, vector<2x1x8x20xf32>
      tpu.vector_store %arg5[%c0_155, %c1_156, %677, %c0_157], %676 {strides = array<i32>} : memref<2x4x20x20xf32, #tpu.memory_space<vmem>>, vector<2x1x8x20xf32>,
    }
    %c3_i32_19 = arith.constant 3 : i32
    %c0_20 = arith.constant 0 : index
    %c1_21 = arith.constant 1 : index
    %c0_22 = arith.constant 0 : index
    %c0_23 = arith.constant 0 : index
    %30 = vector.load %arg5[%c0_20, %c1_21, %c0_22, %c0_23] : memref<2x4x20x20xf32, #tpu.memory_space<vmem>>, vector<2x1x20x20xf32>
    %31 = vector.shape_cast %30 : vector<2x1x20x20xf32> to vector<1x2x1x20x20xf32>
    %cst_24 = arith.constant dense<0.000000e+00> : vector<1xf32>
    %32 = vector.multi_reduction <add>, %31, %cst_24 [1, 2, 3, 4] : vector<1x2x1x20x20xf32> to vector<1xf32>
    %33 = vector.shape_cast %32 : vector<1xf32> to vector<1x1x1x1x1xf32>
    %34 = vector.extract %33[0, 0, 0, 0, 0] : f32 from vector<1x1x1x1x1xf32>
    %cst_25 = arith.constant 8.000000e+02 : f32
    %35 = arith.divf %34, %cst_25 : f32
    %36 = vector.broadcast %35 : f32 to vector<2x1x20x20xf32>
    %37 = arith.subf %30, %36 : vector<2x1x20x20xf32>
    %38 = arith.mulf %37, %37 : vector<2x1x20x20xf32>
    %39 = vector.shape_cast %38 : vector<2x1x20x20xf32> to vector<1x2x1x20x20xf32>
    %cst_26 = arith.constant dense<0.000000e+00> : vector<1xf32>
    %40 = vector.multi_reduction <add>, %39, %cst_26 [1, 2, 3, 4] : vector<1x2x1x20x20xf32> to vector<1xf32>
    %41 = vector.shape_cast %40 : vector<1xf32> to vector<1x1x1x1x1xf32>
    %42 = vector.extract %41[0, 0, 0, 0, 0] : f32 from vector<1x1x1x1x1xf32>
    %cst_27 = arith.constant 8.000000e+02 : f32
    %43 = arith.divf %42, %cst_27 : f32
    %c1_28 = arith.constant 1 : index
    %44 = memref.load %arg3[%c1_28] : memref<4xf32, #tpu.memory_space<smem>>
    %cst_29 = arith.constant 9.99999974E-6 : f32
    %45 = arith.addf %43, %cst_29 : f32
    %46 = math.rsqrt %45 : f32
    %47 = arith.mulf %44, %46 : f32
    %48 = vector.broadcast %47 : f32 to vector<2x1x20x20xf32>
    %49 = arith.mulf %37, %48 : vector<2x1x20x20xf32>
    %c1_30 = arith.constant 1 : index
    %50 = memref.load %arg4[%c1_30] : memref<4xf32, #tpu.memory_space<smem>>
    %51 = vector.broadcast %50 : f32 to vector<2x1x20x20xf32>
    %52 = arith.addf %49, %51 : vector<2x1x20x20xf32>
    %cst_31 = arith.constant 0.000000e+00 : f32
    %53 = vector.broadcast %cst_31 : f32 to vector<2x1x20x20xf32>
    %54 = arith.maximumf %52, %53 : vector<2x1x20x20xf32>
    %c0_32 = arith.constant 0 : index
    %c1_33 = arith.constant 1 : index
    %c0_34 = arith.constant 0 : index
    %c0_35 = arith.constant 0 : index
    %55 = vector.load %arg5[%c0_32, %c1_33, %c0_34, %c0_35] : memref<2x4x20x20xf32, #tpu.memory_space<vmem>>, vector<2x1x20x20xf32>
    tpu.vector_store %arg5[%c0_32, %c1_33, %c0_34, %c0_35], %54 {strides = array<i32>} : memref<2x4x20x20xf32, #tpu.memory_space<vmem>>, vector<2x1x20x20xf32>,
    %c2 = arith.constant 2 : index
    %56 = memref.load %arg2[%c2] : memref<4xf32, #tpu.memory_space<smem>>
    %c0_i32_36 = arith.constant 0 : i32
    %c3_i32_37 = arith.constant 3 : i32
    %57 = arith.addi %c0_i32_36, %c3_i32_37 : i32
    %c1_i32_38 = arith.constant 1 : i32
    scf.for %arg6 = %c0_i32_36 to %57 step %c1_i32_38  : i32 {
      %c8_i32 = arith.constant 8 : i32
      %112 = arith.muli %arg6, %c8_i32 : i32
      %c12_i32 = arith.constant 12 : i32
      %113 = arith.minsi %112, %c12_i32 : i32
      %cst_76 = arith.constant 0.000000e+00 : f32
      %114 = vector.broadcast %cst_76 : f32 to vector<2x1x8x20xf32>
      %115 = vector.broadcast %56 : f32 to vector<2x1x8x20xf32>
      %116 = arith.addf %114, %115 : vector<2x1x8x20xf32>
      %c0_i32_77 = arith.constant 0 : i32
      %117 = arith.addi %113, %c0_i32_77 : i32
      %c0_78 = arith.constant 0 : index
      %c0_79 = arith.constant 0 : index
      %118 = arith.index_cast %117 : i32 to index
      %c0_80 = arith.constant 0 : index
      %119 = vector.load %arg0[%c0_78, %c0_79, %118, %c0_80] : memref<2x4x24x24xf32, #tpu.memory_space<vmem>>, vector<2x1x8x24xf32>
      %c200 = arith.constant 200 : index
      %120 = memref.load %arg1[%c200] : memref<400xf32, #tpu.memory_space<smem>>
      %121 = vector.extract_strided_slice %119 {offsets = [0, 0, 0, 0], sizes = [2, 1, 8, 20], strides = [1, 1, 1, 1]} : vector<2x1x8x24xf32> to vector<2x1x8x20xf32>
      %122 = vector.broadcast %120 : f32 to vector<2x1x8x20xf32>
      %123 = arith.mulf %121, %122 : vector<2x1x8x20xf32>
      %124 = arith.addf %116, %123 : vector<2x1x8x20xf32>
      %c201 = arith.constant 201 : index
      %125 = memref.load %arg1[%c201] : memref<400xf32, #tpu.memory_space<smem>>
      %126 = vector.extract_strided_slice %119 {offsets = [0, 0, 0, 1], sizes = [2, 1, 8, 20], strides = [1, 1, 1, 1]} : vector<2x1x8x24xf32> to vector<2x1x8x20xf32>
      %127 = vector.broadcast %125 : f32 to vector<2x1x8x20xf32>
      %128 = arith.mulf %126, %127 : vector<2x1x8x20xf32>
      %129 = arith.addf %124, %128 : vector<2x1x8x20xf32>
      %c202 = arith.constant 202 : index
      %130 = memref.load %arg1[%c202] : memref<400xf32, #tpu.memory_space<smem>>
      %131 = vector.extract_strided_slice %119 {offsets = [0, 0, 0, 2], sizes = [2, 1, 8, 20], strides = [1, 1, 1, 1]} : vector<2x1x8x24xf32> to vector<2x1x8x20xf32>
      %132 = vector.broadcast %130 : f32 to vector<2x1x8x20xf32>
      %133 = arith.mulf %131, %132 : vector<2x1x8x20xf32>
      %134 = arith.addf %129, %133 : vector<2x1x8x20xf32>
      %c203 = arith.constant 203 : index
      %135 = memref.load %arg1[%c203] : memref<400xf32, #tpu.memory_space<smem>>
      %136 = vector.extract_strided_slice %119 {offsets = [0, 0, 0, 3], sizes = [2, 1, 8, 20], strides = [1, 1, 1, 1]} : vector<2x1x8x24xf32> to vector<2x1x8x20xf32>
      %137 = vector.broadcast %135 : f32 to vector<2x1x8x20xf32>
      %138 = arith.mulf %136, %137 : vector<2x1x8x20xf32>
      %139 = arith.addf %134, %138 : vector<2x1x8x20xf32>
      %c204 = arith.constant 204 : index
      %140 = memref.load %arg1[%c204] : memref<400xf32, #tpu.memory_space<smem>>
      %141 = vector.extract_strided_slice %119 {offsets = [0, 0, 0, 4], sizes = [2, 1, 8, 20], strides = [1, 1, 1, 1]} : vector<2x1x8x24xf32> to vector<2x1x8x20xf32>
      %142 = vector.broadcast %140 : f32 to vector<2x1x8x20xf32>
      %143 = arith.mulf %141, %142 : vector<2x1x8x20xf32>
      %144 = arith.addf %139, %143 : vector<2x1x8x20xf32>
      %c1_i32_81 = arith.constant 1 : i32
      %145 = arith.addi %113, %c1_i32_81 : i32
      %c0_82 = arith.constant 0 : index
      %c0_83 = arith.constant 0 : index
      %146 = arith.index_cast %145 : i32 to index
      %c0_84 = arith.constant 0 : index
      %147 = vector.load %arg0[%c0_82, %c0_83, %146, %c0_84] : memref<2x4x24x24xf32, #tpu.memory_space<vmem>>, vector<2x1x8x24xf32>
      %c205 = arith.constant 205 : index
      %148 = memref.load %arg1[%c205] : memref<400xf32, #tpu.memory_space<smem>>
      %149 = vector.extract_strided_slice %147 {offsets = [0, 0, 0, 0], sizes = [2, 1, 8, 20], strides = [1, 1, 1, 1]} : vector<2x1x8x24xf32> to vector<2x1x8x20xf32>
      %150 = vector.broadcast %148 : f32 to vector<2x1x8x20xf32>
      %151 = arith.mulf %149, %150 : vector<2x1x8x20xf32>
      %152 = arith.addf %144, %151 : vector<2x1x8x20xf32>
      %c206 = arith.constant 206 : index
      %153 = memref.load %arg1[%c206] : memref<400xf32, #tpu.memory_space<smem>>
      %154 = vector.extract_strided_slice %147 {offsets = [0, 0, 0, 1], sizes = [2, 1, 8, 20], strides = [1, 1, 1, 1]} : vector<2x1x8x24xf32> to vector<2x1x8x20xf32>
      %155 = vector.broadcast %153 : f32 to vector<2x1x8x20xf32>
      %156 = arith.mulf %154, %155 : vector<2x1x8x20xf32>
      %157 = arith.addf %152, %156 : vector<2x1x8x20xf32>
      %c207 = arith.constant 207 : index
      %158 = memref.load %arg1[%c207] : memref<400xf32, #tpu.memory_space<smem>>
      %159 = vector.extract_strided_slice %147 {offsets = [0, 0, 0, 2], sizes = [2, 1, 8, 20], strides = [1, 1, 1, 1]} : vector<2x1x8x24xf32> to vector<2x1x8x20xf32>
      %160 = vector.broadcast %158 : f32 to vector<2x1x8x20xf32>
      %161 = arith.mulf %159, %160 : vector<2x1x8x20xf32>
      %162 = arith.addf %157, %161 : vector<2x1x8x20xf32>
      %c208 = arith.constant 208 : index
      %163 = memref.load %arg1[%c208] : memref<400xf32, #tpu.memory_space<smem>>
      %164 = vector.extract_strided_slice %147 {offsets = [0, 0, 0, 3], sizes = [2, 1, 8, 20], strides = [1, 1, 1, 1]} : vector<2x1x8x24xf32> to vector<2x1x8x20xf32>
      %165 = vector.broadcast %163 : f32 to vector<2x1x8x20xf32>
      %166 = arith.mulf %164, %165 : vector<2x1x8x20xf32>
      %167 = arith.addf %162, %166 : vector<2x1x8x20xf32>
      %c209 = arith.constant 209 : index
      %168 = memref.load %arg1[%c209] : memref<400xf32, #tpu.memory_space<smem>>
      %169 = vector.extract_strided_slice %147 {offsets = [0, 0, 0, 4], sizes = [2, 1, 8, 20], strides = [1, 1, 1, 1]} : vector<2x1x8x24xf32> to vector<2x1x8x20xf32>
      %170 = vector.broadcast %168 : f32 to vector<2x1x8x20xf32>
      %171 = arith.mulf %169, %170 : vector<2x1x8x20xf32>
      %172 = arith.addf %167, %171 : vector<2x1x8x20xf32>
      %c2_i32 = arith.constant 2 : i32
      %173 = arith.addi %113, %c2_i32 : i32
      %c0_85 = arith.constant 0 : index
      %c0_86 = arith.constant 0 : index
      %174 = arith.index_cast %173 : i32 to index
      %c0_87 = arith.constant 0 : index
      %175 = vector.load %arg0[%c0_85, %c0_86, %174, %c0_87] : memref<2x4x24x24xf32, #tpu.memory_space<vmem>>, vector<2x1x8x24xf32>
      %c210 = arith.constant 210 : index
      %176 = memref.load %arg1[%c210] : memref<400xf32, #tpu.memory_space<smem>>
      %177 = vector.extract_strided_slice %175 {offsets = [0, 0, 0, 0], sizes = [2, 1, 8, 20], strides = [1, 1, 1, 1]} : vector<2x1x8x24xf32> to vector<2x1x8x20xf32>
      %178 = vector.broadcast %176 : f32 to vector<2x1x8x20xf32>
      %179 = arith.mulf %177, %178 : vector<2x1x8x20xf32>
      %180 = arith.addf %172, %179 : vector<2x1x8x20xf32>
      %c211 = arith.constant 211 : index
      %181 = memref.load %arg1[%c211] : memref<400xf32, #tpu.memory_space<smem>>
      %182 = vector.extract_strided_slice %175 {offsets = [0, 0, 0, 1], sizes = [2, 1, 8, 20], strides = [1, 1, 1, 1]} : vector<2x1x8x24xf32> to vector<2x1x8x20xf32>
      %183 = vector.broadcast %181 : f32 to vector<2x1x8x20xf32>
      %184 = arith.mulf %182, %183 : vector<2x1x8x20xf32>
      %185 = arith.addf %180, %184 : vector<2x1x8x20xf32>
      %c212 = arith.constant 212 : index
      %186 = memref.load %arg1[%c212] : memref<400xf32, #tpu.memory_space<smem>>
      %187 = vector.extract_strided_slice %175 {offsets = [0, 0, 0, 2], sizes = [2, 1, 8, 20], strides = [1, 1, 1, 1]} : vector<2x1x8x24xf32> to vector<2x1x8x20xf32>
      %188 = vector.broadcast %186 : f32 to vector<2x1x8x20xf32>
      %189 = arith.mulf %187, %188 : vector<2x1x8x20xf32>
      %190 = arith.addf %185, %189 : vector<2x1x8x20xf32>
      %c213 = arith.constant 213 : index
      %191 = memref.load %arg1[%c213] : memref<400xf32, #tpu.memory_space<smem>>
      %192 = vector.extract_strided_slice %175 {offsets = [0, 0, 0, 3], sizes = [2, 1, 8, 20], strides = [1, 1, 1, 1]} : vector<2x1x8x24xf32> to vector<2x1x8x20xf32>
      %193 = vector.broadcast %191 : f32 to vector<2x1x8x20xf32>
      %194 = arith.mulf %192, %193 : vector<2x1x8x20xf32>
      %195 = arith.addf %190, %194 : vector<2x1x8x20xf32>
      %c214 = arith.constant 214 : index
      %196 = memref.load %arg1[%c214] : memref<400xf32, #tpu.memory_space<smem>>
      %197 = vector.extract_strided_slice %175 {offsets = [0, 0, 0, 4], sizes = [2, 1, 8, 20], strides = [1, 1, 1, 1]} : vector<2x1x8x24xf32> to vector<2x1x8x20xf32>
      %198 = vector.broadcast %196 : f32 to vector<2x1x8x20xf32>
      %199 = arith.mulf %197, %198 : vector<2x1x8x20xf32>
      %200 = arith.addf %195, %199 : vector<2x1x8x20xf32>
      %c3_i32_88 = arith.constant 3 : i32
      %201 = arith.addi %113, %c3_i32_88 : i32
      %c0_89 = arith.constant 0 : index
      %c0_90 = arith.constant 0 : index
      %202 = arith.index_cast %201 : i32 to index
      %c0_91 = arith.constant 0 : index
      %203 = vector.load %arg0[%c0_89, %c0_90, %202, %c0_91] : memref<2x4x24x24xf32, #tpu.memory_space<vmem>>, vector<2x1x8x24xf32>
      %c215 = arith.constant 215 : index
      %204 = memref.load %arg1[%c215] : memref<400xf32, #tpu.memory_space<smem>>
      %205 = vector.extract_strided_slice %203 {offsets = [0, 0, 0, 0], sizes = [2, 1, 8, 20], strides = [1, 1, 1, 1]} : vector<2x1x8x24xf32> to vector<2x1x8x20xf32>
      %206 = vector.broadcast %204 : f32 to vector<2x1x8x20xf32>
      %207 = arith.mulf %205, %206 : vector<2x1x8x20xf32>
      %208 = arith.addf %200, %207 : vector<2x1x8x20xf32>
      %c216 = arith.constant 216 : index
      %209 = memref.load %arg1[%c216] : memref<400xf32, #tpu.memory_space<smem>>
      %210 = vector.extract_strided_slice %203 {offsets = [0, 0, 0, 1], sizes = [2, 1, 8, 20], strides = [1, 1, 1, 1]} : vector<2x1x8x24xf32> to vector<2x1x8x20xf32>
      %211 = vector.broadcast %209 : f32 to vector<2x1x8x20xf32>
      %212 = arith.mulf %210, %211 : vector<2x1x8x20xf32>
      %213 = arith.addf %208, %212 : vector<2x1x8x20xf32>
      %c217 = arith.constant 217 : index
      %214 = memref.load %arg1[%c217] : memref<400xf32, #tpu.memory_space<smem>>
      %215 = vector.extract_strided_slice %203 {offsets = [0, 0, 0, 2], sizes = [2, 1, 8, 20], strides = [1, 1, 1, 1]} : vector<2x1x8x24xf32> to vector<2x1x8x20xf32>
      %216 = vector.broadcast %214 : f32 to vector<2x1x8x20xf32>
      %217 = arith.mulf %215, %216 : vector<2x1x8x20xf32>
      %218 = arith.addf %213, %217 : vector<2x1x8x20xf32>
      %c218 = arith.constant 218 : index
      %219 = memref.load %arg1[%c218] : memref<400xf32, #tpu.memory_space<smem>>
      %220 = vector.extract_strided_slice %203 {offsets = [0, 0, 0, 3], sizes = [2, 1, 8, 20], strides = [1, 1, 1, 1]} : vector<2x1x8x24xf32> to vector<2x1x8x20xf32>
      %221 = vector.broadcast %219 : f32 to vector<2x1x8x20xf32>
      %222 = arith.mulf %220, %221 : vector<2x1x8x20xf32>
      %223 = arith.addf %218, %222 : vector<2x1x8x20xf32>
      %c219 = arith.constant 219 : index
      %224 = memref.load %arg1[%c219] : memref<400xf32, #tpu.memory_space<smem>>
      %225 = vector.extract_strided_slice %203 {offsets = [0, 0, 0, 4], sizes = [2, 1, 8, 20], strides = [1, 1, 1, 1]} : vector<2x1x8x24xf32> to vector<2x1x8x20xf32>
      %226 = vector.broadcast %224 : f32 to vector<2x1x8x20xf32>
      %227 = arith.mulf %225, %226 : vector<2x1x8x20xf32>
      %228 = arith.addf %223, %227 : vector<2x1x8x20xf32>
      %c4_i32 = arith.constant 4 : i32
      %229 = arith.addi %113, %c4_i32 : i32
      %c0_92 = arith.constant 0 : index
      %c0_93 = arith.constant 0 : index
      %230 = arith.index_cast %229 : i32 to index
      %c0_94 = arith.constant 0 : index
      %231 = vector.load %arg0[%c0_92, %c0_93, %230, %c0_94] : memref<2x4x24x24xf32, #tpu.memory_space<vmem>>, vector<2x1x8x24xf32>
      %c220 = arith.constant 220 : index
      %232 = memref.load %arg1[%c220] : memref<400xf32, #tpu.memory_space<smem>>
      %233 = vector.extract_strided_slice %231 {offsets = [0, 0, 0, 0], sizes = [2, 1, 8, 20], strides = [1, 1, 1, 1]} : vector<2x1x8x24xf32> to vector<2x1x8x20xf32>
      %234 = vector.broadcast %232 : f32 to vector<2x1x8x20xf32>
      %235 = arith.mulf %233, %234 : vector<2x1x8x20xf32>
      %236 = arith.addf %228, %235 : vector<2x1x8x20xf32>
      %c221 = arith.constant 221 : index
      %237 = memref.load %arg1[%c221] : memref<400xf32, #tpu.memory_space<smem>>
      %238 = vector.extract_strided_slice %231 {offsets = [0, 0, 0, 1], sizes = [2, 1, 8, 20], strides = [1, 1, 1, 1]} : vector<2x1x8x24xf32> to vector<2x1x8x20xf32>
      %239 = vector.broadcast %237 : f32 to vector<2x1x8x20xf32>
      %240 = arith.mulf %238, %239 : vector<2x1x8x20xf32>
      %241 = arith.addf %236, %240 : vector<2x1x8x20xf32>
      %c222 = arith.constant 222 : index
      %242 = memref.load %arg1[%c222] : memref<400xf32, #tpu.memory_space<smem>>
      %243 = vector.extract_strided_slice %231 {offsets = [0, 0, 0, 2], sizes = [2, 1, 8, 20], strides = [1, 1, 1, 1]} : vector<2x1x8x24xf32> to vector<2x1x8x20xf32>
      %244 = vector.broadcast %242 : f32 to vector<2x1x8x20xf32>
      %245 = arith.mulf %243, %244 : vector<2x1x8x20xf32>
      %246 = arith.addf %241, %245 : vector<2x1x8x20xf32>
      %c223 = arith.constant 223 : index
      %247 = memref.load %arg1[%c223] : memref<400xf32, #tpu.memory_space<smem>>
      %248 = vector.extract_strided_slice %231 {offsets = [0, 0, 0, 3], sizes = [2, 1, 8, 20], strides = [1, 1, 1, 1]} : vector<2x1x8x24xf32> to vector<2x1x8x20xf32>
      %249 = vector.broadcast %247 : f32 to vector<2x1x8x20xf32>
      %250 = arith.mulf %248, %249 : vector<2x1x8x20xf32>
      %251 = arith.addf %246, %250 : vector<2x1x8x20xf32>
      %c224 = arith.constant 224 : index
      %252 = memref.load %arg1[%c224] : memref<400xf32, #tpu.memory_space<smem>>
      %253 = vector.extract_strided_slice %231 {offsets = [0, 0, 0, 4], sizes = [2, 1, 8, 20], strides = [1, 1, 1, 1]} : vector<2x1x8x24xf32> to vector<2x1x8x20xf32>
      %254 = vector.broadcast %252 : f32 to vector<2x1x8x20xf32>
      %255 = arith.mulf %253, %254 : vector<2x1x8x20xf32>
      %256 = arith.addf %251, %255 : vector<2x1x8x20xf32>
      %c0_i32_95 = arith.constant 0 : i32
      %257 = arith.addi %113, %c0_i32_95 : i32
      %c0_96 = arith.constant 0 : index
      %c1_97 = arith.constant 1 : index
      %258 = arith.index_cast %257 : i32 to index
      %c0_98 = arith.constant 0 : index
      %259 = vector.load %arg0[%c0_96, %c1_97, %258, %c0_98] : memref<2x4x24x24xf32, #tpu.memory_space<vmem>>, vector<2x1x8x24xf32>
      %c225 = arith.constant 225 : index
      %260 = memref.load %arg1[%c225] : memref<400xf32, #tpu.memory_space<smem>>
      %261 = vector.extract_strided_slice %259 {offsets = [0, 0, 0, 0], sizes = [2, 1, 8, 20], strides = [1, 1, 1, 1]} : vector<2x1x8x24xf32> to vector<2x1x8x20xf32>
      %262 = vector.broadcast %260 : f32 to vector<2x1x8x20xf32>
      %263 = arith.mulf %261, %262 : vector<2x1x8x20xf32>
      %264 = arith.addf %256, %263 : vector<2x1x8x20xf32>
      %c226 = arith.constant 226 : index
      %265 = memref.load %arg1[%c226] : memref<400xf32, #tpu.memory_space<smem>>
      %266 = vector.extract_strided_slice %259 {offsets = [0, 0, 0, 1], sizes = [2, 1, 8, 20], strides = [1, 1, 1, 1]} : vector<2x1x8x24xf32> to vector<2x1x8x20xf32>
      %267 = vector.broadcast %265 : f32 to vector<2x1x8x20xf32>
      %268 = arith.mulf %266, %267 : vector<2x1x8x20xf32>
      %269 = arith.addf %264, %268 : vector<2x1x8x20xf32>
      %c227 = arith.constant 227 : index
      %270 = memref.load %arg1[%c227] : memref<400xf32, #tpu.memory_space<smem>>
      %271 = vector.extract_strided_slice %259 {offsets = [0, 0, 0, 2], sizes = [2, 1, 8, 20], strides = [1, 1, 1, 1]} : vector<2x1x8x24xf32> to vector<2x1x8x20xf32>
      %272 = vector.broadcast %270 : f32 to vector<2x1x8x20xf32>
      %273 = arith.mulf %271, %272 : vector<2x1x8x20xf32>
      %274 = arith.addf %269, %273 : vector<2x1x8x20xf32>
      %c228 = arith.constant 228 : index
      %275 = memref.load %arg1[%c228] : memref<400xf32, #tpu.memory_space<smem>>
      %276 = vector.extract_strided_slice %259 {offsets = [0, 0, 0, 3], sizes = [2, 1, 8, 20], strides = [1, 1, 1, 1]} : vector<2x1x8x24xf32> to vector<2x1x8x20xf32>
      %277 = vector.broadcast %275 : f32 to vector<2x1x8x20xf32>
      %278 = arith.mulf %276, %277 : vector<2x1x8x20xf32>
      %279 = arith.addf %274, %278 : vector<2x1x8x20xf32>
      %c229 = arith.constant 229 : index
      %280 = memref.load %arg1[%c229] : memref<400xf32, #tpu.memory_space<smem>>
      %281 = vector.extract_strided_slice %259 {offsets = [0, 0, 0, 4], sizes = [2, 1, 8, 20], strides = [1, 1, 1, 1]} : vector<2x1x8x24xf32> to vector<2x1x8x20xf32>
      %282 = vector.broadcast %280 : f32 to vector<2x1x8x20xf32>
      %283 = arith.mulf %281, %282 : vector<2x1x8x20xf32>
      %284 = arith.addf %279, %283 : vector<2x1x8x20xf32>
      %c1_i32_99 = arith.constant 1 : i32
      %285 = arith.addi %113, %c1_i32_99 : i32
      %c0_100 = arith.constant 0 : index
      %c1_101 = arith.constant 1 : index
      %286 = arith.index_cast %285 : i32 to index
      %c0_102 = arith.constant 0 : index
      %287 = vector.load %arg0[%c0_100, %c1_101, %286, %c0_102] : memref<2x4x24x24xf32, #tpu.memory_space<vmem>>, vector<2x1x8x24xf32>
      %c230 = arith.constant 230 : index
      %288 = memref.load %arg1[%c230] : memref<400xf32, #tpu.memory_space<smem>>
      %289 = vector.extract_strided_slice %287 {offsets = [0, 0, 0, 0], sizes = [2, 1, 8, 20], strides = [1, 1, 1, 1]} : vector<2x1x8x24xf32> to vector<2x1x8x20xf32>
      %290 = vector.broadcast %288 : f32 to vector<2x1x8x20xf32>
      %291 = arith.mulf %289, %290 : vector<2x1x8x20xf32>
      %292 = arith.addf %284, %291 : vector<2x1x8x20xf32>
      %c231 = arith.constant 231 : index
      %293 = memref.load %arg1[%c231] : memref<400xf32, #tpu.memory_space<smem>>
      %294 = vector.extract_strided_slice %287 {offsets = [0, 0, 0, 1], sizes = [2, 1, 8, 20], strides = [1, 1, 1, 1]} : vector<2x1x8x24xf32> to vector<2x1x8x20xf32>
      %295 = vector.broadcast %293 : f32 to vector<2x1x8x20xf32>
      %296 = arith.mulf %294, %295 : vector<2x1x8x20xf32>
      %297 = arith.addf %292, %296 : vector<2x1x8x20xf32>
      %c232 = arith.constant 232 : index
      %298 = memref.load %arg1[%c232] : memref<400xf32, #tpu.memory_space<smem>>
      %299 = vector.extract_strided_slice %287 {offsets = [0, 0, 0, 2], sizes = [2, 1, 8, 20], strides = [1, 1, 1, 1]} : vector<2x1x8x24xf32> to vector<2x1x8x20xf32>
      %300 = vector.broadcast %298 : f32 to vector<2x1x8x20xf32>
      %301 = arith.mulf %299, %300 : vector<2x1x8x20xf32>
      %302 = arith.addf %297, %301 : vector<2x1x8x20xf32>
      %c233 = arith.constant 233 : index
      %303 = memref.load %arg1[%c233] : memref<400xf32, #tpu.memory_space<smem>>
      %304 = vector.extract_strided_slice %287 {offsets = [0, 0, 0, 3], sizes = [2, 1, 8, 20], strides = [1, 1, 1, 1]} : vector<2x1x8x24xf32> to vector<2x1x8x20xf32>
      %305 = vector.broadcast %303 : f32 to vector<2x1x8x20xf32>
      %306 = arith.mulf %304, %305 : vector<2x1x8x20xf32>
      %307 = arith.addf %302, %306 : vector<2x1x8x20xf32>
      %c234 = arith.constant 234 : index
      %308 = memref.load %arg1[%c234] : memref<400xf32, #tpu.memory_space<smem>>
      %309 = vector.extract_strided_slice %287 {offsets = [0, 0, 0, 4], sizes = [2, 1, 8, 20], strides = [1, 1, 1, 1]} : vector<2x1x8x24xf32> to vector<2x1x8x20xf32>
      %310 = vector.broadcast %308 : f32 to vector<2x1x8x20xf32>
      %311 = arith.mulf %309, %310 : vector<2x1x8x20xf32>
      %312 = arith.addf %307, %311 : vector<2x1x8x20xf32>
      %c2_i32_103 = arith.constant 2 : i32
      %313 = arith.addi %113, %c2_i32_103 : i32
      %c0_104 = arith.constant 0 : index
      %c1_105 = arith.constant 1 : index
      %314 = arith.index_cast %313 : i32 to index
      %c0_106 = arith.constant 0 : index
      %315 = vector.load %arg0[%c0_104, %c1_105, %314, %c0_106] : memref<2x4x24x24xf32, #tpu.memory_space<vmem>>, vector<2x1x8x24xf32>
      %c235 = arith.constant 235 : index
      %316 = memref.load %arg1[%c235] : memref<400xf32, #tpu.memory_space<smem>>
      %317 = vector.extract_strided_slice %315 {offsets = [0, 0, 0, 0], sizes = [2, 1, 8, 20], strides = [1, 1, 1, 1]} : vector<2x1x8x24xf32> to vector<2x1x8x20xf32>
      %318 = vector.broadcast %316 : f32 to vector<2x1x8x20xf32>
      %319 = arith.mulf %317, %318 : vector<2x1x8x20xf32>
      %320 = arith.addf %312, %319 : vector<2x1x8x20xf32>
      %c236 = arith.constant 236 : index
      %321 = memref.load %arg1[%c236] : memref<400xf32, #tpu.memory_space<smem>>
      %322 = vector.extract_strided_slice %315 {offsets = [0, 0, 0, 1], sizes = [2, 1, 8, 20], strides = [1, 1, 1, 1]} : vector<2x1x8x24xf32> to vector<2x1x8x20xf32>
      %323 = vector.broadcast %321 : f32 to vector<2x1x8x20xf32>
      %324 = arith.mulf %322, %323 : vector<2x1x8x20xf32>
      %325 = arith.addf %320, %324 : vector<2x1x8x20xf32>
      %c237 = arith.constant 237 : index
      %326 = memref.load %arg1[%c237] : memref<400xf32, #tpu.memory_space<smem>>
      %327 = vector.extract_strided_slice %315 {offsets = [0, 0, 0, 2], sizes = [2, 1, 8, 20], strides = [1, 1, 1, 1]} : vector<2x1x8x24xf32> to vector<2x1x8x20xf32>
      %328 = vector.broadcast %326 : f32 to vector<2x1x8x20xf32>
      %329 = arith.mulf %327, %328 : vector<2x1x8x20xf32>
      %330 = arith.addf %325, %329 : vector<2x1x8x20xf32>
      %c238 = arith.constant 238 : index
      %331 = memref.load %arg1[%c238] : memref<400xf32, #tpu.memory_space<smem>>
      %332 = vector.extract_strided_slice %315 {offsets = [0, 0, 0, 3], sizes = [2, 1, 8, 20], strides = [1, 1, 1, 1]} : vector<2x1x8x24xf32> to vector<2x1x8x20xf32>
      %333 = vector.broadcast %331 : f32 to vector<2x1x8x20xf32>
      %334 = arith.mulf %332, %333 : vector<2x1x8x20xf32>
      %335 = arith.addf %330, %334 : vector<2x1x8x20xf32>
      %c239 = arith.constant 239 : index
      %336 = memref.load %arg1[%c239] : memref<400xf32, #tpu.memory_space<smem>>
      %337 = vector.extract_strided_slice %315 {offsets = [0, 0, 0, 4], sizes = [2, 1, 8, 20], strides = [1, 1, 1, 1]} : vector<2x1x8x24xf32> to vector<2x1x8x20xf32>
      %338 = vector.broadcast %336 : f32 to vector<2x1x8x20xf32>
      %339 = arith.mulf %337, %338 : vector<2x1x8x20xf32>
      %340 = arith.addf %335, %339 : vector<2x1x8x20xf32>
      %c3_i32_107 = arith.constant 3 : i32
      %341 = arith.addi %113, %c3_i32_107 : i32
      %c0_108 = arith.constant 0 : index
      %c1_109 = arith.constant 1 : index
      %342 = arith.index_cast %341 : i32 to index
      %c0_110 = arith.constant 0 : index
      %343 = vector.load %arg0[%c0_108, %c1_109, %342, %c0_110] : memref<2x4x24x24xf32, #tpu.memory_space<vmem>>, vector<2x1x8x24xf32>
      %c240 = arith.constant 240 : index
      %344 = memref.load %arg1[%c240] : memref<400xf32, #tpu.memory_space<smem>>
      %345 = vector.extract_strided_slice %343 {offsets = [0, 0, 0, 0], sizes = [2, 1, 8, 20], strides = [1, 1, 1, 1]} : vector<2x1x8x24xf32> to vector<2x1x8x20xf32>
      %346 = vector.broadcast %344 : f32 to vector<2x1x8x20xf32>
      %347 = arith.mulf %345, %346 : vector<2x1x8x20xf32>
      %348 = arith.addf %340, %347 : vector<2x1x8x20xf32>
      %c241 = arith.constant 241 : index
      %349 = memref.load %arg1[%c241] : memref<400xf32, #tpu.memory_space<smem>>
      %350 = vector.extract_strided_slice %343 {offsets = [0, 0, 0, 1], sizes = [2, 1, 8, 20], strides = [1, 1, 1, 1]} : vector<2x1x8x24xf32> to vector<2x1x8x20xf32>
      %351 = vector.broadcast %349 : f32 to vector<2x1x8x20xf32>
      %352 = arith.mulf %350, %351 : vector<2x1x8x20xf32>
      %353 = arith.addf %348, %352 : vector<2x1x8x20xf32>
      %c242 = arith.constant 242 : index
      %354 = memref.load %arg1[%c242] : memref<400xf32, #tpu.memory_space<smem>>
      %355 = vector.extract_strided_slice %343 {offsets = [0, 0, 0, 2], sizes = [2, 1, 8, 20], strides = [1, 1, 1, 1]} : vector<2x1x8x24xf32> to vector<2x1x8x20xf32>
      %356 = vector.broadcast %354 : f32 to vector<2x1x8x20xf32>
      %357 = arith.mulf %355, %356 : vector<2x1x8x20xf32>
      %358 = arith.addf %353, %357 : vector<2x1x8x20xf32>
      %c243 = arith.constant 243 : index
      %359 = memref.load %arg1[%c243] : memref<400xf32, #tpu.memory_space<smem>>
      %360 = vector.extract_strided_slice %343 {offsets = [0, 0, 0, 3], sizes = [2, 1, 8, 20], strides = [1, 1, 1, 1]} : vector<2x1x8x24xf32> to vector<2x1x8x20xf32>
      %361 = vector.broadcast %359 : f32 to vector<2x1x8x20xf32>
      %362 = arith.mulf %360, %361 : vector<2x1x8x20xf32>
      %363 = arith.addf %358, %362 : vector<2x1x8x20xf32>
      %c244 = arith.constant 244 : index
      %364 = memref.load %arg1[%c244] : memref<400xf32, #tpu.memory_space<smem>>
      %365 = vector.extract_strided_slice %343 {offsets = [0, 0, 0, 4], sizes = [2, 1, 8, 20], strides = [1, 1, 1, 1]} : vector<2x1x8x24xf32> to vector<2x1x8x20xf32>
      %366 = vector.broadcast %364 : f32 to vector<2x1x8x20xf32>
      %367 = arith.mulf %365, %366 : vector<2x1x8x20xf32>
      %368 = arith.addf %363, %367 : vector<2x1x8x20xf32>
      %c4_i32_111 = arith.constant 4 : i32
      %369 = arith.addi %113, %c4_i32_111 : i32
      %c0_112 = arith.constant 0 : index
      %c1_113 = arith.constant 1 : index
      %370 = arith.index_cast %369 : i32 to index
      %c0_114 = arith.constant 0 : index
      %371 = vector.load %arg0[%c0_112, %c1_113, %370, %c0_114] : memref<2x4x24x24xf32, #tpu.memory_space<vmem>>, vector<2x1x8x24xf32>
      %c245 = arith.constant 245 : index
      %372 = memref.load %arg1[%c245] : memref<400xf32, #tpu.memory_space<smem>>
      %373 = vector.extract_strided_slice %371 {offsets = [0, 0, 0, 0], sizes = [2, 1, 8, 20], strides = [1, 1, 1, 1]} : vector<2x1x8x24xf32> to vector<2x1x8x20xf32>
      %374 = vector.broadcast %372 : f32 to vector<2x1x8x20xf32>
      %375 = arith.mulf %373, %374 : vector<2x1x8x20xf32>
      %376 = arith.addf %368, %375 : vector<2x1x8x20xf32>
      %c246 = arith.constant 246 : index
      %377 = memref.load %arg1[%c246] : memref<400xf32, #tpu.memory_space<smem>>
      %378 = vector.extract_strided_slice %371 {offsets = [0, 0, 0, 1], sizes = [2, 1, 8, 20], strides = [1, 1, 1, 1]} : vector<2x1x8x24xf32> to vector<2x1x8x20xf32>
      %379 = vector.broadcast %377 : f32 to vector<2x1x8x20xf32>
      %380 = arith.mulf %378, %379 : vector<2x1x8x20xf32>
      %381 = arith.addf %376, %380 : vector<2x1x8x20xf32>
      %c247 = arith.constant 247 : index
      %382 = memref.load %arg1[%c247] : memref<400xf32, #tpu.memory_space<smem>>
      %383 = vector.extract_strided_slice %371 {offsets = [0, 0, 0, 2], sizes = [2, 1, 8, 20], strides = [1, 1, 1, 1]} : vector<2x1x8x24xf32> to vector<2x1x8x20xf32>
      %384 = vector.broadcast %382 : f32 to vector<2x1x8x20xf32>
      %385 = arith.mulf %383, %384 : vector<2x1x8x20xf32>
      %386 = arith.addf %381, %385 : vector<2x1x8x20xf32>
      %c248 = arith.constant 248 : index
      %387 = memref.load %arg1[%c248] : memref<400xf32, #tpu.memory_space<smem>>
      %388 = vector.extract_strided_slice %371 {offsets = [0, 0, 0, 3], sizes = [2, 1, 8, 20], strides = [1, 1, 1, 1]} : vector<2x1x8x24xf32> to vector<2x1x8x20xf32>
      %389 = vector.broadcast %387 : f32 to vector<2x1x8x20xf32>
      %390 = arith.mulf %388, %389 : vector<2x1x8x20xf32>
      %391 = arith.addf %386, %390 : vector<2x1x8x20xf32>
      %c249 = arith.constant 249 : index
      %392 = memref.load %arg1[%c249] : memref<400xf32, #tpu.memory_space<smem>>
      %393 = vector.extract_strided_slice %371 {offsets = [0, 0, 0, 4], sizes = [2, 1, 8, 20], strides = [1, 1, 1, 1]} : vector<2x1x8x24xf32> to vector<2x1x8x20xf32>
      %394 = vector.broadcast %392 : f32 to vector<2x1x8x20xf32>
      %395 = arith.mulf %393, %394 : vector<2x1x8x20xf32>
      %396 = arith.addf %391, %395 : vector<2x1x8x20xf32>
      %c0_i32_115 = arith.constant 0 : i32
      %397 = arith.addi %113, %c0_i32_115 : i32
      %c0_116 = arith.constant 0 : index
      %c2_117 = arith.constant 2 : index
      %398 = arith.index_cast %397 : i32 to index
      %c0_118 = arith.constant 0 : index
      %399 = vector.load %arg0[%c0_116, %c2_117, %398, %c0_118] : memref<2x4x24x24xf32, #tpu.memory_space<vmem>>, vector<2x1x8x24xf32>
      %c250 = arith.constant 250 : index
      %400 = memref.load %arg1[%c250] : memref<400xf32, #tpu.memory_space<smem>>
      %401 = vector.extract_strided_slice %399 {offsets = [0, 0, 0, 0], sizes = [2, 1, 8, 20], strides = [1, 1, 1, 1]} : vector<2x1x8x24xf32> to vector<2x1x8x20xf32>
      %402 = vector.broadcast %400 : f32 to vector<2x1x8x20xf32>
      %403 = arith.mulf %401, %402 : vector<2x1x8x20xf32>
      %404 = arith.addf %396, %403 : vector<2x1x8x20xf32>
      %c251 = arith.constant 251 : index
      %405 = memref.load %arg1[%c251] : memref<400xf32, #tpu.memory_space<smem>>
      %406 = vector.extract_strided_slice %399 {offsets = [0, 0, 0, 1], sizes = [2, 1, 8, 20], strides = [1, 1, 1, 1]} : vector<2x1x8x24xf32> to vector<2x1x8x20xf32>
      %407 = vector.broadcast %405 : f32 to vector<2x1x8x20xf32>
      %408 = arith.mulf %406, %407 : vector<2x1x8x20xf32>
      %409 = arith.addf %404, %408 : vector<2x1x8x20xf32>
      %c252 = arith.constant 252 : index
      %410 = memref.load %arg1[%c252] : memref<400xf32, #tpu.memory_space<smem>>
      %411 = vector.extract_strided_slice %399 {offsets = [0, 0, 0, 2], sizes = [2, 1, 8, 20], strides = [1, 1, 1, 1]} : vector<2x1x8x24xf32> to vector<2x1x8x20xf32>
      %412 = vector.broadcast %410 : f32 to vector<2x1x8x20xf32>
      %413 = arith.mulf %411, %412 : vector<2x1x8x20xf32>
      %414 = arith.addf %409, %413 : vector<2x1x8x20xf32>
      %c253 = arith.constant 253 : index
      %415 = memref.load %arg1[%c253] : memref<400xf32, #tpu.memory_space<smem>>
      %416 = vector.extract_strided_slice %399 {offsets = [0, 0, 0, 3], sizes = [2, 1, 8, 20], strides = [1, 1, 1, 1]} : vector<2x1x8x24xf32> to vector<2x1x8x20xf32>
      %417 = vector.broadcast %415 : f32 to vector<2x1x8x20xf32>
      %418 = arith.mulf %416, %417 : vector<2x1x8x20xf32>
      %419 = arith.addf %414, %418 : vector<2x1x8x20xf32>
      %c254 = arith.constant 254 : index
      %420 = memref.load %arg1[%c254] : memref<400xf32, #tpu.memory_space<smem>>
      %421 = vector.extract_strided_slice %399 {offsets = [0, 0, 0, 4], sizes = [2, 1, 8, 20], strides = [1, 1, 1, 1]} : vector<2x1x8x24xf32> to vector<2x1x8x20xf32>
      %422 = vector.broadcast %420 : f32 to vector<2x1x8x20xf32>
      %423 = arith.mulf %421, %422 : vector<2x1x8x20xf32>
      %424 = arith.addf %419, %423 : vector<2x1x8x20xf32>
      %c1_i32_119 = arith.constant 1 : i32
      %425 = arith.addi %113, %c1_i32_119 : i32
      %c0_120 = arith.constant 0 : index
      %c2_121 = arith.constant 2 : index
      %426 = arith.index_cast %425 : i32 to index
      %c0_122 = arith.constant 0 : index
      %427 = vector.load %arg0[%c0_120, %c2_121, %426, %c0_122] : memref<2x4x24x24xf32, #tpu.memory_space<vmem>>, vector<2x1x8x24xf32>
      %c255 = arith.constant 255 : index
      %428 = memref.load %arg1[%c255] : memref<400xf32, #tpu.memory_space<smem>>
      %429 = vector.extract_strided_slice %427 {offsets = [0, 0, 0, 0], sizes = [2, 1, 8, 20], strides = [1, 1, 1, 1]} : vector<2x1x8x24xf32> to vector<2x1x8x20xf32>
      %430 = vector.broadcast %428 : f32 to vector<2x1x8x20xf32>
      %431 = arith.mulf %429, %430 : vector<2x1x8x20xf32>
      %432 = arith.addf %424, %431 : vector<2x1x8x20xf32>
      %c256 = arith.constant 256 : index
      %433 = memref.load %arg1[%c256] : memref<400xf32, #tpu.memory_space<smem>>
      %434 = vector.extract_strided_slice %427 {offsets = [0, 0, 0, 1], sizes = [2, 1, 8, 20], strides = [1, 1, 1, 1]} : vector<2x1x8x24xf32> to vector<2x1x8x20xf32>
      %435 = vector.broadcast %433 : f32 to vector<2x1x8x20xf32>
      %436 = arith.mulf %434, %435 : vector<2x1x8x20xf32>
      %437 = arith.addf %432, %436 : vector<2x1x8x20xf32>
      %c257 = arith.constant 257 : index
      %438 = memref.load %arg1[%c257] : memref<400xf32, #tpu.memory_space<smem>>
      %439 = vector.extract_strided_slice %427 {offsets = [0, 0, 0, 2], sizes = [2, 1, 8, 20], strides = [1, 1, 1, 1]} : vector<2x1x8x24xf32> to vector<2x1x8x20xf32>
      %440 = vector.broadcast %438 : f32 to vector<2x1x8x20xf32>
      %441 = arith.mulf %439, %440 : vector<2x1x8x20xf32>
      %442 = arith.addf %437, %441 : vector<2x1x8x20xf32>
      %c258 = arith.constant 258 : index
      %443 = memref.load %arg1[%c258] : memref<400xf32, #tpu.memory_space<smem>>
      %444 = vector.extract_strided_slice %427 {offsets = [0, 0, 0, 3], sizes = [2, 1, 8, 20], strides = [1, 1, 1, 1]} : vector<2x1x8x24xf32> to vector<2x1x8x20xf32>
      %445 = vector.broadcast %443 : f32 to vector<2x1x8x20xf32>
      %446 = arith.mulf %444, %445 : vector<2x1x8x20xf32>
      %447 = arith.addf %442, %446 : vector<2x1x8x20xf32>
      %c259 = arith.constant 259 : index
      %448 = memref.load %arg1[%c259] : memref<400xf32, #tpu.memory_space<smem>>
      %449 = vector.extract_strided_slice %427 {offsets = [0, 0, 0, 4], sizes = [2, 1, 8, 20], strides = [1, 1, 1, 1]} : vector<2x1x8x24xf32> to vector<2x1x8x20xf32>
      %450 = vector.broadcast %448 : f32 to vector<2x1x8x20xf32>
      %451 = arith.mulf %449, %450 : vector<2x1x8x20xf32>
      %452 = arith.addf %447, %451 : vector<2x1x8x20xf32>
      %c2_i32_123 = arith.constant 2 : i32
      %453 = arith.addi %113, %c2_i32_123 : i32
      %c0_124 = arith.constant 0 : index
      %c2_125 = arith.constant 2 : index
      %454 = arith.index_cast %453 : i32 to index
      %c0_126 = arith.constant 0 : index
      %455 = vector.load %arg0[%c0_124, %c2_125, %454, %c0_126] : memref<2x4x24x24xf32, #tpu.memory_space<vmem>>, vector<2x1x8x24xf32>
      %c260 = arith.constant 260 : index
      %456 = memref.load %arg1[%c260] : memref<400xf32, #tpu.memory_space<smem>>
      %457 = vector.extract_strided_slice %455 {offsets = [0, 0, 0, 0], sizes = [2, 1, 8, 20], strides = [1, 1, 1, 1]} : vector<2x1x8x24xf32> to vector<2x1x8x20xf32>
      %458 = vector.broadcast %456 : f32 to vector<2x1x8x20xf32>
      %459 = arith.mulf %457, %458 : vector<2x1x8x20xf32>
      %460 = arith.addf %452, %459 : vector<2x1x8x20xf32>
      %c261 = arith.constant 261 : index
      %461 = memref.load %arg1[%c261] : memref<400xf32, #tpu.memory_space<smem>>
      %462 = vector.extract_strided_slice %455 {offsets = [0, 0, 0, 1], sizes = [2, 1, 8, 20], strides = [1, 1, 1, 1]} : vector<2x1x8x24xf32> to vector<2x1x8x20xf32>
      %463 = vector.broadcast %461 : f32 to vector<2x1x8x20xf32>
      %464 = arith.mulf %462, %463 : vector<2x1x8x20xf32>
      %465 = arith.addf %460, %464 : vector<2x1x8x20xf32>
      %c262 = arith.constant 262 : index
      %466 = memref.load %arg1[%c262] : memref<400xf32, #tpu.memory_space<smem>>
      %467 = vector.extract_strided_slice %455 {offsets = [0, 0, 0, 2], sizes = [2, 1, 8, 20], strides = [1, 1, 1, 1]} : vector<2x1x8x24xf32> to vector<2x1x8x20xf32>
      %468 = vector.broadcast %466 : f32 to vector<2x1x8x20xf32>
      %469 = arith.mulf %467, %468 : vector<2x1x8x20xf32>
      %470 = arith.addf %465, %469 : vector<2x1x8x20xf32>
      %c263 = arith.constant 263 : index
      %471 = memref.load %arg1[%c263] : memref<400xf32, #tpu.memory_space<smem>>
      %472 = vector.extract_strided_slice %455 {offsets = [0, 0, 0, 3], sizes = [2, 1, 8, 20], strides = [1, 1, 1, 1]} : vector<2x1x8x24xf32> to vector<2x1x8x20xf32>
      %473 = vector.broadcast %471 : f32 to vector<2x1x8x20xf32>
      %474 = arith.mulf %472, %473 : vector<2x1x8x20xf32>
      %475 = arith.addf %470, %474 : vector<2x1x8x20xf32>
      %c264 = arith.constant 264 : index
      %476 = memref.load %arg1[%c264] : memref<400xf32, #tpu.memory_space<smem>>
      %477 = vector.extract_strided_slice %455 {offsets = [0, 0, 0, 4], sizes = [2, 1, 8, 20], strides = [1, 1, 1, 1]} : vector<2x1x8x24xf32> to vector<2x1x8x20xf32>
      %478 = vector.broadcast %476 : f32 to vector<2x1x8x20xf32>
      %479 = arith.mulf %477, %478 : vector<2x1x8x20xf32>
      %480 = arith.addf %475, %479 : vector<2x1x8x20xf32>
      %c3_i32_127 = arith.constant 3 : i32
      %481 = arith.addi %113, %c3_i32_127 : i32
      %c0_128 = arith.constant 0 : index
      %c2_129 = arith.constant 2 : index
      %482 = arith.index_cast %481 : i32 to index
      %c0_130 = arith.constant 0 : index
      %483 = vector.load %arg0[%c0_128, %c2_129, %482, %c0_130] : memref<2x4x24x24xf32, #tpu.memory_space<vmem>>, vector<2x1x8x24xf32>
      %c265 = arith.constant 265 : index
      %484 = memref.load %arg1[%c265] : memref<400xf32, #tpu.memory_space<smem>>
      %485 = vector.extract_strided_slice %483 {offsets = [0, 0, 0, 0], sizes = [2, 1, 8, 20], strides = [1, 1, 1, 1]} : vector<2x1x8x24xf32> to vector<2x1x8x20xf32>
      %486 = vector.broadcast %484 : f32 to vector<2x1x8x20xf32>
      %487 = arith.mulf %485, %486 : vector<2x1x8x20xf32>
      %488 = arith.addf %480, %487 : vector<2x1x8x20xf32>
      %c266 = arith.constant 266 : index
      %489 = memref.load %arg1[%c266] : memref<400xf32, #tpu.memory_space<smem>>
      %490 = vector.extract_strided_slice %483 {offsets = [0, 0, 0, 1], sizes = [2, 1, 8, 20], strides = [1, 1, 1, 1]} : vector<2x1x8x24xf32> to vector<2x1x8x20xf32>
      %491 = vector.broadcast %489 : f32 to vector<2x1x8x20xf32>
      %492 = arith.mulf %490, %491 : vector<2x1x8x20xf32>
      %493 = arith.addf %488, %492 : vector<2x1x8x20xf32>
      %c267 = arith.constant 267 : index
      %494 = memref.load %arg1[%c267] : memref<400xf32, #tpu.memory_space<smem>>
      %495 = vector.extract_strided_slice %483 {offsets = [0, 0, 0, 2], sizes = [2, 1, 8, 20], strides = [1, 1, 1, 1]} : vector<2x1x8x24xf32> to vector<2x1x8x20xf32>
      %496 = vector.broadcast %494 : f32 to vector<2x1x8x20xf32>
      %497 = arith.mulf %495, %496 : vector<2x1x8x20xf32>
      %498 = arith.addf %493, %497 : vector<2x1x8x20xf32>
      %c268 = arith.constant 268 : index
      %499 = memref.load %arg1[%c268] : memref<400xf32, #tpu.memory_space<smem>>
      %500 = vector.extract_strided_slice %483 {offsets = [0, 0, 0, 3], sizes = [2, 1, 8, 20], strides = [1, 1, 1, 1]} : vector<2x1x8x24xf32> to vector<2x1x8x20xf32>
      %501 = vector.broadcast %499 : f32 to vector<2x1x8x20xf32>
      %502 = arith.mulf %500, %501 : vector<2x1x8x20xf32>
      %503 = arith.addf %498, %502 : vector<2x1x8x20xf32>
      %c269 = arith.constant 269 : index
      %504 = memref.load %arg1[%c269] : memref<400xf32, #tpu.memory_space<smem>>
      %505 = vector.extract_strided_slice %483 {offsets = [0, 0, 0, 4], sizes = [2, 1, 8, 20], strides = [1, 1, 1, 1]} : vector<2x1x8x24xf32> to vector<2x1x8x20xf32>
      %506 = vector.broadcast %504 : f32 to vector<2x1x8x20xf32>
      %507 = arith.mulf %505, %506 : vector<2x1x8x20xf32>
      %508 = arith.addf %503, %507 : vector<2x1x8x20xf32>
      %c4_i32_131 = arith.constant 4 : i32
      %509 = arith.addi %113, %c4_i32_131 : i32
      %c0_132 = arith.constant 0 : index
      %c2_133 = arith.constant 2 : index
      %510 = arith.index_cast %509 : i32 to index
      %c0_134 = arith.constant 0 : index
      %511 = vector.load %arg0[%c0_132, %c2_133, %510, %c0_134] : memref<2x4x24x24xf32, #tpu.memory_space<vmem>>, vector<2x1x8x24xf32>
      %c270 = arith.constant 270 : index
      %512 = memref.load %arg1[%c270] : memref<400xf32, #tpu.memory_space<smem>>
      %513 = vector.extract_strided_slice %511 {offsets = [0, 0, 0, 0], sizes = [2, 1, 8, 20], strides = [1, 1, 1, 1]} : vector<2x1x8x24xf32> to vector<2x1x8x20xf32>
      %514 = vector.broadcast %512 : f32 to vector<2x1x8x20xf32>
      %515 = arith.mulf %513, %514 : vector<2x1x8x20xf32>
      %516 = arith.addf %508, %515 : vector<2x1x8x20xf32>
      %c271 = arith.constant 271 : index
      %517 = memref.load %arg1[%c271] : memref<400xf32, #tpu.memory_space<smem>>
      %518 = vector.extract_strided_slice %511 {offsets = [0, 0, 0, 1], sizes = [2, 1, 8, 20], strides = [1, 1, 1, 1]} : vector<2x1x8x24xf32> to vector<2x1x8x20xf32>
      %519 = vector.broadcast %517 : f32 to vector<2x1x8x20xf32>
      %520 = arith.mulf %518, %519 : vector<2x1x8x20xf32>
      %521 = arith.addf %516, %520 : vector<2x1x8x20xf32>
      %c272 = arith.constant 272 : index
      %522 = memref.load %arg1[%c272] : memref<400xf32, #tpu.memory_space<smem>>
      %523 = vector.extract_strided_slice %511 {offsets = [0, 0, 0, 2], sizes = [2, 1, 8, 20], strides = [1, 1, 1, 1]} : vector<2x1x8x24xf32> to vector<2x1x8x20xf32>
      %524 = vector.broadcast %522 : f32 to vector<2x1x8x20xf32>
      %525 = arith.mulf %523, %524 : vector<2x1x8x20xf32>
      %526 = arith.addf %521, %525 : vector<2x1x8x20xf32>
      %c273 = arith.constant 273 : index
      %527 = memref.load %arg1[%c273] : memref<400xf32, #tpu.memory_space<smem>>
      %528 = vector.extract_strided_slice %511 {offsets = [0, 0, 0, 3], sizes = [2, 1, 8, 20], strides = [1, 1, 1, 1]} : vector<2x1x8x24xf32> to vector<2x1x8x20xf32>
      %529 = vector.broadcast %527 : f32 to vector<2x1x8x20xf32>
      %530 = arith.mulf %528, %529 : vector<2x1x8x20xf32>
      %531 = arith.addf %526, %530 : vector<2x1x8x20xf32>
      %c274 = arith.constant 274 : index
      %532 = memref.load %arg1[%c274] : memref<400xf32, #tpu.memory_space<smem>>
      %533 = vector.extract_strided_slice %511 {offsets = [0, 0, 0, 4], sizes = [2, 1, 8, 20], strides = [1, 1, 1, 1]} : vector<2x1x8x24xf32> to vector<2x1x8x20xf32>
      %534 = vector.broadcast %532 : f32 to vector<2x1x8x20xf32>
      %535 = arith.mulf %533, %534 : vector<2x1x8x20xf32>
      %536 = arith.addf %531, %535 : vector<2x1x8x20xf32>
      %c0_i32_135 = arith.constant 0 : i32
      %537 = arith.addi %113, %c0_i32_135 : i32
      %c0_136 = arith.constant 0 : index
      %c3_137 = arith.constant 3 : index
      %538 = arith.index_cast %537 : i32 to index
      %c0_138 = arith.constant 0 : index
      %539 = vector.load %arg0[%c0_136, %c3_137, %538, %c0_138] : memref<2x4x24x24xf32, #tpu.memory_space<vmem>>, vector<2x1x8x24xf32>
      %c275 = arith.constant 275 : index
      %540 = memref.load %arg1[%c275] : memref<400xf32, #tpu.memory_space<smem>>
      %541 = vector.extract_strided_slice %539 {offsets = [0, 0, 0, 0], sizes = [2, 1, 8, 20], strides = [1, 1, 1, 1]} : vector<2x1x8x24xf32> to vector<2x1x8x20xf32>
      %542 = vector.broadcast %540 : f32 to vector<2x1x8x20xf32>
      %543 = arith.mulf %541, %542 : vector<2x1x8x20xf32>
      %544 = arith.addf %536, %543 : vector<2x1x8x20xf32>
      %c276 = arith.constant 276 : index
      %545 = memref.load %arg1[%c276] : memref<400xf32, #tpu.memory_space<smem>>
      %546 = vector.extract_strided_slice %539 {offsets = [0, 0, 0, 1], sizes = [2, 1, 8, 20], strides = [1, 1, 1, 1]} : vector<2x1x8x24xf32> to vector<2x1x8x20xf32>
      %547 = vector.broadcast %545 : f32 to vector<2x1x8x20xf32>
      %548 = arith.mulf %546, %547 : vector<2x1x8x20xf32>
      %549 = arith.addf %544, %548 : vector<2x1x8x20xf32>
      %c277 = arith.constant 277 : index
      %550 = memref.load %arg1[%c277] : memref<400xf32, #tpu.memory_space<smem>>
      %551 = vector.extract_strided_slice %539 {offsets = [0, 0, 0, 2], sizes = [2, 1, 8, 20], strides = [1, 1, 1, 1]} : vector<2x1x8x24xf32> to vector<2x1x8x20xf32>
      %552 = vector.broadcast %550 : f32 to vector<2x1x8x20xf32>
      %553 = arith.mulf %551, %552 : vector<2x1x8x20xf32>
      %554 = arith.addf %549, %553 : vector<2x1x8x20xf32>
      %c278 = arith.constant 278 : index
      %555 = memref.load %arg1[%c278] : memref<400xf32, #tpu.memory_space<smem>>
      %556 = vector.extract_strided_slice %539 {offsets = [0, 0, 0, 3], sizes = [2, 1, 8, 20], strides = [1, 1, 1, 1]} : vector<2x1x8x24xf32> to vector<2x1x8x20xf32>
      %557 = vector.broadcast %555 : f32 to vector<2x1x8x20xf32>
      %558 = arith.mulf %556, %557 : vector<2x1x8x20xf32>
      %559 = arith.addf %554, %558 : vector<2x1x8x20xf32>
      %c279 = arith.constant 279 : index
      %560 = memref.load %arg1[%c279] : memref<400xf32, #tpu.memory_space<smem>>
      %561 = vector.extract_strided_slice %539 {offsets = [0, 0, 0, 4], sizes = [2, 1, 8, 20], strides = [1, 1, 1, 1]} : vector<2x1x8x24xf32> to vector<2x1x8x20xf32>
      %562 = vector.broadcast %560 : f32 to vector<2x1x8x20xf32>
      %563 = arith.mulf %561, %562 : vector<2x1x8x20xf32>
      %564 = arith.addf %559, %563 : vector<2x1x8x20xf32>
      %c1_i32_139 = arith.constant 1 : i32
      %565 = arith.addi %113, %c1_i32_139 : i32
      %c0_140 = arith.constant 0 : index
      %c3_141 = arith.constant 3 : index
      %566 = arith.index_cast %565 : i32 to index
      %c0_142 = arith.constant 0 : index
      %567 = vector.load %arg0[%c0_140, %c3_141, %566, %c0_142] : memref<2x4x24x24xf32, #tpu.memory_space<vmem>>, vector<2x1x8x24xf32>
      %c280 = arith.constant 280 : index
      %568 = memref.load %arg1[%c280] : memref<400xf32, #tpu.memory_space<smem>>
      %569 = vector.extract_strided_slice %567 {offsets = [0, 0, 0, 0], sizes = [2, 1, 8, 20], strides = [1, 1, 1, 1]} : vector<2x1x8x24xf32> to vector<2x1x8x20xf32>
      %570 = vector.broadcast %568 : f32 to vector<2x1x8x20xf32>
      %571 = arith.mulf %569, %570 : vector<2x1x8x20xf32>
      %572 = arith.addf %564, %571 : vector<2x1x8x20xf32>
      %c281 = arith.constant 281 : index
      %573 = memref.load %arg1[%c281] : memref<400xf32, #tpu.memory_space<smem>>
      %574 = vector.extract_strided_slice %567 {offsets = [0, 0, 0, 1], sizes = [2, 1, 8, 20], strides = [1, 1, 1, 1]} : vector<2x1x8x24xf32> to vector<2x1x8x20xf32>
      %575 = vector.broadcast %573 : f32 to vector<2x1x8x20xf32>
      %576 = arith.mulf %574, %575 : vector<2x1x8x20xf32>
      %577 = arith.addf %572, %576 : vector<2x1x8x20xf32>
      %c282 = arith.constant 282 : index
      %578 = memref.load %arg1[%c282] : memref<400xf32, #tpu.memory_space<smem>>
      %579 = vector.extract_strided_slice %567 {offsets = [0, 0, 0, 2], sizes = [2, 1, 8, 20], strides = [1, 1, 1, 1]} : vector<2x1x8x24xf32> to vector<2x1x8x20xf32>
      %580 = vector.broadcast %578 : f32 to vector<2x1x8x20xf32>
      %581 = arith.mulf %579, %580 : vector<2x1x8x20xf32>
      %582 = arith.addf %577, %581 : vector<2x1x8x20xf32>
      %c283 = arith.constant 283 : index
      %583 = memref.load %arg1[%c283] : memref<400xf32, #tpu.memory_space<smem>>
      %584 = vector.extract_strided_slice %567 {offsets = [0, 0, 0, 3], sizes = [2, 1, 8, 20], strides = [1, 1, 1, 1]} : vector<2x1x8x24xf32> to vector<2x1x8x20xf32>
      %585 = vector.broadcast %583 : f32 to vector<2x1x8x20xf32>
      %586 = arith.mulf %584, %585 : vector<2x1x8x20xf32>
      %587 = arith.addf %582, %586 : vector<2x1x8x20xf32>
      %c284 = arith.constant 284 : index
      %588 = memref.load %arg1[%c284] : memref<400xf32, #tpu.memory_space<smem>>
      %589 = vector.extract_strided_slice %567 {offsets = [0, 0, 0, 4], sizes = [2, 1, 8, 20], strides = [1, 1, 1, 1]} : vector<2x1x8x24xf32> to vector<2x1x8x20xf32>
      %590 = vector.broadcast %588 : f32 to vector<2x1x8x20xf32>
      %591 = arith.mulf %589, %590 : vector<2x1x8x20xf32>
      %592 = arith.addf %587, %591 : vector<2x1x8x20xf32>
      %c2_i32_143 = arith.constant 2 : i32
      %593 = arith.addi %113, %c2_i32_143 : i32
      %c0_144 = arith.constant 0 : index
      %c3_145 = arith.constant 3 : index
      %594 = arith.index_cast %593 : i32 to index
      %c0_146 = arith.constant 0 : index
      %595 = vector.load %arg0[%c0_144, %c3_145, %594, %c0_146] : memref<2x4x24x24xf32, #tpu.memory_space<vmem>>, vector<2x1x8x24xf32>
      %c285 = arith.constant 285 : index
      %596 = memref.load %arg1[%c285] : memref<400xf32, #tpu.memory_space<smem>>
      %597 = vector.extract_strided_slice %595 {offsets = [0, 0, 0, 0], sizes = [2, 1, 8, 20], strides = [1, 1, 1, 1]} : vector<2x1x8x24xf32> to vector<2x1x8x20xf32>
      %598 = vector.broadcast %596 : f32 to vector<2x1x8x20xf32>
      %599 = arith.mulf %597, %598 : vector<2x1x8x20xf32>
      %600 = arith.addf %592, %599 : vector<2x1x8x20xf32>
      %c286 = arith.constant 286 : index
      %601 = memref.load %arg1[%c286] : memref<400xf32, #tpu.memory_space<smem>>
      %602 = vector.extract_strided_slice %595 {offsets = [0, 0, 0, 1], sizes = [2, 1, 8, 20], strides = [1, 1, 1, 1]} : vector<2x1x8x24xf32> to vector<2x1x8x20xf32>
      %603 = vector.broadcast %601 : f32 to vector<2x1x8x20xf32>
      %604 = arith.mulf %602, %603 : vector<2x1x8x20xf32>
      %605 = arith.addf %600, %604 : vector<2x1x8x20xf32>
      %c287 = arith.constant 287 : index
      %606 = memref.load %arg1[%c287] : memref<400xf32, #tpu.memory_space<smem>>
      %607 = vector.extract_strided_slice %595 {offsets = [0, 0, 0, 2], sizes = [2, 1, 8, 20], strides = [1, 1, 1, 1]} : vector<2x1x8x24xf32> to vector<2x1x8x20xf32>
      %608 = vector.broadcast %606 : f32 to vector<2x1x8x20xf32>
      %609 = arith.mulf %607, %608 : vector<2x1x8x20xf32>
      %610 = arith.addf %605, %609 : vector<2x1x8x20xf32>
      %c288 = arith.constant 288 : index
      %611 = memref.load %arg1[%c288] : memref<400xf32, #tpu.memory_space<smem>>
      %612 = vector.extract_strided_slice %595 {offsets = [0, 0, 0, 3], sizes = [2, 1, 8, 20], strides = [1, 1, 1, 1]} : vector<2x1x8x24xf32> to vector<2x1x8x20xf32>
      %613 = vector.broadcast %611 : f32 to vector<2x1x8x20xf32>
      %614 = arith.mulf %612, %613 : vector<2x1x8x20xf32>
      %615 = arith.addf %610, %614 : vector<2x1x8x20xf32>
      %c289 = arith.constant 289 : index
      %616 = memref.load %arg1[%c289] : memref<400xf32, #tpu.memory_space<smem>>
      %617 = vector.extract_strided_slice %595 {offsets = [0, 0, 0, 4], sizes = [2, 1, 8, 20], strides = [1, 1, 1, 1]} : vector<2x1x8x24xf32> to vector<2x1x8x20xf32>
      %618 = vector.broadcast %616 : f32 to vector<2x1x8x20xf32>
      %619 = arith.mulf %617, %618 : vector<2x1x8x20xf32>
      %620 = arith.addf %615, %619 : vector<2x1x8x20xf32>
      %c3_i32_147 = arith.constant 3 : i32
      %621 = arith.addi %113, %c3_i32_147 : i32
      %c0_148 = arith.constant 0 : index
      %c3_149 = arith.constant 3 : index
      %622 = arith.index_cast %621 : i32 to index
      %c0_150 = arith.constant 0 : index
      %623 = vector.load %arg0[%c0_148, %c3_149, %622, %c0_150] : memref<2x4x24x24xf32, #tpu.memory_space<vmem>>, vector<2x1x8x24xf32>
      %c290 = arith.constant 290 : index
      %624 = memref.load %arg1[%c290] : memref<400xf32, #tpu.memory_space<smem>>
      %625 = vector.extract_strided_slice %623 {offsets = [0, 0, 0, 0], sizes = [2, 1, 8, 20], strides = [1, 1, 1, 1]} : vector<2x1x8x24xf32> to vector<2x1x8x20xf32>
      %626 = vector.broadcast %624 : f32 to vector<2x1x8x20xf32>
      %627 = arith.mulf %625, %626 : vector<2x1x8x20xf32>
      %628 = arith.addf %620, %627 : vector<2x1x8x20xf32>
      %c291 = arith.constant 291 : index
      %629 = memref.load %arg1[%c291] : memref<400xf32, #tpu.memory_space<smem>>
      %630 = vector.extract_strided_slice %623 {offsets = [0, 0, 0, 1], sizes = [2, 1, 8, 20], strides = [1, 1, 1, 1]} : vector<2x1x8x24xf32> to vector<2x1x8x20xf32>
      %631 = vector.broadcast %629 : f32 to vector<2x1x8x20xf32>
      %632 = arith.mulf %630, %631 : vector<2x1x8x20xf32>
      %633 = arith.addf %628, %632 : vector<2x1x8x20xf32>
      %c292 = arith.constant 292 : index
      %634 = memref.load %arg1[%c292] : memref<400xf32, #tpu.memory_space<smem>>
      %635 = vector.extract_strided_slice %623 {offsets = [0, 0, 0, 2], sizes = [2, 1, 8, 20], strides = [1, 1, 1, 1]} : vector<2x1x8x24xf32> to vector<2x1x8x20xf32>
      %636 = vector.broadcast %634 : f32 to vector<2x1x8x20xf32>
      %637 = arith.mulf %635, %636 : vector<2x1x8x20xf32>
      %638 = arith.addf %633, %637 : vector<2x1x8x20xf32>
      %c293 = arith.constant 293 : index
      %639 = memref.load %arg1[%c293] : memref<400xf32, #tpu.memory_space<smem>>
      %640 = vector.extract_strided_slice %623 {offsets = [0, 0, 0, 3], sizes = [2, 1, 8, 20], strides = [1, 1, 1, 1]} : vector<2x1x8x24xf32> to vector<2x1x8x20xf32>
      %641 = vector.broadcast %639 : f32 to vector<2x1x8x20xf32>
      %642 = arith.mulf %640, %641 : vector<2x1x8x20xf32>
      %643 = arith.addf %638, %642 : vector<2x1x8x20xf32>
      %c294 = arith.constant 294 : index
      %644 = memref.load %arg1[%c294] : memref<400xf32, #tpu.memory_space<smem>>
      %645 = vector.extract_strided_slice %623 {offsets = [0, 0, 0, 4], sizes = [2, 1, 8, 20], strides = [1, 1, 1, 1]} : vector<2x1x8x24xf32> to vector<2x1x8x20xf32>
      %646 = vector.broadcast %644 : f32 to vector<2x1x8x20xf32>
      %647 = arith.mulf %645, %646 : vector<2x1x8x20xf32>
      %648 = arith.addf %643, %647 : vector<2x1x8x20xf32>
      %c4_i32_151 = arith.constant 4 : i32
      %649 = arith.addi %113, %c4_i32_151 : i32
      %c0_152 = arith.constant 0 : index
      %c3_153 = arith.constant 3 : index
      %650 = arith.index_cast %649 : i32 to index
      %c0_154 = arith.constant 0 : index
      %651 = vector.load %arg0[%c0_152, %c3_153, %650, %c0_154] : memref<2x4x24x24xf32, #tpu.memory_space<vmem>>, vector<2x1x8x24xf32>
      %c295 = arith.constant 295 : index
      %652 = memref.load %arg1[%c295] : memref<400xf32, #tpu.memory_space<smem>>
      %653 = vector.extract_strided_slice %651 {offsets = [0, 0, 0, 0], sizes = [2, 1, 8, 20], strides = [1, 1, 1, 1]} : vector<2x1x8x24xf32> to vector<2x1x8x20xf32>
      %654 = vector.broadcast %652 : f32 to vector<2x1x8x20xf32>
      %655 = arith.mulf %653, %654 : vector<2x1x8x20xf32>
      %656 = arith.addf %648, %655 : vector<2x1x8x20xf32>
      %c296 = arith.constant 296 : index
      %657 = memref.load %arg1[%c296] : memref<400xf32, #tpu.memory_space<smem>>
      %658 = vector.extract_strided_slice %651 {offsets = [0, 0, 0, 1], sizes = [2, 1, 8, 20], strides = [1, 1, 1, 1]} : vector<2x1x8x24xf32> to vector<2x1x8x20xf32>
      %659 = vector.broadcast %657 : f32 to vector<2x1x8x20xf32>
      %660 = arith.mulf %658, %659 : vector<2x1x8x20xf32>
      %661 = arith.addf %656, %660 : vector<2x1x8x20xf32>
      %c297 = arith.constant 297 : index
      %662 = memref.load %arg1[%c297] : memref<400xf32, #tpu.memory_space<smem>>
      %663 = vector.extract_strided_slice %651 {offsets = [0, 0, 0, 2], sizes = [2, 1, 8, 20], strides = [1, 1, 1, 1]} : vector<2x1x8x24xf32> to vector<2x1x8x20xf32>
      %664 = vector.broadcast %662 : f32 to vector<2x1x8x20xf32>
      %665 = arith.mulf %663, %664 : vector<2x1x8x20xf32>
      %666 = arith.addf %661, %665 : vector<2x1x8x20xf32>
      %c298 = arith.constant 298 : index
      %667 = memref.load %arg1[%c298] : memref<400xf32, #tpu.memory_space<smem>>
      %668 = vector.extract_strided_slice %651 {offsets = [0, 0, 0, 3], sizes = [2, 1, 8, 20], strides = [1, 1, 1, 1]} : vector<2x1x8x24xf32> to vector<2x1x8x20xf32>
      %669 = vector.broadcast %667 : f32 to vector<2x1x8x20xf32>
      %670 = arith.mulf %668, %669 : vector<2x1x8x20xf32>
      %671 = arith.addf %666, %670 : vector<2x1x8x20xf32>
      %c299 = arith.constant 299 : index
      %672 = memref.load %arg1[%c299] : memref<400xf32, #tpu.memory_space<smem>>
      %673 = vector.extract_strided_slice %651 {offsets = [0, 0, 0, 4], sizes = [2, 1, 8, 20], strides = [1, 1, 1, 1]} : vector<2x1x8x24xf32> to vector<2x1x8x20xf32>
      %674 = vector.broadcast %672 : f32 to vector<2x1x8x20xf32>
      %675 = arith.mulf %673, %674 : vector<2x1x8x20xf32>
      %676 = arith.addf %671, %675 : vector<2x1x8x20xf32>
      %c0_155 = arith.constant 0 : index
      %c2_156 = arith.constant 2 : index
      %677 = arith.index_cast %113 : i32 to index
      %c0_157 = arith.constant 0 : index
      %678 = vector.load %arg5[%c0_155, %c2_156, %677, %c0_157] : memref<2x4x20x20xf32, #tpu.memory_space<vmem>>, vector<2x1x8x20xf32>
      tpu.vector_store %arg5[%c0_155, %c2_156, %677, %c0_157], %676 {strides = array<i32>} : memref<2x4x20x20xf32, #tpu.memory_space<vmem>>, vector<2x1x8x20xf32>,
    }
    %c3_i32_39 = arith.constant 3 : i32
    %c0_40 = arith.constant 0 : index
    %c2_41 = arith.constant 2 : index
    %c0_42 = arith.constant 0 : index
    %c0_43 = arith.constant 0 : index
    %58 = vector.load %arg5[%c0_40, %c2_41, %c0_42, %c0_43] : memref<2x4x20x20xf32, #tpu.memory_space<vmem>>, vector<2x1x20x20xf32>
    %59 = vector.shape_cast %58 : vector<2x1x20x20xf32> to vector<1x2x1x20x20xf32>
    %cst_44 = arith.constant dense<0.000000e+00> : vector<1xf32>
    %60 = vector.multi_reduction <add>, %59, %cst_44 [1, 2, 3, 4] : vector<1x2x1x20x20xf32> to vector<1xf32>
    %61 = vector.shape_cast %60 : vector<1xf32> to vector<1x1x1x1x1xf32>
    %62 = vector.extract %61[0, 0, 0, 0, 0] : f32 from vector<1x1x1x1x1xf32>
    %cst_45 = arith.constant 8.000000e+02 : f32
    %63 = arith.divf %62, %cst_45 : f32
    %64 = vector.broadcast %63 : f32 to vector<2x1x20x20xf32>
    %65 = arith.subf %58, %64 : vector<2x1x20x20xf32>
    %66 = arith.mulf %65, %65 : vector<2x1x20x20xf32>
    %67 = vector.shape_cast %66 : vector<2x1x20x20xf32> to vector<1x2x1x20x20xf32>
    %cst_46 = arith.constant dense<0.000000e+00> : vector<1xf32>
    %68 = vector.multi_reduction <add>, %67, %cst_46 [1, 2, 3, 4] : vector<1x2x1x20x20xf32> to vector<1xf32>
    %69 = vector.shape_cast %68 : vector<1xf32> to vector<1x1x1x1x1xf32>
    %70 = vector.extract %69[0, 0, 0, 0, 0] : f32 from vector<1x1x1x1x1xf32>
    %cst_47 = arith.constant 8.000000e+02 : f32
    %71 = arith.divf %70, %cst_47 : f32
    %c2_48 = arith.constant 2 : index
    %72 = memref.load %arg3[%c2_48] : memref<4xf32, #tpu.memory_space<smem>>
    %cst_49 = arith.constant 9.99999974E-6 : f32
    %73 = arith.addf %71, %cst_49 : f32
    %74 = math.rsqrt %73 : f32
    %75 = arith.mulf %72, %74 : f32
    %76 = vector.broadcast %75 : f32 to vector<2x1x20x20xf32>
    %77 = arith.mulf %65, %76 : vector<2x1x20x20xf32>
    %c2_50 = arith.constant 2 : index
    %78 = memref.load %arg4[%c2_50] : memref<4xf32, #tpu.memory_space<smem>>
    %79 = vector.broadcast %78 : f32 to vector<2x1x20x20xf32>
    %80 = arith.addf %77, %79 : vector<2x1x20x20xf32>
    %cst_51 = arith.constant 0.000000e+00 : f32
    %81 = vector.broadcast %cst_51 : f32 to vector<2x1x20x20xf32>
    %82 = arith.maximumf %80, %81 : vector<2x1x20x20xf32>
    %c0_52 = arith.constant 0 : index
    %c2_53 = arith.constant 2 : index
    %c0_54 = arith.constant 0 : index
    %c0_55 = arith.constant 0 : index
    %83 = vector.load %arg5[%c0_52, %c2_53, %c0_54, %c0_55] : memref<2x4x20x20xf32, #tpu.memory_space<vmem>>, vector<2x1x20x20xf32>
    tpu.vector_store %arg5[%c0_52, %c2_53, %c0_54, %c0_55], %82 {strides = array<i32>} : memref<2x4x20x20xf32, #tpu.memory_space<vmem>>, vector<2x1x20x20xf32>,
    %c3 = arith.constant 3 : index
    %84 = memref.load %arg2[%c3] : memref<4xf32, #tpu.memory_space<smem>>
    %c0_i32_56 = arith.constant 0 : i32
    %c3_i32_57 = arith.constant 3 : i32
    %85 = arith.addi %c0_i32_56, %c3_i32_57 : i32
    %c1_i32_58 = arith.constant 1 : i32
    scf.for %arg6 = %c0_i32_56 to %85 step %c1_i32_58  : i32 {
      %c8_i32 = arith.constant 8 : i32
      %112 = arith.muli %arg6, %c8_i32 : i32
      %c12_i32 = arith.constant 12 : i32
      %113 = arith.minsi %112, %c12_i32 : i32
      %cst_76 = arith.constant 0.000000e+00 : f32
      %114 = vector.broadcast %cst_76 : f32 to vector<2x1x8x20xf32>
      %115 = vector.broadcast %84 : f32 to vector<2x1x8x20xf32>
      %116 = arith.addf %114, %115 : vector<2x1x8x20xf32>
      %c0_i32_77 = arith.constant 0 : i32
      %117 = arith.addi %113, %c0_i32_77 : i32
      %c0_78 = arith.constant 0 : index
      %c0_79 = arith.constant 0 : index
      %118 = arith.index_cast %117 : i32 to index
      %c0_80 = arith.constant 0 : index
      %119 = vector.load %arg0[%c0_78, %c0_79, %118, %c0_80] : memref<2x4x24x24xf32, #tpu.memory_space<vmem>>, vector<2x1x8x24xf32>
      %c300 = arith.constant 300 : index
      %120 = memref.load %arg1[%c300] : memref<400xf32, #tpu.memory_space<smem>>
      %121 = vector.extract_strided_slice %119 {offsets = [0, 0, 0, 0], sizes = [2, 1, 8, 20], strides = [1, 1, 1, 1]} : vector<2x1x8x24xf32> to vector<2x1x8x20xf32>
      %122 = vector.broadcast %120 : f32 to vector<2x1x8x20xf32>
      %123 = arith.mulf %121, %122 : vector<2x1x8x20xf32>
      %124 = arith.addf %116, %123 : vector<2x1x8x20xf32>
      %c301 = arith.constant 301 : index
      %125 = memref.load %arg1[%c301] : memref<400xf32, #tpu.memory_space<smem>>
      %126 = vector.extract_strided_slice %119 {offsets = [0, 0, 0, 1], sizes = [2, 1, 8, 20], strides = [1, 1, 1, 1]} : vector<2x1x8x24xf32> to vector<2x1x8x20xf32>
      %127 = vector.broadcast %125 : f32 to vector<2x1x8x20xf32>
      %128 = arith.mulf %126, %127 : vector<2x1x8x20xf32>
      %129 = arith.addf %124, %128 : vector<2x1x8x20xf32>
      %c302 = arith.constant 302 : index
      %130 = memref.load %arg1[%c302] : memref<400xf32, #tpu.memory_space<smem>>
      %131 = vector.extract_strided_slice %119 {offsets = [0, 0, 0, 2], sizes = [2, 1, 8, 20], strides = [1, 1, 1, 1]} : vector<2x1x8x24xf32> to vector<2x1x8x20xf32>
      %132 = vector.broadcast %130 : f32 to vector<2x1x8x20xf32>
      %133 = arith.mulf %131, %132 : vector<2x1x8x20xf32>
      %134 = arith.addf %129, %133 : vector<2x1x8x20xf32>
      %c303 = arith.constant 303 : index
      %135 = memref.load %arg1[%c303] : memref<400xf32, #tpu.memory_space<smem>>
      %136 = vector.extract_strided_slice %119 {offsets = [0, 0, 0, 3], sizes = [2, 1, 8, 20], strides = [1, 1, 1, 1]} : vector<2x1x8x24xf32> to vector<2x1x8x20xf32>
      %137 = vector.broadcast %135 : f32 to vector<2x1x8x20xf32>
      %138 = arith.mulf %136, %137 : vector<2x1x8x20xf32>
      %139 = arith.addf %134, %138 : vector<2x1x8x20xf32>
      %c304 = arith.constant 304 : index
      %140 = memref.load %arg1[%c304] : memref<400xf32, #tpu.memory_space<smem>>
      %141 = vector.extract_strided_slice %119 {offsets = [0, 0, 0, 4], sizes = [2, 1, 8, 20], strides = [1, 1, 1, 1]} : vector<2x1x8x24xf32> to vector<2x1x8x20xf32>
      %142 = vector.broadcast %140 : f32 to vector<2x1x8x20xf32>
      %143 = arith.mulf %141, %142 : vector<2x1x8x20xf32>
      %144 = arith.addf %139, %143 : vector<2x1x8x20xf32>
      %c1_i32_81 = arith.constant 1 : i32
      %145 = arith.addi %113, %c1_i32_81 : i32
      %c0_82 = arith.constant 0 : index
      %c0_83 = arith.constant 0 : index
      %146 = arith.index_cast %145 : i32 to index
      %c0_84 = arith.constant 0 : index
      %147 = vector.load %arg0[%c0_82, %c0_83, %146, %c0_84] : memref<2x4x24x24xf32, #tpu.memory_space<vmem>>, vector<2x1x8x24xf32>
      %c305 = arith.constant 305 : index
      %148 = memref.load %arg1[%c305] : memref<400xf32, #tpu.memory_space<smem>>
      %149 = vector.extract_strided_slice %147 {offsets = [0, 0, 0, 0], sizes = [2, 1, 8, 20], strides = [1, 1, 1, 1]} : vector<2x1x8x24xf32> to vector<2x1x8x20xf32>
      %150 = vector.broadcast %148 : f32 to vector<2x1x8x20xf32>
      %151 = arith.mulf %149, %150 : vector<2x1x8x20xf32>
      %152 = arith.addf %144, %151 : vector<2x1x8x20xf32>
      %c306 = arith.constant 306 : index
      %153 = memref.load %arg1[%c306] : memref<400xf32, #tpu.memory_space<smem>>
      %154 = vector.extract_strided_slice %147 {offsets = [0, 0, 0, 1], sizes = [2, 1, 8, 20], strides = [1, 1, 1, 1]} : vector<2x1x8x24xf32> to vector<2x1x8x20xf32>
      %155 = vector.broadcast %153 : f32 to vector<2x1x8x20xf32>
      %156 = arith.mulf %154, %155 : vector<2x1x8x20xf32>
      %157 = arith.addf %152, %156 : vector<2x1x8x20xf32>
      %c307 = arith.constant 307 : index
      %158 = memref.load %arg1[%c307] : memref<400xf32, #tpu.memory_space<smem>>
      %159 = vector.extract_strided_slice %147 {offsets = [0, 0, 0, 2], sizes = [2, 1, 8, 20], strides = [1, 1, 1, 1]} : vector<2x1x8x24xf32> to vector<2x1x8x20xf32>
      %160 = vector.broadcast %158 : f32 to vector<2x1x8x20xf32>
      %161 = arith.mulf %159, %160 : vector<2x1x8x20xf32>
      %162 = arith.addf %157, %161 : vector<2x1x8x20xf32>
      %c308 = arith.constant 308 : index
      %163 = memref.load %arg1[%c308] : memref<400xf32, #tpu.memory_space<smem>>
      %164 = vector.extract_strided_slice %147 {offsets = [0, 0, 0, 3], sizes = [2, 1, 8, 20], strides = [1, 1, 1, 1]} : vector<2x1x8x24xf32> to vector<2x1x8x20xf32>
      %165 = vector.broadcast %163 : f32 to vector<2x1x8x20xf32>
      %166 = arith.mulf %164, %165 : vector<2x1x8x20xf32>
      %167 = arith.addf %162, %166 : vector<2x1x8x20xf32>
      %c309 = arith.constant 309 : index
      %168 = memref.load %arg1[%c309] : memref<400xf32, #tpu.memory_space<smem>>
      %169 = vector.extract_strided_slice %147 {offsets = [0, 0, 0, 4], sizes = [2, 1, 8, 20], strides = [1, 1, 1, 1]} : vector<2x1x8x24xf32> to vector<2x1x8x20xf32>
      %170 = vector.broadcast %168 : f32 to vector<2x1x8x20xf32>
      %171 = arith.mulf %169, %170 : vector<2x1x8x20xf32>
      %172 = arith.addf %167, %171 : vector<2x1x8x20xf32>
      %c2_i32 = arith.constant 2 : i32
      %173 = arith.addi %113, %c2_i32 : i32
      %c0_85 = arith.constant 0 : index
      %c0_86 = arith.constant 0 : index
      %174 = arith.index_cast %173 : i32 to index
      %c0_87 = arith.constant 0 : index
      %175 = vector.load %arg0[%c0_85, %c0_86, %174, %c0_87] : memref<2x4x24x24xf32, #tpu.memory_space<vmem>>, vector<2x1x8x24xf32>
      %c310 = arith.constant 310 : index
      %176 = memref.load %arg1[%c310] : memref<400xf32, #tpu.memory_space<smem>>
      %177 = vector.extract_strided_slice %175 {offsets = [0, 0, 0, 0], sizes = [2, 1, 8, 20], strides = [1, 1, 1, 1]} : vector<2x1x8x24xf32> to vector<2x1x8x20xf32>
      %178 = vector.broadcast %176 : f32 to vector<2x1x8x20xf32>
      %179 = arith.mulf %177, %178 : vector<2x1x8x20xf32>
      %180 = arith.addf %172, %179 : vector<2x1x8x20xf32>
      %c311 = arith.constant 311 : index
      %181 = memref.load %arg1[%c311] : memref<400xf32, #tpu.memory_space<smem>>
      %182 = vector.extract_strided_slice %175 {offsets = [0, 0, 0, 1], sizes = [2, 1, 8, 20], strides = [1, 1, 1, 1]} : vector<2x1x8x24xf32> to vector<2x1x8x20xf32>
      %183 = vector.broadcast %181 : f32 to vector<2x1x8x20xf32>
      %184 = arith.mulf %182, %183 : vector<2x1x8x20xf32>
      %185 = arith.addf %180, %184 : vector<2x1x8x20xf32>
      %c312 = arith.constant 312 : index
      %186 = memref.load %arg1[%c312] : memref<400xf32, #tpu.memory_space<smem>>
      %187 = vector.extract_strided_slice %175 {offsets = [0, 0, 0, 2], sizes = [2, 1, 8, 20], strides = [1, 1, 1, 1]} : vector<2x1x8x24xf32> to vector<2x1x8x20xf32>
      %188 = vector.broadcast %186 : f32 to vector<2x1x8x20xf32>
      %189 = arith.mulf %187, %188 : vector<2x1x8x20xf32>
      %190 = arith.addf %185, %189 : vector<2x1x8x20xf32>
      %c313 = arith.constant 313 : index
      %191 = memref.load %arg1[%c313] : memref<400xf32, #tpu.memory_space<smem>>
      %192 = vector.extract_strided_slice %175 {offsets = [0, 0, 0, 3], sizes = [2, 1, 8, 20], strides = [1, 1, 1, 1]} : vector<2x1x8x24xf32> to vector<2x1x8x20xf32>
      %193 = vector.broadcast %191 : f32 to vector<2x1x8x20xf32>
      %194 = arith.mulf %192, %193 : vector<2x1x8x20xf32>
      %195 = arith.addf %190, %194 : vector<2x1x8x20xf32>
      %c314 = arith.constant 314 : index
      %196 = memref.load %arg1[%c314] : memref<400xf32, #tpu.memory_space<smem>>
      %197 = vector.extract_strided_slice %175 {offsets = [0, 0, 0, 4], sizes = [2, 1, 8, 20], strides = [1, 1, 1, 1]} : vector<2x1x8x24xf32> to vector<2x1x8x20xf32>
      %198 = vector.broadcast %196 : f32 to vector<2x1x8x20xf32>
      %199 = arith.mulf %197, %198 : vector<2x1x8x20xf32>
      %200 = arith.addf %195, %199 : vector<2x1x8x20xf32>
      %c3_i32_88 = arith.constant 3 : i32
      %201 = arith.addi %113, %c3_i32_88 : i32
      %c0_89 = arith.constant 0 : index
      %c0_90 = arith.constant 0 : index
      %202 = arith.index_cast %201 : i32 to index
      %c0_91 = arith.constant 0 : index
      %203 = vector.load %arg0[%c0_89, %c0_90, %202, %c0_91] : memref<2x4x24x24xf32, #tpu.memory_space<vmem>>, vector<2x1x8x24xf32>
      %c315 = arith.constant 315 : index
      %204 = memref.load %arg1[%c315] : memref<400xf32, #tpu.memory_space<smem>>
      %205 = vector.extract_strided_slice %203 {offsets = [0, 0, 0, 0], sizes = [2, 1, 8, 20], strides = [1, 1, 1, 1]} : vector<2x1x8x24xf32> to vector<2x1x8x20xf32>
      %206 = vector.broadcast %204 : f32 to vector<2x1x8x20xf32>
      %207 = arith.mulf %205, %206 : vector<2x1x8x20xf32>
      %208 = arith.addf %200, %207 : vector<2x1x8x20xf32>
      %c316 = arith.constant 316 : index
      %209 = memref.load %arg1[%c316] : memref<400xf32, #tpu.memory_space<smem>>
      %210 = vector.extract_strided_slice %203 {offsets = [0, 0, 0, 1], sizes = [2, 1, 8, 20], strides = [1, 1, 1, 1]} : vector<2x1x8x24xf32> to vector<2x1x8x20xf32>
      %211 = vector.broadcast %209 : f32 to vector<2x1x8x20xf32>
      %212 = arith.mulf %210, %211 : vector<2x1x8x20xf32>
      %213 = arith.addf %208, %212 : vector<2x1x8x20xf32>
      %c317 = arith.constant 317 : index
      %214 = memref.load %arg1[%c317] : memref<400xf32, #tpu.memory_space<smem>>
      %215 = vector.extract_strided_slice %203 {offsets = [0, 0, 0, 2], sizes = [2, 1, 8, 20], strides = [1, 1, 1, 1]} : vector<2x1x8x24xf32> to vector<2x1x8x20xf32>
      %216 = vector.broadcast %214 : f32 to vector<2x1x8x20xf32>
      %217 = arith.mulf %215, %216 : vector<2x1x8x20xf32>
      %218 = arith.addf %213, %217 : vector<2x1x8x20xf32>
      %c318 = arith.constant 318 : index
      %219 = memref.load %arg1[%c318] : memref<400xf32, #tpu.memory_space<smem>>
      %220 = vector.extract_strided_slice %203 {offsets = [0, 0, 0, 3], sizes = [2, 1, 8, 20], strides = [1, 1, 1, 1]} : vector<2x1x8x24xf32> to vector<2x1x8x20xf32>
      %221 = vector.broadcast %219 : f32 to vector<2x1x8x20xf32>
      %222 = arith.mulf %220, %221 : vector<2x1x8x20xf32>
      %223 = arith.addf %218, %222 : vector<2x1x8x20xf32>
      %c319 = arith.constant 319 : index
      %224 = memref.load %arg1[%c319] : memref<400xf32, #tpu.memory_space<smem>>
      %225 = vector.extract_strided_slice %203 {offsets = [0, 0, 0, 4], sizes = [2, 1, 8, 20], strides = [1, 1, 1, 1]} : vector<2x1x8x24xf32> to vector<2x1x8x20xf32>
      %226 = vector.broadcast %224 : f32 to vector<2x1x8x20xf32>
      %227 = arith.mulf %225, %226 : vector<2x1x8x20xf32>
      %228 = arith.addf %223, %227 : vector<2x1x8x20xf32>
      %c4_i32 = arith.constant 4 : i32
      %229 = arith.addi %113, %c4_i32 : i32
      %c0_92 = arith.constant 0 : index
      %c0_93 = arith.constant 0 : index
      %230 = arith.index_cast %229 : i32 to index
      %c0_94 = arith.constant 0 : index
      %231 = vector.load %arg0[%c0_92, %c0_93, %230, %c0_94] : memref<2x4x24x24xf32, #tpu.memory_space<vmem>>, vector<2x1x8x24xf32>
      %c320 = arith.constant 320 : index
      %232 = memref.load %arg1[%c320] : memref<400xf32, #tpu.memory_space<smem>>
      %233 = vector.extract_strided_slice %231 {offsets = [0, 0, 0, 0], sizes = [2, 1, 8, 20], strides = [1, 1, 1, 1]} : vector<2x1x8x24xf32> to vector<2x1x8x20xf32>
      %234 = vector.broadcast %232 : f32 to vector<2x1x8x20xf32>
      %235 = arith.mulf %233, %234 : vector<2x1x8x20xf32>
      %236 = arith.addf %228, %235 : vector<2x1x8x20xf32>
      %c321 = arith.constant 321 : index
      %237 = memref.load %arg1[%c321] : memref<400xf32, #tpu.memory_space<smem>>
      %238 = vector.extract_strided_slice %231 {offsets = [0, 0, 0, 1], sizes = [2, 1, 8, 20], strides = [1, 1, 1, 1]} : vector<2x1x8x24xf32> to vector<2x1x8x20xf32>
      %239 = vector.broadcast %237 : f32 to vector<2x1x8x20xf32>
      %240 = arith.mulf %238, %239 : vector<2x1x8x20xf32>
      %241 = arith.addf %236, %240 : vector<2x1x8x20xf32>
      %c322 = arith.constant 322 : index
      %242 = memref.load %arg1[%c322] : memref<400xf32, #tpu.memory_space<smem>>
      %243 = vector.extract_strided_slice %231 {offsets = [0, 0, 0, 2], sizes = [2, 1, 8, 20], strides = [1, 1, 1, 1]} : vector<2x1x8x24xf32> to vector<2x1x8x20xf32>
      %244 = vector.broadcast %242 : f32 to vector<2x1x8x20xf32>
      %245 = arith.mulf %243, %244 : vector<2x1x8x20xf32>
      %246 = arith.addf %241, %245 : vector<2x1x8x20xf32>
      %c323 = arith.constant 323 : index
      %247 = memref.load %arg1[%c323] : memref<400xf32, #tpu.memory_space<smem>>
      %248 = vector.extract_strided_slice %231 {offsets = [0, 0, 0, 3], sizes = [2, 1, 8, 20], strides = [1, 1, 1, 1]} : vector<2x1x8x24xf32> to vector<2x1x8x20xf32>
      %249 = vector.broadcast %247 : f32 to vector<2x1x8x20xf32>
      %250 = arith.mulf %248, %249 : vector<2x1x8x20xf32>
      %251 = arith.addf %246, %250 : vector<2x1x8x20xf32>
      %c324 = arith.constant 324 : index
      %252 = memref.load %arg1[%c324] : memref<400xf32, #tpu.memory_space<smem>>
      %253 = vector.extract_strided_slice %231 {offsets = [0, 0, 0, 4], sizes = [2, 1, 8, 20], strides = [1, 1, 1, 1]} : vector<2x1x8x24xf32> to vector<2x1x8x20xf32>
      %254 = vector.broadcast %252 : f32 to vector<2x1x8x20xf32>
      %255 = arith.mulf %253, %254 : vector<2x1x8x20xf32>
      %256 = arith.addf %251, %255 : vector<2x1x8x20xf32>
      %c0_i32_95 = arith.constant 0 : i32
      %257 = arith.addi %113, %c0_i32_95 : i32
      %c0_96 = arith.constant 0 : index
      %c1_97 = arith.constant 1 : index
      %258 = arith.index_cast %257 : i32 to index
      %c0_98 = arith.constant 0 : index
      %259 = vector.load %arg0[%c0_96, %c1_97, %258, %c0_98] : memref<2x4x24x24xf32, #tpu.memory_space<vmem>>, vector<2x1x8x24xf32>
      %c325 = arith.constant 325 : index
      %260 = memref.load %arg1[%c325] : memref<400xf32, #tpu.memory_space<smem>>
      %261 = vector.extract_strided_slice %259 {offsets = [0, 0, 0, 0], sizes = [2, 1, 8, 20], strides = [1, 1, 1, 1]} : vector<2x1x8x24xf32> to vector<2x1x8x20xf32>
      %262 = vector.broadcast %260 : f32 to vector<2x1x8x20xf32>
      %263 = arith.mulf %261, %262 : vector<2x1x8x20xf32>
      %264 = arith.addf %256, %263 : vector<2x1x8x20xf32>
      %c326 = arith.constant 326 : index
      %265 = memref.load %arg1[%c326] : memref<400xf32, #tpu.memory_space<smem>>
      %266 = vector.extract_strided_slice %259 {offsets = [0, 0, 0, 1], sizes = [2, 1, 8, 20], strides = [1, 1, 1, 1]} : vector<2x1x8x24xf32> to vector<2x1x8x20xf32>
      %267 = vector.broadcast %265 : f32 to vector<2x1x8x20xf32>
      %268 = arith.mulf %266, %267 : vector<2x1x8x20xf32>
      %269 = arith.addf %264, %268 : vector<2x1x8x20xf32>
      %c327 = arith.constant 327 : index
      %270 = memref.load %arg1[%c327] : memref<400xf32, #tpu.memory_space<smem>>
      %271 = vector.extract_strided_slice %259 {offsets = [0, 0, 0, 2], sizes = [2, 1, 8, 20], strides = [1, 1, 1, 1]} : vector<2x1x8x24xf32> to vector<2x1x8x20xf32>
      %272 = vector.broadcast %270 : f32 to vector<2x1x8x20xf32>
      %273 = arith.mulf %271, %272 : vector<2x1x8x20xf32>
      %274 = arith.addf %269, %273 : vector<2x1x8x20xf32>
      %c328 = arith.constant 328 : index
      %275 = memref.load %arg1[%c328] : memref<400xf32, #tpu.memory_space<smem>>
      %276 = vector.extract_strided_slice %259 {offsets = [0, 0, 0, 3], sizes = [2, 1, 8, 20], strides = [1, 1, 1, 1]} : vector<2x1x8x24xf32> to vector<2x1x8x20xf32>
      %277 = vector.broadcast %275 : f32 to vector<2x1x8x20xf32>
      %278 = arith.mulf %276, %277 : vector<2x1x8x20xf32>
      %279 = arith.addf %274, %278 : vector<2x1x8x20xf32>
      %c329 = arith.constant 329 : index
      %280 = memref.load %arg1[%c329] : memref<400xf32, #tpu.memory_space<smem>>
      %281 = vector.extract_strided_slice %259 {offsets = [0, 0, 0, 4], sizes = [2, 1, 8, 20], strides = [1, 1, 1, 1]} : vector<2x1x8x24xf32> to vector<2x1x8x20xf32>
      %282 = vector.broadcast %280 : f32 to vector<2x1x8x20xf32>
      %283 = arith.mulf %281, %282 : vector<2x1x8x20xf32>
      %284 = arith.addf %279, %283 : vector<2x1x8x20xf32>
      %c1_i32_99 = arith.constant 1 : i32
      %285 = arith.addi %113, %c1_i32_99 : i32
      %c0_100 = arith.constant 0 : index
      %c1_101 = arith.constant 1 : index
      %286 = arith.index_cast %285 : i32 to index
      %c0_102 = arith.constant 0 : index
      %287 = vector.load %arg0[%c0_100, %c1_101, %286, %c0_102] : memref<2x4x24x24xf32, #tpu.memory_space<vmem>>, vector<2x1x8x24xf32>
      %c330 = arith.constant 330 : index
      %288 = memref.load %arg1[%c330] : memref<400xf32, #tpu.memory_space<smem>>
      %289 = vector.extract_strided_slice %287 {offsets = [0, 0, 0, 0], sizes = [2, 1, 8, 20], strides = [1, 1, 1, 1]} : vector<2x1x8x24xf32> to vector<2x1x8x20xf32>
      %290 = vector.broadcast %288 : f32 to vector<2x1x8x20xf32>
      %291 = arith.mulf %289, %290 : vector<2x1x8x20xf32>
      %292 = arith.addf %284, %291 : vector<2x1x8x20xf32>
      %c331 = arith.constant 331 : index
      %293 = memref.load %arg1[%c331] : memref<400xf32, #tpu.memory_space<smem>>
      %294 = vector.extract_strided_slice %287 {offsets = [0, 0, 0, 1], sizes = [2, 1, 8, 20], strides = [1, 1, 1, 1]} : vector<2x1x8x24xf32> to vector<2x1x8x20xf32>
      %295 = vector.broadcast %293 : f32 to vector<2x1x8x20xf32>
      %296 = arith.mulf %294, %295 : vector<2x1x8x20xf32>
      %297 = arith.addf %292, %296 : vector<2x1x8x20xf32>
      %c332 = arith.constant 332 : index
      %298 = memref.load %arg1[%c332] : memref<400xf32, #tpu.memory_space<smem>>
      %299 = vector.extract_strided_slice %287 {offsets = [0, 0, 0, 2], sizes = [2, 1, 8, 20], strides = [1, 1, 1, 1]} : vector<2x1x8x24xf32> to vector<2x1x8x20xf32>
      %300 = vector.broadcast %298 : f32 to vector<2x1x8x20xf32>
      %301 = arith.mulf %299, %300 : vector<2x1x8x20xf32>
      %302 = arith.addf %297, %301 : vector<2x1x8x20xf32>
      %c333 = arith.constant 333 : index
      %303 = memref.load %arg1[%c333] : memref<400xf32, #tpu.memory_space<smem>>
      %304 = vector.extract_strided_slice %287 {offsets = [0, 0, 0, 3], sizes = [2, 1, 8, 20], strides = [1, 1, 1, 1]} : vector<2x1x8x24xf32> to vector<2x1x8x20xf32>
      %305 = vector.broadcast %303 : f32 to vector<2x1x8x20xf32>
      %306 = arith.mulf %304, %305 : vector<2x1x8x20xf32>
      %307 = arith.addf %302, %306 : vector<2x1x8x20xf32>
      %c334 = arith.constant 334 : index
      %308 = memref.load %arg1[%c334] : memref<400xf32, #tpu.memory_space<smem>>
      %309 = vector.extract_strided_slice %287 {offsets = [0, 0, 0, 4], sizes = [2, 1, 8, 20], strides = [1, 1, 1, 1]} : vector<2x1x8x24xf32> to vector<2x1x8x20xf32>
      %310 = vector.broadcast %308 : f32 to vector<2x1x8x20xf32>
      %311 = arith.mulf %309, %310 : vector<2x1x8x20xf32>
      %312 = arith.addf %307, %311 : vector<2x1x8x20xf32>
      %c2_i32_103 = arith.constant 2 : i32
      %313 = arith.addi %113, %c2_i32_103 : i32
      %c0_104 = arith.constant 0 : index
      %c1_105 = arith.constant 1 : index
      %314 = arith.index_cast %313 : i32 to index
      %c0_106 = arith.constant 0 : index
      %315 = vector.load %arg0[%c0_104, %c1_105, %314, %c0_106] : memref<2x4x24x24xf32, #tpu.memory_space<vmem>>, vector<2x1x8x24xf32>
      %c335 = arith.constant 335 : index
      %316 = memref.load %arg1[%c335] : memref<400xf32, #tpu.memory_space<smem>>
      %317 = vector.extract_strided_slice %315 {offsets = [0, 0, 0, 0], sizes = [2, 1, 8, 20], strides = [1, 1, 1, 1]} : vector<2x1x8x24xf32> to vector<2x1x8x20xf32>
      %318 = vector.broadcast %316 : f32 to vector<2x1x8x20xf32>
      %319 = arith.mulf %317, %318 : vector<2x1x8x20xf32>
      %320 = arith.addf %312, %319 : vector<2x1x8x20xf32>
      %c336 = arith.constant 336 : index
      %321 = memref.load %arg1[%c336] : memref<400xf32, #tpu.memory_space<smem>>
      %322 = vector.extract_strided_slice %315 {offsets = [0, 0, 0, 1], sizes = [2, 1, 8, 20], strides = [1, 1, 1, 1]} : vector<2x1x8x24xf32> to vector<2x1x8x20xf32>
      %323 = vector.broadcast %321 : f32 to vector<2x1x8x20xf32>
      %324 = arith.mulf %322, %323 : vector<2x1x8x20xf32>
      %325 = arith.addf %320, %324 : vector<2x1x8x20xf32>
      %c337 = arith.constant 337 : index
      %326 = memref.load %arg1[%c337] : memref<400xf32, #tpu.memory_space<smem>>
      %327 = vector.extract_strided_slice %315 {offsets = [0, 0, 0, 2], sizes = [2, 1, 8, 20], strides = [1, 1, 1, 1]} : vector<2x1x8x24xf32> to vector<2x1x8x20xf32>
      %328 = vector.broadcast %326 : f32 to vector<2x1x8x20xf32>
      %329 = arith.mulf %327, %328 : vector<2x1x8x20xf32>
      %330 = arith.addf %325, %329 : vector<2x1x8x20xf32>
      %c338 = arith.constant 338 : index
      %331 = memref.load %arg1[%c338] : memref<400xf32, #tpu.memory_space<smem>>
      %332 = vector.extract_strided_slice %315 {offsets = [0, 0, 0, 3], sizes = [2, 1, 8, 20], strides = [1, 1, 1, 1]} : vector<2x1x8x24xf32> to vector<2x1x8x20xf32>
      %333 = vector.broadcast %331 : f32 to vector<2x1x8x20xf32>
      %334 = arith.mulf %332, %333 : vector<2x1x8x20xf32>
      %335 = arith.addf %330, %334 : vector<2x1x8x20xf32>
      %c339 = arith.constant 339 : index
      %336 = memref.load %arg1[%c339] : memref<400xf32, #tpu.memory_space<smem>>
      %337 = vector.extract_strided_slice %315 {offsets = [0, 0, 0, 4], sizes = [2, 1, 8, 20], strides = [1, 1, 1, 1]} : vector<2x1x8x24xf32> to vector<2x1x8x20xf32>
      %338 = vector.broadcast %336 : f32 to vector<2x1x8x20xf32>
      %339 = arith.mulf %337, %338 : vector<2x1x8x20xf32>
      %340 = arith.addf %335, %339 : vector<2x1x8x20xf32>
      %c3_i32_107 = arith.constant 3 : i32
      %341 = arith.addi %113, %c3_i32_107 : i32
      %c0_108 = arith.constant 0 : index
      %c1_109 = arith.constant 1 : index
      %342 = arith.index_cast %341 : i32 to index
      %c0_110 = arith.constant 0 : index
      %343 = vector.load %arg0[%c0_108, %c1_109, %342, %c0_110] : memref<2x4x24x24xf32, #tpu.memory_space<vmem>>, vector<2x1x8x24xf32>
      %c340 = arith.constant 340 : index
      %344 = memref.load %arg1[%c340] : memref<400xf32, #tpu.memory_space<smem>>
      %345 = vector.extract_strided_slice %343 {offsets = [0, 0, 0, 0], sizes = [2, 1, 8, 20], strides = [1, 1, 1, 1]} : vector<2x1x8x24xf32> to vector<2x1x8x20xf32>
      %346 = vector.broadcast %344 : f32 to vector<2x1x8x20xf32>
      %347 = arith.mulf %345, %346 : vector<2x1x8x20xf32>
      %348 = arith.addf %340, %347 : vector<2x1x8x20xf32>
      %c341 = arith.constant 341 : index
      %349 = memref.load %arg1[%c341] : memref<400xf32, #tpu.memory_space<smem>>
      %350 = vector.extract_strided_slice %343 {offsets = [0, 0, 0, 1], sizes = [2, 1, 8, 20], strides = [1, 1, 1, 1]} : vector<2x1x8x24xf32> to vector<2x1x8x20xf32>
      %351 = vector.broadcast %349 : f32 to vector<2x1x8x20xf32>
      %352 = arith.mulf %350, %351 : vector<2x1x8x20xf32>
      %353 = arith.addf %348, %352 : vector<2x1x8x20xf32>
      %c342 = arith.constant 342 : index
      %354 = memref.load %arg1[%c342] : memref<400xf32, #tpu.memory_space<smem>>
      %355 = vector.extract_strided_slice %343 {offsets = [0, 0, 0, 2], sizes = [2, 1, 8, 20], strides = [1, 1, 1, 1]} : vector<2x1x8x24xf32> to vector<2x1x8x20xf32>
      %356 = vector.broadcast %354 : f32 to vector<2x1x8x20xf32>
      %357 = arith.mulf %355, %356 : vector<2x1x8x20xf32>
      %358 = arith.addf %353, %357 : vector<2x1x8x20xf32>
      %c343 = arith.constant 343 : index
      %359 = memref.load %arg1[%c343] : memref<400xf32, #tpu.memory_space<smem>>
      %360 = vector.extract_strided_slice %343 {offsets = [0, 0, 0, 3], sizes = [2, 1, 8, 20], strides = [1, 1, 1, 1]} : vector<2x1x8x24xf32> to vector<2x1x8x20xf32>
      %361 = vector.broadcast %359 : f32 to vector<2x1x8x20xf32>
      %362 = arith.mulf %360, %361 : vector<2x1x8x20xf32>
      %363 = arith.addf %358, %362 : vector<2x1x8x20xf32>
      %c344 = arith.constant 344 : index
      %364 = memref.load %arg1[%c344] : memref<400xf32, #tpu.memory_space<smem>>
      %365 = vector.extract_strided_slice %343 {offsets = [0, 0, 0, 4], sizes = [2, 1, 8, 20], strides = [1, 1, 1, 1]} : vector<2x1x8x24xf32> to vector<2x1x8x20xf32>
      %366 = vector.broadcast %364 : f32 to vector<2x1x8x20xf32>
      %367 = arith.mulf %365, %366 : vector<2x1x8x20xf32>
      %368 = arith.addf %363, %367 : vector<2x1x8x20xf32>
      %c4_i32_111 = arith.constant 4 : i32
      %369 = arith.addi %113, %c4_i32_111 : i32
      %c0_112 = arith.constant 0 : index
      %c1_113 = arith.constant 1 : index
      %370 = arith.index_cast %369 : i32 to index
      %c0_114 = arith.constant 0 : index
      %371 = vector.load %arg0[%c0_112, %c1_113, %370, %c0_114] : memref<2x4x24x24xf32, #tpu.memory_space<vmem>>, vector<2x1x8x24xf32>
      %c345 = arith.constant 345 : index
      %372 = memref.load %arg1[%c345] : memref<400xf32, #tpu.memory_space<smem>>
      %373 = vector.extract_strided_slice %371 {offsets = [0, 0, 0, 0], sizes = [2, 1, 8, 20], strides = [1, 1, 1, 1]} : vector<2x1x8x24xf32> to vector<2x1x8x20xf32>
      %374 = vector.broadcast %372 : f32 to vector<2x1x8x20xf32>
      %375 = arith.mulf %373, %374 : vector<2x1x8x20xf32>
      %376 = arith.addf %368, %375 : vector<2x1x8x20xf32>
      %c346 = arith.constant 346 : index
      %377 = memref.load %arg1[%c346] : memref<400xf32, #tpu.memory_space<smem>>
      %378 = vector.extract_strided_slice %371 {offsets = [0, 0, 0, 1], sizes = [2, 1, 8, 20], strides = [1, 1, 1, 1]} : vector<2x1x8x24xf32> to vector<2x1x8x20xf32>
      %379 = vector.broadcast %377 : f32 to vector<2x1x8x20xf32>
      %380 = arith.mulf %378, %379 : vector<2x1x8x20xf32>
      %381 = arith.addf %376, %380 : vector<2x1x8x20xf32>
      %c347 = arith.constant 347 : index
      %382 = memref.load %arg1[%c347] : memref<400xf32, #tpu.memory_space<smem>>
      %383 = vector.extract_strided_slice %371 {offsets = [0, 0, 0, 2], sizes = [2, 1, 8, 20], strides = [1, 1, 1, 1]} : vector<2x1x8x24xf32> to vector<2x1x8x20xf32>
      %384 = vector.broadcast %382 : f32 to vector<2x1x8x20xf32>
      %385 = arith.mulf %383, %384 : vector<2x1x8x20xf32>
      %386 = arith.addf %381, %385 : vector<2x1x8x20xf32>
      %c348 = arith.constant 348 : index
      %387 = memref.load %arg1[%c348] : memref<400xf32, #tpu.memory_space<smem>>
      %388 = vector.extract_strided_slice %371 {offsets = [0, 0, 0, 3], sizes = [2, 1, 8, 20], strides = [1, 1, 1, 1]} : vector<2x1x8x24xf32> to vector<2x1x8x20xf32>
      %389 = vector.broadcast %387 : f32 to vector<2x1x8x20xf32>
      %390 = arith.mulf %388, %389 : vector<2x1x8x20xf32>
      %391 = arith.addf %386, %390 : vector<2x1x8x20xf32>
      %c349 = arith.constant 349 : index
      %392 = memref.load %arg1[%c349] : memref<400xf32, #tpu.memory_space<smem>>
      %393 = vector.extract_strided_slice %371 {offsets = [0, 0, 0, 4], sizes = [2, 1, 8, 20], strides = [1, 1, 1, 1]} : vector<2x1x8x24xf32> to vector<2x1x8x20xf32>
      %394 = vector.broadcast %392 : f32 to vector<2x1x8x20xf32>
      %395 = arith.mulf %393, %394 : vector<2x1x8x20xf32>
      %396 = arith.addf %391, %395 : vector<2x1x8x20xf32>
      %c0_i32_115 = arith.constant 0 : i32
      %397 = arith.addi %113, %c0_i32_115 : i32
      %c0_116 = arith.constant 0 : index
      %c2_117 = arith.constant 2 : index
      %398 = arith.index_cast %397 : i32 to index
      %c0_118 = arith.constant 0 : index
      %399 = vector.load %arg0[%c0_116, %c2_117, %398, %c0_118] : memref<2x4x24x24xf32, #tpu.memory_space<vmem>>, vector<2x1x8x24xf32>
      %c350 = arith.constant 350 : index
      %400 = memref.load %arg1[%c350] : memref<400xf32, #tpu.memory_space<smem>>
      %401 = vector.extract_strided_slice %399 {offsets = [0, 0, 0, 0], sizes = [2, 1, 8, 20], strides = [1, 1, 1, 1]} : vector<2x1x8x24xf32> to vector<2x1x8x20xf32>
      %402 = vector.broadcast %400 : f32 to vector<2x1x8x20xf32>
      %403 = arith.mulf %401, %402 : vector<2x1x8x20xf32>
      %404 = arith.addf %396, %403 : vector<2x1x8x20xf32>
      %c351 = arith.constant 351 : index
      %405 = memref.load %arg1[%c351] : memref<400xf32, #tpu.memory_space<smem>>
      %406 = vector.extract_strided_slice %399 {offsets = [0, 0, 0, 1], sizes = [2, 1, 8, 20], strides = [1, 1, 1, 1]} : vector<2x1x8x24xf32> to vector<2x1x8x20xf32>
      %407 = vector.broadcast %405 : f32 to vector<2x1x8x20xf32>
      %408 = arith.mulf %406, %407 : vector<2x1x8x20xf32>
      %409 = arith.addf %404, %408 : vector<2x1x8x20xf32>
      %c352 = arith.constant 352 : index
      %410 = memref.load %arg1[%c352] : memref<400xf32, #tpu.memory_space<smem>>
      %411 = vector.extract_strided_slice %399 {offsets = [0, 0, 0, 2], sizes = [2, 1, 8, 20], strides = [1, 1, 1, 1]} : vector<2x1x8x24xf32> to vector<2x1x8x20xf32>
      %412 = vector.broadcast %410 : f32 to vector<2x1x8x20xf32>
      %413 = arith.mulf %411, %412 : vector<2x1x8x20xf32>
      %414 = arith.addf %409, %413 : vector<2x1x8x20xf32>
      %c353 = arith.constant 353 : index
      %415 = memref.load %arg1[%c353] : memref<400xf32, #tpu.memory_space<smem>>
      %416 = vector.extract_strided_slice %399 {offsets = [0, 0, 0, 3], sizes = [2, 1, 8, 20], strides = [1, 1, 1, 1]} : vector<2x1x8x24xf32> to vector<2x1x8x20xf32>
      %417 = vector.broadcast %415 : f32 to vector<2x1x8x20xf32>
      %418 = arith.mulf %416, %417 : vector<2x1x8x20xf32>
      %419 = arith.addf %414, %418 : vector<2x1x8x20xf32>
      %c354 = arith.constant 354 : index
      %420 = memref.load %arg1[%c354] : memref<400xf32, #tpu.memory_space<smem>>
      %421 = vector.extract_strided_slice %399 {offsets = [0, 0, 0, 4], sizes = [2, 1, 8, 20], strides = [1, 1, 1, 1]} : vector<2x1x8x24xf32> to vector<2x1x8x20xf32>
      %422 = vector.broadcast %420 : f32 to vector<2x1x8x20xf32>
      %423 = arith.mulf %421, %422 : vector<2x1x8x20xf32>
      %424 = arith.addf %419, %423 : vector<2x1x8x20xf32>
      %c1_i32_119 = arith.constant 1 : i32
      %425 = arith.addi %113, %c1_i32_119 : i32
      %c0_120 = arith.constant 0 : index
      %c2_121 = arith.constant 2 : index
      %426 = arith.index_cast %425 : i32 to index
      %c0_122 = arith.constant 0 : index
      %427 = vector.load %arg0[%c0_120, %c2_121, %426, %c0_122] : memref<2x4x24x24xf32, #tpu.memory_space<vmem>>, vector<2x1x8x24xf32>
      %c355 = arith.constant 355 : index
      %428 = memref.load %arg1[%c355] : memref<400xf32, #tpu.memory_space<smem>>
      %429 = vector.extract_strided_slice %427 {offsets = [0, 0, 0, 0], sizes = [2, 1, 8, 20], strides = [1, 1, 1, 1]} : vector<2x1x8x24xf32> to vector<2x1x8x20xf32>
      %430 = vector.broadcast %428 : f32 to vector<2x1x8x20xf32>
      %431 = arith.mulf %429, %430 : vector<2x1x8x20xf32>
      %432 = arith.addf %424, %431 : vector<2x1x8x20xf32>
      %c356 = arith.constant 356 : index
      %433 = memref.load %arg1[%c356] : memref<400xf32, #tpu.memory_space<smem>>
      %434 = vector.extract_strided_slice %427 {offsets = [0, 0, 0, 1], sizes = [2, 1, 8, 20], strides = [1, 1, 1, 1]} : vector<2x1x8x24xf32> to vector<2x1x8x20xf32>
      %435 = vector.broadcast %433 : f32 to vector<2x1x8x20xf32>
      %436 = arith.mulf %434, %435 : vector<2x1x8x20xf32>
      %437 = arith.addf %432, %436 : vector<2x1x8x20xf32>
      %c357 = arith.constant 357 : index
      %438 = memref.load %arg1[%c357] : memref<400xf32, #tpu.memory_space<smem>>
      %439 = vector.extract_strided_slice %427 {offsets = [0, 0, 0, 2], sizes = [2, 1, 8, 20], strides = [1, 1, 1, 1]} : vector<2x1x8x24xf32> to vector<2x1x8x20xf32>
      %440 = vector.broadcast %438 : f32 to vector<2x1x8x20xf32>
      %441 = arith.mulf %439, %440 : vector<2x1x8x20xf32>
      %442 = arith.addf %437, %441 : vector<2x1x8x20xf32>
      %c358 = arith.constant 358 : index
      %443 = memref.load %arg1[%c358] : memref<400xf32, #tpu.memory_space<smem>>
      %444 = vector.extract_strided_slice %427 {offsets = [0, 0, 0, 3], sizes = [2, 1, 8, 20], strides = [1, 1, 1, 1]} : vector<2x1x8x24xf32> to vector<2x1x8x20xf32>
      %445 = vector.broadcast %443 : f32 to vector<2x1x8x20xf32>
      %446 = arith.mulf %444, %445 : vector<2x1x8x20xf32>
      %447 = arith.addf %442, %446 : vector<2x1x8x20xf32>
      %c359 = arith.constant 359 : index
      %448 = memref.load %arg1[%c359] : memref<400xf32, #tpu.memory_space<smem>>
      %449 = vector.extract_strided_slice %427 {offsets = [0, 0, 0, 4], sizes = [2, 1, 8, 20], strides = [1, 1, 1, 1]} : vector<2x1x8x24xf32> to vector<2x1x8x20xf32>
      %450 = vector.broadcast %448 : f32 to vector<2x1x8x20xf32>
      %451 = arith.mulf %449, %450 : vector<2x1x8x20xf32>
      %452 = arith.addf %447, %451 : vector<2x1x8x20xf32>
      %c2_i32_123 = arith.constant 2 : i32
      %453 = arith.addi %113, %c2_i32_123 : i32
      %c0_124 = arith.constant 0 : index
      %c2_125 = arith.constant 2 : index
      %454 = arith.index_cast %453 : i32 to index
      %c0_126 = arith.constant 0 : index
      %455 = vector.load %arg0[%c0_124, %c2_125, %454, %c0_126] : memref<2x4x24x24xf32, #tpu.memory_space<vmem>>, vector<2x1x8x24xf32>
      %c360 = arith.constant 360 : index
      %456 = memref.load %arg1[%c360] : memref<400xf32, #tpu.memory_space<smem>>
      %457 = vector.extract_strided_slice %455 {offsets = [0, 0, 0, 0], sizes = [2, 1, 8, 20], strides = [1, 1, 1, 1]} : vector<2x1x8x24xf32> to vector<2x1x8x20xf32>
      %458 = vector.broadcast %456 : f32 to vector<2x1x8x20xf32>
      %459 = arith.mulf %457, %458 : vector<2x1x8x20xf32>
      %460 = arith.addf %452, %459 : vector<2x1x8x20xf32>
      %c361 = arith.constant 361 : index
      %461 = memref.load %arg1[%c361] : memref<400xf32, #tpu.memory_space<smem>>
      %462 = vector.extract_strided_slice %455 {offsets = [0, 0, 0, 1], sizes = [2, 1, 8, 20], strides = [1, 1, 1, 1]} : vector<2x1x8x24xf32> to vector<2x1x8x20xf32>
      %463 = vector.broadcast %461 : f32 to vector<2x1x8x20xf32>
      %464 = arith.mulf %462, %463 : vector<2x1x8x20xf32>
      %465 = arith.addf %460, %464 : vector<2x1x8x20xf32>
      %c362 = arith.constant 362 : index
      %466 = memref.load %arg1[%c362] : memref<400xf32, #tpu.memory_space<smem>>
      %467 = vector.extract_strided_slice %455 {offsets = [0, 0, 0, 2], sizes = [2, 1, 8, 20], strides = [1, 1, 1, 1]} : vector<2x1x8x24xf32> to vector<2x1x8x20xf32>
      %468 = vector.broadcast %466 : f32 to vector<2x1x8x20xf32>
      %469 = arith.mulf %467, %468 : vector<2x1x8x20xf32>
      %470 = arith.addf %465, %469 : vector<2x1x8x20xf32>
      %c363 = arith.constant 363 : index
      %471 = memref.load %arg1[%c363] : memref<400xf32, #tpu.memory_space<smem>>
      %472 = vector.extract_strided_slice %455 {offsets = [0, 0, 0, 3], sizes = [2, 1, 8, 20], strides = [1, 1, 1, 1]} : vector<2x1x8x24xf32> to vector<2x1x8x20xf32>
      %473 = vector.broadcast %471 : f32 to vector<2x1x8x20xf32>
      %474 = arith.mulf %472, %473 : vector<2x1x8x20xf32>
      %475 = arith.addf %470, %474 : vector<2x1x8x20xf32>
      %c364 = arith.constant 364 : index
      %476 = memref.load %arg1[%c364] : memref<400xf32, #tpu.memory_space<smem>>
      %477 = vector.extract_strided_slice %455 {offsets = [0, 0, 0, 4], sizes = [2, 1, 8, 20], strides = [1, 1, 1, 1]} : vector<2x1x8x24xf32> to vector<2x1x8x20xf32>
      %478 = vector.broadcast %476 : f32 to vector<2x1x8x20xf32>
      %479 = arith.mulf %477, %478 : vector<2x1x8x20xf32>
      %480 = arith.addf %475, %479 : vector<2x1x8x20xf32>
      %c3_i32_127 = arith.constant 3 : i32
      %481 = arith.addi %113, %c3_i32_127 : i32
      %c0_128 = arith.constant 0 : index
      %c2_129 = arith.constant 2 : index
      %482 = arith.index_cast %481 : i32 to index
      %c0_130 = arith.constant 0 : index
      %483 = vector.load %arg0[%c0_128, %c2_129, %482, %c0_130] : memref<2x4x24x24xf32, #tpu.memory_space<vmem>>, vector<2x1x8x24xf32>
      %c365 = arith.constant 365 : index
      %484 = memref.load %arg1[%c365] : memref<400xf32, #tpu.memory_space<smem>>
      %485 = vector.extract_strided_slice %483 {offsets = [0, 0, 0, 0], sizes = [2, 1, 8, 20], strides = [1, 1, 1, 1]} : vector<2x1x8x24xf32> to vector<2x1x8x20xf32>
      %486 = vector.broadcast %484 : f32 to vector<2x1x8x20xf32>
      %487 = arith.mulf %485, %486 : vector<2x1x8x20xf32>
      %488 = arith.addf %480, %487 : vector<2x1x8x20xf32>
      %c366 = arith.constant 366 : index
      %489 = memref.load %arg1[%c366] : memref<400xf32, #tpu.memory_space<smem>>
      %490 = vector.extract_strided_slice %483 {offsets = [0, 0, 0, 1], sizes = [2, 1, 8, 20], strides = [1, 1, 1, 1]} : vector<2x1x8x24xf32> to vector<2x1x8x20xf32>
      %491 = vector.broadcast %489 : f32 to vector<2x1x8x20xf32>
      %492 = arith.mulf %490, %491 : vector<2x1x8x20xf32>
      %493 = arith.addf %488, %492 : vector<2x1x8x20xf32>
      %c367 = arith.constant 367 : index
      %494 = memref.load %arg1[%c367] : memref<400xf32, #tpu.memory_space<smem>>
      %495 = vector.extract_strided_slice %483 {offsets = [0, 0, 0, 2], sizes = [2, 1, 8, 20], strides = [1, 1, 1, 1]} : vector<2x1x8x24xf32> to vector<2x1x8x20xf32>
      %496 = vector.broadcast %494 : f32 to vector<2x1x8x20xf32>
      %497 = arith.mulf %495, %496 : vector<2x1x8x20xf32>
      %498 = arith.addf %493, %497 : vector<2x1x8x20xf32>
      %c368 = arith.constant 368 : index
      %499 = memref.load %arg1[%c368] : memref<400xf32, #tpu.memory_space<smem>>
      %500 = vector.extract_strided_slice %483 {offsets = [0, 0, 0, 3], sizes = [2, 1, 8, 20], strides = [1, 1, 1, 1]} : vector<2x1x8x24xf32> to vector<2x1x8x20xf32>
      %501 = vector.broadcast %499 : f32 to vector<2x1x8x20xf32>
      %502 = arith.mulf %500, %501 : vector<2x1x8x20xf32>
      %503 = arith.addf %498, %502 : vector<2x1x8x20xf32>
      %c369 = arith.constant 369 : index
      %504 = memref.load %arg1[%c369] : memref<400xf32, #tpu.memory_space<smem>>
      %505 = vector.extract_strided_slice %483 {offsets = [0, 0, 0, 4], sizes = [2, 1, 8, 20], strides = [1, 1, 1, 1]} : vector<2x1x8x24xf32> to vector<2x1x8x20xf32>
      %506 = vector.broadcast %504 : f32 to vector<2x1x8x20xf32>
      %507 = arith.mulf %505, %506 : vector<2x1x8x20xf32>
      %508 = arith.addf %503, %507 : vector<2x1x8x20xf32>
      %c4_i32_131 = arith.constant 4 : i32
      %509 = arith.addi %113, %c4_i32_131 : i32
      %c0_132 = arith.constant 0 : index
      %c2_133 = arith.constant 2 : index
      %510 = arith.index_cast %509 : i32 to index
      %c0_134 = arith.constant 0 : index
      %511 = vector.load %arg0[%c0_132, %c2_133, %510, %c0_134] : memref<2x4x24x24xf32, #tpu.memory_space<vmem>>, vector<2x1x8x24xf32>
      %c370 = arith.constant 370 : index
      %512 = memref.load %arg1[%c370] : memref<400xf32, #tpu.memory_space<smem>>
      %513 = vector.extract_strided_slice %511 {offsets = [0, 0, 0, 0], sizes = [2, 1, 8, 20], strides = [1, 1, 1, 1]} : vector<2x1x8x24xf32> to vector<2x1x8x20xf32>
      %514 = vector.broadcast %512 : f32 to vector<2x1x8x20xf32>
      %515 = arith.mulf %513, %514 : vector<2x1x8x20xf32>
      %516 = arith.addf %508, %515 : vector<2x1x8x20xf32>
      %c371 = arith.constant 371 : index
      %517 = memref.load %arg1[%c371] : memref<400xf32, #tpu.memory_space<smem>>
      %518 = vector.extract_strided_slice %511 {offsets = [0, 0, 0, 1], sizes = [2, 1, 8, 20], strides = [1, 1, 1, 1]} : vector<2x1x8x24xf32> to vector<2x1x8x20xf32>
      %519 = vector.broadcast %517 : f32 to vector<2x1x8x20xf32>
      %520 = arith.mulf %518, %519 : vector<2x1x8x20xf32>
      %521 = arith.addf %516, %520 : vector<2x1x8x20xf32>
      %c372 = arith.constant 372 : index
      %522 = memref.load %arg1[%c372] : memref<400xf32, #tpu.memory_space<smem>>
      %523 = vector.extract_strided_slice %511 {offsets = [0, 0, 0, 2], sizes = [2, 1, 8, 20], strides = [1, 1, 1, 1]} : vector<2x1x8x24xf32> to vector<2x1x8x20xf32>
      %524 = vector.broadcast %522 : f32 to vector<2x1x8x20xf32>
      %525 = arith.mulf %523, %524 : vector<2x1x8x20xf32>
      %526 = arith.addf %521, %525 : vector<2x1x8x20xf32>
      %c373 = arith.constant 373 : index
      %527 = memref.load %arg1[%c373] : memref<400xf32, #tpu.memory_space<smem>>
      %528 = vector.extract_strided_slice %511 {offsets = [0, 0, 0, 3], sizes = [2, 1, 8, 20], strides = [1, 1, 1, 1]} : vector<2x1x8x24xf32> to vector<2x1x8x20xf32>
      %529 = vector.broadcast %527 : f32 to vector<2x1x8x20xf32>
      %530 = arith.mulf %528, %529 : vector<2x1x8x20xf32>
      %531 = arith.addf %526, %530 : vector<2x1x8x20xf32>
      %c374 = arith.constant 374 : index
      %532 = memref.load %arg1[%c374] : memref<400xf32, #tpu.memory_space<smem>>
      %533 = vector.extract_strided_slice %511 {offsets = [0, 0, 0, 4], sizes = [2, 1, 8, 20], strides = [1, 1, 1, 1]} : vector<2x1x8x24xf32> to vector<2x1x8x20xf32>
      %534 = vector.broadcast %532 : f32 to vector<2x1x8x20xf32>
      %535 = arith.mulf %533, %534 : vector<2x1x8x20xf32>
      %536 = arith.addf %531, %535 : vector<2x1x8x20xf32>
      %c0_i32_135 = arith.constant 0 : i32
      %537 = arith.addi %113, %c0_i32_135 : i32
      %c0_136 = arith.constant 0 : index
      %c3_137 = arith.constant 3 : index
      %538 = arith.index_cast %537 : i32 to index
      %c0_138 = arith.constant 0 : index
      %539 = vector.load %arg0[%c0_136, %c3_137, %538, %c0_138] : memref<2x4x24x24xf32, #tpu.memory_space<vmem>>, vector<2x1x8x24xf32>
      %c375 = arith.constant 375 : index
      %540 = memref.load %arg1[%c375] : memref<400xf32, #tpu.memory_space<smem>>
      %541 = vector.extract_strided_slice %539 {offsets = [0, 0, 0, 0], sizes = [2, 1, 8, 20], strides = [1, 1, 1, 1]} : vector<2x1x8x24xf32> to vector<2x1x8x20xf32>
      %542 = vector.broadcast %540 : f32 to vector<2x1x8x20xf32>
      %543 = arith.mulf %541, %542 : vector<2x1x8x20xf32>
      %544 = arith.addf %536, %543 : vector<2x1x8x20xf32>
      %c376 = arith.constant 376 : index
      %545 = memref.load %arg1[%c376] : memref<400xf32, #tpu.memory_space<smem>>
      %546 = vector.extract_strided_slice %539 {offsets = [0, 0, 0, 1], sizes = [2, 1, 8, 20], strides = [1, 1, 1, 1]} : vector<2x1x8x24xf32> to vector<2x1x8x20xf32>
      %547 = vector.broadcast %545 : f32 to vector<2x1x8x20xf32>
      %548 = arith.mulf %546, %547 : vector<2x1x8x20xf32>
      %549 = arith.addf %544, %548 : vector<2x1x8x20xf32>
      %c377 = arith.constant 377 : index
      %550 = memref.load %arg1[%c377] : memref<400xf32, #tpu.memory_space<smem>>
      %551 = vector.extract_strided_slice %539 {offsets = [0, 0, 0, 2], sizes = [2, 1, 8, 20], strides = [1, 1, 1, 1]} : vector<2x1x8x24xf32> to vector<2x1x8x20xf32>
      %552 = vector.broadcast %550 : f32 to vector<2x1x8x20xf32>
      %553 = arith.mulf %551, %552 : vector<2x1x8x20xf32>
      %554 = arith.addf %549, %553 : vector<2x1x8x20xf32>
      %c378 = arith.constant 378 : index
      %555 = memref.load %arg1[%c378] : memref<400xf32, #tpu.memory_space<smem>>
      %556 = vector.extract_strided_slice %539 {offsets = [0, 0, 0, 3], sizes = [2, 1, 8, 20], strides = [1, 1, 1, 1]} : vector<2x1x8x24xf32> to vector<2x1x8x20xf32>
      %557 = vector.broadcast %555 : f32 to vector<2x1x8x20xf32>
      %558 = arith.mulf %556, %557 : vector<2x1x8x20xf32>
      %559 = arith.addf %554, %558 : vector<2x1x8x20xf32>
      %c379 = arith.constant 379 : index
      %560 = memref.load %arg1[%c379] : memref<400xf32, #tpu.memory_space<smem>>
      %561 = vector.extract_strided_slice %539 {offsets = [0, 0, 0, 4], sizes = [2, 1, 8, 20], strides = [1, 1, 1, 1]} : vector<2x1x8x24xf32> to vector<2x1x8x20xf32>
      %562 = vector.broadcast %560 : f32 to vector<2x1x8x20xf32>
      %563 = arith.mulf %561, %562 : vector<2x1x8x20xf32>
      %564 = arith.addf %559, %563 : vector<2x1x8x20xf32>
      %c1_i32_139 = arith.constant 1 : i32
      %565 = arith.addi %113, %c1_i32_139 : i32
      %c0_140 = arith.constant 0 : index
      %c3_141 = arith.constant 3 : index
      %566 = arith.index_cast %565 : i32 to index
      %c0_142 = arith.constant 0 : index
      %567 = vector.load %arg0[%c0_140, %c3_141, %566, %c0_142] : memref<2x4x24x24xf32, #tpu.memory_space<vmem>>, vector<2x1x8x24xf32>
      %c380 = arith.constant 380 : index
      %568 = memref.load %arg1[%c380] : memref<400xf32, #tpu.memory_space<smem>>
      %569 = vector.extract_strided_slice %567 {offsets = [0, 0, 0, 0], sizes = [2, 1, 8, 20], strides = [1, 1, 1, 1]} : vector<2x1x8x24xf32> to vector<2x1x8x20xf32>
      %570 = vector.broadcast %568 : f32 to vector<2x1x8x20xf32>
      %571 = arith.mulf %569, %570 : vector<2x1x8x20xf32>
      %572 = arith.addf %564, %571 : vector<2x1x8x20xf32>
      %c381 = arith.constant 381 : index
      %573 = memref.load %arg1[%c381] : memref<400xf32, #tpu.memory_space<smem>>
      %574 = vector.extract_strided_slice %567 {offsets = [0, 0, 0, 1], sizes = [2, 1, 8, 20], strides = [1, 1, 1, 1]} : vector<2x1x8x24xf32> to vector<2x1x8x20xf32>
      %575 = vector.broadcast %573 : f32 to vector<2x1x8x20xf32>
      %576 = arith.mulf %574, %575 : vector<2x1x8x20xf32>
      %577 = arith.addf %572, %576 : vector<2x1x8x20xf32>
      %c382 = arith.constant 382 : index
      %578 = memref.load %arg1[%c382] : memref<400xf32, #tpu.memory_space<smem>>
      %579 = vector.extract_strided_slice %567 {offsets = [0, 0, 0, 2], sizes = [2, 1, 8, 20], strides = [1, 1, 1, 1]} : vector<2x1x8x24xf32> to vector<2x1x8x20xf32>
      %580 = vector.broadcast %578 : f32 to vector<2x1x8x20xf32>
      %581 = arith.mulf %579, %580 : vector<2x1x8x20xf32>
      %582 = arith.addf %577, %581 : vector<2x1x8x20xf32>
      %c383 = arith.constant 383 : index
      %583 = memref.load %arg1[%c383] : memref<400xf32, #tpu.memory_space<smem>>
      %584 = vector.extract_strided_slice %567 {offsets = [0, 0, 0, 3], sizes = [2, 1, 8, 20], strides = [1, 1, 1, 1]} : vector<2x1x8x24xf32> to vector<2x1x8x20xf32>
      %585 = vector.broadcast %583 : f32 to vector<2x1x8x20xf32>
      %586 = arith.mulf %584, %585 : vector<2x1x8x20xf32>
      %587 = arith.addf %582, %586 : vector<2x1x8x20xf32>
      %c384 = arith.constant 384 : index
      %588 = memref.load %arg1[%c384] : memref<400xf32, #tpu.memory_space<smem>>
      %589 = vector.extract_strided_slice %567 {offsets = [0, 0, 0, 4], sizes = [2, 1, 8, 20], strides = [1, 1, 1, 1]} : vector<2x1x8x24xf32> to vector<2x1x8x20xf32>
      %590 = vector.broadcast %588 : f32 to vector<2x1x8x20xf32>
      %591 = arith.mulf %589, %590 : vector<2x1x8x20xf32>
      %592 = arith.addf %587, %591 : vector<2x1x8x20xf32>
      %c2_i32_143 = arith.constant 2 : i32
      %593 = arith.addi %113, %c2_i32_143 : i32
      %c0_144 = arith.constant 0 : index
      %c3_145 = arith.constant 3 : index
      %594 = arith.index_cast %593 : i32 to index
      %c0_146 = arith.constant 0 : index
      %595 = vector.load %arg0[%c0_144, %c3_145, %594, %c0_146] : memref<2x4x24x24xf32, #tpu.memory_space<vmem>>, vector<2x1x8x24xf32>
      %c385 = arith.constant 385 : index
      %596 = memref.load %arg1[%c385] : memref<400xf32, #tpu.memory_space<smem>>
      %597 = vector.extract_strided_slice %595 {offsets = [0, 0, 0, 0], sizes = [2, 1, 8, 20], strides = [1, 1, 1, 1]} : vector<2x1x8x24xf32> to vector<2x1x8x20xf32>
      %598 = vector.broadcast %596 : f32 to vector<2x1x8x20xf32>
      %599 = arith.mulf %597, %598 : vector<2x1x8x20xf32>
      %600 = arith.addf %592, %599 : vector<2x1x8x20xf32>
      %c386 = arith.constant 386 : index
      %601 = memref.load %arg1[%c386] : memref<400xf32, #tpu.memory_space<smem>>
      %602 = vector.extract_strided_slice %595 {offsets = [0, 0, 0, 1], sizes = [2, 1, 8, 20], strides = [1, 1, 1, 1]} : vector<2x1x8x24xf32> to vector<2x1x8x20xf32>
      %603 = vector.broadcast %601 : f32 to vector<2x1x8x20xf32>
      %604 = arith.mulf %602, %603 : vector<2x1x8x20xf32>
      %605 = arith.addf %600, %604 : vector<2x1x8x20xf32>
      %c387 = arith.constant 387 : index
      %606 = memref.load %arg1[%c387] : memref<400xf32, #tpu.memory_space<smem>>
      %607 = vector.extract_strided_slice %595 {offsets = [0, 0, 0, 2], sizes = [2, 1, 8, 20], strides = [1, 1, 1, 1]} : vector<2x1x8x24xf32> to vector<2x1x8x20xf32>
      %608 = vector.broadcast %606 : f32 to vector<2x1x8x20xf32>
      %609 = arith.mulf %607, %608 : vector<2x1x8x20xf32>
      %610 = arith.addf %605, %609 : vector<2x1x8x20xf32>
      %c388 = arith.constant 388 : index
      %611 = memref.load %arg1[%c388] : memref<400xf32, #tpu.memory_space<smem>>
      %612 = vector.extract_strided_slice %595 {offsets = [0, 0, 0, 3], sizes = [2, 1, 8, 20], strides = [1, 1, 1, 1]} : vector<2x1x8x24xf32> to vector<2x1x8x20xf32>
      %613 = vector.broadcast %611 : f32 to vector<2x1x8x20xf32>
      %614 = arith.mulf %612, %613 : vector<2x1x8x20xf32>
      %615 = arith.addf %610, %614 : vector<2x1x8x20xf32>
      %c389 = arith.constant 389 : index
      %616 = memref.load %arg1[%c389] : memref<400xf32, #tpu.memory_space<smem>>
      %617 = vector.extract_strided_slice %595 {offsets = [0, 0, 0, 4], sizes = [2, 1, 8, 20], strides = [1, 1, 1, 1]} : vector<2x1x8x24xf32> to vector<2x1x8x20xf32>
      %618 = vector.broadcast %616 : f32 to vector<2x1x8x20xf32>
      %619 = arith.mulf %617, %618 : vector<2x1x8x20xf32>
      %620 = arith.addf %615, %619 : vector<2x1x8x20xf32>
      %c3_i32_147 = arith.constant 3 : i32
      %621 = arith.addi %113, %c3_i32_147 : i32
      %c0_148 = arith.constant 0 : index
      %c3_149 = arith.constant 3 : index
      %622 = arith.index_cast %621 : i32 to index
      %c0_150 = arith.constant 0 : index
      %623 = vector.load %arg0[%c0_148, %c3_149, %622, %c0_150] : memref<2x4x24x24xf32, #tpu.memory_space<vmem>>, vector<2x1x8x24xf32>
      %c390 = arith.constant 390 : index
      %624 = memref.load %arg1[%c390] : memref<400xf32, #tpu.memory_space<smem>>
      %625 = vector.extract_strided_slice %623 {offsets = [0, 0, 0, 0], sizes = [2, 1, 8, 20], strides = [1, 1, 1, 1]} : vector<2x1x8x24xf32> to vector<2x1x8x20xf32>
      %626 = vector.broadcast %624 : f32 to vector<2x1x8x20xf32>
      %627 = arith.mulf %625, %626 : vector<2x1x8x20xf32>
      %628 = arith.addf %620, %627 : vector<2x1x8x20xf32>
      %c391 = arith.constant 391 : index
      %629 = memref.load %arg1[%c391] : memref<400xf32, #tpu.memory_space<smem>>
      %630 = vector.extract_strided_slice %623 {offsets = [0, 0, 0, 1], sizes = [2, 1, 8, 20], strides = [1, 1, 1, 1]} : vector<2x1x8x24xf32> to vector<2x1x8x20xf32>
      %631 = vector.broadcast %629 : f32 to vector<2x1x8x20xf32>
      %632 = arith.mulf %630, %631 : vector<2x1x8x20xf32>
      %633 = arith.addf %628, %632 : vector<2x1x8x20xf32>
      %c392 = arith.constant 392 : index
      %634 = memref.load %arg1[%c392] : memref<400xf32, #tpu.memory_space<smem>>
      %635 = vector.extract_strided_slice %623 {offsets = [0, 0, 0, 2], sizes = [2, 1, 8, 20], strides = [1, 1, 1, 1]} : vector<2x1x8x24xf32> to vector<2x1x8x20xf32>
      %636 = vector.broadcast %634 : f32 to vector<2x1x8x20xf32>
      %637 = arith.mulf %635, %636 : vector<2x1x8x20xf32>
      %638 = arith.addf %633, %637 : vector<2x1x8x20xf32>
      %c393 = arith.constant 393 : index
      %639 = memref.load %arg1[%c393] : memref<400xf32, #tpu.memory_space<smem>>
      %640 = vector.extract_strided_slice %623 {offsets = [0, 0, 0, 3], sizes = [2, 1, 8, 20], strides = [1, 1, 1, 1]} : vector<2x1x8x24xf32> to vector<2x1x8x20xf32>
      %641 = vector.broadcast %639 : f32 to vector<2x1x8x20xf32>
      %642 = arith.mulf %640, %641 : vector<2x1x8x20xf32>
      %643 = arith.addf %638, %642 : vector<2x1x8x20xf32>
      %c394 = arith.constant 394 : index
      %644 = memref.load %arg1[%c394] : memref<400xf32, #tpu.memory_space<smem>>
      %645 = vector.extract_strided_slice %623 {offsets = [0, 0, 0, 4], sizes = [2, 1, 8, 20], strides = [1, 1, 1, 1]} : vector<2x1x8x24xf32> to vector<2x1x8x20xf32>
      %646 = vector.broadcast %644 : f32 to vector<2x1x8x20xf32>
      %647 = arith.mulf %645, %646 : vector<2x1x8x20xf32>
      %648 = arith.addf %643, %647 : vector<2x1x8x20xf32>
      %c4_i32_151 = arith.constant 4 : i32
      %649 = arith.addi %113, %c4_i32_151 : i32
      %c0_152 = arith.constant 0 : index
      %c3_153 = arith.constant 3 : index
      %650 = arith.index_cast %649 : i32 to index
      %c0_154 = arith.constant 0 : index
      %651 = vector.load %arg0[%c0_152, %c3_153, %650, %c0_154] : memref<2x4x24x24xf32, #tpu.memory_space<vmem>>, vector<2x1x8x24xf32>
      %c395 = arith.constant 395 : index
      %652 = memref.load %arg1[%c395] : memref<400xf32, #tpu.memory_space<smem>>
      %653 = vector.extract_strided_slice %651 {offsets = [0, 0, 0, 0], sizes = [2, 1, 8, 20], strides = [1, 1, 1, 1]} : vector<2x1x8x24xf32> to vector<2x1x8x20xf32>
      %654 = vector.broadcast %652 : f32 to vector<2x1x8x20xf32>
      %655 = arith.mulf %653, %654 : vector<2x1x8x20xf32>
      %656 = arith.addf %648, %655 : vector<2x1x8x20xf32>
      %c396 = arith.constant 396 : index
      %657 = memref.load %arg1[%c396] : memref<400xf32, #tpu.memory_space<smem>>
      %658 = vector.extract_strided_slice %651 {offsets = [0, 0, 0, 1], sizes = [2, 1, 8, 20], strides = [1, 1, 1, 1]} : vector<2x1x8x24xf32> to vector<2x1x8x20xf32>
      %659 = vector.broadcast %657 : f32 to vector<2x1x8x20xf32>
      %660 = arith.mulf %658, %659 : vector<2x1x8x20xf32>
      %661 = arith.addf %656, %660 : vector<2x1x8x20xf32>
      %c397 = arith.constant 397 : index
      %662 = memref.load %arg1[%c397] : memref<400xf32, #tpu.memory_space<smem>>
      %663 = vector.extract_strided_slice %651 {offsets = [0, 0, 0, 2], sizes = [2, 1, 8, 20], strides = [1, 1, 1, 1]} : vector<2x1x8x24xf32> to vector<2x1x8x20xf32>
      %664 = vector.broadcast %662 : f32 to vector<2x1x8x20xf32>
      %665 = arith.mulf %663, %664 : vector<2x1x8x20xf32>
      %666 = arith.addf %661, %665 : vector<2x1x8x20xf32>
      %c398 = arith.constant 398 : index
      %667 = memref.load %arg1[%c398] : memref<400xf32, #tpu.memory_space<smem>>
      %668 = vector.extract_strided_slice %651 {offsets = [0, 0, 0, 3], sizes = [2, 1, 8, 20], strides = [1, 1, 1, 1]} : vector<2x1x8x24xf32> to vector<2x1x8x20xf32>
      %669 = vector.broadcast %667 : f32 to vector<2x1x8x20xf32>
      %670 = arith.mulf %668, %669 : vector<2x1x8x20xf32>
      %671 = arith.addf %666, %670 : vector<2x1x8x20xf32>
      %c399 = arith.constant 399 : index
      %672 = memref.load %arg1[%c399] : memref<400xf32, #tpu.memory_space<smem>>
      %673 = vector.extract_strided_slice %651 {offsets = [0, 0, 0, 4], sizes = [2, 1, 8, 20], strides = [1, 1, 1, 1]} : vector<2x1x8x24xf32> to vector<2x1x8x20xf32>
      %674 = vector.broadcast %672 : f32 to vector<2x1x8x20xf32>
      %675 = arith.mulf %673, %674 : vector<2x1x8x20xf32>
      %676 = arith.addf %671, %675 : vector<2x1x8x20xf32>
      %c0_155 = arith.constant 0 : index
      %c3_156 = arith.constant 3 : index
      %677 = arith.index_cast %113 : i32 to index
      %c0_157 = arith.constant 0 : index
      %678 = vector.load %arg5[%c0_155, %c3_156, %677, %c0_157] : memref<2x4x20x20xf32, #tpu.memory_space<vmem>>, vector<2x1x8x20xf32>
      tpu.vector_store %arg5[%c0_155, %c3_156, %677, %c0_157], %676 {strides = array<i32>} : memref<2x4x20x20xf32, #tpu.memory_space<vmem>>, vector<2x1x8x20xf32>,
    }
    %c3_i32_59 = arith.constant 3 : i32
    %c0_60 = arith.constant 0 : index
    %c3_61 = arith.constant 3 : index
    %c0_62 = arith.constant 0 : index
    %c0_63 = arith.constant 0 : index
    %86 = vector.load %arg5[%c0_60, %c3_61, %c0_62, %c0_63] : memref<2x4x20x20xf32, #tpu.memory_space<vmem>>, vector<2x1x20x20xf32>
    %87 = vector.shape_cast %86 : vector<2x1x20x20xf32> to vector<1x2x1x20x20xf32>
    %cst_64 = arith.constant dense<0.000000e+00> : vector<1xf32>
    %88 = vector.multi_reduction <add>, %87, %cst_64 [1, 2, 3, 4] : vector<1x2x1x20x20xf32> to vector<1xf32>
    %89 = vector.shape_cast %88 : vector<1xf32> to vector<1x1x1x1x1xf32>
    %90 = vector.extract %89[0, 0, 0, 0, 0] : f32 from vector<1x1x1x1x1xf32>
    %cst_65 = arith.constant 8.000000e+02 : f32
    %91 = arith.divf %90, %cst_65 : f32
    %92 = vector.broadcast %91 : f32 to vector<2x1x20x20xf32>
    %93 = arith.subf %86, %92 : vector<2x1x20x20xf32>
    %94 = arith.mulf %93, %93 : vector<2x1x20x20xf32>
    %95 = vector.shape_cast %94 : vector<2x1x20x20xf32> to vector<1x2x1x20x20xf32>
    %cst_66 = arith.constant dense<0.000000e+00> : vector<1xf32>
    %96 = vector.multi_reduction <add>, %95, %cst_66 [1, 2, 3, 4] : vector<1x2x1x20x20xf32> to vector<1xf32>
    %97 = vector.shape_cast %96 : vector<1xf32> to vector<1x1x1x1x1xf32>
    %98 = vector.extract %97[0, 0, 0, 0, 0] : f32 from vector<1x1x1x1x1xf32>
    %cst_67 = arith.constant 8.000000e+02 : f32
    %99 = arith.divf %98, %cst_67 : f32
    %c3_68 = arith.constant 3 : index
    %100 = memref.load %arg3[%c3_68] : memref<4xf32, #tpu.memory_space<smem>>
    %cst_69 = arith.constant 9.99999974E-6 : f32
    %101 = arith.addf %99, %cst_69 : f32
    %102 = math.rsqrt %101 : f32
    %103 = arith.mulf %100, %102 : f32
    %104 = vector.broadcast %103 : f32 to vector<2x1x20x20xf32>
    %105 = arith.mulf %93, %104 : vector<2x1x20x20xf32>
    %c3_70 = arith.constant 3 : index
    %106 = memref.load %arg4[%c3_70] : memref<4xf32, #tpu.memory_space<smem>>
    %107 = vector.broadcast %106 : f32 to vector<2x1x20x20xf32>
    %108 = arith.addf %105, %107 : vector<2x1x20x20xf32>
    %cst_71 = arith.constant 0.000000e+00 : f32
    %109 = vector.broadcast %cst_71 : f32 to vector<2x1x20x20xf32>
    %110 = arith.maximumf %108, %109 : vector<2x1x20x20xf32>
    %c0_72 = arith.constant 0 : index
    %c3_73 = arith.constant 3 : index
    %c0_74 = arith.constant 0 : index
    %c0_75 = arith.constant 0 : index
    %111 = vector.load %arg5[%c0_72, %c3_73, %c0_74, %c0_75] : memref<2x4x20x20xf32, #tpu.memory_space<vmem>>, vector<2x1x20x20xf32>
    tpu.vector_store %arg5[%c0_72, %c3_73, %c0_74, %c0_75], %110 {strides = array<i32>} : memref<2x4x20x20xf32, #tpu.memory_space<vmem>>, vector<2x1x20x20xf32>,
    return
  }
}

</mosaic_0001>

<llo_original>
// kernel: tpu_custom_call.1
$region0: #{tpu_custom_call.1}
  #allocation0 [shape = 'u32[]', space=smem, size = 0x4, offset = 0x4, fixed_abs, tag = 'smem constant byte address 0x4 - core index']
  #allocation1 [shape = 'u32[72,128]{1,0:T(1,128)}', space=vmem, size = 0x9000, scoped, tag = 'internal scratch']
  %s0 = inlined_call_operand.hbm [shape: f32[2,4,24,24], index: 0, kind: input, shape index: {}]
  %s1 = inlined_call_operand.hbm [shape: f32[400], index: 1, kind: input, shape index: {}]
  %s2 = inlined_call_operand.vmem [shape: f32[4], index: 2, kind: input, shape index: {}]
  %s3 = inlined_call_operand.vmem [shape: f32[4], index: 3, kind: input, shape index: {}]
  %s4 = inlined_call_operand.vmem [shape: f32[4], index: 4, kind: input, shape index: {}]
  %s5 = inlined_call_operand.vmem [shape: f32[2,4,20,20], index: 5, kind: output, shape index: {}]
  %s6 = sld [smem:[#allocation0]]
  $region78: #{tpu_custom_call.1} parent=0
    _
  %s8 = ssub.s32 1, %s6
  %s9 = scalar_select 0, %s8, %s6
  $region1: #{tpu_custom_call.1} parent=0
    #allocation2 [shape = 'u8[98304]{0}', space=vmem, size = 0x18000, scoped, tag = 'input window, operand 0, single buffered']
    #allocation3 [shape = 's32[1]{0}', space=sflag, size = 0x4, scoped, tag = 'scoped memory for tpu_custom_call.1']
    #allocation4 [shape = 's32[1]{0}', space=sflag, size = 0x4, scoped, tag = 'scoped memory for tpu_custom_call.1']
    #allocation5 [shape = 's32[1]{0}', space=sflag, size = 0x4, scoped, tag = 'scoped memory for tpu_custom_call.1']
    #allocation6 [shape = 'u8[2048]{0}', space=smem, size = 0x800, scoped, tag = 'input window, operand 1, single buffered']
    #allocation7 [shape = 'u8[512]{0}', space=smem, size = 0x200, scoped, tag = 'input window, operand 2, single buffered']
    #allocation8 [shape = 'u8[512]{0}', space=smem, size = 0x200, scoped, tag = 'input window, operand 3, single buffered']
    #allocation9 [shape = 's32[1]{0}', space=sflag, size = 0x4, scoped, tag = 'scoped memory for tpu_custom_call.1']
    #allocation10 [shape = 'u8[512]{0}', space=smem, size = 0x200, scoped, tag = 'input window, operand 4, single buffered']
    %10 = vsyncpa [#allocation3], 0
    %11 = vsyncpa [#allocation4], 0
    %12 = vsyncpa [#allocation5], 0
    %13 = vsyncpa [#allocation9], 0
    // Predicated region
    $region2: #{tpu_custom_call.1} parent=1 // pred_check
      _
    $region3: #{tpu_custom_call.1} parent=1 // pred_check_branch
      %15 = sbr.rel (0) target = $region5
    $region4: #{tpu_custom_call.1} parent=1 // pred_region
      %17 = vsyncadd [#allocation3], 0
      %s18 = sshll.u32 %s0, 4
      %s19 = int_to_ptr.hbm [resolvable:$true] %s18
      %s20 = sshll.u32 [#allocation2], 4
      %s21 = int_to_ptr.vmem [resolvable:$true] %s20
      %26 = dma.hbm_to_vmem [thread:$0]  %s19, 3072, %s21, [#allocation3], 128, 128, 8
    $region5: #{tpu_custom_call.1} parent=1 // pred_fallthru
      _
    // Predicated region
    $region6: #{tpu_custom_call.1} parent=1 // pred_check
      _
    $region7: #{tpu_custom_call.1} parent=1 // pred_check_branch
      %28 = sbr.rel (0) target = $region9
    $region8: #{tpu_custom_call.1} parent=1 // pred_region
      %30 = vsyncadd [#allocation4], 0
      %s32 = sshll.u32 %s1, 4
      %s33 = int_to_ptr.hbm [resolvable:$true] %s32
      %35 = dma.hbm_to_smem %s33, 64, [#allocation6], [#allocation4]
    $region9: #{tpu_custom_call.1} parent=1 // pred_fallthru
      _
    // Predicated region
    $region10: #{tpu_custom_call.1} parent=1 // pred_check
      _
    $region11: #{tpu_custom_call.1} parent=1 // pred_check_branch
      %37 = sbr.rel (0) target = $region13
    $region12: #{tpu_custom_call.1} parent=1 // pred_region
      %39 = vsyncadd [#allocation5], 0
      %s41 = sshll.u32 %s2, 4
      %s42 = int_to_ptr.vmem [resolvable:$true] %s41
      %44 = dma.vmem_to_smem %s42, 16, [#allocation7], [#allocation5]
    $region13: #{tpu_custom_call.1} parent=1 // pred_fallthru
      _
    // Predicated region
    $region14: #{tpu_custom_call.1} parent=1 // pred_check
      _
    $region15: #{tpu_custom_call.1} parent=1 // pred_check_branch
      %46 = sbr.rel (0) target = $region17
    $region16: #{tpu_custom_call.1} parent=1 // pred_region
      %48 = vsyncadd [#allocation9], 0
      %s50 = sshll.u32 %s3, 4
      %s51 = int_to_ptr.vmem [resolvable:$true] %s50
      %53 = dma.vmem_to_smem %s51, 16, [#allocation8], [#allocation9]
    $region17: #{tpu_custom_call.1} parent=1 // pred_fallthru
      _
    // Predicated region
    $region18: #{tpu_custom_call.1} parent=1 // pred_check
      _
    $region19: #{tpu_custom_call.1} parent=1 // pred_check_branch
      %55 = sbr.rel (0) target = $region21
    $region20: #{tpu_custom_call.1} parent=1 // pred_region
      %57 = vsyncadd [#allocation9], 0
      %s59 = sshll.u32 %s4, 4
      %s60 = int_to_ptr.vmem [resolvable:$true] %s59
      %62 = dma.vmem_to_smem %s60, 16, [#allocation10], [#allocation9]
    $region21: #{tpu_custom_call.1} parent=1 // pred_fallthru
      _
    // Predicated region
    $region22: #{tpu_custom_call.1} parent=1 // pred_check
      _
    $region23: #{tpu_custom_call.1} parent=1 // pred_check_branch
      %64 = sbr.rel (0) target = $region25
    $region24: #{tpu_custom_call.1} parent=1 // pred_region
      %66 = dma.done [#allocation3], 3072
    $region25: #{tpu_custom_call.1} parent=1 // pred_fallthru
      _
    // Predicated region
    $region26: #{tpu_custom_call.1} parent=1 // pred_check
      _
    $region27: #{tpu_custom_call.1} parent=1 // pred_check_branch
      %68 = sbr.rel (0) target = $region29
    $region28: #{tpu_custom_call.1} parent=1 // pred_region
      %70 = dma.done [#allocation4], 64
    $region29: #{tpu_custom_call.1} parent=1 // pred_fallthru
      _
    // Predicated region
    $region30: #{tpu_custom_call.1} parent=1 // pred_check
      _
    $region31: #{tpu_custom_call.1} parent=1 // pred_check_branch
      %72 = sbr.rel (0) target = $region33
    $region32: #{tpu_custom_call.1} parent=1 // pred_region
      %74 = dma.done [#allocation5], 16
    $region33: #{tpu_custom_call.1} parent=1 // pred_fallthru
      _
    // Predicated region
    $region34: #{tpu_custom_call.1} parent=1 // pred_check
      _
    $region35: #{tpu_custom_call.1} parent=1 // pred_check_branch
      %76 = sbr.rel (0) target = $region37
    $region36: #{tpu_custom_call.1} parent=1 // pred_region
      %78 = dma.done [#allocation9], 16
    $region37: #{tpu_custom_call.1} parent=1 // pred_fallthru
      _
    // Predicated region
    $region38: #{tpu_custom_call.1} parent=1 // pred_check
      _
    $region39: #{tpu_custom_call.1} parent=1 // pred_check_branch
      %80 = sbr.rel (0) target = $region41
    $region40: #{tpu_custom_call.1} parent=1 // pred_region
      %82 = dma.done [#allocation9], 16
    $region41: #{tpu_custom_call.1} parent=1 // pred_fallthru
      _
    %83 = sfence
    %s84 = sld [smem:[#allocation7]]
    loop: start=0, step=1, limit=3
    $region42: #{tpu_custom_call.1} parent=1 // loop_pre_header
      _
    $region43: #{tpu_custom_call.1} parent=1 // loop_header
      %s86 = sphi 0, %s90
      %p87 = scmp.ge.s32.totalorder %s86, 3
    $region44: #{tpu_custom_call.1} parent=1 // loop_header_branch
      %89 = sbr.rel (%p87) target = $region48
    $region45: #{tpu_custom_call.1} parent=1 // loop_body
      %s91 = smul.u32 %s86, 8
      %p92 = scmp.lt.s32.totalorder %s91, 12
      %s93 = scalar_select %p92, %s91, 12
      %v94 = vstv %s84
      %v95 = vadd.f32 %v94, 0.0
      %s96 = scalar_lea.vmem [#allocation2], %s93
      %v97 = vld [vmem:[%s96] sm:$0xff]
      %v98 = vld [vmem:[%s96 + $0x60] sm:$0xff]
      %s99 = sld [smem:[#allocation6]]
      %v100 = vstv %s99
      %v101 = vmul.f32 %v97, %v100
      %v102 = vmul.f32 %v98, %v100
      %v103 = vadd.f32 %v95, %v101
      %v104 = vadd.f32 %v95, %v102
      %s105 = sld [smem:[#allocation6 + $0x1]]
      %v106 = vstv %s105
      %v107 = vmul.f32 %v97, %v106
      %v108 = vmul.f32 %v98, %v106
      %111 = vrot.lane.b32.xlu0 %v107, 127
      %v112 = vpop.permute.xlu0 %111
      %113 = vrot.lane.b32.xlu0 %v108, 127
      %v114 = vpop.permute.xlu0 %113
      %v117 = vadd.f32 %v103, %v112
      %v118 = vadd.f32 %v104, %v114
      %s119 = sld [smem:[#allocation6 + $0x2]]
      %v120 = vstv %s119
      %v121 = vmul.f32 %v97, %v120
      %v122 = vmul.f32 %v98, %v120
      %125 = vrot.lane.b32.xlu0 %v121, 126
      %v126 = vpop.permute.xlu0 %125
      %127 = vrot.lane.b32.xlu0 %v122, 126
      %v128 = vpop.permute.xlu0 %127
      %v131 = vadd.f32 %v117, %v126
      %v132 = vadd.f32 %v118, %v128
      %s133 = sld [smem:[#allocation6 + $0x3]]
      %v134 = vstv %s133
      %v135 = vmul.f32 %v97, %v134
      %v136 = vmul.f32 %v98, %v134
      %139 = vrot.lane.b32.xlu0 %v135, 125
      %v140 = vpop.permute.xlu0 %139
      %141 = vrot.lane.b32.xlu0 %v136, 125
      %v142 = vpop.permute.xlu0 %141
      %v145 = vadd.f32 %v131, %v140
      %v146 = vadd.f32 %v132, %v142
      %s147 = sld [smem:[#allocation6 + $0x4]]
      %v148 = vstv %s147
      %v149 = vmul.f32 %v97, %v148
      %v150 = vmul.f32 %v98, %v148
      %153 = vrot.lane.b32.xlu0 %v149, 124
      %v154 = vpop.permute.xlu0 %153
      %155 = vrot.lane.b32.xlu0 %v150, 124
      %v156 = vpop.permute.xlu0 %155
      %v159 = vadd.f32 %v145, %v154
      %v160 = vadd.f32 %v146, %v156
      %s161 = sadd.s32 %s93, 1
      %s162 = scalar_lea.vmem [#allocation2], %s161
      %v163 = vld [vmem:[%s162] sm:$0xff]
      %v164 = vld [vmem:[%s162 + $0x60] sm:$0xff]
      %s165 = sld [smem:[#allocation6 + $0x5]]
      %v166 = vstv %s165
      %v167 = vmul.f32 %v163, %v166
      %v168 = vmul.f32 %v164, %v166
      %v169 = vadd.f32 %v159, %v167
      %v170 = vadd.f32 %v160, %v168
      %s171 = sld [smem:[#allocation6 + $0x6]]
      %v172 = vstv %s171
      %v173 = vmul.f32 %v163, %v172
      %v174 = vmul.f32 %v164, %v172
      %177 = vrot.lane.b32.xlu0 %v173, 127
      %v178 = vpop.permute.xlu0 %177
      %179 = vrot.lane.b32.xlu0 %v174, 127
      %v180 = vpop.permute.xlu0 %179
      %v183 = vadd.f32 %v169, %v178
      %v184 = vadd.f32 %v170, %v180
      %s185 = sld [smem:[#allocation6 + $0x7]]
      %v186 = vstv %s185
      %v187 = vmul.f32 %v163, %v186
      %v188 = vmul.f32 %v164, %v186
      %191 = vrot.lane.b32.xlu0 %v187, 126
      %v192 = vpop.permute.xlu0 %191
      %193 = vrot.lane.b32.xlu0 %v188, 126
      %v194 = vpop.permute.xlu0 %193
      %v197 = vadd.f32 %v183, %v192
      %v198 = vadd.f32 %v184, %v194
      %s199 = sld [smem:[#allocation6 + $0x8]]
      %v200 = vstv %s199
      %v201 = vmul.f32 %v163, %v200
      %v202 = vmul.f32 %v164, %v200
      %205 = vrot.lane.b32.xlu0 %v201, 125
      %v206 = vpop.permute.xlu0 %205
      %207 = vrot.lane.b32.xlu0 %v202, 125
      %v208 = vpop.permute.xlu0 %207
      %v211 = vadd.f32 %v197, %v206
      %v212 = vadd.f32 %v198, %v208
      %s213 = sld [smem:[#allocation6 + $0x9]]
      %v214 = vstv %s213
      %v215 = vmul.f32 %v163, %v214
      %v216 = vmul.f32 %v164, %v214
      %219 = vrot.lane.b32.xlu0 %v215, 124
      %v220 = vpop.permute.xlu0 %219
      %221 = vrot.lane.b32.xlu0 %v216, 124
      %v222 = vpop.permute.xlu0 %221
      %v225 = vadd.f32 %v211, %v220
      %v226 = vadd.f32 %v212, %v222
      %s227 = sadd.s32 %s93, 2
      %s228 = scalar_lea.vmem [#allocation2], %s227
      %v229 = vld [vmem:[%s228] sm:$0xff]
      %v230 = vld [vmem:[%s228 + $0x60] sm:$0xff]
      %s231 = sld [smem:[#allocation6 + $0xa]]
      %v232 = vstv %s231
      %v233 = vmul.f32 %v229, %v232
      %v234 = vmul.f32 %v230, %v232
      %v235 = vadd.f32 %v225, %v233
      %v236 = vadd.f32 %v226, %v234
      %s237 = sld [smem:[#allocation6 + $0xb]]
      %v238 = vstv %s237
      %v239 = vmul.f32 %v229, %v238
      %v240 = vmul.f32 %v230, %v238
      %243 = vrot.lane.b32.xlu0 %v239, 127
      %v244 = vpop.permute.xlu0 %243
      %245 = vrot.lane.b32.xlu0 %v240, 127
      %v246 = vpop.permute.xlu0 %245
      %v249 = vadd.f32 %v235, %v244
      %v250 = vadd.f32 %v236, %v246
      %s251 = sld [smem:[#allocation6 + $0xc]]
      %v252 = vstv %s251
      %v253 = vmul.f32 %v229, %v252
      %v254 = vmul.f32 %v230, %v252
      %257 = vrot.lane.b32.xlu0 %v253, 126
      %v258 = vpop.permute.xlu0 %257
      %259 = vrot.lane.b32.xlu0 %v254, 126
      %v260 = vpop.permute.xlu0 %259
      %v263 = vadd.f32 %v249, %v258
      %v264 = vadd.f32 %v250, %v260
      %s265 = sld [smem:[#allocation6 + $0xd]]
      %v266 = vstv %s265
      %v267 = vmul.f32 %v229, %v266
      %v268 = vmul.f32 %v230, %v266
      %271 = vrot.lane.b32.xlu0 %v267, 125
      %v272 = vpop.permute.xlu0 %271
      %273 = vrot.lane.b32.xlu0 %v268, 125
      %v274 = vpop.permute.xlu0 %273
      %v277 = vadd.f32 %v263, %v272
      %v278 = vadd.f32 %v264, %v274
      %s279 = sld [smem:[#allocation6 + $0xe]]
      %v280 = vstv %s279
      %v281 = vmul.f32 %v229, %v280
      %v282 = vmul.f32 %v230, %v280
      %285 = vrot.lane.b32.xlu0 %v281, 124
      %v286 = vpop.permute.xlu0 %285
      %287 = vrot.lane.b32.xlu0 %v282, 124
      %v288 = vpop.permute.xlu0 %287
      %v291 = vadd.f32 %v277, %v286
      %v292 = vadd.f32 %v278, %v288
      %s293 = sadd.s32 %s93, 3
      %s294 = scalar_lea.vmem [#allocation2], %s293
      %v295 = vld [vmem:[%s294] sm:$0xff]
      %v296 = vld [vmem:[%s294 + $0x60] sm:$0xff]
      %s297 = sld [smem:[#allocation6 + $0xf]]
      %v298 = vstv %s297
      %v299 = vmul.f32 %v295, %v298
      %v300 = vmul.f32 %v296, %v298
      %v301 = vadd.f32 %v291, %v299
      %v302 = vadd.f32 %v292, %v300
      %s303 = sld [smem:[#allocation6 + $0x10]]
      %v304 = vstv %s303
      %v305 = vmul.f32 %v295, %v304
      %v306 = vmul.f32 %v296, %v304
      %309 = vrot.lane.b32.xlu0 %v305, 127
      %v310 = vpop.permute.xlu0 %309
      %311 = vrot.lane.b32.xlu0 %v306, 127
      %v312 = vpop.permute.xlu0 %311
      %v315 = vadd.f32 %v301, %v310
      %v316 = vadd.f32 %v302, %v312
      %s317 = sld [smem:[#allocation6 + $0x11]]
      %v318 = vstv %s317
      %v319 = vmul.f32 %v295, %v318
      %v320 = vmul.f32 %v296, %v318
      %323 = vrot.lane.b32.xlu0 %v319, 126
      %v324 = vpop.permute.xlu0 %323
      %325 = vrot.lane.b32.xlu0 %v320, 126
      %v326 = vpop.permute.xlu0 %325
      %v329 = vadd.f32 %v315, %v324
      %v330 = vadd.f32 %v316, %v326
      %s331 = sld [smem:[#allocation6 + $0x12]]
      %v332 = vstv %s331
      %v333 = vmul.f32 %v295, %v332
      %v334 = vmul.f32 %v296, %v332
      %337 = vrot.lane.b32.xlu0 %v333, 125
      %v338 = vpop.permute.xlu0 %337
      %339 = vrot.lane.b32.xlu0 %v334, 125
      %v340 = vpop.permute.xlu0 %339
      %v343 = vadd.f32 %v329, %v338
      %v344 = vadd.f32 %v330, %v340
      %s345 = sld [smem:[#allocation6 + $0x13]]
      %v346 = vstv %s345
      %v347 = vmul.f32 %v295, %v346
      %v348 = vmul.f32 %v296, %v346
      %351 = vrot.lane.b32.xlu0 %v347, 124
      %v352 = vpop.permute.xlu0 %351
      %353 = vrot.lane.b32.xlu0 %v348, 124
      %v354 = vpop.permute.xlu0 %353
      %v357 = vadd.f32 %v343, %v352
      %v358 = vadd.f32 %v344, %v354
      %s359 = sadd.s32 %s93, 4
      %s360 = scalar_lea.vmem [#allocation2], %s359
      %v361 = vld [vmem:[%s360] sm:$0xff]
      %v362 = vld [vmem:[%s360 + $0x60] sm:$0xff]
      %s363 = sld [smem:[#allocation6 + $0x14]]
      %v364 = vstv %s363
      %v365 = vmul.f32 %v361, %v364
      %v366 = vmul.f32 %v362, %v364
      %v367 = vadd.f32 %v357, %v365
      %v368 = vadd.f32 %v358, %v366
      %s369 = sld [smem:[#allocation6 + $0x15]]
      %v370 = vstv %s369
      %v371 = vmul.f32 %v361, %v370
      %v372 = vmul.f32 %v362, %v370
      %375 = vrot.lane.b32.xlu0 %v371, 127
      %v376 = vpop.permute.xlu0 %375
      %377 = vrot.lane.b32.xlu0 %v372, 127
      %v378 = vpop.permute.xlu0 %377
      %v381 = vadd.f32 %v367, %v376
      %v382 = vadd.f32 %v368, %v378
      %s383 = sld [smem:[#allocation6 + $0x16]]
      %v384 = vstv %s383
      %v385 = vmul.f32 %v361, %v384
      %v386 = vmul.f32 %v362, %v384
      %389 = vrot.lane.b32.xlu0 %v385, 126
      %v390 = vpop.permute.xlu0 %389
      %391 = vrot.lane.b32.xlu0 %v386, 126
      %v392 = vpop.permute.xlu0 %391
      %v395 = vadd.f32 %v381, %v390
      %v396 = vadd.f32 %v382, %v392
      %s397 = sld [smem:[#allocation6 + $0x17]]
      %v398 = vstv %s397
      %v399 = vmul.f32 %v361, %v398
      %v400 = vmul.f32 %v362, %v398
      %403 = vrot.lane.b32.xlu0 %v399, 125
      %v404 = vpop.permute.xlu0 %403
      %405 = vrot.lane.b32.xlu0 %v400, 125
      %v406 = vpop.permute.xlu0 %405
      %v409 = vadd.f32 %v395, %v404
      %v410 = vadd.f32 %v396, %v406
      %s411 = sld [smem:[#allocation6 + $0x18]]
      %v412 = vstv %s411
      %v413 = vmul.f32 %v361, %v412
      %v414 = vmul.f32 %v362, %v412
      %417 = vrot.lane.b32.xlu0 %v413, 124
      %v418 = vpop.permute.xlu0 %417
      %419 = vrot.lane.b32.xlu0 %v414, 124
      %v420 = vpop.permute.xlu0 %419
      %v423 = vadd.f32 %v409, %v418
      %v424 = vadd.f32 %v410, %v420
      %s425 = sadd.s32 %s93, 24
      %s426 = scalar_lea.vmem [#allocation2], %s425
      %v427 = vld [vmem:[%s426] sm:$0xff]
      %v428 = vld [vmem:[%s426 + $0x60] sm:$0xff]
      %s429 = sld [smem:[#allocation6 + $0x19]]
      %v430 = vstv %s429
      %v431 = vmul.f32 %v427, %v430
      %v432 = vmul.f32 %v428, %v430
      %v433 = vadd.f32 %v423, %v431
      %v434 = vadd.f32 %v424, %v432
      %s435 = sld [smem:[#allocation6 + $0x1a]]
      %v436 = vstv %s435
      %v437 = vmul.f32 %v427, %v436
      %v438 = vmul.f32 %v428, %v436
      %441 = vrot.lane.b32.xlu0 %v437, 127
      %v442 = vpop.permute.xlu0 %441
      %443 = vrot.lane.b32.xlu0 %v438, 127
      %v444 = vpop.permute.xlu0 %443
      %v447 = vadd.f32 %v433, %v442
      %v448 = vadd.f32 %v434, %v444
      %s449 = sld [smem:[#allocation6 + $0x1b]]
      %v450 = vstv %s449
      %v451 = vmul.f32 %v427, %v450
      %v452 = vmul.f32 %v428, %v450
      %455 = vrot.lane.b32.xlu0 %v451, 126
      %v456 = vpop.permute.xlu0 %455
      %457 = vrot.lane.b32.xlu0 %v452, 126
      %v458 = vpop.permute.xlu0 %457
      %v461 = vadd.f32 %v447, %v456
      %v462 = vadd.f32 %v448, %v458
      %s463 = sld [smem:[#allocation6 + $0x1c]]
      %v464 = vstv %s463
      %v465 = vmul.f32 %v427, %v464
      %v466 = vmul.f32 %v428, %v464
      %469 = vrot.lane.b32.xlu0 %v465, 125
      %v470 = vpop.permute.xlu0 %469
      %471 = vrot.lane.b32.xlu0 %v466, 125
      %v472 = vpop.permute.xlu0 %471
      %v475 = vadd.f32 %v461, %v470
      %v476 = vadd.f32 %v462, %v472
      %s477 = sld [smem:[#allocation6 + $0x1d]]
      %v478 = vstv %s477
      %v479 = vmul.f32 %v427, %v478
      %v480 = vmul.f32 %v428, %v478
      %483 = vrot.lane.b32.xlu0 %v479, 124
      %v484 = vpop.permute.xlu0 %483
      %485 = vrot.lane.b32.xlu0 %v480, 124
      %v486 = vpop.permute.xlu0 %485
      %v489 = vadd.f32 %v475, %v484
      %v490 = vadd.f32 %v476, %v486
      %s491 = sadd.s32 %s161, 24
      %s492 = scalar_lea.vmem [#allocation2], %s491
      %v493 = vld [vmem:[%s492] sm:$0xff]
      %v494 = vld [vmem:[%s492 + $0x60] sm:$0xff]
      %s495 = sld [smem:[#allocation6 + $0x1e]]
      %v496 = vstv %s495
      %v497 = vmul.f32 %v493, %v496
      %v498 = vmul.f32 %v494, %v496
      %v499 = vadd.f32 %v489, %v497
      %v500 = vadd.f32 %v490, %v498
      %s501 = sld [smem:[#allocation6 + $0x1f]]
      %v502 = vstv %s501
      %v503 = vmul.f32 %v493, %v502
      %v504 = vmul.f32 %v494, %v502
      %507 = vrot.lane.b32.xlu0 %v503, 127
      %v508 = vpop.permute.xlu0 %507
      %509 = vrot.lane.b32.xlu0 %v504, 127
      %v510 = vpop.permute.xlu0 %509
      %v513 = vadd.f32 %v499, %v508
      %v514 = vadd.f32 %v500, %v510
      %s515 = sld [smem:[#allocation6 + $0x20]]
      %v516 = vstv %s515
      %v517 = vmul.f32 %v493, %v516
      %v518 = vmul.f32 %v494, %v516
      %521 = vrot.lane.b32.xlu0 %v517, 126
      %v522 = vpop.permute.xlu0 %521
      %523 = vrot.lane.b32.xlu0 %v518, 126
      %v524 = vpop.permute.xlu0 %523
      %v527 = vadd.f32 %v513, %v522
      %v528 = vadd.f32 %v514, %v524
      %s529 = sld [smem:[#allocation6 + $0x21]]
      %v530 = vstv %s529
      %v531 = vmul.f32 %v493, %v530
      %v532 = vmul.f32 %v494, %v530
      %535 = vrot.lane.b32.xlu0 %v531, 125
      %v536 = vpop.permute.xlu0 %535
      %537 = vrot.lane.b32.xlu0 %v532, 125
      %v538 = vpop.permute.xlu0 %537
      %v541 = vadd.f32 %v527, %v536
      %v542 = vadd.f32 %v528, %v538
      %s543 = sld [smem:[#allocation6 + $0x22]]
      %v544 = vstv %s543
      %v545 = vmul.f32 %v493, %v544
      %v546 = vmul.f32 %v494, %v544
      %549 = vrot.lane.b32.xlu0 %v545, 124
      %v550 = vpop.permute.xlu0 %549
      %551 = vrot.lane.b32.xlu0 %v546, 124
      %v552 = vpop.permute.xlu0 %551
      %v555 = vadd.f32 %v541, %v550
      %v556 = vadd.f32 %v542, %v552
      %s557 = sadd.s32 %s227, 24
      %s558 = scalar_lea.vmem [#allocation2], %s557
      %v559 = vld [vmem:[%s558] sm:$0xff]
      %v560 = vld [vmem:[%s558 + $0x60] sm:$0xff]
      %s561 = sld [smem:[#allocation6 + $0x23]]
      %v562 = vstv %s561
      %v563 = vmul.f32 %v559, %v562
      %v564 = vmul.f32 %v560, %v562
      %v565 = vadd.f32 %v555, %v563
      %v566 = vadd.f32 %v556, %v564
      %s567 = sld [smem:[#allocation6 + $0x24]]
      %v568 = vstv %s567
      %v569 = vmul.f32 %v559, %v568
      %v570 = vmul.f32 %v560, %v568
      %573 = vrot.lane.b32.xlu0 %v569, 127
      %v574 = vpop.permute.xlu0 %573
      %575 = vrot.lane.b32.xlu0 %v570, 127
      %v576 = vpop.permute.xlu0 %575
      %v579 = vadd.f32 %v565, %v574
      %v580 = vadd.f32 %v566, %v576
      %s581 = sld [smem:[#allocation6 + $0x25]]
      %v582 = vstv %s581
      %v583 = vmul.f32 %v559, %v582
      %v584 = vmul.f32 %v560, %v582
      %587 = vrot.lane.b32.xlu0 %v583, 126
      %v588 = vpop.permute.xlu0 %587
      %589 = vrot.lane.b32.xlu0 %v584, 126
      %v590 = vpop.permute.xlu0 %589
      %v593 = vadd.f32 %v579, %v588
      %v594 = vadd.f32 %v580, %v590
      %s595 = sld [smem:[#allocation6 + $0x26]]
      %v596 = vstv %s595
      %v597 = vmul.f32 %v559, %v596
      %v598 = vmul.f32 %v560, %v596
      %601 = vrot.lane.b32.xlu0 %v597, 125
      %v602 = vpop.permute.xlu0 %601
      %603 = vrot.lane.b32.xlu0 %v598, 125
      %v604 = vpop.permute.xlu0 %603
      %v607 = vadd.f32 %v593, %v602
      %v608 = vadd.f32 %v594, %v604
      %s609 = sld [smem:[#allocation6 + $0x27]]
      %v610 = vstv %s609
      %v611 = vmul.f32 %v559, %v610
      %v612 = vmul.f32 %v560, %v610
      %615 = vrot.lane.b32.xlu0 %v611, 124
      %v616 = vpop.permute.xlu0 %615
      %617 = vrot.lane.b32.xlu0 %v612, 124
      %v618 = vpop.permute.xlu0 %617
      %v621 = vadd.f32 %v607, %v616
      %v622 = vadd.f32 %v608, %v618
      %s623 = sadd.s32 %s293, 24
      %s624 = scalar_lea.vmem [#allocation2], %s623
      %v625 = vld [vmem:[%s624] sm:$0xff]
      %v626 = vld [vmem:[%s624 + $0x60] sm:$0xff]
      %s627 = sld [smem:[#allocation6 + $0x28]]
      %v628 = vstv %s627
      %v629 = vmul.f32 %v625, %v628
      %v630 = vmul.f32 %v626, %v628
      %v631 = vadd.f32 %v621, %v629
      %v632 = vadd.f32 %v622, %v630
      %s633 = sld [smem:[#allocation6 + $0x29]]
      %v634 = vstv %s633
      %v635 = vmul.f32 %v625, %v634
      %v636 = vmul.f32 %v626, %v634
      %639 = vrot.lane.b32.xlu0 %v635, 127
      %v640 = vpop.permute.xlu0 %639
      %641 = vrot.lane.b32.xlu0 %v636, 127
      %v642 = vpop.permute.xlu0 %641
      %v645 = vadd.f32 %v631, %v640
      %v646 = vadd.f32 %v632, %v642
      %s647 = sld [smem:[#allocation6 + $0x2a]]
      %v648 = vstv %s647
      %v649 = vmul.f32 %v625, %v648
      %v650 = vmul.f32 %v626, %v648
      %653 = vrot.lane.b32.xlu0 %v649, 126
      %v654 = vpop.permute.xlu0 %653
      %655 = vrot.lane.b32.xlu0 %v650, 126
      %v656 = vpop.permute.xlu0 %655
      %v659 = vadd.f32 %v645, %v654
      %v660 = vadd.f32 %v646, %v656
      %s661 = sld [smem:[#allocation6 + $0x2b]]
      %v662 = vstv %s661
      %v663 = vmul.f32 %v625, %v662
      %v664 = vmul.f32 %v626, %v662
      %667 = vrot.lane.b32.xlu0 %v663, 125
      %v668 = vpop.permute.xlu0 %667
      %669 = vrot.lane.b32.xlu0 %v664, 125
      %v670 = vpop.permute.xlu0 %669
      %v673 = vadd.f32 %v659, %v668
      %v674 = vadd.f32 %v660, %v670
      %s675 = sld [smem:[#allocation6 + $0x2c]]
      %v676 = vstv %s675
      %v677 = vmul.f32 %v625, %v676
      %v678 = vmul.f32 %v626, %v676
      %681 = vrot.lane.b32.xlu0 %v677, 124
      %v682 = vpop.permute.xlu0 %681
      %683 = vrot.lane.b32.xlu0 %v678, 124
      %v684 = vpop.permute.xlu0 %683
      %v687 = vadd.f32 %v673, %v682
      %v688 = vadd.f32 %v674, %v684
      %s689 = sadd.s32 %s359, 24
      %s690 = scalar_lea.vmem [#allocation2], %s689
      %v691 = vld [vmem:[%s690] sm:$0xff]
      %v692 = vld [vmem:[%s690 + $0x60] sm:$0xff]
      %s693 = sld [smem:[#allocation6 + $0x2d]]
      %v694 = vstv %s693
      %v695 = vmul.f32 %v691, %v694
      %v696 = vmul.f32 %v692, %v694
      %v697 = vadd.f32 %v687, %v695
      %v698 = vadd.f32 %v688, %v696
      %s699 = sld [smem:[#allocation6 + $0x2e]]
      %v700 = vstv %s699
      %v701 = vmul.f32 %v691, %v700
      %v702 = vmul.f32 %v692, %v700
      %705 = vrot.lane.b32.xlu0 %v701, 127
      %v706 = vpop.permute.xlu0 %705
      %707 = vrot.lane.b32.xlu0 %v702, 127
      %v708 = vpop.permute.xlu0 %707
      %v711 = vadd.f32 %v697, %v706
      %v712 = vadd.f32 %v698, %v708
      %s713 = sld [smem:[#allocation6 + $0x2f]]
      %v714 = vstv %s713
      %v715 = vmul.f32 %v691, %v714
      %v716 = vmul.f32 %v692, %v714
      %719 = vrot.lane.b32.xlu0 %v715, 126
      %v720 = vpop.permute.xlu0 %719
      %721 = vrot.lane.b32.xlu0 %v716, 126
      %v722 = vpop.permute.xlu0 %721
      %v725 = vadd.f32 %v711, %v720
      %v726 = vadd.f32 %v712, %v722
      %s727 = sld [smem:[#allocation6 + $0x30]]
      %v728 = vstv %s727
      %v729 = vmul.f32 %v691, %v728
      %v730 = vmul.f32 %v692, %v728
      %733 = vrot.lane.b32.xlu0 %v729, 125
      %v734 = vpop.permute.xlu0 %733
      %735 = vrot.lane.b32.xlu0 %v730, 125
      %v736 = vpop.permute.xlu0 %735
      %v739 = vadd.f32 %v725, %v734
      %v740 = vadd.f32 %v726, %v736
      %s741 = sld [smem:[#allocation6 + $0x31]]
      %v742 = vstv %s741
      %v743 = vmul.f32 %v691, %v742
      %v744 = vmul.f32 %v692, %v742
      %747 = vrot.lane.b32.xlu0 %v743, 124
      %v748 = vpop.permute.xlu0 %747
      %749 = vrot.lane.b32.xlu0 %v744, 124
      %v750 = vpop.permute.xlu0 %749
      %v753 = vadd.f32 %v739, %v748
      %v754 = vadd.f32 %v740, %v750
      %s755 = sadd.s32 %s93, 48
      %s756 = scalar_lea.vmem [#allocation2], %s755
      %v757 = vld [vmem:[%s756] sm:$0xff]
      %v758 = vld [vmem:[%s756 + $0x60] sm:$0xff]
      %s759 = sld [smem:[#allocation6 + $0x32]]
      %v760 = vstv %s759
      %v761 = vmul.f32 %v757, %v760
      %v762 = vmul.f32 %v758, %v760
      %v763 = vadd.f32 %v753, %v761
      %v764 = vadd.f32 %v754, %v762
      %s765 = sld [smem:[#allocation6 + $0x33]]
      %v766 = vstv %s765
      %v767 = vmul.f32 %v757, %v766
      %v768 = vmul.f32 %v758, %v766
      %771 = vrot.lane.b32.xlu0 %v767, 127
      %v772 = vpop.permute.xlu0 %771
      %773 = vrot.lane.b32.xlu0 %v768, 127
      %v774 = vpop.permute.xlu0 %773
      %v777 = vadd.f32 %v763, %v772
      %v778 = vadd.f32 %v764, %v774
      %s779 = sld [smem:[#allocation6 + $0x34]]
      %v780 = vstv %s779
      %v781 = vmul.f32 %v757, %v780
      %v782 = vmul.f32 %v758, %v780
      %785 = vrot.lane.b32.xlu0 %v781, 126
      %v786 = vpop.permute.xlu0 %785
      %787 = vrot.lane.b32.xlu0 %v782, 126
      %v788 = vpop.permute.xlu0 %787
      %v791 = vadd.f32 %v777, %v786
      %v792 = vadd.f32 %v778, %v788
      %s793 = sld [smem:[#allocation6 + $0x35]]
      %v794 = vstv %s793
      %v795 = vmul.f32 %v757, %v794
      %v796 = vmul.f32 %v758, %v794
      %799 = vrot.lane.b32.xlu0 %v795, 125
      %v800 = vpop.permute.xlu0 %799
      %801 = vrot.lane.b32.xlu0 %v796, 125
      %v802 = vpop.permute.xlu0 %801
      %v805 = vadd.f32 %v791, %v800
      %v806 = vadd.f32 %v792, %v802
      %s807 = sld [smem:[#allocation6 + $0x36]]
      %v808 = vstv %s807
      %v809 = vmul.f32 %v757, %v808
      %v810 = vmul.f32 %v758, %v808
      %813 = vrot.lane.b32.xlu0 %v809, 124
      %v814 = vpop.permute.xlu0 %813
      %815 = vrot.lane.b32.xlu0 %v810, 124
      %v816 = vpop.permute.xlu0 %815
      %v819 = vadd.f32 %v805, %v814
      %v820 = vadd.f32 %v806, %v816
      %s821 = sadd.s32 %s161, 48
      %s822 = scalar_lea.vmem [#allocation2], %s821
      %v823 = vld [vmem:[%s822] sm:$0xff]
      %v824 = vld [vmem:[%s822 + $0x60] sm:$0xff]
      %s825 = sld [smem:[#allocation6 + $0x37]]
      %v826 = vstv %s825
      %v827 = vmul.f32 %v823, %v826
      %v828 = vmul.f32 %v824, %v826
      %v829 = vadd.f32 %v819, %v827
      %v830 = vadd.f32 %v820, %v828
      %s831 = sld [smem:[#allocation6 + $0x38]]
      %v832 = vstv %s831
      %v833 = vmul.f32 %v823, %v832
      %v834 = vmul.f32 %v824, %v832
      %837 = vrot.lane.b32.xlu0 %v833, 127
      %v838 = vpop.permute.xlu0 %837
      %839 = vrot.lane.b32.xlu0 %v834, 127
      %v840 = vpop.permute.xlu0 %839
      %v843 = vadd.f32 %v829, %v838
      %v844 = vadd.f32 %v830, %v840
      %s845 = sld [smem:[#allocation6 + $0x39]]
      %v846 = vstv %s845
      %v847 = vmul.f32 %v823, %v846
      %v848 = vmul.f32 %v824, %v846
      %851 = vrot.lane.b32.xlu0 %v847, 126
      %v852 = vpop.permute.xlu0 %851
      %853 = vrot.lane.b32.xlu0 %v848, 126
      %v854 = vpop.permute.xlu0 %853
      %v857 = vadd.f32 %v843, %v852
      %v858 = vadd.f32 %v844, %v854
      %s859 = sld [smem:[#allocation6 + $0x3a]]
      %v860 = vstv %s859
      %v861 = vmul.f32 %v823, %v860
      %v862 = vmul.f32 %v824, %v860
      %865 = vrot.lane.b32.xlu0 %v861, 125
      %v866 = vpop.permute.xlu0 %865
      %867 = vrot.lane.b32.xlu0 %v862, 125
      %v868 = vpop.permute.xlu0 %867
      %v871 = vadd.f32 %v857, %v866
      %v872 = vadd.f32 %v858, %v868
      %s873 = sld [smem:[#allocation6 + $0x3b]]
      %v874 = vstv %s873
      %v875 = vmul.f32 %v823, %v874
      %v876 = vmul.f32 %v824, %v874
      %879 = vrot.lane.b32.xlu0 %v875, 124
      %v880 = vpop.permute.xlu0 %879
      %881 = vrot.lane.b32.xlu0 %v876, 124
      %v882 = vpop.permute.xlu0 %881
      %v885 = vadd.f32 %v871, %v880
      %v886 = vadd.f32 %v872, %v882
      %s887 = sadd.s32 %s227, 48
      %s888 = scalar_lea.vmem [#allocation2], %s887
      %v889 = vld [vmem:[%s888] sm:$0xff]
      %v890 = vld [vmem:[%s888 + $0x60] sm:$0xff]
      %s891 = sld [smem:[#allocation6 + $0x3c]]
      %v892 = vstv %s891
      %v893 = vmul.f32 %v889, %v892
      %v894 = vmul.f32 %v890, %v892
      %v895 = vadd.f32 %v885, %v893
      %v896 = vadd.f32 %v886, %v894
      %s897 = sld [smem:[#allocation6 + $0x3d]]
      %v898 = vstv %s897
      %v899 = vmul.f32 %v889, %v898
      %v900 = vmul.f32 %v890, %v898
      %903 = vrot.lane.b32.xlu0 %v899, 127
      %v904 = vpop.permute.xlu0 %903
      %905 = vrot.lane.b32.xlu0 %v900, 127
      %v906 = vpop.permute.xlu0 %905
      %v909 = vadd.f32 %v895, %v904
      %v910 = vadd.f32 %v896, %v906
      %s911 = sld [smem:[#allocation6 + $0x3e]]
      %v912 = vstv %s911
      %v913 = vmul.f32 %v889, %v912
      %v914 = vmul.f32 %v890, %v912
      %917 = vrot.lane.b32.xlu0 %v913, 126
      %v918 = vpop.permute.xlu0 %917
      %919 = vrot.lane.b32.xlu0 %v914, 126
      %v920 = vpop.permute.xlu0 %919
      %v923 = vadd.f32 %v909, %v918
      %v924 = vadd.f32 %v910, %v920
      %s925 = sld [smem:[#allocation6 + $0x3f]]
      %v926 = vstv %s925
      %v927 = vmul.f32 %v889, %v926
      %v928 = vmul.f32 %v890, %v926
      %931 = vrot.lane.b32.xlu0 %v927, 125
      %v932 = vpop.permute.xlu0 %931
      %933 = vrot.lane.b32.xlu0 %v928, 125
      %v934 = vpop.permute.xlu0 %933
      %v937 = vadd.f32 %v923, %v932
      %v938 = vadd.f32 %v924, %v934
      %s939 = sld [smem:[#allocation6 + $0x40]]
      %v940 = vstv %s939
      %v941 = vmul.f32 %v889, %v940
      %v942 = vmul.f32 %v890, %v940
      %945 = vrot.lane.b32.xlu0 %v941, 124
      %v946 = vpop.permute.xlu0 %945
      %947 = vrot.lane.b32.xlu0 %v942, 124
      %v948 = vpop.permute.xlu0 %947
      %v951 = vadd.f32 %v937, %v946
      %v952 = vadd.f32 %v938, %v948
      %s953 = sadd.s32 %s293, 48
      %s954 = scalar_lea.vmem [#allocation2], %s953
      %v955 = vld [vmem:[%s954] sm:$0xff]
      %v956 = vld [vmem:[%s954 + $0x60] sm:$0xff]
      %s957 = sld [smem:[#allocation6 + $0x41]]
      %v958 = vstv %s957
      %v959 = vmul.f32 %v955, %v958
      %v960 = vmul.f32 %v956, %v958
      %v961 = vadd.f32 %v951, %v959
      %v962 = vadd.f32 %v952, %v960
      %s963 = sld [smem:[#allocation6 + $0x42]]
      %v964 = vstv %s963
      %v965 = vmul.f32 %v955, %v964
      %v966 = vmul.f32 %v956, %v964
      %969 = vrot.lane.b32.xlu0 %v965, 127
      %v970 = vpop.permute.xlu0 %969
      %971 = vrot.lane.b32.xlu0 %v966, 127
      %v972 = vpop.permute.xlu0 %971
      %v975 = vadd.f32 %v961, %v970
      %v976 = vadd.f32 %v962, %v972
      %s977 = sld [smem:[#allocation6 + $0x43]]
      %v978 = vstv %s977
      %v979 = vmul.f32 %v955, %v978
      %v980 = vmul.f32 %v956, %v978
      %983 = vrot.lane.b32.xlu0 %v979, 126
      %v984 = vpop.permute.xlu0 %983
      %985 = vrot.lane.b32.xlu0 %v980, 126
      %v986 = vpop.permute.xlu0 %985
      %v989 = vadd.f32 %v975, %v984
      %v990 = vadd.f32 %v976, %v986
      %s991 = sld [smem:[#allocation6 + $0x44]]
      %v992 = vstv %s991
      %v993 = vmul.f32 %v955, %v992
      %v994 = vmul.f32 %v956, %v992
      %997 = vrot.lane.b32.xlu0 %v993, 125
      %v998 = vpop.permute.xlu0 %997
      %999 = vrot.lane.b32.xlu0 %v994, 125
      %v1000 = vpop.permute.xlu0 %999
      %v1003 = vadd.f32 %v989, %v998
      %v1004 = vadd.f32 %v990, %v1000
      %s1005 = sld [smem:[#allocation6 + $0x45]]
      %v1006 = vstv %s1005
      %v1007 = vmul.f32 %v955, %v1006
      %v1008 = vmul.f32 %v956, %v1006
      %1011 = vrot.lane.b32.xlu0 %v1007, 124
      %v1012 = vpop.permute.xlu0 %1011
      %1013 = vrot.lane.b32.xlu0 %v1008, 124
      %v1014 = vpop.permute.xlu0 %1013
      %v1017 = vadd.f32 %v1003, %v1012
      %v1018 = vadd.f32 %v1004, %v1014
      %s1019 = sadd.s32 %s359, 48
      %s1020 = scalar_lea.vmem [#allocation2], %s1019
      %v1021 = vld [vmem:[%s1020] sm:$0xff]
      %v1022 = vld [vmem:[%s1020 + $0x60] sm:$0xff]
      %s1023 = sld [smem:[#allocation6 + $0x46]]
      %v1024 = vstv %s1023
      %v1025 = vmul.f32 %v1021, %v1024
      %v1026 = vmul.f32 %v1022, %v1024
      %v1027 = vadd.f32 %v1017, %v1025
      %v1028 = vadd.f32 %v1018, %v1026
      %s1029 = sld [smem:[#allocation6 + $0x47]]
      %v1030 = vstv %s1029
      %v1031 = vmul.f32 %v1021, %v1030
      %v1032 = vmul.f32 %v1022, %v1030
      %1035 = vrot.lane.b32.xlu0 %v1031, 127
      %v1036 = vpop.permute.xlu0 %1035
      %1037 = vrot.lane.b32.xlu0 %v1032, 127
      %v1038 = vpop.permute.xlu0 %1037
      %v1041 = vadd.f32 %v1027, %v1036
      %v1042 = vadd.f32 %v1028, %v1038
      %s1043 = sld [smem:[#allocation6 + $0x48]]
      %v1044 = vstv %s1043
      %v1045 = vmul.f32 %v1021, %v1044
      %v1046 = vmul.f32 %v1022, %v1044
      %1049 = vrot.lane.b32.xlu0 %v1045, 126
      %v1050 = vpop.permute.xlu0 %1049
      %1051 = vrot.lane.b32.xlu0 %v1046, 126
      %v1052 = vpop.permute.xlu0 %1051
      %v1055 = vadd.f32 %v1041, %v1050
      %v1056 = vadd.f32 %v1042, %v1052
      %s1057 = sld [smem:[#allocation6 + $0x49]]
      %v1058 = vstv %s1057
      %v1059 = vmul.f32 %v1021, %v1058
      %v1060 = vmul.f32 %v1022, %v1058
      %1063 = vrot.lane.b32.xlu0 %v1059, 125
      %v1064 = vpop.permute.xlu0 %1063
      %1065 = vrot.lane.b32.xlu0 %v1060, 125
      %v1066 = vpop.permute.xlu0 %1065
      %v1069 = vadd.f32 %v1055, %v1064
      %v1070 = vadd.f32 %v1056, %v1066
      %s1071 = sld [smem:[#allocation6 + $0x4a]]
      %v1072 = vstv %s1071
      %v1073 = vmul.f32 %v1021, %v1072
      %v1074 = vmul.f32 %v1022, %v1072
      %1077 = vrot.lane.b32.xlu0 %v1073, 124
      %v1078 = vpop.permute.xlu0 %1077
      %1079 = vrot.lane.b32.xlu0 %v1074, 124
      %v1080 = vpop.permute.xlu0 %1079
      %v1083 = vadd.f32 %v1069, %v1078
      %v1084 = vadd.f32 %v1070, %v1080
      %s1085 = sadd.s32 %s93, 72
      %s1086 = scalar_lea.vmem [#allocation2], %s1085
      %v1087 = vld [vmem:[%s1086] sm:$0xff]
      %v1088 = vld [vmem:[%s1086 + $0x60] sm:$0xff]
      %s1089 = sld [smem:[#allocation6 + $0x4b]]
      %v1090 = vstv %s1089
      %v1091 = vmul.f32 %v1087, %v1090
      %v1092 = vmul.f32 %v1088, %v1090
      %v1093 = vadd.f32 %v1083, %v1091
      %v1094 = vadd.f32 %v1084, %v1092
      %s1095 = sld [smem:[#allocation6 + $0x4c]]
      %v1096 = vstv %s1095
      %v1097 = vmul.f32 %v1087, %v1096
      %v1098 = vmul.f32 %v1088, %v1096
      %1101 = vrot.lane.b32.xlu0 %v1097, 127
      %v1102 = vpop.permute.xlu0 %1101
      %1103 = vrot.lane.b32.xlu0 %v1098, 127
      %v1104 = vpop.permute.xlu0 %1103
      %v1107 = vadd.f32 %v1093, %v1102
      %v1108 = vadd.f32 %v1094, %v1104
      %s1109 = sld [smem:[#allocation6 + $0x4d]]
      %v1110 = vstv %s1109
      %v1111 = vmul.f32 %v1087, %v1110
      %v1112 = vmul.f32 %v1088, %v1110
      %1115 = vrot.lane.b32.xlu0 %v1111, 126
      %v1116 = vpop.permute.xlu0 %1115
      %1117 = vrot.lane.b32.xlu0 %v1112, 126
      %v1118 = vpop.permute.xlu0 %1117
      %v1121 = vadd.f32 %v1107, %v1116
      %v1122 = vadd.f32 %v1108, %v1118
      %s1123 = sld [smem:[#allocation6 + $0x4e]]
      %v1124 = vstv %s1123
      %v1125 = vmul.f32 %v1087, %v1124
      %v1126 = vmul.f32 %v1088, %v1124
      %1129 = vrot.lane.b32.xlu0 %v1125, 125
      %v1130 = vpop.permute.xlu0 %1129
      %1131 = vrot.lane.b32.xlu0 %v1126, 125
      %v1132 = vpop.permute.xlu0 %1131
      %v1135 = vadd.f32 %v1121, %v1130
      %v1136 = vadd.f32 %v1122, %v1132
      %s1137 = sld [smem:[#allocation6 + $0x4f]]
      %v1138 = vstv %s1137
      %v1139 = vmul.f32 %v1087, %v1138
      %v1140 = vmul.f32 %v1088, %v1138
      %1143 = vrot.lane.b32.xlu0 %v1139, 124
      %v1144 = vpop.permute.xlu0 %1143
      %1145 = vrot.lane.b32.xlu0 %v1140, 124
      %v1146 = vpop.permute.xlu0 %1145
      %v1149 = vadd.f32 %v1135, %v1144
      %v1150 = vadd.f32 %v1136, %v1146
      %s1151 = sadd.s32 %s161, 72
      %s1152 = scalar_lea.vmem [#allocation2], %s1151
      %v1153 = vld [vmem:[%s1152] sm:$0xff]
      %v1154 = vld [vmem:[%s1152 + $0x60] sm:$0xff]
      %s1155 = sld [smem:[#allocation6 + $0x50]]
      %v1156 = vstv %s1155
      %v1157 = vmul.f32 %v1153, %v1156
      %v1158 = vmul.f32 %v1154, %v1156
      %v1159 = vadd.f32 %v1149, %v1157
      %v1160 = vadd.f32 %v1150, %v1158
      %s1161 = sld [smem:[#allocation6 + $0x51]]
      %v1162 = vstv %s1161
      %v1163 = vmul.f32 %v1153, %v1162
      %v1164 = vmul.f32 %v1154, %v1162
      %1167 = vrot.lane.b32.xlu0 %v1163, 127
      %v1168 = vpop.permute.xlu0 %1167
      %1169 = vrot.lane.b32.xlu0 %v1164, 127
      %v1170 = vpop.permute.xlu0 %1169
      %v1173 = vadd.f32 %v1159, %v1168
      %v1174 = vadd.f32 %v1160, %v1170
      %s1175 = sld [smem:[#allocation6 + $0x52]]
      %v1176 = vstv %s1175
      %v1177 = vmul.f32 %v1153, %v1176
      %v1178 = vmul.f32 %v1154, %v1176
      %1181 = vrot.lane.b32.xlu0 %v1177, 126
      %v1182 = vpop.permute.xlu0 %1181
      %1183 = vrot.lane.b32.xlu0 %v1178, 126
      %v1184 = vpop.permute.xlu0 %1183
      %v1187 = vadd.f32 %v1173, %v1182
      %v1188 = vadd.f32 %v1174, %v1184
      %s1189 = sld [smem:[#allocation6 + $0x53]]
      %v1190 = vstv %s1189
      %v1191 = vmul.f32 %v1153, %v1190
      %v1192 = vmul.f32 %v1154, %v1190
      %1195 = vrot.lane.b32.xlu0 %v1191, 125
      %v1196 = vpop.permute.xlu0 %1195
      %1197 = vrot.lane.b32.xlu0 %v1192, 125
      %v1198 = vpop.permute.xlu0 %1197
      %v1201 = vadd.f32 %v1187, %v1196
      %v1202 = vadd.f32 %v1188, %v1198
      %s1203 = sld [smem:[#allocation6 + $0x54]]
      %v1204 = vstv %s1203
      %v1205 = vmul.f32 %v1153, %v1204
      %v1206 = vmul.f32 %v1154, %v1204
      %1209 = vrot.lane.b32.xlu0 %v1205, 124
      %v1210 = vpop.permute.xlu0 %1209
      %1211 = vrot.lane.b32.xlu0 %v1206, 124
      %v1212 = vpop.permute.xlu0 %1211
      %v1215 = vadd.f32 %v1201, %v1210
      %v1216 = vadd.f32 %v1202, %v1212
      %s1217 = sadd.s32 %s227, 72
      %s1218 = scalar_lea.vmem [#allocation2], %s1217
      %v1219 = vld [vmem:[%s1218] sm:$0xff]
      %v1220 = vld [vmem:[%s1218 + $0x60] sm:$0xff]
      %s1221 = sld [smem:[#allocation6 + $0x55]]
      %v1222 = vstv %s1221
      %v1223 = vmul.f32 %v1219, %v1222
      %v1224 = vmul.f32 %v1220, %v1222
      %v1225 = vadd.f32 %v1215, %v1223
      %v1226 = vadd.f32 %v1216, %v1224
      %s1227 = sld [smem:[#allocation6 + $0x56]]
      %v1228 = vstv %s1227
      %v1229 = vmul.f32 %v1219, %v1228
      %v1230 = vmul.f32 %v1220, %v1228
      %1233 = vrot.lane.b32.xlu0 %v1229, 127
      %v1234 = vpop.permute.xlu0 %1233
      %1235 = vrot.lane.b32.xlu0 %v1230, 127
      %v1236 = vpop.permute.xlu0 %1235
      %v1239 = vadd.f32 %v1225, %v1234
      %v1240 = vadd.f32 %v1226, %v1236
      %s1241 = sld [smem:[#allocation6 + $0x57]]
      %v1242 = vstv %s1241
      %v1243 = vmul.f32 %v1219, %v1242
      %v1244 = vmul.f32 %v1220, %v1242
      %1247 = vrot.lane.b32.xlu0 %v1243, 126
      %v1248 = vpop.permute.xlu0 %1247
      %1249 = vrot.lane.b32.xlu0 %v1244, 126
      %v1250 = vpop.permute.xlu0 %1249
      %v1253 = vadd.f32 %v1239, %v1248
      %v1254 = vadd.f32 %v1240, %v1250
      %s1255 = sld [smem:[#allocation6 + $0x58]]
      %v1256 = vstv %s1255
      %v1257 = vmul.f32 %v1219, %v1256
      %v1258 = vmul.f32 %v1220, %v1256
      %1261 = vrot.lane.b32.xlu0 %v1257, 125
      %v1262 = vpop.permute.xlu0 %1261
      %1263 = vrot.lane.b32.xlu0 %v1258, 125
      %v1264 = vpop.permute.xlu0 %1263
      %v1267 = vadd.f32 %v1253, %v1262
      %v1268 = vadd.f32 %v1254, %v1264
      %s1269 = sld [smem:[#allocation6 + $0x59]]
      %v1270 = vstv %s1269
      %v1271 = vmul.f32 %v1219, %v1270
      %v1272 = vmul.f32 %v1220, %v1270
      %1275 = vrot.lane.b32.xlu0 %v1271, 124
      %v1276 = vpop.permute.xlu0 %1275
      %1277 = vrot.lane.b32.xlu0 %v1272, 124
      %v1278 = vpop.permute.xlu0 %1277
      %v1281 = vadd.f32 %v1267, %v1276
      %v1282 = vadd.f32 %v1268, %v1278
      %s1283 = sadd.s32 %s293, 72
      %s1284 = scalar_lea.vmem [#allocation2], %s1283
      %v1285 = vld [vmem:[%s1284] sm:$0xff]
      %v1286 = vld [vmem:[%s1284 + $0x60] sm:$0xff]
      %s1287 = sld [smem:[#allocation6 + $0x5a]]
      %v1288 = vstv %s1287
      %v1289 = vmul.f32 %v1285, %v1288
      %v1290 = vmul.f32 %v1286, %v1288
      %v1291 = vadd.f32 %v1281, %v1289
      %v1292 = vadd.f32 %v1282, %v1290
      %s1293 = sld [smem:[#allocation6 + $0x5b]]
      %v1294 = vstv %s1293
      %v1295 = vmul.f32 %v1285, %v1294
      %v1296 = vmul.f32 %v1286, %v1294
      %1299 = vrot.lane.b32.xlu0 %v1295, 127
      %v1300 = vpop.permute.xlu0 %1299
      %1301 = vrot.lane.b32.xlu0 %v1296, 127
      %v1302 = vpop.permute.xlu0 %1301
      %v1305 = vadd.f32 %v1291, %v1300
      %v1306 = vadd.f32 %v1292, %v1302
      %s1307 = sld [smem:[#allocation6 + $0x5c]]
      %v1308 = vstv %s1307
      %v1309 = vmul.f32 %v1285, %v1308
      %v1310 = vmul.f32 %v1286, %v1308
      %1313 = vrot.lane.b32.xlu0 %v1309, 126
      %v1314 = vpop.permute.xlu0 %1313
      %1315 = vrot.lane.b32.xlu0 %v1310, 126
      %v1316 = vpop.permute.xlu0 %1315
      %v1319 = vadd.f32 %v1305, %v1314
      %v1320 = vadd.f32 %v1306, %v1316
      %s1321 = sld [smem:[#allocation6 + $0x5d]]
      %v1322 = vstv %s1321
      %v1323 = vmul.f32 %v1285, %v1322
      %v1324 = vmul.f32 %v1286, %v1322
      %1327 = vrot.lane.b32.xlu0 %v1323, 125
      %v1328 = vpop.permute.xlu0 %1327
      %1329 = vrot.lane.b32.xlu0 %v1324, 125
      %v1330 = vpop.permute.xlu0 %1329
      %v1333 = vadd.f32 %v1319, %v1328
      %v1334 = vadd.f32 %v1320, %v1330
      %s1335 = sld [smem:[#allocation6 + $0x5e]]
      %v1336 = vstv %s1335
      %v1337 = vmul.f32 %v1285, %v1336
      %v1338 = vmul.f32 %v1286, %v1336
      %1341 = vrot.lane.b32.xlu0 %v1337, 124
      %v1342 = vpop.permute.xlu0 %1341
      %1343 = vrot.lane.b32.xlu0 %v1338, 124
      %v1344 = vpop.permute.xlu0 %1343
      %v1347 = vadd.f32 %v1333, %v1342
      %v1348 = vadd.f32 %v1334, %v1344
      %s1349 = sadd.s32 %s359, 72
      %s1350 = scalar_lea.vmem [#allocation2], %s1349
      %v1351 = vld [vmem:[%s1350] sm:$0xff]
      %v1352 = vld [vmem:[%s1350 + $0x60] sm:$0xff]
      %s1353 = sld [smem:[#allocation6 + $0x5f]]
      %v1354 = vstv %s1353
      %v1355 = vmul.f32 %v1351, %v1354
      %v1356 = vmul.f32 %v1352, %v1354
      %v1357 = vadd.f32 %v1347, %v1355
      %v1358 = vadd.f32 %v1348, %v1356
      %s1359 = sld [smem:[#allocation6 + $0x60]]
      %v1360 = vstv %s1359
      %v1361 = vmul.f32 %v1351, %v1360
      %v1362 = vmul.f32 %v1352, %v1360
      %1365 = vrot.lane.b32.xlu0 %v1361, 127
      %v1366 = vpop.permute.xlu0 %1365
      %1367 = vrot.lane.b32.xlu0 %v1362, 127
      %v1368 = vpop.permute.xlu0 %1367
      %v1371 = vadd.f32 %v1357, %v1366
      %v1372 = vadd.f32 %v1358, %v1368
      %s1373 = sld [smem:[#allocation6 + $0x61]]
      %v1374 = vstv %s1373
      %v1375 = vmul.f32 %v1351, %v1374
      %v1376 = vmul.f32 %v1352, %v1374
      %1379 = vrot.lane.b32.xlu0 %v1375, 126
      %v1380 = vpop.permute.xlu0 %1379
      %1381 = vrot.lane.b32.xlu0 %v1376, 126
      %v1382 = vpop.permute.xlu0 %1381
      %v1385 = vadd.f32 %v1371, %v1380
      %v1386 = vadd.f32 %v1372, %v1382
      %s1387 = sld [smem:[#allocation6 + $0x62]]
      %v1388 = vstv %s1387
      %v1389 = vmul.f32 %v1351, %v1388
      %v1390 = vmul.f32 %v1352, %v1388
      %1393 = vrot.lane.b32.xlu0 %v1389, 125
      %v1394 = vpop.permute.xlu0 %1393
      %1395 = vrot.lane.b32.xlu0 %v1390, 125
      %v1396 = vpop.permute.xlu0 %1395
      %v1399 = vadd.f32 %v1385, %v1394
      %v1400 = vadd.f32 %v1386, %v1396
      %s1401 = sld [smem:[#allocation6 + $0x63]]
      %v1402 = vstv %s1401
      %v1403 = vmul.f32 %v1351, %v1402
      %v1404 = vmul.f32 %v1352, %v1402
      %1407 = vrot.lane.b32.xlu0 %v1403, 124
      %v1408 = vpop.permute.xlu0 %1407
      %1409 = vrot.lane.b32.xlu0 %v1404, 124
      %v1410 = vpop.permute.xlu0 %1409
      %v1413 = vadd.f32 %v1399, %v1408
      %v1414 = vadd.f32 %v1400, %v1410
      %s1415 = scalar_lea.vmem %s5, %s93
      %vm1416 = vcmask 162816
      %1417 = vst.msk [vmem:[%s1415] sm:$0xff] %vm1416, %v1413
      %1418 = vst.msk [vmem:[%s1415 + $0x60] sm:$0xff] %vm1416, %v1414
    $region46: #{tpu_custom_call.1} parent=1 // loop_footer
      %s90 = sadd.s32 1, %s86
    $region47: #{tpu_custom_call.1} parent=1 // loop_footer_branch
      %85 = sbr.rel target = $region43
    $region48: #{tpu_custom_call.1} parent=1 // loop_exit
      _
    %v1419 = vld [vmem:[%s5] sm:$0xff]
    %v1420 = vld [vmem:[%s5 + $0x8] sm:$0xff]
    %v1421 = vld [vmem:[%s5 + $0x10] sm:$0xf]
    %v1422 = vld [vmem:[%s5 + $0x60] sm:$0xff]
    %v1423 = vld [vmem:[%s5 + $0x68] sm:$0xff]
    %v1424 = vld [vmem:[%s5 + $0x70] sm:$0xf]
    %vm1425 = vcmask 162816
    %v1426 = vsel %vm1425, %v1419, 0.0
    %v1427 = vsel %vm1425, %v1420, 0.0
    %v1428 = vadd.f32 %v1426, %v1427
    %vm1429 = vcmask 158720
    %v1430 = vsel %vm1429, %v1421, 0.0
    %v1431 = vadd.f32 %v1428, %v1430
    %v1432 = vsel %vm1425, %v1422, 0.0
    %v1433 = vadd.f32 %v1431, %v1432
    %v1434 = vsel %vm1425, %v1423, 0.0
    %v1435 = vadd.f32 %v1433, %v1434
    %v1436 = vsel %vm1429, %v1424, 0.0
    %v1437 = vadd.f32 %v1435, %v1436
    %1438 = vadd.xlane.f32.xlu0 %v1437
    %v1439 = vpop.xlane.xlu0 %1438
    %v1440 = vrot.slane %v1439, 4
    %v1441 = vadd.f32 %v1439, %v1440
    %v1442 = vrot.slane %v1441, 2
    %v1443 = vadd.f32 %v1441, %v1442
    %v1444 = vrot.slane %v1443, 1
    %v1445 = vadd.f32 %v1443, %v1444
    %s1446 = vtos %v1445
    %v1447 = vrcp.pop 800.0
    %v1448 = vmul.f32 800.0, %v1447
    %v1449 = vsub.f32 1.0, %v1448
    %v1450 = vmul.f32 %v1447, %v1449
    %v1451 = vadd.f32 %v1447, %v1450
    %vm1452 = vweird.f32 %v1447
    %v1453 = vsel %vm1452, %v1447, %v1451
    %s1454 = vtos %v1453
    %s1455 = smul.f32 %s1446, %s1454
    %v1456 = vstv %s1455
    %v1457 = vsub.f32 %v1419, %v1456
    %v1458 = vsub.f32 %v1420, %v1456
    %v1459 = vsub.f32 %v1421, %v1456
    %v1460 = vsub.f32 %v1422, %v1456
    %v1461 = vsub.f32 %v1423, %v1456
    %v1462 = vsub.f32 %v1424, %v1456
    %v1463 = vmul.f32 %v1457, %v1457
    %v1464 = vmul.f32 %v1458, %v1458
    %v1465 = vmul.f32 %v1459, %v1459
    %v1466 = vmul.f32 %v1460, %v1460
    %v1467 = vmul.f32 %v1461, %v1461
    %v1468 = vmul.f32 %v1462, %v1462
    %v1469 = vsel %vm1425, %v1463, 0.0
    %v1470 = vsel %vm1425, %v1464, 0.0
    %v1471 = vadd.f32 %v1469, %v1470
    %v1472 = vsel %vm1429, %v1465, 0.0
    %v1473 = vadd.f32 %v1471, %v1472
    %v1474 = vsel %vm1425, %v1466, 0.0
    %v1475 = vadd.f32 %v1473, %v1474
    %v1476 = vsel %vm1425, %v1467, 0.0
    %v1477 = vadd.f32 %v1475, %v1476
    %v1478 = vsel %vm1429, %v1468, 0.0
    %v1479 = vadd.f32 %v1477, %v1478
    %1480 = vadd.xlane.f32.xlu0 %v1479
    %v1481 = vpop.xlane.xlu0 %1480
    %v1482 = vrot.slane %v1481, 4
    %v1483 = vadd.f32 %v1481, %v1482
    %v1484 = vrot.slane %v1483, 2
    %v1485 = vadd.f32 %v1483, %v1484
    %v1486 = vrot.slane %v1485, 1
    %v1487 = vadd.f32 %v1485, %v1486
    %s1488 = vtos %v1487
    %v1489 = vrcp.pop 800.0
    %v1490 = vmul.f32 800.0, %v1489
    %v1491 = vsub.f32 1.0, %v1490
    %v1492 = vmul.f32 %v1489, %v1491
    %v1493 = vadd.f32 %v1489, %v1492
    %vm1494 = vweird.f32 %v1489
    %v1495 = vsel %vm1494, %v1489, %v1493
    %s1496 = vtos %v1495
    %s1497 = smul.f32 %s1488, %s1496
    %s1498 = sld [smem:[#allocation8]]
    %s1499 = sadd.f32 %s1497, 1e-05
    %v1500 = vstv %s1499
    %v1501 = vrsqrt.pop %v1500
    %v1502 = vmul.f32 %v1501, %v1500
    %v1503 = vmul.f32 %v1502, %v1501
    %v1504 = vmul.f32 0.5, %v1503
    %v1505 = vsub.f32 1.5, %v1504
    %v1506 = vmul.f32 %v1501, %v1505
    %vm1507 = vweird.f32 %v1500
    %vm1508 = vweird.f32 %v1501
    %vm1509 = vmor %vm1507, %vm1508
    %v1510 = vsel %vm1509, %v1501, %v1506
    %s1511 = vtos %v1510
    %s1512 = smul.f32 %s1498, %s1511
    %v1513 = vstv %s1512
    %v1514 = vmul.f32 %v1457, %v1513
    %v1515 = vmul.f32 %v1458, %v1513
    %v1516 = vmul.f32 %v1459, %v1513
    %v1517 = vmul.f32 %v1460, %v1513
    %v1518 = vmul.f32 %v1461, %v1513
    %v1519 = vmul.f32 %v1462, %v1513
    %s1520 = sld [smem:[#allocation10]]
    %v1521 = vstv %s1520
    %v1522 = vadd.f32 %v1514, %v1521
    %v1523 = vadd.f32 %v1515, %v1521
    %v1524 = vadd.f32 %v1516, %v1521
    %v1525 = vadd.f32 %v1517, %v1521
    %v1526 = vadd.f32 %v1518, %v1521
    %v1527 = vadd.f32 %v1519, %v1521
    %v1528 = vmax.f32 %v1522, 0.0
    %v1529 = vmax.f32 %v1523, 0.0
    %v1530 = vmax.f32 %v1524, 0.0
    %v1531 = vmax.f32 %v1525, 0.0
    %v1532 = vmax.f32 %v1526, 0.0
    %v1533 = vmax.f32 %v1527, 0.0
    %1534 = vst.msk [vmem:[%s5] sm:$0xff] %vm1425, %v1528
    %1535 = vst.msk [vmem:[%s5 + $0x8] sm:$0xff] %vm1425, %v1529
    %1536 = vst.msk [vmem:[%s5 + $0x10] sm:$0xf] %vm1429, %v1530
    %1537 = vst.msk [vmem:[%s5 + $0x60] sm:$0xff] %vm1425, %v1531
    %1538 = vst.msk [vmem:[%s5 + $0x68] sm:$0xff] %vm1425, %v1532
    %1539 = vst.msk [vmem:[%s5 + $0x70] sm:$0xf] %vm1429, %v1533
    %s1540 = sld [smem:[#allocation7 + $0x1]]
    loop: start=0, step=1, limit=3
    $region49: #{tpu_custom_call.1} parent=1 // loop_pre_header
      _
    $region50: #{tpu_custom_call.1} parent=1 // loop_header
      %s1542 = sphi 0, %s1546
      %p1543 = scmp.ge.s32.totalorder %s1542, 3
    $region51: #{tpu_custom_call.1} parent=1 // loop_header_branch
      %1545 = sbr.rel (%p1543) target = $region55
    $region52: #{tpu_custom_call.1} parent=1 // loop_body
      %s1547 = smul.u32 %s1542, 8
      %p1548 = scmp.lt.s32.totalorder %s1547, 12
      %s1549 = scalar_select %p1548, %s1547, 12
      %v1550 = vstv %s1540
      %v1551 = vadd.f32 %v1550, 0.0
      %s1552 = scalar_lea.vmem [#allocation2], %s1549
      %v1553 = vld [vmem:[%s1552] sm:$0xff]
      %v1554 = vld [vmem:[%s1552 + $0x60] sm:$0xff]
      %s1555 = sld [smem:[#allocation6 + $0x64]]
      %v1556 = vstv %s1555
      %v1557 = vmul.f32 %v1553, %v1556
      %v1558 = vmul.f32 %v1554, %v1556
      %v1559 = vadd.f32 %v1551, %v1557
      %v1560 = vadd.f32 %v1551, %v1558
      %s1561 = sld [smem:[#allocation6 + $0x65]]
      %v1562 = vstv %s1561
      %v1563 = vmul.f32 %v1553, %v1562
      %v1564 = vmul.f32 %v1554, %v1562
      %1567 = vrot.lane.b32.xlu0 %v1563, 127
      %v1568 = vpop.permute.xlu0 %1567
      %1569 = vrot.lane.b32.xlu0 %v1564, 127
      %v1570 = vpop.permute.xlu0 %1569
      %v1573 = vadd.f32 %v1559, %v1568
      %v1574 = vadd.f32 %v1560, %v1570
      %s1575 = sld [smem:[#allocation6 + $0x66]]
      %v1576 = vstv %s1575
      %v1577 = vmul.f32 %v1553, %v1576
      %v1578 = vmul.f32 %v1554, %v1576
      %1581 = vrot.lane.b32.xlu0 %v1577, 126
      %v1582 = vpop.permute.xlu0 %1581
      %1583 = vrot.lane.b32.xlu0 %v1578, 126
      %v1584 = vpop.permute.xlu0 %1583
      %v1587 = vadd.f32 %v1573, %v1582
      %v1588 = vadd.f32 %v1574, %v1584
      %s1589 = sld [smem:[#allocation6 + $0x67]]
      %v1590 = vstv %s1589
      %v1591 = vmul.f32 %v1553, %v1590
      %v1592 = vmul.f32 %v1554, %v1590
      %1595 = vrot.lane.b32.xlu0 %v1591, 125
      %v1596 = vpop.permute.xlu0 %1595
      %1597 = vrot.lane.b32.xlu0 %v1592, 125
      %v1598 = vpop.permute.xlu0 %1597
      %v1601 = vadd.f32 %v1587, %v1596
      %v1602 = vadd.f32 %v1588, %v1598
      %s1603 = sld [smem:[#allocation6 + $0x68]]
      %v1604 = vstv %s1603
      %v1605 = vmul.f32 %v1553, %v1604
      %v1606 = vmul.f32 %v1554, %v1604
      %1609 = vrot.lane.b32.xlu0 %v1605, 124
      %v1610 = vpop.permute.xlu0 %1609
      %1611 = vrot.lane.b32.xlu0 %v1606, 124
      %v1612 = vpop.permute.xlu0 %1611
      %v1615 = vadd.f32 %v1601, %v1610
      %v1616 = vadd.f32 %v1602, %v1612
      %s1617 = sadd.s32 %s1549, 1
      %s1618 = scalar_lea.vmem [#allocation2], %s1617
      %v1619 = vld [vmem:[%s1618] sm:$0xff]
      %v1620 = vld [vmem:[%s1618 + $0x60] sm:$0xff]
      %s1621 = sld [smem:[#allocation6 + $0x69]]
      %v1622 = vstv %s1621
      %v1623 = vmul.f32 %v1619, %v1622
      %v1624 = vmul.f32 %v1620, %v1622
      %v1625 = vadd.f32 %v1615, %v1623
      %v1626 = vadd.f32 %v1616, %v1624
      %s1627 = sld [smem:[#allocation6 + $0x6a]]
      %v1628 = vstv %s1627
      %v1629 = vmul.f32 %v1619, %v1628
      %v1630 = vmul.f32 %v1620, %v1628
      %1633 = vrot.lane.b32.xlu0 %v1629, 127
      %v1634 = vpop.permute.xlu0 %1633
      %1635 = vrot.lane.b32.xlu0 %v1630, 127
      %v1636 = vpop.permute.xlu0 %1635
      %v1639 = vadd.f32 %v1625, %v1634
      %v1640 = vadd.f32 %v1626, %v1636
      %s1641 = sld [smem:[#allocation6 + $0x6b]]
      %v1642 = vstv %s1641
      %v1643 = vmul.f32 %v1619, %v1642
      %v1644 = vmul.f32 %v1620, %v1642
      %1647 = vrot.lane.b32.xlu0 %v1643, 126
      %v1648 = vpop.permute.xlu0 %1647
      %1649 = vrot.lane.b32.xlu0 %v1644, 126
      %v1650 = vpop.permute.xlu0 %1649
      %v1653 = vadd.f32 %v1639, %v1648
      %v1654 = vadd.f32 %v1640, %v1650
      %s1655 = sld [smem:[#allocation6 + $0x6c]]
      %v1656 = vstv %s1655
      %v1657 = vmul.f32 %v1619, %v1656
      %v1658 = vmul.f32 %v1620, %v1656
      %1661 = vrot.lane.b32.xlu0 %v1657, 125
      %v1662 = vpop.permute.xlu0 %1661
      %1663 = vrot.lane.b32.xlu0 %v1658, 125
      %v1664 = vpop.permute.xlu0 %1663
      %v1667 = vadd.f32 %v1653, %v1662
      %v1668 = vadd.f32 %v1654, %v1664
      %s1669 = sld [smem:[#allocation6 + $0x6d]]
      %v1670 = vstv %s1669
      %v1671 = vmul.f32 %v1619, %v1670
      %v1672 = vmul.f32 %v1620, %v1670
      %1675 = vrot.lane.b32.xlu0 %v1671, 124
      %v1676 = vpop.permute.xlu0 %1675
      %1677 = vrot.lane.b32.xlu0 %v1672, 124
      %v1678 = vpop.permute.xlu0 %1677
      %v1681 = vadd.f32 %v1667, %v1676
      %v1682 = vadd.f32 %v1668, %v1678
      %s1683 = sadd.s32 %s1549, 2
      %s1684 = scalar_lea.vmem [#allocation2], %s1683
      %v1685 = vld [vmem:[%s1684] sm:$0xff]
      %v1686 = vld [vmem:[%s1684 + $0x60] sm:$0xff]
      %s1687 = sld [smem:[#allocation6 + $0x6e]]
      %v1688 = vstv %s1687
      %v1689 = vmul.f32 %v1685, %v1688
      %v1690 = vmul.f32 %v1686, %v1688
      %v1691 = vadd.f32 %v1681, %v1689
      %v1692 = vadd.f32 %v1682, %v1690
      %s1693 = sld [smem:[#allocation6 + $0x6f]]
      %v1694 = vstv %s1693
      %v1695 = vmul.f32 %v1685, %v1694
      %v1696 = vmul.f32 %v1686, %v1694
      %1699 = vrot.lane.b32.xlu0 %v1695, 127
      %v1700 = vpop.permute.xlu0 %1699
      %1701 = vrot.lane.b32.xlu0 %v1696, 127
      %v1702 = vpop.permute.xlu0 %1701
      %v1705 = vadd.f32 %v1691, %v1700
      %v1706 = vadd.f32 %v1692, %v1702
      %s1707 = sld [smem:[#allocation6 + $0x70]]
      %v1708 = vstv %s1707
      %v1709 = vmul.f32 %v1685, %v1708
      %v1710 = vmul.f32 %v1686, %v1708
      %1713 = vrot.lane.b32.xlu0 %v1709, 126
      %v1714 = vpop.permute.xlu0 %1713
      %1715 = vrot.lane.b32.xlu0 %v1710, 126
      %v1716 = vpop.permute.xlu0 %1715
      %v1719 = vadd.f32 %v1705, %v1714
      %v1720 = vadd.f32 %v1706, %v1716
      %s1721 = sld [smem:[#allocation6 + $0x71]]
      %v1722 = vstv %s1721
      %v1723 = vmul.f32 %v1685, %v1722
      %v1724 = vmul.f32 %v1686, %v1722
      %1727 = vrot.lane.b32.xlu0 %v1723, 125
      %v1728 = vpop.permute.xlu0 %1727
      %1729 = vrot.lane.b32.xlu0 %v1724, 125
      %v1730 = vpop.permute.xlu0 %1729
      %v1733 = vadd.f32 %v1719, %v1728
      %v1734 = vadd.f32 %v1720, %v1730
      %s1735 = sld [smem:[#allocation6 + $0x72]]
      %v1736 = vstv %s1735
      %v1737 = vmul.f32 %v1685, %v1736
      %v1738 = vmul.f32 %v1686, %v1736
      %1741 = vrot.lane.b32.xlu0 %v1737, 124
      %v1742 = vpop.permute.xlu0 %1741
      %1743 = vrot.lane.b32.xlu0 %v1738, 124
      %v1744 = vpop.permute.xlu0 %1743
      %v1747 = vadd.f32 %v1733, %v1742
      %v1748 = vadd.f32 %v1734, %v1744
      %s1749 = sadd.s32 %s1549, 3
      %s1750 = scalar_lea.vmem [#allocation2], %s1749
      %v1751 = vld [vmem:[%s1750] sm:$0xff]
      %v1752 = vld [vmem:[%s1750 + $0x60] sm:$0xff]
      %s1753 = sld [smem:[#allocation6 + $0x73]]
      %v1754 = vstv %s1753
      %v1755 = vmul.f32 %v1751, %v1754
      %v1756 = vmul.f32 %v1752, %v1754
      %v1757 = vadd.f32 %v1747, %v1755
      %v1758 = vadd.f32 %v1748, %v1756
      %s1759 = sld [smem:[#allocation6 + $0x74]]
      %v1760 = vstv %s1759
      %v1761 = vmul.f32 %v1751, %v1760
      %v1762 = vmul.f32 %v1752, %v1760
      %1765 = vrot.lane.b32.xlu0 %v1761, 127
      %v1766 = vpop.permute.xlu0 %1765
      %1767 = vrot.lane.b32.xlu0 %v1762, 127
      %v1768 = vpop.permute.xlu0 %1767
      %v1771 = vadd.f32 %v1757, %v1766
      %v1772 = vadd.f32 %v1758, %v1768
      %s1773 = sld [smem:[#allocation6 + $0x75]]
      %v1774 = vstv %s1773
      %v1775 = vmul.f32 %v1751, %v1774
      %v1776 = vmul.f32 %v1752, %v1774
      %1779 = vrot.lane.b32.xlu0 %v1775, 126
      %v1780 = vpop.permute.xlu0 %1779
      %1781 = vrot.lane.b32.xlu0 %v1776, 126
      %v1782 = vpop.permute.xlu0 %1781
      %v1785 = vadd.f32 %v1771, %v1780
      %v1786 = vadd.f32 %v1772, %v1782
      %s1787 = sld [smem:[#allocation6 + $0x76]]
      %v1788 = vstv %s1787
      %v1789 = vmul.f32 %v1751, %v1788
      %v1790 = vmul.f32 %v1752, %v1788
      %1793 = vrot.lane.b32.xlu0 %v1789, 125
      %v1794 = vpop.permute.xlu0 %1793
      %1795 = vrot.lane.b32.xlu0 %v1790, 125
      %v1796 = vpop.permute.xlu0 %1795
      %v1799 = vadd.f32 %v1785, %v1794
      %v1800 = vadd.f32 %v1786, %v1796
      %s1801 = sld [smem:[#allocation6 + $0x77]]
      %v1802 = vstv %s1801
      %v1803 = vmul.f32 %v1751, %v1802
      %v1804 = vmul.f32 %v1752, %v1802
      %1807 = vrot.lane.b32.xlu0 %v1803, 124
      %v1808 = vpop.permute.xlu0 %1807
      %1809 = vrot.lane.b32.xlu0 %v1804, 124
      %v1810 = vpop.permute.xlu0 %1809
      %v1813 = vadd.f32 %v1799, %v1808
      %v1814 = vadd.f32 %v1800, %v1810
      %s1815 = sadd.s32 %s1549, 4
      %s1816 = scalar_lea.vmem [#allocation2], %s1815
      %v1817 = vld [vmem:[%s1816] sm:$0xff]
      %v1818 = vld [vmem:[%s1816 + $0x60] sm:$0xff]
      %s1819 = sld [smem:[#allocation6 + $0x78]]
      %v1820 = vstv %s1819
      %v1821 = vmul.f32 %v1817, %v1820
      %v1822 = vmul.f32 %v1818, %v1820
      %v1823 = vadd.f32 %v1813, %v1821
      %v1824 = vadd.f32 %v1814, %v1822
      %s1825 = sld [smem:[#allocation6 + $0x79]]
      %v1826 = vstv %s1825
      %v1827 = vmul.f32 %v1817, %v1826
      %v1828 = vmul.f32 %v1818, %v1826
      %1831 = vrot.lane.b32.xlu0 %v1827, 127
      %v1832 = vpop.permute.xlu0 %1831
      %1833 = vrot.lane.b32.xlu0 %v1828, 127
      %v1834 = vpop.permute.xlu0 %1833
      %v1837 = vadd.f32 %v1823, %v1832
      %v1838 = vadd.f32 %v1824, %v1834
      %s1839 = sld [smem:[#allocation6 + $0x7a]]
      %v1840 = vstv %s1839
      %v1841 = vmul.f32 %v1817, %v1840
      %v1842 = vmul.f32 %v1818, %v1840
      %1845 = vrot.lane.b32.xlu0 %v1841, 126
      %v1846 = vpop.permute.xlu0 %1845
      %1847 = vrot.lane.b32.xlu0 %v1842, 126
      %v1848 = vpop.permute.xlu0 %1847
      %v1851 = vadd.f32 %v1837, %v1846
      %v1852 = vadd.f32 %v1838, %v1848
      %s1853 = sld [smem:[#allocation6 + $0x7b]]
      %v1854 = vstv %s1853
      %v1855 = vmul.f32 %v1817, %v1854
      %v1856 = vmul.f32 %v1818, %v1854
      %1859 = vrot.lane.b32.xlu0 %v1855, 125
      %v1860 = vpop.permute.xlu0 %1859
      %1861 = vrot.lane.b32.xlu0 %v1856, 125
      %v1862 = vpop.permute.xlu0 %1861
      %v1865 = vadd.f32 %v1851, %v1860
      %v1866 = vadd.f32 %v1852, %v1862
      %s1867 = sld [smem:[#allocation6 + $0x7c]]
      %v1868 = vstv %s1867
      %v1869 = vmul.f32 %v1817, %v1868
      %v1870 = vmul.f32 %v1818, %v1868
      %1873 = vrot.lane.b32.xlu0 %v1869, 124
      %v1874 = vpop.permute.xlu0 %1873
      %1875 = vrot.lane.b32.xlu0 %v1870, 124
      %v1876 = vpop.permute.xlu0 %1875
      %v1879 = vadd.f32 %v1865, %v1874
      %v1880 = vadd.f32 %v1866, %v1876
      %s1881 = sadd.s32 %s1549, 24
      %s1882 = scalar_lea.vmem [#allocation2], %s1881
      %v1883 = vld [vmem:[%s1882] sm:$0xff]
      %v1884 = vld [vmem:[%s1882 + $0x60] sm:$0xff]
      %s1885 = sld [smem:[#allocation6 + $0x7d]]
      %v1886 = vstv %s1885
      %v1887 = vmul.f32 %v1883, %v1886
      %v1888 = vmul.f32 %v1884, %v1886
      %v1889 = vadd.f32 %v1879, %v1887
      %v1890 = vadd.f32 %v1880, %v1888
      %s1891 = sld [smem:[#allocation6 + $0x7e]]
      %v1892 = vstv %s1891
      %v1893 = vmul.f32 %v1883, %v1892
      %v1894 = vmul.f32 %v1884, %v1892
      %1897 = vrot.lane.b32.xlu0 %v1893, 127
      %v1898 = vpop.permute.xlu0 %1897
      %1899 = vrot.lane.b32.xlu0 %v1894, 127
      %v1900 = vpop.permute.xlu0 %1899
      %v1903 = vadd.f32 %v1889, %v1898
      %v1904 = vadd.f32 %v1890, %v1900
      %s1905 = sld [smem:[#allocation6 + $0x7f]]
      %v1906 = vstv %s1905
      %v1907 = vmul.f32 %v1883, %v1906
      %v1908 = vmul.f32 %v1884, %v1906
      %1911 = vrot.lane.b32.xlu0 %v1907, 126
      %v1912 = vpop.permute.xlu0 %1911
      %1913 = vrot.lane.b32.xlu0 %v1908, 126
      %v1914 = vpop.permute.xlu0 %1913
      %v1917 = vadd.f32 %v1903, %v1912
      %v1918 = vadd.f32 %v1904, %v1914
      %s1919 = sld [smem:[#allocation6 + $0x80]]
      %v1920 = vstv %s1919
      %v1921 = vmul.f32 %v1883, %v1920
      %v1922 = vmul.f32 %v1884, %v1920
      %1925 = vrot.lane.b32.xlu0 %v1921, 125
      %v1926 = vpop.permute.xlu0 %1925
      %1927 = vrot.lane.b32.xlu0 %v1922, 125
      %v1928 = vpop.permute.xlu0 %1927
      %v1931 = vadd.f32 %v1917, %v1926
      %v1932 = vadd.f32 %v1918, %v1928
      %s1933 = sld [smem:[#allocation6 + $0x81]]
      %v1934 = vstv %s1933
      %v1935 = vmul.f32 %v1883, %v1934
      %v1936 = vmul.f32 %v1884, %v1934
      %1939 = vrot.lane.b32.xlu0 %v1935, 124
      %v1940 = vpop.permute.xlu0 %1939
      %1941 = vrot.lane.b32.xlu0 %v1936, 124
      %v1942 = vpop.permute.xlu0 %1941
      %v1945 = vadd.f32 %v1931, %v1940
      %v1946 = vadd.f32 %v1932, %v1942
      %s1947 = sadd.s32 %s1617, 24
      %s1948 = scalar_lea.vmem [#allocation2], %s1947
      %v1949 = vld [vmem:[%s1948] sm:$0xff]
      %v1950 = vld [vmem:[%s1948 + $0x60] sm:$0xff]
      %s1951 = sld [smem:[#allocation6 + $0x82]]
      %v1952 = vstv %s1951
      %v1953 = vmul.f32 %v1949, %v1952
      %v1954 = vmul.f32 %v1950, %v1952
      %v1955 = vadd.f32 %v1945, %v1953
      %v1956 = vadd.f32 %v1946, %v1954
      %s1957 = sld [smem:[#allocation6 + $0x83]]
      %v1958 = vstv %s1957
      %v1959 = vmul.f32 %v1949, %v1958
      %v1960 = vmul.f32 %v1950, %v1958
      %1963 = vrot.lane.b32.xlu0 %v1959, 127
      %v1964 = vpop.permute.xlu0 %1963
      %1965 = vrot.lane.b32.xlu0 %v1960, 127
      %v1966 = vpop.permute.xlu0 %1965
      %v1969 = vadd.f32 %v1955, %v1964
      %v1970 = vadd.f32 %v1956, %v1966
      %s1971 = sld [smem:[#allocation6 + $0x84]]
      %v1972 = vstv %s1971
      %v1973 = vmul.f32 %v1949, %v1972
      %v1974 = vmul.f32 %v1950, %v1972
      %1977 = vrot.lane.b32.xlu0 %v1973, 126
      %v1978 = vpop.permute.xlu0 %1977
      %1979 = vrot.lane.b32.xlu0 %v1974, 126
      %v1980 = vpop.permute.xlu0 %1979
      %v1983 = vadd.f32 %v1969, %v1978
      %v1984 = vadd.f32 %v1970, %v1980
      %s1985 = sld [smem:[#allocation6 + $0x85]]
      %v1986 = vstv %s1985
      %v1987 = vmul.f32 %v1949, %v1986
      %v1988 = vmul.f32 %v1950, %v1986
      %1991 = vrot.lane.b32.xlu0 %v1987, 125
      %v1992 = vpop.permute.xlu0 %1991
      %1993 = vrot.lane.b32.xlu0 %v1988, 125
      %v1994 = vpop.permute.xlu0 %1993
      %v1997 = vadd.f32 %v1983, %v1992
      %v1998 = vadd.f32 %v1984, %v1994
      %s1999 = sld [smem:[#allocation6 + $0x86]]
      %v2000 = vstv %s1999
      %v2001 = vmul.f32 %v1949, %v2000
      %v2002 = vmul.f32 %v1950, %v2000
      %2005 = vrot.lane.b32.xlu0 %v2001, 124
      %v2006 = vpop.permute.xlu0 %2005
      %2007 = vrot.lane.b32.xlu0 %v2002, 124
      %v2008 = vpop.permute.xlu0 %2007
      %v2011 = vadd.f32 %v1997, %v2006
      %v2012 = vadd.f32 %v1998, %v2008
      %s2013 = sadd.s32 %s1683, 24
      %s2014 = scalar_lea.vmem [#allocation2], %s2013
      %v2015 = vld [vmem:[%s2014] sm:$0xff]
      %v2016 = vld [vmem:[%s2014 + $0x60] sm:$0xff]
      %s2017 = sld [smem:[#allocation6 + $0x87]]
      %v2018 = vstv %s2017
      %v2019 = vmul.f32 %v2015, %v2018
      %v2020 = vmul.f32 %v2016, %v2018
      %v2021 = vadd.f32 %v2011, %v2019
      %v2022 = vadd.f32 %v2012, %v2020
      %s2023 = sld [smem:[#allocation6 + $0x88]]
      %v2024 = vstv %s2023
      %v2025 = vmul.f32 %v2015, %v2024
      %v2026 = vmul.f32 %v2016, %v2024
      %2029 = vrot.lane.b32.xlu0 %v2025, 127
      %v2030 = vpop.permute.xlu0 %2029
      %2031 = vrot.lane.b32.xlu0 %v2026, 127
      %v2032 = vpop.permute.xlu0 %2031
      %v2035 = vadd.f32 %v2021, %v2030
      %v2036 = vadd.f32 %v2022, %v2032
      %s2037 = sld [smem:[#allocation6 + $0x89]]
      %v2038 = vstv %s2037
      %v2039 = vmul.f32 %v2015, %v2038
      %v2040 = vmul.f32 %v2016, %v2038
      %2043 = vrot.lane.b32.xlu0 %v2039, 126
      %v2044 = vpop.permute.xlu0 %2043
      %2045 = vrot.lane.b32.xlu0 %v2040, 126
      %v2046 = vpop.permute.xlu0 %2045
      %v2049 = vadd.f32 %v2035, %v2044
      %v2050 = vadd.f32 %v2036, %v2046
      %s2051 = sld [smem:[#allocation6 + $0x8a]]
      %v2052 = vstv %s2051
      %v2053 = vmul.f32 %v2015, %v2052
      %v2054 = vmul.f32 %v2016, %v2052
      %2057 = vrot.lane.b32.xlu0 %v2053, 125
      %v2058 = vpop.permute.xlu0 %2057
      %2059 = vrot.lane.b32.xlu0 %v2054, 125
      %v2060 = vpop.permute.xlu0 %2059
      %v2063 = vadd.f32 %v2049, %v2058
      %v2064 = vadd.f32 %v2050, %v2060
      %s2065 = sld [smem:[#allocation6 + $0x8b]]
      %v2066 = vstv %s2065
      %v2067 = vmul.f32 %v2015, %v2066
      %v2068 = vmul.f32 %v2016, %v2066
      %2071 = vrot.lane.b32.xlu0 %v2067, 124
      %v2072 = vpop.permute.xlu0 %2071
      %2073 = vrot.lane.b32.xlu0 %v2068, 124
      %v2074 = vpop.permute.xlu0 %2073
      %v2077 = vadd.f32 %v2063, %v2072
      %v2078 = vadd.f32 %v2064, %v2074
      %s2079 = sadd.s32 %s1749, 24
      %s2080 = scalar_lea.vmem [#allocation2], %s2079
      %v2081 = vld [vmem:[%s2080] sm:$0xff]
      %v2082 = vld [vmem:[%s2080 + $0x60] sm:$0xff]
      %s2083 = sld [smem:[#allocation6 + $0x8c]]
      %v2084 = vstv %s2083
      %v2085 = vmul.f32 %v2081, %v2084
      %v2086 = vmul.f32 %v2082, %v2084
      %v2087 = vadd.f32 %v2077, %v2085
      %v2088 = vadd.f32 %v2078, %v2086
      %s2089 = sld [smem:[#allocation6 + $0x8d]]
      %v2090 = vstv %s2089
      %v2091 = vmul.f32 %v2081, %v2090
      %v2092 = vmul.f32 %v2082, %v2090
      %2095 = vrot.lane.b32.xlu0 %v2091, 127
      %v2096 = vpop.permute.xlu0 %2095
      %2097 = vrot.lane.b32.xlu0 %v2092, 127
      %v2098 = vpop.permute.xlu0 %2097
      %v2101 = vadd.f32 %v2087, %v2096
      %v2102 = vadd.f32 %v2088, %v2098
      %s2103 = sld [smem:[#allocation6 + $0x8e]]
      %v2104 = vstv %s2103
      %v2105 = vmul.f32 %v2081, %v2104
      %v2106 = vmul.f32 %v2082, %v2104
      %2109 = vrot.lane.b32.xlu0 %v2105, 126
      %v2110 = vpop.permute.xlu0 %2109
      %2111 = vrot.lane.b32.xlu0 %v2106, 126
      %v2112 = vpop.permute.xlu0 %2111
      %v2115 = vadd.f32 %v2101, %v2110
      %v2116 = vadd.f32 %v2102, %v2112
      %s2117 = sld [smem:[#allocation6 + $0x8f]]
      %v2118 = vstv %s2117
      %v2119 = vmul.f32 %v2081, %v2118
      %v2120 = vmul.f32 %v2082, %v2118
      %2123 = vrot.lane.b32.xlu0 %v2119, 125
      %v2124 = vpop.permute.xlu0 %2123
      %2125 = vrot.lane.b32.xlu0 %v2120, 125
      %v2126 = vpop.permute.xlu0 %2125
      %v2129 = vadd.f32 %v2115, %v2124
      %v2130 = vadd.f32 %v2116, %v2126
      %s2131 = sld [smem:[#allocation6 + $0x90]]
      %v2132 = vstv %s2131
      %v2133 = vmul.f32 %v2081, %v2132
      %v2134 = vmul.f32 %v2082, %v2132
      %2137 = vrot.lane.b32.xlu0 %v2133, 124
      %v2138 = vpop.permute.xlu0 %2137
      %2139 = vrot.lane.b32.xlu0 %v2134, 124
      %v2140 = vpop.permute.xlu0 %2139
      %v2143 = vadd.f32 %v2129, %v2138
      %v2144 = vadd.f32 %v2130, %v2140
      %s2145 = sadd.s32 %s1815, 24
      %s2146 = scalar_lea.vmem [#allocation2], %s2145
      %v2147 = vld [vmem:[%s2146] sm:$0xff]
      %v2148 = vld [vmem:[%s2146 + $0x60] sm:$0xff]
      %s2149 = sld [smem:[#allocation6 + $0x91]]
      %v2150 = vstv %s2149
      %v2151 = vmul.f32 %v2147, %v2150
      %v2152 = vmul.f32 %v2148, %v2150
      %v2153 = vadd.f32 %v2143, %v2151
      %v2154 = vadd.f32 %v2144, %v2152
      %s2155 = sld [smem:[#allocation6 + $0x92]]
      %v2156 = vstv %s2155
      %v2157 = vmul.f32 %v2147, %v2156
      %v2158 = vmul.f32 %v2148, %v2156
      %2161 = vrot.lane.b32.xlu0 %v2157, 127
      %v2162 = vpop.permute.xlu0 %2161
      %2163 = vrot.lane.b32.xlu0 %v2158, 127
      %v2164 = vpop.permute.xlu0 %2163
      %v2167 = vadd.f32 %v2153, %v2162
      %v2168 = vadd.f32 %v2154, %v2164
      %s2169 = sld [smem:[#allocation6 + $0x93]]
      %v2170 = vstv %s2169
      %v2171 = vmul.f32 %v2147, %v2170
      %v2172 = vmul.f32 %v2148, %v2170
      %2175 = vrot.lane.b32.xlu0 %v2171, 126
      %v2176 = vpop.permute.xlu0 %2175
      %2177 = vrot.lane.b32.xlu0 %v2172, 126
      %v2178 = vpop.permute.xlu0 %2177
      %v2181 = vadd.f32 %v2167, %v2176
      %v2182 = vadd.f32 %v2168, %v2178
      %s2183 = sld [smem:[#allocation6 + $0x94]]
      %v2184 = vstv %s2183
      %v2185 = vmul.f32 %v2147, %v2184
      %v2186 = vmul.f32 %v2148, %v2184
      %2189 = vrot.lane.b32.xlu0 %v2185, 125
      %v2190 = vpop.permute.xlu0 %2189
      %2191 = vrot.lane.b32.xlu0 %v2186, 125
      %v2192 = vpop.permute.xlu0 %2191
      %v2195 = vadd.f32 %v2181, %v2190
      %v2196 = vadd.f32 %v2182, %v2192
      %s2197 = sld [smem:[#allocation6 + $0x95]]
      %v2198 = vstv %s2197
      %v2199 = vmul.f32 %v2147, %v2198
      %v2200 = vmul.f32 %v2148, %v2198
      %2203 = vrot.lane.b32.xlu0 %v2199, 124
      %v2204 = vpop.permute.xlu0 %2203
      %2205 = vrot.lane.b32.xlu0 %v2200, 124
      %v2206 = vpop.permute.xlu0 %2205
      %v2209 = vadd.f32 %v2195, %v2204
      %v2210 = vadd.f32 %v2196, %v2206
      %s2211 = sadd.s32 %s1549, 48
      %s2212 = scalar_lea.vmem [#allocation2], %s2211
      %v2213 = vld [vmem:[%s2212] sm:$0xff]
      %v2214 = vld [vmem:[%s2212 + $0x60] sm:$0xff]
      %s2215 = sld [smem:[#allocation6 + $0x96]]
      %v2216 = vstv %s2215
      %v2217 = vmul.f32 %v2213, %v2216
      %v2218 = vmul.f32 %v2214, %v2216
      %v2219 = vadd.f32 %v2209, %v2217
      %v2220 = vadd.f32 %v2210, %v2218
      %s2221 = sld [smem:[#allocation6 + $0x97]]
      %v2222 = vstv %s2221
      %v2223 = vmul.f32 %v2213, %v2222
      %v2224 = vmul.f32 %v2214, %v2222
      %2227 = vrot.lane.b32.xlu0 %v2223, 127
      %v2228 = vpop.permute.xlu0 %2227
      %2229 = vrot.lane.b32.xlu0 %v2224, 127
      %v2230 = vpop.permute.xlu0 %2229
      %v2233 = vadd.f32 %v2219, %v2228
      %v2234 = vadd.f32 %v2220, %v2230
      %s2235 = sld [smem:[#allocation6 + $0x98]]
      %v2236 = vstv %s2235
      %v2237 = vmul.f32 %v2213, %v2236
      %v2238 = vmul.f32 %v2214, %v2236
      %2241 = vrot.lane.b32.xlu0 %v2237, 126
      %v2242 = vpop.permute.xlu0 %2241
      %2243 = vrot.lane.b32.xlu0 %v2238, 126
      %v2244 = vpop.permute.xlu0 %2243
      %v2247 = vadd.f32 %v2233, %v2242
      %v2248 = vadd.f32 %v2234, %v2244
      %s2249 = sld [smem:[#allocation6 + $0x99]]
      %v2250 = vstv %s2249
      %v2251 = vmul.f32 %v2213, %v2250
      %v2252 = vmul.f32 %v2214, %v2250
      %2255 = vrot.lane.b32.xlu0 %v2251, 125
      %v2256 = vpop.permute.xlu0 %2255
      %2257 = vrot.lane.b32.xlu0 %v2252, 125
      %v2258 = vpop.permute.xlu0 %2257
      %v2261 = vadd.f32 %v2247, %v2256
      %v2262 = vadd.f32 %v2248, %v2258
      %s2263 = sld [smem:[#allocation6 + $0x9a]]
      %v2264 = vstv %s2263
      %v2265 = vmul.f32 %v2213, %v2264
      %v2266 = vmul.f32 %v2214, %v2264
      %2269 = vrot.lane.b32.xlu0 %v2265, 124
      %v2270 = vpop.permute.xlu0 %2269
      %2271 = vrot.lane.b32.xlu0 %v2266, 124
      %v2272 = vpop.permute.xlu0 %2271
      %v2275 = vadd.f32 %v2261, %v2270
      %v2276 = vadd.f32 %v2262, %v2272
      %s2277 = sadd.s32 %s1617, 48
      %s2278 = scalar_lea.vmem [#allocation2], %s2277
      %v2279 = vld [vmem:[%s2278] sm:$0xff]
      %v2280 = vld [vmem:[%s2278 + $0x60] sm:$0xff]
      %s2281 = sld [smem:[#allocation6 + $0x9b]]
      %v2282 = vstv %s2281
      %v2283 = vmul.f32 %v2279, %v2282
      %v2284 = vmul.f32 %v2280, %v2282
      %v2285 = vadd.f32 %v2275, %v2283
      %v2286 = vadd.f32 %v2276, %v2284
      %s2287 = sld [smem:[#allocation6 + $0x9c]]
      %v2288 = vstv %s2287
      %v2289 = vmul.f32 %v2279, %v2288
      %v2290 = vmul.f32 %v2280, %v2288
      %2293 = vrot.lane.b32.xlu0 %v2289, 127
      %v2294 = vpop.permute.xlu0 %2293
      %2295 = vrot.lane.b32.xlu0 %v2290, 127
      %v2296 = vpop.permute.xlu0 %2295
      %v2299 = vadd.f32 %v2285, %v2294
      %v2300 = vadd.f32 %v2286, %v2296
      %s2301 = sld [smem:[#allocation6 + $0x9d]]
      %v2302 = vstv %s2301
      %v2303 = vmul.f32 %v2279, %v2302
      %v2304 = vmul.f32 %v2280, %v2302
      %2307 = vrot.lane.b32.xlu0 %v2303, 126
      %v2308 = vpop.permute.xlu0 %2307
      %2309 = vrot.lane.b32.xlu0 %v2304, 126
      %v2310 = vpop.permute.xlu0 %2309
      %v2313 = vadd.f32 %v2299, %v2308
      %v2314 = vadd.f32 %v2300, %v2310
      %s2315 = sld [smem:[#allocation6 + $0x9e]]
      %v2316 = vstv %s2315
      %v2317 = vmul.f32 %v2279, %v2316
      %v2318 = vmul.f32 %v2280, %v2316
      %2321 = vrot.lane.b32.xlu0 %v2317, 125
      %v2322 = vpop.permute.xlu0 %2321
      %2323 = vrot.lane.b32.xlu0 %v2318, 125
      %v2324 = vpop.permute.xlu0 %2323
      %v2327 = vadd.f32 %v2313, %v2322
      %v2328 = vadd.f32 %v2314, %v2324
      %s2329 = sld [smem:[#allocation6 + $0x9f]]
      %v2330 = vstv %s2329
      %v2331 = vmul.f32 %v2279, %v2330
      %v2332 = vmul.f32 %v2280, %v2330
      %2335 = vrot.lane.b32.xlu0 %v2331, 124
      %v2336 = vpop.permute.xlu0 %2335
      %2337 = vrot.lane.b32.xlu0 %v2332, 124
      %v2338 = vpop.permute.xlu0 %2337
      %v2341 = vadd.f32 %v2327, %v2336
      %v2342 = vadd.f32 %v2328, %v2338
      %s2343 = sadd.s32 %s1683, 48
      %s2344 = scalar_lea.vmem [#allocation2], %s2343
      %v2345 = vld [vmem:[%s2344] sm:$0xff]
      %v2346 = vld [vmem:[%s2344 + $0x60] sm:$0xff]
      %s2347 = sld [smem:[#allocation6 + $0xa0]]
      %v2348 = vstv %s2347
      %v2349 = vmul.f32 %v2345, %v2348
      %v2350 = vmul.f32 %v2346, %v2348
      %v2351 = vadd.f32 %v2341, %v2349
      %v2352 = vadd.f32 %v2342, %v2350
      %s2353 = sld [smem:[#allocation6 + $0xa1]]
      %v2354 = vstv %s2353
      %v2355 = vmul.f32 %v2345, %v2354
      %v2356 = vmul.f32 %v2346, %v2354
      %2359 = vrot.lane.b32.xlu0 %v2355, 127
      %v2360 = vpop.permute.xlu0 %2359
      %2361 = vrot.lane.b32.xlu0 %v2356, 127
      %v2362 = vpop.permute.xlu0 %2361
      %v2365 = vadd.f32 %v2351, %v2360
      %v2366 = vadd.f32 %v2352, %v2362
      %s2367 = sld [smem:[#allocation6 + $0xa2]]
      %v2368 = vstv %s2367
      %v2369 = vmul.f32 %v2345, %v2368
      %v2370 = vmul.f32 %v2346, %v2368
      %2373 = vrot.lane.b32.xlu0 %v2369, 126
      %v2374 = vpop.permute.xlu0 %2373
      %2375 = vrot.lane.b32.xlu0 %v2370, 126
      %v2376 = vpop.permute.xlu0 %2375
      %v2379 = vadd.f32 %v2365, %v2374
      %v2380 = vadd.f32 %v2366, %v2376
      %s2381 = sld [smem:[#allocation6 + $0xa3]]
      %v2382 = vstv %s2381
      %v2383 = vmul.f32 %v2345, %v2382
      %v2384 = vmul.f32 %v2346, %v2382
      %2387 = vrot.lane.b32.xlu0 %v2383, 125
      %v2388 = vpop.permute.xlu0 %2387
      %2389 = vrot.lane.b32.xlu0 %v2384, 125
      %v2390 = vpop.permute.xlu0 %2389
      %v2393 = vadd.f32 %v2379, %v2388
      %v2394 = vadd.f32 %v2380, %v2390
      %s2395 = sld [smem:[#allocation6 + $0xa4]]
      %v2396 = vstv %s2395
      %v2397 = vmul.f32 %v2345, %v2396
      %v2398 = vmul.f32 %v2346, %v2396
      %2401 = vrot.lane.b32.xlu0 %v2397, 124
      %v2402 = vpop.permute.xlu0 %2401
      %2403 = vrot.lane.b32.xlu0 %v2398, 124
      %v2404 = vpop.permute.xlu0 %2403
      %v2407 = vadd.f32 %v2393, %v2402
      %v2408 = vadd.f32 %v2394, %v2404
      %s2409 = sadd.s32 %s1749, 48
      %s2410 = scalar_lea.vmem [#allocation2], %s2409
      %v2411 = vld [vmem:[%s2410] sm:$0xff]
      %v2412 = vld [vmem:[%s2410 + $0x60] sm:$0xff]
      %s2413 = sld [smem:[#allocation6 + $0xa5]]
      %v2414 = vstv %s2413
      %v2415 = vmul.f32 %v2411, %v2414
      %v2416 = vmul.f32 %v2412, %v2414
      %v2417 = vadd.f32 %v2407, %v2415
      %v2418 = vadd.f32 %v2408, %v2416
      %s2419 = sld [smem:[#allocation6 + $0xa6]]
      %v2420 = vstv %s2419
      %v2421 = vmul.f32 %v2411, %v2420
      %v2422 = vmul.f32 %v2412, %v2420
      %2425 = vrot.lane.b32.xlu0 %v2421, 127
      %v2426 = vpop.permute.xlu0 %2425
      %2427 = vrot.lane.b32.xlu0 %v2422, 127
      %v2428 = vpop.permute.xlu0 %2427
      %v2431 = vadd.f32 %v2417, %v2426
      %v2432 = vadd.f32 %v2418, %v2428
      %s2433 = sld [smem:[#allocation6 + $0xa7]]
      %v2434 = vstv %s2433
      %v2435 = vmul.f32 %v2411, %v2434
      %v2436 = vmul.f32 %v2412, %v2434
      %2439 = vrot.lane.b32.xlu0 %v2435, 126
      %v2440 = vpop.permute.xlu0 %2439
      %2441 = vrot.lane.b32.xlu0 %v2436, 126
      %v2442 = vpop.permute.xlu0 %2441
      %v2445 = vadd.f32 %v2431, %v2440
      %v2446 = vadd.f32 %v2432, %v2442
      %s2447 = sld [smem:[#allocation6 + $0xa8]]
      %v2448 = vstv %s2447
      %v2449 = vmul.f32 %v2411, %v2448
      %v2450 = vmul.f32 %v2412, %v2448
      %2453 = vrot.lane.b32.xlu0 %v2449, 125
      %v2454 = vpop.permute.xlu0 %2453
      %2455 = vrot.lane.b32.xlu0 %v2450, 125
      %v2456 = vpop.permute.xlu0 %2455
      %v2459 = vadd.f32 %v2445, %v2454
      %v2460 = vadd.f32 %v2446, %v2456
      %s2461 = sld [smem:[#allocation6 + $0xa9]]
      %v2462 = vstv %s2461
      %v2463 = vmul.f32 %v2411, %v2462
      %v2464 = vmul.f32 %v2412, %v2462
      %2467 = vrot.lane.b32.xlu0 %v2463, 124
      %v2468 = vpop.permute.xlu0 %2467
      %2469 = vrot.lane.b32.xlu0 %v2464, 124
      %v2470 = vpop.permute.xlu0 %2469
      %v2473 = vadd.f32 %v2459, %v2468
      %v2474 = vadd.f32 %v2460, %v2470
      %s2475 = sadd.s32 %s1815, 48
      %s2476 = scalar_lea.vmem [#allocation2], %s2475
      %v2477 = vld [vmem:[%s2476] sm:$0xff]
      %v2478 = vld [vmem:[%s2476 + $0x60] sm:$0xff]
      %s2479 = sld [smem:[#allocation6 + $0xaa]]
      %v2480 = vstv %s2479
      %v2481 = vmul.f32 %v2477, %v2480
      %v2482 = vmul.f32 %v2478, %v2480
      %v2483 = vadd.f32 %v2473, %v2481
      %v2484 = vadd.f32 %v2474, %v2482
      %s2485 = sld [smem:[#allocation6 + $0xab]]
      %v2486 = vstv %s2485
      %v2487 = vmul.f32 %v2477, %v2486
      %v2488 = vmul.f32 %v2478, %v2486
      %2491 = vrot.lane.b32.xlu0 %v2487, 127
      %v2492 = vpop.permute.xlu0 %2491
      %2493 = vrot.lane.b32.xlu0 %v2488, 127
      %v2494 = vpop.permute.xlu0 %2493
      %v2497 = vadd.f32 %v2483, %v2492
      %v2498 = vadd.f32 %v2484, %v2494
      %s2499 = sld [smem:[#allocation6 + $0xac]]
      %v2500 = vstv %s2499
      %v2501 = vmul.f32 %v2477, %v2500
      %v2502 = vmul.f32 %v2478, %v2500
      %2505 = vrot.lane.b32.xlu0 %v2501, 126
      %v2506 = vpop.permute.xlu0 %2505
      %2507 = vrot.lane.b32.xlu0 %v2502, 126
      %v2508 = vpop.permute.xlu0 %2507
      %v2511 = vadd.f32 %v2497, %v2506
      %v2512 = vadd.f32 %v2498, %v2508
      %s2513 = sld [smem:[#allocation6 + $0xad]]
      %v2514 = vstv %s2513
      %v2515 = vmul.f32 %v2477, %v2514
      %v2516 = vmul.f32 %v2478, %v2514
      %2519 = vrot.lane.b32.xlu0 %v2515, 125
      %v2520 = vpop.permute.xlu0 %2519
      %2521 = vrot.lane.b32.xlu0 %v2516, 125
      %v2522 = vpop.permute.xlu0 %2521
      %v2525 = vadd.f32 %v2511, %v2520
      %v2526 = vadd.f32 %v2512, %v2522
      %s2527 = sld [smem:[#allocation6 + $0xae]]
      %v2528 = vstv %s2527
      %v2529 = vmul.f32 %v2477, %v2528
      %v2530 = vmul.f32 %v2478, %v2528
      %2533 = vrot.lane.b32.xlu0 %v2529, 124
      %v2534 = vpop.permute.xlu0 %2533
      %2535 = vrot.lane.b32.xlu0 %v2530, 124
      %v2536 = vpop.permute.xlu0 %2535
      %v2539 = vadd.f32 %v2525, %v2534
      %v2540 = vadd.f32 %v2526, %v2536
      %s2541 = sadd.s32 %s1549, 72
      %s2542 = scalar_lea.vmem [#allocation2], %s2541
      %v2543 = vld [vmem:[%s2542] sm:$0xff]
      %v2544 = vld [vmem:[%s2542 + $0x60] sm:$0xff]
      %s2545 = sld [smem:[#allocation6 + $0xaf]]
      %v2546 = vstv %s2545
      %v2547 = vmul.f32 %v2543, %v2546
      %v2548 = vmul.f32 %v2544, %v2546
      %v2549 = vadd.f32 %v2539, %v2547
      %v2550 = vadd.f32 %v2540, %v2548
      %s2551 = sld [smem:[#allocation6 + $0xb0]]
      %v2552 = vstv %s2551
      %v2553 = vmul.f32 %v2543, %v2552
      %v2554 = vmul.f32 %v2544, %v2552
      %2557 = vrot.lane.b32.xlu0 %v2553, 127
      %v2558 = vpop.permute.xlu0 %2557
      %2559 = vrot.lane.b32.xlu0 %v2554, 127
      %v2560 = vpop.permute.xlu0 %2559
      %v2563 = vadd.f32 %v2549, %v2558
      %v2564 = vadd.f32 %v2550, %v2560
      %s2565 = sld [smem:[#allocation6 + $0xb1]]
      %v2566 = vstv %s2565
      %v2567 = vmul.f32 %v2543, %v2566
      %v2568 = vmul.f32 %v2544, %v2566
      %2571 = vrot.lane.b32.xlu0 %v2567, 126
      %v2572 = vpop.permute.xlu0 %2571
      %2573 = vrot.lane.b32.xlu0 %v2568, 126
      %v2574 = vpop.permute.xlu0 %2573
      %v2577 = vadd.f32 %v2563, %v2572
      %v2578 = vadd.f32 %v2564, %v2574
      %s2579 = sld [smem:[#allocation6 + $0xb2]]
      %v2580 = vstv %s2579
      %v2581 = vmul.f32 %v2543, %v2580
      %v2582 = vmul.f32 %v2544, %v2580
      %2585 = vrot.lane.b32.xlu0 %v2581, 125
      %v2586 = vpop.permute.xlu0 %2585
      %2587 = vrot.lane.b32.xlu0 %v2582, 125
      %v2588 = vpop.permute.xlu0 %2587
      %v2591 = vadd.f32 %v2577, %v2586
      %v2592 = vadd.f32 %v2578, %v2588
      %s2593 = sld [smem:[#allocation6 + $0xb3]]
      %v2594 = vstv %s2593
      %v2595 = vmul.f32 %v2543, %v2594
      %v2596 = vmul.f32 %v2544, %v2594
      %2599 = vrot.lane.b32.xlu0 %v2595, 124
      %v2600 = vpop.permute.xlu0 %2599
      %2601 = vrot.lane.b32.xlu0 %v2596, 124
      %v2602 = vpop.permute.xlu0 %2601
      %v2605 = vadd.f32 %v2591, %v2600
      %v2606 = vadd.f32 %v2592, %v2602
      %s2607 = sadd.s32 %s1617, 72
      %s2608 = scalar_lea.vmem [#allocation2], %s2607
      %v2609 = vld [vmem:[%s2608] sm:$0xff]
      %v2610 = vld [vmem:[%s2608 + $0x60] sm:$0xff]
      %s2611 = sld [smem:[#allocation6 + $0xb4]]
      %v2612 = vstv %s2611
      %v2613 = vmul.f32 %v2609, %v2612
      %v2614 = vmul.f32 %v2610, %v2612
      %v2615 = vadd.f32 %v2605, %v2613
      %v2616 = vadd.f32 %v2606, %v2614
      %s2617 = sld [smem:[#allocation6 + $0xb5]]
      %v2618 = vstv %s2617
      %v2619 = vmul.f32 %v2609, %v2618
      %v2620 = vmul.f32 %v2610, %v2618
      %2623 = vrot.lane.b32.xlu0 %v2619, 127
      %v2624 = vpop.permute.xlu0 %2623
      %2625 = vrot.lane.b32.xlu0 %v2620, 127
      %v2626 = vpop.permute.xlu0 %2625
      %v2629 = vadd.f32 %v2615, %v2624
      %v2630 = vadd.f32 %v2616, %v2626
      %s2631 = sld [smem:[#allocation6 + $0xb6]]
      %v2632 = vstv %s2631
      %v2633 = vmul.f32 %v2609, %v2632
      %v2634 = vmul.f32 %v2610, %v2632
      %2637 = vrot.lane.b32.xlu0 %v2633, 126
      %v2638 = vpop.permute.xlu0 %2637
      %2639 = vrot.lane.b32.xlu0 %v2634, 126
      %v2640 = vpop.permute.xlu0 %2639
      %v2643 = vadd.f32 %v2629, %v2638
      %v2644 = vadd.f32 %v2630, %v2640
      %s2645 = sld [smem:[#allocation6 + $0xb7]]
      %v2646 = vstv %s2645
      %v2647 = vmul.f32 %v2609, %v2646
      %v2648 = vmul.f32 %v2610, %v2646
      %2651 = vrot.lane.b32.xlu0 %v2647, 125
      %v2652 = vpop.permute.xlu0 %2651
      %2653 = vrot.lane.b32.xlu0 %v2648, 125
      %v2654 = vpop.permute.xlu0 %2653
      %v2657 = vadd.f32 %v2643, %v2652
      %v2658 = vadd.f32 %v2644, %v2654
      %s2659 = sld [smem:[#allocation6 + $0xb8]]
      %v2660 = vstv %s2659
      %v2661 = vmul.f32 %v2609, %v2660
      %v2662 = vmul.f32 %v2610, %v2660
      %2665 = vrot.lane.b32.xlu0 %v2661, 124
      %v2666 = vpop.permute.xlu0 %2665
      %2667 = vrot.lane.b32.xlu0 %v2662, 124
      %v2668 = vpop.permute.xlu0 %2667
      %v2671 = vadd.f32 %v2657, %v2666
      %v2672 = vadd.f32 %v2658, %v2668
      %s2673 = sadd.s32 %s1683, 72
      %s2674 = scalar_lea.vmem [#allocation2], %s2673
      %v2675 = vld [vmem:[%s2674] sm:$0xff]
      %v2676 = vld [vmem:[%s2674 + $0x60] sm:$0xff]
      %s2677 = sld [smem:[#allocation6 + $0xb9]]
      %v2678 = vstv %s2677
      %v2679 = vmul.f32 %v2675, %v2678
      %v2680 = vmul.f32 %v2676, %v2678
      %v2681 = vadd.f32 %v2671, %v2679
      %v2682 = vadd.f32 %v2672, %v2680
      %s2683 = sld [smem:[#allocation6 + $0xba]]
      %v2684 = vstv %s2683
      %v2685 = vmul.f32 %v2675, %v2684
      %v2686 = vmul.f32 %v2676, %v2684
      %2689 = vrot.lane.b32.xlu0 %v2685, 127
      %v2690 = vpop.permute.xlu0 %2689
      %2691 = vrot.lane.b32.xlu0 %v2686, 127
      %v2692 = vpop.permute.xlu0 %2691
      %v2695 = vadd.f32 %v2681, %v2690
      %v2696 = vadd.f32 %v2682, %v2692
      %s2697 = sld [smem:[#allocation6 + $0xbb]]
      %v2698 = vstv %s2697
      %v2699 = vmul.f32 %v2675, %v2698
      %v2700 = vmul.f32 %v2676, %v2698
      %2703 = vrot.lane.b32.xlu0 %v2699, 126
      %v2704 = vpop.permute.xlu0 %2703
      %2705 = vrot.lane.b32.xlu0 %v2700, 126
      %v2706 = vpop.permute.xlu0 %2705
      %v2709 = vadd.f32 %v2695, %v2704
      %v2710 = vadd.f32 %v2696, %v2706
      %s2711 = sld [smem:[#allocation6 + $0xbc]]
      %v2712 = vstv %s2711
      %v2713 = vmul.f32 %v2675, %v2712
      %v2714 = vmul.f32 %v2676, %v2712
      %2717 = vrot.lane.b32.xlu0 %v2713, 125
      %v2718 = vpop.permute.xlu0 %2717
      %2719 = vrot.lane.b32.xlu0 %v2714, 125
      %v2720 = vpop.permute.xlu0 %2719
      %v2723 = vadd.f32 %v2709, %v2718
      %v2724 = vadd.f32 %v2710, %v2720
      %s2725 = sld [smem:[#allocation6 + $0xbd]]
      %v2726 = vstv %s2725
      %v2727 = vmul.f32 %v2675, %v2726
      %v2728 = vmul.f32 %v2676, %v2726
      %2731 = vrot.lane.b32.xlu0 %v2727, 124
      %v2732 = vpop.permute.xlu0 %2731
      %2733 = vrot.lane.b32.xlu0 %v2728, 124
      %v2734 = vpop.permute.xlu0 %2733
      %v2737 = vadd.f32 %v2723, %v2732
      %v2738 = vadd.f32 %v2724, %v2734
      %s2739 = sadd.s32 %s1749, 72
      %s2740 = scalar_lea.vmem [#allocation2], %s2739
      %v2741 = vld [vmem:[%s2740] sm:$0xff]
      %v2742 = vld [vmem:[%s2740 + $0x60] sm:$0xff]
      %s2743 = sld [smem:[#allocation6 + $0xbe]]
      %v2744 = vstv %s2743
      %v2745 = vmul.f32 %v2741, %v2744
      %v2746 = vmul.f32 %v2742, %v2744
      %v2747 = vadd.f32 %v2737, %v2745
      %v2748 = vadd.f32 %v2738, %v2746
      %s2749 = sld [smem:[#allocation6 + $0xbf]]
      %v2750 = vstv %s2749
      %v2751 = vmul.f32 %v2741, %v2750
      %v2752 = vmul.f32 %v2742, %v2750
      %2755 = vrot.lane.b32.xlu0 %v2751, 127
      %v2756 = vpop.permute.xlu0 %2755
      %2757 = vrot.lane.b32.xlu0 %v2752, 127
      %v2758 = vpop.permute.xlu0 %2757
      %v2761 = vadd.f32 %v2747, %v2756
      %v2762 = vadd.f32 %v2748, %v2758
      %s2763 = sld [smem:[#allocation6 + $0xc0]]
      %v2764 = vstv %s2763
      %v2765 = vmul.f32 %v2741, %v2764
      %v2766 = vmul.f32 %v2742, %v2764
      %2769 = vrot.lane.b32.xlu0 %v2765, 126
      %v2770 = vpop.permute.xlu0 %2769
      %2771 = vrot.lane.b32.xlu0 %v2766, 126
      %v2772 = vpop.permute.xlu0 %2771
      %v2775 = vadd.f32 %v2761, %v2770
      %v2776 = vadd.f32 %v2762, %v2772
      %s2777 = sld [smem:[#allocation6 + $0xc1]]
      %v2778 = vstv %s2777
      %v2779 = vmul.f32 %v2741, %v2778
      %v2780 = vmul.f32 %v2742, %v2778
      %2783 = vrot.lane.b32.xlu0 %v2779, 125
      %v2784 = vpop.permute.xlu0 %2783
      %2785 = vrot.lane.b32.xlu0 %v2780, 125
      %v2786 = vpop.permute.xlu0 %2785
      %v2789 = vadd.f32 %v2775, %v2784
      %v2790 = vadd.f32 %v2776, %v2786
      %s2791 = sld [smem:[#allocation6 + $0xc2]]
      %v2792 = vstv %s2791
      %v2793 = vmul.f32 %v2741, %v2792
      %v2794 = vmul.f32 %v2742, %v2792
      %2797 = vrot.lane.b32.xlu0 %v2793, 124
      %v2798 = vpop.permute.xlu0 %2797
      %2799 = vrot.lane.b32.xlu0 %v2794, 124
      %v2800 = vpop.permute.xlu0 %2799
      %v2803 = vadd.f32 %v2789, %v2798
      %v2804 = vadd.f32 %v2790, %v2800
      %s2805 = sadd.s32 %s1815, 72
      %s2806 = scalar_lea.vmem [#allocation2], %s2805
      %v2807 = vld [vmem:[%s2806] sm:$0xff]
      %v2808 = vld [vmem:[%s2806 + $0x60] sm:$0xff]
      %s2809 = sld [smem:[#allocation6 + $0xc3]]
      %v2810 = vstv %s2809
      %v2811 = vmul.f32 %v2807, %v2810
      %v2812 = vmul.f32 %v2808, %v2810
      %v2813 = vadd.f32 %v2803, %v2811
      %v2814 = vadd.f32 %v2804, %v2812
      %s2815 = sld [smem:[#allocation6 + $0xc4]]
      %v2816 = vstv %s2815
      %v2817 = vmul.f32 %v2807, %v2816
      %v2818 = vmul.f32 %v2808, %v2816
      %2821 = vrot.lane.b32.xlu0 %v2817, 127
      %v2822 = vpop.permute.xlu0 %2821
      %2823 = vrot.lane.b32.xlu0 %v2818, 127
      %v2824 = vpop.permute.xlu0 %2823
      %v2827 = vadd.f32 %v2813, %v2822
      %v2828 = vadd.f32 %v2814, %v2824
      %s2829 = sld [smem:[#allocation6 + $0xc5]]
      %v2830 = vstv %s2829
      %v2831 = vmul.f32 %v2807, %v2830
      %v2832 = vmul.f32 %v2808, %v2830
      %2835 = vrot.lane.b32.xlu0 %v2831, 126
      %v2836 = vpop.permute.xlu0 %2835
      %2837 = vrot.lane.b32.xlu0 %v2832, 126
      %v2838 = vpop.permute.xlu0 %2837
      %v2841 = vadd.f32 %v2827, %v2836
      %v2842 = vadd.f32 %v2828, %v2838
      %s2843 = sld [smem:[#allocation6 + $0xc6]]
      %v2844 = vstv %s2843
      %v2845 = vmul.f32 %v2807, %v2844
      %v2846 = vmul.f32 %v2808, %v2844
      %2849 = vrot.lane.b32.xlu0 %v2845, 125
      %v2850 = vpop.permute.xlu0 %2849
      %2851 = vrot.lane.b32.xlu0 %v2846, 125
      %v2852 = vpop.permute.xlu0 %2851
      %v2855 = vadd.f32 %v2841, %v2850
      %v2856 = vadd.f32 %v2842, %v2852
      %s2857 = sld [smem:[#allocation6 + $0xc7]]
      %v2858 = vstv %s2857
      %v2859 = vmul.f32 %v2807, %v2858
      %v2860 = vmul.f32 %v2808, %v2858
      %2863 = vrot.lane.b32.xlu0 %v2859, 124
      %v2864 = vpop.permute.xlu0 %2863
      %2865 = vrot.lane.b32.xlu0 %v2860, 124
      %v2866 = vpop.permute.xlu0 %2865
      %v2869 = vadd.f32 %v2855, %v2864
      %v2870 = vadd.f32 %v2856, %v2866
      %s2871 = scalar_lea.vmem %s5, %s1881
      %2872 = vst.msk [vmem:[%s2871] sm:$0xff] %vm1425, %v2869
      %2873 = vst.msk [vmem:[%s2871 + $0x60] sm:$0xff] %vm1425, %v2870
    $region53: #{tpu_custom_call.1} parent=1 // loop_footer
      %s1546 = sadd.s32 1, %s1542
    $region54: #{tpu_custom_call.1} parent=1 // loop_footer_branch
      %1541 = sbr.rel target = $region50
    $region55: #{tpu_custom_call.1} parent=1 // loop_exit
      _
    %s2874 = scalar_lea.vmem %s5, 24
    %v2875 = vld [vmem:[%s2874] sm:$0xff]
    %v2876 = vld [vmem:[%s2874 + $0x8] sm:$0xff]
    %v2877 = vld [vmem:[%s2874 + $0x10] sm:$0xf]
    %v2878 = vld [vmem:[%s2874 + $0x60] sm:$0xff]
    %v2879 = vld [vmem:[%s2874 + $0x68] sm:$0xff]
    %v2880 = vld [vmem:[%s2874 + $0x70] sm:$0xf]
    %v2881 = vsel %vm1425, %v2875, 0.0
    %v2882 = vsel %vm1425, %v2876, 0.0
    %v2883 = vadd.f32 %v2881, %v2882
    %v2884 = vsel %vm1429, %v2877, 0.0
    %v2885 = vadd.f32 %v2883, %v2884
    %v2886 = vsel %vm1425, %v2878, 0.0
    %v2887 = vadd.f32 %v2885, %v2886
    %v2888 = vsel %vm1425, %v2879, 0.0
    %v2889 = vadd.f32 %v2887, %v2888
    %v2890 = vsel %vm1429, %v2880, 0.0
    %v2891 = vadd.f32 %v2889, %v2890
    %2892 = vadd.xlane.f32.xlu0 %v2891
    %v2893 = vpop.xlane.xlu0 %2892
    %v2894 = vrot.slane %v2893, 4
    %v2895 = vadd.f32 %v2893, %v2894
    %v2896 = vrot.slane %v2895, 2
    %v2897 = vadd.f32 %v2895, %v2896
    %v2898 = vrot.slane %v2897, 1
    %v2899 = vadd.f32 %v2897, %v2898
    %s2900 = vtos %v2899
    %v2901 = vrcp.pop 800.0
    %v2902 = vmul.f32 800.0, %v2901
    %v2903 = vsub.f32 1.0, %v2902
    %v2904 = vmul.f32 %v2901, %v2903
    %v2905 = vadd.f32 %v2901, %v2904
    %vm2906 = vweird.f32 %v2901
    %v2907 = vsel %vm2906, %v2901, %v2905
    %s2908 = vtos %v2907
    %s2909 = smul.f32 %s2900, %s2908
    %v2910 = vstv %s2909
    %v2911 = vsub.f32 %v2875, %v2910
    %v2912 = vsub.f32 %v2876, %v2910
    %v2913 = vsub.f32 %v2877, %v2910
    %v2914 = vsub.f32 %v2878, %v2910
    %v2915 = vsub.f32 %v2879, %v2910
    %v2916 = vsub.f32 %v2880, %v2910
    %v2917 = vmul.f32 %v2911, %v2911
    %v2918 = vmul.f32 %v2912, %v2912
    %v2919 = vmul.f32 %v2913, %v2913
    %v2920 = vmul.f32 %v2914, %v2914
    %v2921 = vmul.f32 %v2915, %v2915
    %v2922 = vmul.f32 %v2916, %v2916
    %v2923 = vsel %vm1425, %v2917, 0.0
    %v2924 = vsel %vm1425, %v2918, 0.0
    %v2925 = vadd.f32 %v2923, %v2924
    %v2926 = vsel %vm1429, %v2919, 0.0
    %v2927 = vadd.f32 %v2925, %v2926
    %v2928 = vsel %vm1425, %v2920, 0.0
    %v2929 = vadd.f32 %v2927, %v2928
    %v2930 = vsel %vm1425, %v2921, 0.0
    %v2931 = vadd.f32 %v2929, %v2930
    %v2932 = vsel %vm1429, %v2922, 0.0
    %v2933 = vadd.f32 %v2931, %v2932
    %2934 = vadd.xlane.f32.xlu0 %v2933
    %v2935 = vpop.xlane.xlu0 %2934
    %v2936 = vrot.slane %v2935, 4
    %v2937 = vadd.f32 %v2935, %v2936
    %v2938 = vrot.slane %v2937, 2
    %v2939 = vadd.f32 %v2937, %v2938
    %v2940 = vrot.slane %v2939, 1
    %v2941 = vadd.f32 %v2939, %v2940
    %s2942 = vtos %v2941
    %v2943 = vrcp.pop 800.0
    %v2944 = vmul.f32 800.0, %v2943
    %v2945 = vsub.f32 1.0, %v2944
    %v2946 = vmul.f32 %v2943, %v2945
    %v2947 = vadd.f32 %v2943, %v2946
    %vm2948 = vweird.f32 %v2943
    %v2949 = vsel %vm2948, %v2943, %v2947
    %s2950 = vtos %v2949
    %s2951 = smul.f32 %s2942, %s2950
    %s2952 = sld [smem:[#allocation8 + $0x1]]
    %s2953 = sadd.f32 %s2951, 1e-05
    %v2954 = vstv %s2953
    %v2955 = vrsqrt.pop %v2954
    %v2956 = vmul.f32 %v2955, %v2954
    %v2957 = vmul.f32 %v2956, %v2955
    %v2958 = vmul.f32 0.5, %v2957
    %v2959 = vsub.f32 1.5, %v2958
    %v2960 = vmul.f32 %v2955, %v2959
    %vm2961 = vweird.f32 %v2954
    %vm2962 = vweird.f32 %v2955
    %vm2963 = vmor %vm2961, %vm2962
    %v2964 = vsel %vm2963, %v2955, %v2960
    %s2965 = vtos %v2964
    %s2966 = smul.f32 %s2952, %s2965
    %v2967 = vstv %s2966
    %v2968 = vmul.f32 %v2911, %v2967
    %v2969 = vmul.f32 %v2912, %v2967
    %v2970 = vmul.f32 %v2913, %v2967
    %v2971 = vmul.f32 %v2914, %v2967
    %v2972 = vmul.f32 %v2915, %v2967
    %v2973 = vmul.f32 %v2916, %v2967
    %s2974 = sld [smem:[#allocation10 + $0x1]]
    %v2975 = vstv %s2974
    %v2976 = vadd.f32 %v2968, %v2975
    %v2977 = vadd.f32 %v2969, %v2975
    %v2978 = vadd.f32 %v2970, %v2975
    %v2979 = vadd.f32 %v2971, %v2975
    %v2980 = vadd.f32 %v2972, %v2975
    %v2981 = vadd.f32 %v2973, %v2975
    %v2982 = vmax.f32 %v2976, 0.0
    %v2983 = vmax.f32 %v2977, 0.0
    %v2984 = vmax.f32 %v2978, 0.0
    %v2985 = vmax.f32 %v2979, 0.0
    %v2986 = vmax.f32 %v2980, 0.0
    %v2987 = vmax.f32 %v2981, 0.0
    %2988 = vst.msk [vmem:[%s2874] sm:$0xff] %vm1425, %v2982
    %2989 = vst.msk [vmem:[%s2874 + $0x8] sm:$0xff] %vm1425, %v2983
    %2990 = vst.msk [vmem:[%s2874 + $0x10] sm:$0xf] %vm1429, %v2984
    %2991 = vst.msk [vmem:[%s2874 + $0x60] sm:$0xff] %vm1425, %v2985
    %2992 = vst.msk [vmem:[%s2874 + $0x68] sm:$0xff] %vm1425, %v2986
    %2993 = vst.msk [vmem:[%s2874 + $0x70] sm:$0xf] %vm1429, %v2987
    %s2994 = sld [smem:[#allocation7 + $0x2]]
    loop: start=0, step=1, limit=3
    $region56: #{tpu_custom_call.1} parent=1 // loop_pre_header
      _
    $region57: #{tpu_custom_call.1} parent=1 // loop_header
      %s2996 = sphi 0, %s3000
      %p2997 = scmp.ge.s32.totalorder %s2996, 3
    $region58: #{tpu_custom_call.1} parent=1 // loop_header_branch
      %2999 = sbr.rel (%p2997) target = $region62
    $region59: #{tpu_custom_call.1} parent=1 // loop_body
      %s3001 = smul.u32 %s2996, 8
      %p3002 = scmp.lt.s32.totalorder %s3001, 12
      %s3003 = scalar_select %p3002, %s3001, 12
      %v3004 = vstv %s2994
      %v3005 = vadd.f32 %v3004, 0.0
      %s3006 = scalar_lea.vmem [#allocation2], %s3003
      %v3007 = vld [vmem:[%s3006] sm:$0xff]
      %v3008 = vld [vmem:[%s3006 + $0x60] sm:$0xff]
      %s3009 = sld [smem:[#allocation6 + $0xc8]]
      %v3010 = vstv %s3009
      %v3011 = vmul.f32 %v3007, %v3010
      %v3012 = vmul.f32 %v3008, %v3010
      %v3013 = vadd.f32 %v3005, %v3011
      %v3014 = vadd.f32 %v3005, %v3012
      %s3015 = sld [smem:[#allocation6 + $0xc9]]
      %v3016 = vstv %s3015
      %v3017 = vmul.f32 %v3007, %v3016
      %v3018 = vmul.f32 %v3008, %v3016
      %3021 = vrot.lane.b32.xlu0 %v3017, 127
      %v3022 = vpop.permute.xlu0 %3021
      %3023 = vrot.lane.b32.xlu0 %v3018, 127
      %v3024 = vpop.permute.xlu0 %3023
      %v3027 = vadd.f32 %v3013, %v3022
      %v3028 = vadd.f32 %v3014, %v3024
      %s3029 = sld [smem:[#allocation6 + $0xca]]
      %v3030 = vstv %s3029
      %v3031 = vmul.f32 %v3007, %v3030
      %v3032 = vmul.f32 %v3008, %v3030
      %3035 = vrot.lane.b32.xlu0 %v3031, 126
      %v3036 = vpop.permute.xlu0 %3035
      %3037 = vrot.lane.b32.xlu0 %v3032, 126
      %v3038 = vpop.permute.xlu0 %3037
      %v3041 = vadd.f32 %v3027, %v3036
      %v3042 = vadd.f32 %v3028, %v3038
      %s3043 = sld [smem:[#allocation6 + $0xcb]]
      %v3044 = vstv %s3043
      %v3045 = vmul.f32 %v3007, %v3044
      %v3046 = vmul.f32 %v3008, %v3044
      %3049 = vrot.lane.b32.xlu0 %v3045, 125
      %v3050 = vpop.permute.xlu0 %3049
      %3051 = vrot.lane.b32.xlu0 %v3046, 125
      %v3052 = vpop.permute.xlu0 %3051
      %v3055 = vadd.f32 %v3041, %v3050
      %v3056 = vadd.f32 %v3042, %v3052
      %s3057 = sld [smem:[#allocation6 + $0xcc]]
      %v3058 = vstv %s3057
      %v3059 = vmul.f32 %v3007, %v3058
      %v3060 = vmul.f32 %v3008, %v3058
      %3063 = vrot.lane.b32.xlu0 %v3059, 124
      %v3064 = vpop.permute.xlu0 %3063
      %3065 = vrot.lane.b32.xlu0 %v3060, 124
      %v3066 = vpop.permute.xlu0 %3065
      %v3069 = vadd.f32 %v3055, %v3064
      %v3070 = vadd.f32 %v3056, %v3066
      %s3071 = sadd.s32 %s3003, 1
      %s3072 = scalar_lea.vmem [#allocation2], %s3071
      %v3073 = vld [vmem:[%s3072] sm:$0xff]
      %v3074 = vld [vmem:[%s3072 + $0x60] sm:$0xff]
      %s3075 = sld [smem:[#allocation6 + $0xcd]]
      %v3076 = vstv %s3075
      %v3077 = vmul.f32 %v3073, %v3076
      %v3078 = vmul.f32 %v3074, %v3076
      %v3079 = vadd.f32 %v3069, %v3077
      %v3080 = vadd.f32 %v3070, %v3078
      %s3081 = sld [smem:[#allocation6 + $0xce]]
      %v3082 = vstv %s3081
      %v3083 = vmul.f32 %v3073, %v3082
      %v3084 = vmul.f32 %v3074, %v3082
      %3087 = vrot.lane.b32.xlu0 %v3083, 127
      %v3088 = vpop.permute.xlu0 %3087
      %3089 = vrot.lane.b32.xlu0 %v3084, 127
      %v3090 = vpop.permute.xlu0 %3089
      %v3093 = vadd.f32 %v3079, %v3088
      %v3094 = vadd.f32 %v3080, %v3090
      %s3095 = sld [smem:[#allocation6 + $0xcf]]
      %v3096 = vstv %s3095
      %v3097 = vmul.f32 %v3073, %v3096
      %v3098 = vmul.f32 %v3074, %v3096
      %3101 = vrot.lane.b32.xlu0 %v3097, 126
      %v3102 = vpop.permute.xlu0 %3101
      %3103 = vrot.lane.b32.xlu0 %v3098, 126
      %v3104 = vpop.permute.xlu0 %3103
      %v3107 = vadd.f32 %v3093, %v3102
      %v3108 = vadd.f32 %v3094, %v3104
      %s3109 = sld [smem:[#allocation6 + $0xd0]]
      %v3110 = vstv %s3109
      %v3111 = vmul.f32 %v3073, %v3110
      %v3112 = vmul.f32 %v3074, %v3110
      %3115 = vrot.lane.b32.xlu0 %v3111, 125
      %v3116 = vpop.permute.xlu0 %3115
      %3117 = vrot.lane.b32.xlu0 %v3112, 125
      %v3118 = vpop.permute.xlu0 %3117
      %v3121 = vadd.f32 %v3107, %v3116
      %v3122 = vadd.f32 %v3108, %v3118
      %s3123 = sld [smem:[#allocation6 + $0xd1]]
      %v3124 = vstv %s3123
      %v3125 = vmul.f32 %v3073, %v3124
      %v3126 = vmul.f32 %v3074, %v3124
      %3129 = vrot.lane.b32.xlu0 %v3125, 124
      %v3130 = vpop.permute.xlu0 %3129
      %3131 = vrot.lane.b32.xlu0 %v3126, 124
      %v3132 = vpop.permute.xlu0 %3131
      %v3135 = vadd.f32 %v3121, %v3130
      %v3136 = vadd.f32 %v3122, %v3132
      %s3137 = sadd.s32 %s3003, 2
      %s3138 = scalar_lea.vmem [#allocation2], %s3137
      %v3139 = vld [vmem:[%s3138] sm:$0xff]
      %v3140 = vld [vmem:[%s3138 + $0x60] sm:$0xff]
      %s3141 = sld [smem:[#allocation6 + $0xd2]]
      %v3142 = vstv %s3141
      %v3143 = vmul.f32 %v3139, %v3142
      %v3144 = vmul.f32 %v3140, %v3142
      %v3145 = vadd.f32 %v3135, %v3143
      %v3146 = vadd.f32 %v3136, %v3144
      %s3147 = sld [smem:[#allocation6 + $0xd3]]
      %v3148 = vstv %s3147
      %v3149 = vmul.f32 %v3139, %v3148
      %v3150 = vmul.f32 %v3140, %v3148
      %3153 = vrot.lane.b32.xlu0 %v3149, 127
      %v3154 = vpop.permute.xlu0 %3153
      %3155 = vrot.lane.b32.xlu0 %v3150, 127
      %v3156 = vpop.permute.xlu0 %3155
      %v3159 = vadd.f32 %v3145, %v3154
      %v3160 = vadd.f32 %v3146, %v3156
      %s3161 = sld [smem:[#allocation6 + $0xd4]]
      %v3162 = vstv %s3161
      %v3163 = vmul.f32 %v3139, %v3162
      %v3164 = vmul.f32 %v3140, %v3162
      %3167 = vrot.lane.b32.xlu0 %v3163, 126
      %v3168 = vpop.permute.xlu0 %3167
      %3169 = vrot.lane.b32.xlu0 %v3164, 126
      %v3170 = vpop.permute.xlu0 %3169
      %v3173 = vadd.f32 %v3159, %v3168
      %v3174 = vadd.f32 %v3160, %v3170
      %s3175 = sld [smem:[#allocation6 + $0xd5]]
      %v3176 = vstv %s3175
      %v3177 = vmul.f32 %v3139, %v3176
      %v3178 = vmul.f32 %v3140, %v3176
      %3181 = vrot.lane.b32.xlu0 %v3177, 125
      %v3182 = vpop.permute.xlu0 %3181
      %3183 = vrot.lane.b32.xlu0 %v3178, 125
      %v3184 = vpop.permute.xlu0 %3183
      %v3187 = vadd.f32 %v3173, %v3182
      %v3188 = vadd.f32 %v3174, %v3184
      %s3189 = sld [smem:[#allocation6 + $0xd6]]
      %v3190 = vstv %s3189
      %v3191 = vmul.f32 %v3139, %v3190
      %v3192 = vmul.f32 %v3140, %v3190
      %3195 = vrot.lane.b32.xlu0 %v3191, 124
      %v3196 = vpop.permute.xlu0 %3195
      %3197 = vrot.lane.b32.xlu0 %v3192, 124
      %v3198 = vpop.permute.xlu0 %3197
      %v3201 = vadd.f32 %v3187, %v3196
      %v3202 = vadd.f32 %v3188, %v3198
      %s3203 = sadd.s32 %s3003, 3
      %s3204 = scalar_lea.vmem [#allocation2], %s3203
      %v3205 = vld [vmem:[%s3204] sm:$0xff]
      %v3206 = vld [vmem:[%s3204 + $0x60] sm:$0xff]
      %s3207 = sld [smem:[#allocation6 + $0xd7]]
      %v3208 = vstv %s3207
      %v3209 = vmul.f32 %v3205, %v3208
      %v3210 = vmul.f32 %v3206, %v3208
      %v3211 = vadd.f32 %v3201, %v3209
      %v3212 = vadd.f32 %v3202, %v3210
      %s3213 = sld [smem:[#allocation6 + $0xd8]]
      %v3214 = vstv %s3213
      %v3215 = vmul.f32 %v3205, %v3214
      %v3216 = vmul.f32 %v3206, %v3214
      %3219 = vrot.lane.b32.xlu0 %v3215, 127
      %v3220 = vpop.permute.xlu0 %3219
      %3221 = vrot.lane.b32.xlu0 %v3216, 127
      %v3222 = vpop.permute.xlu0 %3221
      %v3225 = vadd.f32 %v3211, %v3220
      %v3226 = vadd.f32 %v3212, %v3222
      %s3227 = sld [smem:[#allocation6 + $0xd9]]
      %v3228 = vstv %s3227
      %v3229 = vmul.f32 %v3205, %v3228
      %v3230 = vmul.f32 %v3206, %v3228
      %3233 = vrot.lane.b32.xlu0 %v3229, 126
      %v3234 = vpop.permute.xlu0 %3233
      %3235 = vrot.lane.b32.xlu0 %v3230, 126
      %v3236 = vpop.permute.xlu0 %3235
      %v3239 = vadd.f32 %v3225, %v3234
      %v3240 = vadd.f32 %v3226, %v3236
      %s3241 = sld [smem:[#allocation6 + $0xda]]
      %v3242 = vstv %s3241
      %v3243 = vmul.f32 %v3205, %v3242
      %v3244 = vmul.f32 %v3206, %v3242
      %3247 = vrot.lane.b32.xlu0 %v3243, 125
      %v3248 = vpop.permute.xlu0 %3247
      %3249 = vrot.lane.b32.xlu0 %v3244, 125
      %v3250 = vpop.permute.xlu0 %3249
      %v3253 = vadd.f32 %v3239, %v3248
      %v3254 = vadd.f32 %v3240, %v3250
      %s3255 = sld [smem:[#allocation6 + $0xdb]]
      %v3256 = vstv %s3255
      %v3257 = vmul.f32 %v3205, %v3256
      %v3258 = vmul.f32 %v3206, %v3256
      %3261 = vrot.lane.b32.xlu0 %v3257, 124
      %v3262 = vpop.permute.xlu0 %3261
      %3263 = vrot.lane.b32.xlu0 %v3258, 124
      %v3264 = vpop.permute.xlu0 %3263
      %v3267 = vadd.f32 %v3253, %v3262
      %v3268 = vadd.f32 %v3254, %v3264
      %s3269 = sadd.s32 %s3003, 4
      %s3270 = scalar_lea.vmem [#allocation2], %s3269
      %v3271 = vld [vmem:[%s3270] sm:$0xff]
      %v3272 = vld [vmem:[%s3270 + $0x60] sm:$0xff]
      %s3273 = sld [smem:[#allocation6 + $0xdc]]
      %v3274 = vstv %s3273
      %v3275 = vmul.f32 %v3271, %v3274
      %v3276 = vmul.f32 %v3272, %v3274
      %v3277 = vadd.f32 %v3267, %v3275
      %v3278 = vadd.f32 %v3268, %v3276
      %s3279 = sld [smem:[#allocation6 + $0xdd]]
      %v3280 = vstv %s3279
      %v3281 = vmul.f32 %v3271, %v3280
      %v3282 = vmul.f32 %v3272, %v3280
      %3285 = vrot.lane.b32.xlu0 %v3281, 127
      %v3286 = vpop.permute.xlu0 %3285
      %3287 = vrot.lane.b32.xlu0 %v3282, 127
      %v3288 = vpop.permute.xlu0 %3287
      %v3291 = vadd.f32 %v3277, %v3286
      %v3292 = vadd.f32 %v3278, %v3288
      %s3293 = sld [smem:[#allocation6 + $0xde]]
      %v3294 = vstv %s3293
      %v3295 = vmul.f32 %v3271, %v3294
      %v3296 = vmul.f32 %v3272, %v3294
      %3299 = vrot.lane.b32.xlu0 %v3295, 126
      %v3300 = vpop.permute.xlu0 %3299
      %3301 = vrot.lane.b32.xlu0 %v3296, 126
      %v3302 = vpop.permute.xlu0 %3301
      %v3305 = vadd.f32 %v3291, %v3300
      %v3306 = vadd.f32 %v3292, %v3302
      %s3307 = sld [smem:[#allocation6 + $0xdf]]
      %v3308 = vstv %s3307
      %v3309 = vmul.f32 %v3271, %v3308
      %v3310 = vmul.f32 %v3272, %v3308
      %3313 = vrot.lane.b32.xlu0 %v3309, 125
      %v3314 = vpop.permute.xlu0 %3313
      %3315 = vrot.lane.b32.xlu0 %v3310, 125
      %v3316 = vpop.permute.xlu0 %3315
      %v3319 = vadd.f32 %v3305, %v3314
      %v3320 = vadd.f32 %v3306, %v3316
      %s3321 = sld [smem:[#allocation6 + $0xe0]]
      %v3322 = vstv %s3321
      %v3323 = vmul.f32 %v3271, %v3322
      %v3324 = vmul.f32 %v3272, %v3322
      %3327 = vrot.lane.b32.xlu0 %v3323, 124
      %v3328 = vpop.permute.xlu0 %3327
      %3329 = vrot.lane.b32.xlu0 %v3324, 124
      %v3330 = vpop.permute.xlu0 %3329
      %v3333 = vadd.f32 %v3319, %v3328
      %v3334 = vadd.f32 %v3320, %v3330
      %s3335 = sadd.s32 %s3003, 24
      %s3336 = scalar_lea.vmem [#allocation2], %s3335
      %v3337 = vld [vmem:[%s3336] sm:$0xff]
      %v3338 = vld [vmem:[%s3336 + $0x60] sm:$0xff]
      %s3339 = sld [smem:[#allocation6 + $0xe1]]
      %v3340 = vstv %s3339
      %v3341 = vmul.f32 %v3337, %v3340
      %v3342 = vmul.f32 %v3338, %v3340
      %v3343 = vadd.f32 %v3333, %v3341
      %v3344 = vadd.f32 %v3334, %v3342
      %s3345 = sld [smem:[#allocation6 + $0xe2]]
      %v3346 = vstv %s3345
      %v3347 = vmul.f32 %v3337, %v3346
      %v3348 = vmul.f32 %v3338, %v3346
      %3351 = vrot.lane.b32.xlu0 %v3347, 127
      %v3352 = vpop.permute.xlu0 %3351
      %3353 = vrot.lane.b32.xlu0 %v3348, 127
      %v3354 = vpop.permute.xlu0 %3353
      %v3357 = vadd.f32 %v3343, %v3352
      %v3358 = vadd.f32 %v3344, %v3354
      %s3359 = sld [smem:[#allocation6 + $0xe3]]
      %v3360 = vstv %s3359
      %v3361 = vmul.f32 %v3337, %v3360
      %v3362 = vmul.f32 %v3338, %v3360
      %3365 = vrot.lane.b32.xlu0 %v3361, 126
      %v3366 = vpop.permute.xlu0 %3365
      %3367 = vrot.lane.b32.xlu0 %v3362, 126
      %v3368 = vpop.permute.xlu0 %3367
      %v3371 = vadd.f32 %v3357, %v3366
      %v3372 = vadd.f32 %v3358, %v3368
      %s3373 = sld [smem:[#allocation6 + $0xe4]]
      %v3374 = vstv %s3373
      %v3375 = vmul.f32 %v3337, %v3374
      %v3376 = vmul.f32 %v3338, %v3374
      %3379 = vrot.lane.b32.xlu0 %v3375, 125
      %v3380 = vpop.permute.xlu0 %3379
      %3381 = vrot.lane.b32.xlu0 %v3376, 125
      %v3382 = vpop.permute.xlu0 %3381
      %v3385 = vadd.f32 %v3371, %v3380
      %v3386 = vadd.f32 %v3372, %v3382
      %s3387 = sld [smem:[#allocation6 + $0xe5]]
      %v3388 = vstv %s3387
      %v3389 = vmul.f32 %v3337, %v3388
      %v3390 = vmul.f32 %v3338, %v3388
      %3393 = vrot.lane.b32.xlu0 %v3389, 124
      %v3394 = vpop.permute.xlu0 %3393
      %3395 = vrot.lane.b32.xlu0 %v3390, 124
      %v3396 = vpop.permute.xlu0 %3395
      %v3399 = vadd.f32 %v3385, %v3394
      %v3400 = vadd.f32 %v3386, %v3396
      %s3401 = sadd.s32 %s3071, 24
      %s3402 = scalar_lea.vmem [#allocation2], %s3401
      %v3403 = vld [vmem:[%s3402] sm:$0xff]
      %v3404 = vld [vmem:[%s3402 + $0x60] sm:$0xff]
      %s3405 = sld [smem:[#allocation6 + $0xe6]]
      %v3406 = vstv %s3405
      %v3407 = vmul.f32 %v3403, %v3406
      %v3408 = vmul.f32 %v3404, %v3406
      %v3409 = vadd.f32 %v3399, %v3407
      %v3410 = vadd.f32 %v3400, %v3408
      %s3411 = sld [smem:[#allocation6 + $0xe7]]
      %v3412 = vstv %s3411
      %v3413 = vmul.f32 %v3403, %v3412
      %v3414 = vmul.f32 %v3404, %v3412
      %3417 = vrot.lane.b32.xlu0 %v3413, 127
      %v3418 = vpop.permute.xlu0 %3417
      %3419 = vrot.lane.b32.xlu0 %v3414, 127
      %v3420 = vpop.permute.xlu0 %3419
      %v3423 = vadd.f32 %v3409, %v3418
      %v3424 = vadd.f32 %v3410, %v3420
      %s3425 = sld [smem:[#allocation6 + $0xe8]]
      %v3426 = vstv %s3425
      %v3427 = vmul.f32 %v3403, %v3426
      %v3428 = vmul.f32 %v3404, %v3426
      %3431 = vrot.lane.b32.xlu0 %v3427, 126
      %v3432 = vpop.permute.xlu0 %3431
      %3433 = vrot.lane.b32.xlu0 %v3428, 126
      %v3434 = vpop.permute.xlu0 %3433
      %v3437 = vadd.f32 %v3423, %v3432
      %v3438 = vadd.f32 %v3424, %v3434
      %s3439 = sld [smem:[#allocation6 + $0xe9]]
      %v3440 = vstv %s3439
      %v3441 = vmul.f32 %v3403, %v3440
      %v3442 = vmul.f32 %v3404, %v3440
      %3445 = vrot.lane.b32.xlu0 %v3441, 125
      %v3446 = vpop.permute.xlu0 %3445
      %3447 = vrot.lane.b32.xlu0 %v3442, 125
      %v3448 = vpop.permute.xlu0 %3447
      %v3451 = vadd.f32 %v3437, %v3446
      %v3452 = vadd.f32 %v3438, %v3448
      %s3453 = sld [smem:[#allocation6 + $0xea]]
      %v3454 = vstv %s3453
      %v3455 = vmul.f32 %v3403, %v3454
      %v3456 = vmul.f32 %v3404, %v3454
      %3459 = vrot.lane.b32.xlu0 %v3455, 124
      %v3460 = vpop.permute.xlu0 %3459
      %3461 = vrot.lane.b32.xlu0 %v3456, 124
      %v3462 = vpop.permute.xlu0 %3461
      %v3465 = vadd.f32 %v3451, %v3460
      %v3466 = vadd.f32 %v3452, %v3462
      %s3467 = sadd.s32 %s3137, 24
      %s3468 = scalar_lea.vmem [#allocation2], %s3467
      %v3469 = vld [vmem:[%s3468] sm:$0xff]
      %v3470 = vld [vmem:[%s3468 + $0x60] sm:$0xff]
      %s3471 = sld [smem:[#allocation6 + $0xeb]]
      %v3472 = vstv %s3471
      %v3473 = vmul.f32 %v3469, %v3472
      %v3474 = vmul.f32 %v3470, %v3472
      %v3475 = vadd.f32 %v3465, %v3473
      %v3476 = vadd.f32 %v3466, %v3474
      %s3477 = sld [smem:[#allocation6 + $0xec]]
      %v3478 = vstv %s3477
      %v3479 = vmul.f32 %v3469, %v3478
      %v3480 = vmul.f32 %v3470, %v3478
      %3483 = vrot.lane.b32.xlu0 %v3479, 127
      %v3484 = vpop.permute.xlu0 %3483
      %3485 = vrot.lane.b32.xlu0 %v3480, 127
      %v3486 = vpop.permute.xlu0 %3485
      %v3489 = vadd.f32 %v3475, %v3484
      %v3490 = vadd.f32 %v3476, %v3486
      %s3491 = sld [smem:[#allocation6 + $0xed]]
      %v3492 = vstv %s3491
      %v3493 = vmul.f32 %v3469, %v3492
      %v3494 = vmul.f32 %v3470, %v3492
      %3497 = vrot.lane.b32.xlu0 %v3493, 126
      %v3498 = vpop.permute.xlu0 %3497
      %3499 = vrot.lane.b32.xlu0 %v3494, 126
      %v3500 = vpop.permute.xlu0 %3499
      %v3503 = vadd.f32 %v3489, %v3498
      %v3504 = vadd.f32 %v3490, %v3500
      %s3505 = sld [smem:[#allocation6 + $0xee]]
      %v3506 = vstv %s3505
      %v3507 = vmul.f32 %v3469, %v3506
      %v3508 = vmul.f32 %v3470, %v3506
      %3511 = vrot.lane.b32.xlu0 %v3507, 125
      %v3512 = vpop.permute.xlu0 %3511
      %3513 = vrot.lane.b32.xlu0 %v3508, 125
      %v3514 = vpop.permute.xlu0 %3513
      %v3517 = vadd.f32 %v3503, %v3512
      %v3518 = vadd.f32 %v3504, %v3514
      %s3519 = sld [smem:[#allocation6 + $0xef]]
      %v3520 = vstv %s3519
      %v3521 = vmul.f32 %v3469, %v3520
      %v3522 = vmul.f32 %v3470, %v3520
      %3525 = vrot.lane.b32.xlu0 %v3521, 124
      %v3526 = vpop.permute.xlu0 %3525
      %3527 = vrot.lane.b32.xlu0 %v3522, 124
      %v3528 = vpop.permute.xlu0 %3527
      %v3531 = vadd.f32 %v3517, %v3526
      %v3532 = vadd.f32 %v3518, %v3528
      %s3533 = sadd.s32 %s3203, 24
      %s3534 = scalar_lea.vmem [#allocation2], %s3533
      %v3535 = vld [vmem:[%s3534] sm:$0xff]
      %v3536 = vld [vmem:[%s3534 + $0x60] sm:$0xff]
      %s3537 = sld [smem:[#allocation6 + $0xf0]]
      %v3538 = vstv %s3537
      %v3539 = vmul.f32 %v3535, %v3538
      %v3540 = vmul.f32 %v3536, %v3538
      %v3541 = vadd.f32 %v3531, %v3539
      %v3542 = vadd.f32 %v3532, %v3540
      %s3543 = sld [smem:[#allocation6 + $0xf1]]
      %v3544 = vstv %s3543
      %v3545 = vmul.f32 %v3535, %v3544
      %v3546 = vmul.f32 %v3536, %v3544
      %3549 = vrot.lane.b32.xlu0 %v3545, 127
      %v3550 = vpop.permute.xlu0 %3549
      %3551 = vrot.lane.b32.xlu0 %v3546, 127
      %v3552 = vpop.permute.xlu0 %3551
      %v3555 = vadd.f32 %v3541, %v3550
      %v3556 = vadd.f32 %v3542, %v3552
      %s3557 = sld [smem:[#allocation6 + $0xf2]]
      %v3558 = vstv %s3557
      %v3559 = vmul.f32 %v3535, %v3558
      %v3560 = vmul.f32 %v3536, %v3558
      %3563 = vrot.lane.b32.xlu0 %v3559, 126
      %v3564 = vpop.permute.xlu0 %3563
      %3565 = vrot.lane.b32.xlu0 %v3560, 126
      %v3566 = vpop.permute.xlu0 %3565
      %v3569 = vadd.f32 %v3555, %v3564
      %v3570 = vadd.f32 %v3556, %v3566
      %s3571 = sld [smem:[#allocation6 + $0xf3]]
      %v3572 = vstv %s3571
      %v3573 = vmul.f32 %v3535, %v3572
      %v3574 = vmul.f32 %v3536, %v3572
      %3577 = vrot.lane.b32.xlu0 %v3573, 125
      %v3578 = vpop.permute.xlu0 %3577
      %3579 = vrot.lane.b32.xlu0 %v3574, 125
      %v3580 = vpop.permute.xlu0 %3579
      %v3583 = vadd.f32 %v3569, %v3578
      %v3584 = vadd.f32 %v3570, %v3580
      %s3585 = sld [smem:[#allocation6 + $0xf4]]
      %v3586 = vstv %s3585
      %v3587 = vmul.f32 %v3535, %v3586
      %v3588 = vmul.f32 %v3536, %v3586
      %3591 = vrot.lane.b32.xlu0 %v3587, 124
      %v3592 = vpop.permute.xlu0 %3591
      %3593 = vrot.lane.b32.xlu0 %v3588, 124
      %v3594 = vpop.permute.xlu0 %3593
      %v3597 = vadd.f32 %v3583, %v3592
      %v3598 = vadd.f32 %v3584, %v3594
      %s3599 = sadd.s32 %s3269, 24
      %s3600 = scalar_lea.vmem [#allocation2], %s3599
      %v3601 = vld [vmem:[%s3600] sm:$0xff]
      %v3602 = vld [vmem:[%s3600 + $0x60] sm:$0xff]
      %s3603 = sld [smem:[#allocation6 + $0xf5]]
      %v3604 = vstv %s3603
      %v3605 = vmul.f32 %v3601, %v3604
      %v3606 = vmul.f32 %v3602, %v3604
      %v3607 = vadd.f32 %v3597, %v3605
      %v3608 = vadd.f32 %v3598, %v3606
      %s3609 = sld [smem:[#allocation6 + $0xf6]]
      %v3610 = vstv %s3609
      %v3611 = vmul.f32 %v3601, %v3610
      %v3612 = vmul.f32 %v3602, %v3610
      %3615 = vrot.lane.b32.xlu0 %v3611, 127
      %v3616 = vpop.permute.xlu0 %3615
      %3617 = vrot.lane.b32.xlu0 %v3612, 127
      %v3618 = vpop.permute.xlu0 %3617
      %v3621 = vadd.f32 %v3607, %v3616
      %v3622 = vadd.f32 %v3608, %v3618
      %s3623 = sld [smem:[#allocation6 + $0xf7]]
      %v3624 = vstv %s3623
      %v3625 = vmul.f32 %v3601, %v3624
      %v3626 = vmul.f32 %v3602, %v3624
      %3629 = vrot.lane.b32.xlu0 %v3625, 126
      %v3630 = vpop.permute.xlu0 %3629
      %3631 = vrot.lane.b32.xlu0 %v3626, 126
      %v3632 = vpop.permute.xlu0 %3631
      %v3635 = vadd.f32 %v3621, %v3630
      %v3636 = vadd.f32 %v3622, %v3632
      %s3637 = sld [smem:[#allocation6 + $0xf8]]
      %v3638 = vstv %s3637
      %v3639 = vmul.f32 %v3601, %v3638
      %v3640 = vmul.f32 %v3602, %v3638
      %3643 = vrot.lane.b32.xlu0 %v3639, 125
      %v3644 = vpop.permute.xlu0 %3643
      %3645 = vrot.lane.b32.xlu0 %v3640, 125
      %v3646 = vpop.permute.xlu0 %3645
      %v3649 = vadd.f32 %v3635, %v3644
      %v3650 = vadd.f32 %v3636, %v3646
      %s3651 = sld [smem:[#allocation6 + $0xf9]]
      %v3652 = vstv %s3651
      %v3653 = vmul.f32 %v3601, %v3652
      %v3654 = vmul.f32 %v3602, %v3652
      %3657 = vrot.lane.b32.xlu0 %v3653, 124
      %v3658 = vpop.permute.xlu0 %3657
      %3659 = vrot.lane.b32.xlu0 %v3654, 124
      %v3660 = vpop.permute.xlu0 %3659
      %v3663 = vadd.f32 %v3649, %v3658
      %v3664 = vadd.f32 %v3650, %v3660
      %s3665 = sadd.s32 %s3003, 48
      %s3666 = scalar_lea.vmem [#allocation2], %s3665
      %v3667 = vld [vmem:[%s3666] sm:$0xff]
      %v3668 = vld [vmem:[%s3666 + $0x60] sm:$0xff]
      %s3669 = sld [smem:[#allocation6 + $0xfa]]
      %v3670 = vstv %s3669
      %v3671 = vmul.f32 %v3667, %v3670
      %v3672 = vmul.f32 %v3668, %v3670
      %v3673 = vadd.f32 %v3663, %v3671
      %v3674 = vadd.f32 %v3664, %v3672
      %s3675 = sld [smem:[#allocation6 + $0xfb]]
      %v3676 = vstv %s3675
      %v3677 = vmul.f32 %v3667, %v3676
      %v3678 = vmul.f32 %v3668, %v3676
      %3681 = vrot.lane.b32.xlu0 %v3677, 127
      %v3682 = vpop.permute.xlu0 %3681
      %3683 = vrot.lane.b32.xlu0 %v3678, 127
      %v3684 = vpop.permute.xlu0 %3683
      %v3687 = vadd.f32 %v3673, %v3682
      %v3688 = vadd.f32 %v3674, %v3684
      %s3689 = sld [smem:[#allocation6 + $0xfc]]
      %v3690 = vstv %s3689
      %v3691 = vmul.f32 %v3667, %v3690
      %v3692 = vmul.f32 %v3668, %v3690
      %3695 = vrot.lane.b32.xlu0 %v3691, 126
      %v3696 = vpop.permute.xlu0 %3695
      %3697 = vrot.lane.b32.xlu0 %v3692, 126
      %v3698 = vpop.permute.xlu0 %3697
      %v3701 = vadd.f32 %v3687, %v3696
      %v3702 = vadd.f32 %v3688, %v3698
      %s3703 = sld [smem:[#allocation6 + $0xfd]]
      %v3704 = vstv %s3703
      %v3705 = vmul.f32 %v3667, %v3704
      %v3706 = vmul.f32 %v3668, %v3704
      %3709 = vrot.lane.b32.xlu0 %v3705, 125
      %v3710 = vpop.permute.xlu0 %3709
      %3711 = vrot.lane.b32.xlu0 %v3706, 125
      %v3712 = vpop.permute.xlu0 %3711
      %v3715 = vadd.f32 %v3701, %v3710
      %v3716 = vadd.f32 %v3702, %v3712
      %s3717 = sld [smem:[#allocation6 + $0xfe]]
      %v3718 = vstv %s3717
      %v3719 = vmul.f32 %v3667, %v3718
      %v3720 = vmul.f32 %v3668, %v3718
      %3723 = vrot.lane.b32.xlu0 %v3719, 124
      %v3724 = vpop.permute.xlu0 %3723
      %3725 = vrot.lane.b32.xlu0 %v3720, 124
      %v3726 = vpop.permute.xlu0 %3725
      %v3729 = vadd.f32 %v3715, %v3724
      %v3730 = vadd.f32 %v3716, %v3726
      %s3731 = sadd.s32 %s3071, 48
      %s3732 = scalar_lea.vmem [#allocation2], %s3731
      %v3733 = vld [vmem:[%s3732] sm:$0xff]
      %v3734 = vld [vmem:[%s3732 + $0x60] sm:$0xff]
      %s3735 = sld [smem:[#allocation6 + $0xff]]
      %v3736 = vstv %s3735
      %v3737 = vmul.f32 %v3733, %v3736
      %v3738 = vmul.f32 %v3734, %v3736
      %v3739 = vadd.f32 %v3729, %v3737
      %v3740 = vadd.f32 %v3730, %v3738
      %s3741 = sld [smem:[#allocation6 + $0x100]]
      %v3742 = vstv %s3741
      %v3743 = vmul.f32 %v3733, %v3742
      %v3744 = vmul.f32 %v3734, %v3742
      %3747 = vrot.lane.b32.xlu0 %v3743, 127
      %v3748 = vpop.permute.xlu0 %3747
      %3749 = vrot.lane.b32.xlu0 %v3744, 127
      %v3750 = vpop.permute.xlu0 %3749
      %v3753 = vadd.f32 %v3739, %v3748
      %v3754 = vadd.f32 %v3740, %v3750
      %s3755 = sld [smem:[#allocation6 + $0x101]]
      %v3756 = vstv %s3755
      %v3757 = vmul.f32 %v3733, %v3756
      %v3758 = vmul.f32 %v3734, %v3756
      %3761 = vrot.lane.b32.xlu0 %v3757, 126
      %v3762 = vpop.permute.xlu0 %3761
      %3763 = vrot.lane.b32.xlu0 %v3758, 126
      %v3764 = vpop.permute.xlu0 %3763
      %v3767 = vadd.f32 %v3753, %v3762
      %v3768 = vadd.f32 %v3754, %v3764
      %s3769 = sld [smem:[#allocation6 + $0x102]]
      %v3770 = vstv %s3769
      %v3771 = vmul.f32 %v3733, %v3770
      %v3772 = vmul.f32 %v3734, %v3770
      %3775 = vrot.lane.b32.xlu0 %v3771, 125
      %v3776 = vpop.permute.xlu0 %3775
      %3777 = vrot.lane.b32.xlu0 %v3772, 125
      %v3778 = vpop.permute.xlu0 %3777
      %v3781 = vadd.f32 %v3767, %v3776
      %v3782 = vadd.f32 %v3768, %v3778
      %s3783 = sld [smem:[#allocation6 + $0x103]]
      %v3784 = vstv %s3783
      %v3785 = vmul.f32 %v3733, %v3784
      %v3786 = vmul.f32 %v3734, %v3784
      %3789 = vrot.lane.b32.xlu0 %v3785, 124
      %v3790 = vpop.permute.xlu0 %3789
      %3791 = vrot.lane.b32.xlu0 %v3786, 124
      %v3792 = vpop.permute.xlu0 %3791
      %v3795 = vadd.f32 %v3781, %v3790
      %v3796 = vadd.f32 %v3782, %v3792
      %s3797 = sadd.s32 %s3137, 48
      %s3798 = scalar_lea.vmem [#allocation2], %s3797
      %v3799 = vld [vmem:[%s3798] sm:$0xff]
      %v3800 = vld [vmem:[%s3798 + $0x60] sm:$0xff]
      %s3801 = sld [smem:[#allocation6 + $0x104]]
      %v3802 = vstv %s3801
      %v3803 = vmul.f32 %v3799, %v3802
      %v3804 = vmul.f32 %v3800, %v3802
      %v3805 = vadd.f32 %v3795, %v3803
      %v3806 = vadd.f32 %v3796, %v3804
      %s3807 = sld [smem:[#allocation6 + $0x105]]
      %v3808 = vstv %s3807
      %v3809 = vmul.f32 %v3799, %v3808
      %v3810 = vmul.f32 %v3800, %v3808
      %3813 = vrot.lane.b32.xlu0 %v3809, 127
      %v3814 = vpop.permute.xlu0 %3813
      %3815 = vrot.lane.b32.xlu0 %v3810, 127
      %v3816 = vpop.permute.xlu0 %3815
      %v3819 = vadd.f32 %v3805, %v3814
      %v3820 = vadd.f32 %v3806, %v3816
      %s3821 = sld [smem:[#allocation6 + $0x106]]
      %v3822 = vstv %s3821
      %v3823 = vmul.f32 %v3799, %v3822
      %v3824 = vmul.f32 %v3800, %v3822
      %3827 = vrot.lane.b32.xlu0 %v3823, 126
      %v3828 = vpop.permute.xlu0 %3827
      %3829 = vrot.lane.b32.xlu0 %v3824, 126
      %v3830 = vpop.permute.xlu0 %3829
      %v3833 = vadd.f32 %v3819, %v3828
      %v3834 = vadd.f32 %v3820, %v3830
      %s3835 = sld [smem:[#allocation6 + $0x107]]
      %v3836 = vstv %s3835
      %v3837 = vmul.f32 %v3799, %v3836
      %v3838 = vmul.f32 %v3800, %v3836
      %3841 = vrot.lane.b32.xlu0 %v3837, 125
      %v3842 = vpop.permute.xlu0 %3841
      %3843 = vrot.lane.b32.xlu0 %v3838, 125
      %v3844 = vpop.permute.xlu0 %3843
      %v3847 = vadd.f32 %v3833, %v3842
      %v3848 = vadd.f32 %v3834, %v3844
      %s3849 = sld [smem:[#allocation6 + $0x108]]
      %v3850 = vstv %s3849
      %v3851 = vmul.f32 %v3799, %v3850
      %v3852 = vmul.f32 %v3800, %v3850
      %3855 = vrot.lane.b32.xlu0 %v3851, 124
      %v3856 = vpop.permute.xlu0 %3855
      %3857 = vrot.lane.b32.xlu0 %v3852, 124
      %v3858 = vpop.permute.xlu0 %3857
      %v3861 = vadd.f32 %v3847, %v3856
      %v3862 = vadd.f32 %v3848, %v3858
      %s3863 = sadd.s32 %s3203, 48
      %s3864 = scalar_lea.vmem [#allocation2], %s3863
      %v3865 = vld [vmem:[%s3864] sm:$0xff]
      %v3866 = vld [vmem:[%s3864 + $0x60] sm:$0xff]
      %s3867 = sld [smem:[#allocation6 + $0x109]]
      %v3868 = vstv %s3867
      %v3869 = vmul.f32 %v3865, %v3868
      %v3870 = vmul.f32 %v3866, %v3868
      %v3871 = vadd.f32 %v3861, %v3869
      %v3872 = vadd.f32 %v3862, %v3870
      %s3873 = sld [smem:[#allocation6 + $0x10a]]
      %v3874 = vstv %s3873
      %v3875 = vmul.f32 %v3865, %v3874
      %v3876 = vmul.f32 %v3866, %v3874
      %3879 = vrot.lane.b32.xlu0 %v3875, 127
      %v3880 = vpop.permute.xlu0 %3879
      %3881 = vrot.lane.b32.xlu0 %v3876, 127
      %v3882 = vpop.permute.xlu0 %3881
      %v3885 = vadd.f32 %v3871, %v3880
      %v3886 = vadd.f32 %v3872, %v3882
      %s3887 = sld [smem:[#allocation6 + $0x10b]]
      %v3888 = vstv %s3887
      %v3889 = vmul.f32 %v3865, %v3888
      %v3890 = vmul.f32 %v3866, %v3888
      %3893 = vrot.lane.b32.xlu0 %v3889, 126
      %v3894 = vpop.permute.xlu0 %3893
      %3895 = vrot.lane.b32.xlu0 %v3890, 126
      %v3896 = vpop.permute.xlu0 %3895
      %v3899 = vadd.f32 %v3885, %v3894
      %v3900 = vadd.f32 %v3886, %v3896
      %s3901 = sld [smem:[#allocation6 + $0x10c]]
      %v3902 = vstv %s3901
      %v3903 = vmul.f32 %v3865, %v3902
      %v3904 = vmul.f32 %v3866, %v3902
      %3907 = vrot.lane.b32.xlu0 %v3903, 125
      %v3908 = vpop.permute.xlu0 %3907
      %3909 = vrot.lane.b32.xlu0 %v3904, 125
      %v3910 = vpop.permute.xlu0 %3909
      %v3913 = vadd.f32 %v3899, %v3908
      %v3914 = vadd.f32 %v3900, %v3910
      %s3915 = sld [smem:[#allocation6 + $0x10d]]
      %v3916 = vstv %s3915
      %v3917 = vmul.f32 %v3865, %v3916
      %v3918 = vmul.f32 %v3866, %v3916
      %3921 = vrot.lane.b32.xlu0 %v3917, 124
      %v3922 = vpop.permute.xlu0 %3921
      %3923 = vrot.lane.b32.xlu0 %v3918, 124
      %v3924 = vpop.permute.xlu0 %3923
      %v3927 = vadd.f32 %v3913, %v3922
      %v3928 = vadd.f32 %v3914, %v3924
      %s3929 = sadd.s32 %s3269, 48
      %s3930 = scalar_lea.vmem [#allocation2], %s3929
      %v3931 = vld [vmem:[%s3930] sm:$0xff]
      %v3932 = vld [vmem:[%s3930 + $0x60] sm:$0xff]
      %s3933 = sld [smem:[#allocation6 + $0x10e]]
      %v3934 = vstv %s3933
      %v3935 = vmul.f32 %v3931, %v3934
      %v3936 = vmul.f32 %v3932, %v3934
      %v3937 = vadd.f32 %v3927, %v3935
      %v3938 = vadd.f32 %v3928, %v3936
      %s3939 = sld [smem:[#allocation6 + $0x10f]]
      %v3940 = vstv %s3939
      %v3941 = vmul.f32 %v3931, %v3940
      %v3942 = vmul.f32 %v3932, %v3940
      %3945 = vrot.lane.b32.xlu0 %v3941, 127
      %v3946 = vpop.permute.xlu0 %3945
      %3947 = vrot.lane.b32.xlu0 %v3942, 127
      %v3948 = vpop.permute.xlu0 %3947
      %v3951 = vadd.f32 %v3937, %v3946
      %v3952 = vadd.f32 %v3938, %v3948
      %s3953 = sld [smem:[#allocation6 + $0x110]]
      %v3954 = vstv %s3953
      %v3955 = vmul.f32 %v3931, %v3954
      %v3956 = vmul.f32 %v3932, %v3954
      %3959 = vrot.lane.b32.xlu0 %v3955, 126
      %v3960 = vpop.permute.xlu0 %3959
      %3961 = vrot.lane.b32.xlu0 %v3956, 126
      %v3962 = vpop.permute.xlu0 %3961
      %v3965 = vadd.f32 %v3951, %v3960
      %v3966 = vadd.f32 %v3952, %v3962
      %s3967 = sld [smem:[#allocation6 + $0x111]]
      %v3968 = vstv %s3967
      %v3969 = vmul.f32 %v3931, %v3968
      %v3970 = vmul.f32 %v3932, %v3968
      %3973 = vrot.lane.b32.xlu0 %v3969, 125
      %v3974 = vpop.permute.xlu0 %3973
      %3975 = vrot.lane.b32.xlu0 %v3970, 125
      %v3976 = vpop.permute.xlu0 %3975
      %v3979 = vadd.f32 %v3965, %v3974
      %v3980 = vadd.f32 %v3966, %v3976
      %s3981 = sld [smem:[#allocation6 + $0x112]]
      %v3982 = vstv %s3981
      %v3983 = vmul.f32 %v3931, %v3982
      %v3984 = vmul.f32 %v3932, %v3982
      %3987 = vrot.lane.b32.xlu0 %v3983, 124
      %v3988 = vpop.permute.xlu0 %3987
      %3989 = vrot.lane.b32.xlu0 %v3984, 124
      %v3990 = vpop.permute.xlu0 %3989
      %v3993 = vadd.f32 %v3979, %v3988
      %v3994 = vadd.f32 %v3980, %v3990
      %s3995 = sadd.s32 %s3003, 72
      %s3996 = scalar_lea.vmem [#allocation2], %s3995
      %v3997 = vld [vmem:[%s3996] sm:$0xff]
      %v3998 = vld [vmem:[%s3996 + $0x60] sm:$0xff]
      %s3999 = sld [smem:[#allocation6 + $0x113]]
      %v4000 = vstv %s3999
      %v4001 = vmul.f32 %v3997, %v4000
      %v4002 = vmul.f32 %v3998, %v4000
      %v4003 = vadd.f32 %v3993, %v4001
      %v4004 = vadd.f32 %v3994, %v4002
      %s4005 = sld [smem:[#allocation6 + $0x114]]
      %v4006 = vstv %s4005
      %v4007 = vmul.f32 %v3997, %v4006
      %v4008 = vmul.f32 %v3998, %v4006
      %4011 = vrot.lane.b32.xlu0 %v4007, 127
      %v4012 = vpop.permute.xlu0 %4011
      %4013 = vrot.lane.b32.xlu0 %v4008, 127
      %v4014 = vpop.permute.xlu0 %4013
      %v4017 = vadd.f32 %v4003, %v4012
      %v4018 = vadd.f32 %v4004, %v4014
      %s4019 = sld [smem:[#allocation6 + $0x115]]
      %v4020 = vstv %s4019
      %v4021 = vmul.f32 %v3997, %v4020
      %v4022 = vmul.f32 %v3998, %v4020
      %4025 = vrot.lane.b32.xlu0 %v4021, 126
      %v4026 = vpop.permute.xlu0 %4025
      %4027 = vrot.lane.b32.xlu0 %v4022, 126
      %v4028 = vpop.permute.xlu0 %4027
      %v4031 = vadd.f32 %v4017, %v4026
      %v4032 = vadd.f32 %v4018, %v4028
      %s4033 = sld [smem:[#allocation6 + $0x116]]
      %v4034 = vstv %s4033
      %v4035 = vmul.f32 %v3997, %v4034
      %v4036 = vmul.f32 %v3998, %v4034
      %4039 = vrot.lane.b32.xlu0 %v4035, 125
      %v4040 = vpop.permute.xlu0 %4039
      %4041 = vrot.lane.b32.xlu0 %v4036, 125
      %v4042 = vpop.permute.xlu0 %4041
      %v4045 = vadd.f32 %v4031, %v4040
      %v4046 = vadd.f32 %v4032, %v4042
      %s4047 = sld [smem:[#allocation6 + $0x117]]
      %v4048 = vstv %s4047
      %v4049 = vmul.f32 %v3997, %v4048
      %v4050 = vmul.f32 %v3998, %v4048
      %4053 = vrot.lane.b32.xlu0 %v4049, 124
      %v4054 = vpop.permute.xlu0 %4053
      %4055 = vrot.lane.b32.xlu0 %v4050, 124
      %v4056 = vpop.permute.xlu0 %4055
      %v4059 = vadd.f32 %v4045, %v4054
      %v4060 = vadd.f32 %v4046, %v4056
      %s4061 = sadd.s32 %s3071, 72
      %s4062 = scalar_lea.vmem [#allocation2], %s4061
      %v4063 = vld [vmem:[%s4062] sm:$0xff]
      %v4064 = vld [vmem:[%s4062 + $0x60] sm:$0xff]
      %s4065 = sld [smem:[#allocation6 + $0x118]]
      %v4066 = vstv %s4065
      %v4067 = vmul.f32 %v4063, %v4066
      %v4068 = vmul.f32 %v4064, %v4066
      %v4069 = vadd.f32 %v4059, %v4067
      %v4070 = vadd.f32 %v4060, %v4068
      %s4071 = sld [smem:[#allocation6 + $0x119]]
      %v4072 = vstv %s4071
      %v4073 = vmul.f32 %v4063, %v4072
      %v4074 = vmul.f32 %v4064, %v4072
      %4077 = vrot.lane.b32.xlu0 %v4073, 127
      %v4078 = vpop.permute.xlu0 %4077
      %4079 = vrot.lane.b32.xlu0 %v4074, 127
      %v4080 = vpop.permute.xlu0 %4079
      %v4083 = vadd.f32 %v4069, %v4078
      %v4084 = vadd.f32 %v4070, %v4080
      %s4085 = sld [smem:[#allocation6 + $0x11a]]
      %v4086 = vstv %s4085
      %v4087 = vmul.f32 %v4063, %v4086
      %v4088 = vmul.f32 %v4064, %v4086
      %4091 = vrot.lane.b32.xlu0 %v4087, 126
      %v4092 = vpop.permute.xlu0 %4091
      %4093 = vrot.lane.b32.xlu0 %v4088, 126
      %v4094 = vpop.permute.xlu0 %4093
      %v4097 = vadd.f32 %v4083, %v4092
      %v4098 = vadd.f32 %v4084, %v4094
      %s4099 = sld [smem:[#allocation6 + $0x11b]]
      %v4100 = vstv %s4099
      %v4101 = vmul.f32 %v4063, %v4100
      %v4102 = vmul.f32 %v4064, %v4100
      %4105 = vrot.lane.b32.xlu0 %v4101, 125
      %v4106 = vpop.permute.xlu0 %4105
      %4107 = vrot.lane.b32.xlu0 %v4102, 125
      %v4108 = vpop.permute.xlu0 %4107
      %v4111 = vadd.f32 %v4097, %v4106
      %v4112 = vadd.f32 %v4098, %v4108
      %s4113 = sld [smem:[#allocation6 + $0x11c]]
      %v4114 = vstv %s4113
      %v4115 = vmul.f32 %v4063, %v4114
      %v4116 = vmul.f32 %v4064, %v4114
      %4119 = vrot.lane.b32.xlu0 %v4115, 124
      %v4120 = vpop.permute.xlu0 %4119
      %4121 = vrot.lane.b32.xlu0 %v4116, 124
      %v4122 = vpop.permute.xlu0 %4121
      %v4125 = vadd.f32 %v4111, %v4120
      %v4126 = vadd.f32 %v4112, %v4122
      %s4127 = sadd.s32 %s3137, 72
      %s4128 = scalar_lea.vmem [#allocation2], %s4127
      %v4129 = vld [vmem:[%s4128] sm:$0xff]
      %v4130 = vld [vmem:[%s4128 + $0x60] sm:$0xff]
      %s4131 = sld [smem:[#allocation6 + $0x11d]]
      %v4132 = vstv %s4131
      %v4133 = vmul.f32 %v4129, %v4132
      %v4134 = vmul.f32 %v4130, %v4132
      %v4135 = vadd.f32 %v4125, %v4133
      %v4136 = vadd.f32 %v4126, %v4134
      %s4137 = sld [smem:[#allocation6 + $0x11e]]
      %v4138 = vstv %s4137
      %v4139 = vmul.f32 %v4129, %v4138
      %v4140 = vmul.f32 %v4130, %v4138
      %4143 = vrot.lane.b32.xlu0 %v4139, 127
      %v4144 = vpop.permute.xlu0 %4143
      %4145 = vrot.lane.b32.xlu0 %v4140, 127
      %v4146 = vpop.permute.xlu0 %4145
      %v4149 = vadd.f32 %v4135, %v4144
      %v4150 = vadd.f32 %v4136, %v4146
      %s4151 = sld [smem:[#allocation6 + $0x11f]]
      %v4152 = vstv %s4151
      %v4153 = vmul.f32 %v4129, %v4152
      %v4154 = vmul.f32 %v4130, %v4152
      %4157 = vrot.lane.b32.xlu0 %v4153, 126
      %v4158 = vpop.permute.xlu0 %4157
      %4159 = vrot.lane.b32.xlu0 %v4154, 126
      %v4160 = vpop.permute.xlu0 %4159
      %v4163 = vadd.f32 %v4149, %v4158
      %v4164 = vadd.f32 %v4150, %v4160
      %s4165 = sld [smem:[#allocation6 + $0x120]]
      %v4166 = vstv %s4165
      %v4167 = vmul.f32 %v4129, %v4166
      %v4168 = vmul.f32 %v4130, %v4166
      %4171 = vrot.lane.b32.xlu0 %v4167, 125
      %v4172 = vpop.permute.xlu0 %4171
      %4173 = vrot.lane.b32.xlu0 %v4168, 125
      %v4174 = vpop.permute.xlu0 %4173
      %v4177 = vadd.f32 %v4163, %v4172
      %v4178 = vadd.f32 %v4164, %v4174
      %s4179 = sld [smem:[#allocation6 + $0x121]]
      %v4180 = vstv %s4179
      %v4181 = vmul.f32 %v4129, %v4180
      %v4182 = vmul.f32 %v4130, %v4180
      %4185 = vrot.lane.b32.xlu0 %v4181, 124
      %v4186 = vpop.permute.xlu0 %4185
      %4187 = vrot.lane.b32.xlu0 %v4182, 124
      %v4188 = vpop.permute.xlu0 %4187
      %v4191 = vadd.f32 %v4177, %v4186
      %v4192 = vadd.f32 %v4178, %v4188
      %s4193 = sadd.s32 %s3203, 72
      %s4194 = scalar_lea.vmem [#allocation2], %s4193
      %v4195 = vld [vmem:[%s4194] sm:$0xff]
      %v4196 = vld [vmem:[%s4194 + $0x60] sm:$0xff]
      %s4197 = sld [smem:[#allocation6 + $0x122]]
      %v4198 = vstv %s4197
      %v4199 = vmul.f32 %v4195, %v4198
      %v4200 = vmul.f32 %v4196, %v4198
      %v4201 = vadd.f32 %v4191, %v4199
      %v4202 = vadd.f32 %v4192, %v4200
      %s4203 = sld [smem:[#allocation6 + $0x123]]
      %v4204 = vstv %s4203
      %v4205 = vmul.f32 %v4195, %v4204
      %v4206 = vmul.f32 %v4196, %v4204
      %4209 = vrot.lane.b32.xlu0 %v4205, 127
      %v4210 = vpop.permute.xlu0 %4209
      %4211 = vrot.lane.b32.xlu0 %v4206, 127
      %v4212 = vpop.permute.xlu0 %4211
      %v4215 = vadd.f32 %v4201, %v4210
      %v4216 = vadd.f32 %v4202, %v4212
      %s4217 = sld [smem:[#allocation6 + $0x124]]
      %v4218 = vstv %s4217
      %v4219 = vmul.f32 %v4195, %v4218
      %v4220 = vmul.f32 %v4196, %v4218
      %4223 = vrot.lane.b32.xlu0 %v4219, 126
      %v4224 = vpop.permute.xlu0 %4223
      %4225 = vrot.lane.b32.xlu0 %v4220, 126
      %v4226 = vpop.permute.xlu0 %4225
      %v4229 = vadd.f32 %v4215, %v4224
      %v4230 = vadd.f32 %v4216, %v4226
      %s4231 = sld [smem:[#allocation6 + $0x125]]
      %v4232 = vstv %s4231
      %v4233 = vmul.f32 %v4195, %v4232
      %v4234 = vmul.f32 %v4196, %v4232
      %4237 = vrot.lane.b32.xlu0 %v4233, 125
      %v4238 = vpop.permute.xlu0 %4237
      %4239 = vrot.lane.b32.xlu0 %v4234, 125
      %v4240 = vpop.permute.xlu0 %4239
      %v4243 = vadd.f32 %v4229, %v4238
      %v4244 = vadd.f32 %v4230, %v4240
      %s4245 = sld [smem:[#allocation6 + $0x126]]
      %v4246 = vstv %s4245
      %v4247 = vmul.f32 %v4195, %v4246
      %v4248 = vmul.f32 %v4196, %v4246
      %4251 = vrot.lane.b32.xlu0 %v4247, 124
      %v4252 = vpop.permute.xlu0 %4251
      %4253 = vrot.lane.b32.xlu0 %v4248, 124
      %v4254 = vpop.permute.xlu0 %4253
      %v4257 = vadd.f32 %v4243, %v4252
      %v4258 = vadd.f32 %v4244, %v4254
      %s4259 = sadd.s32 %s3269, 72
      %s4260 = scalar_lea.vmem [#allocation2], %s4259
      %v4261 = vld [vmem:[%s4260] sm:$0xff]
      %v4262 = vld [vmem:[%s4260 + $0x60] sm:$0xff]
      %s4263 = sld [smem:[#allocation6 + $0x127]]
      %v4264 = vstv %s4263
      %v4265 = vmul.f32 %v4261, %v4264
      %v4266 = vmul.f32 %v4262, %v4264
      %v4267 = vadd.f32 %v4257, %v4265
      %v4268 = vadd.f32 %v4258, %v4266
      %s4269 = sld [smem:[#allocation6 + $0x128]]
      %v4270 = vstv %s4269
      %v4271 = vmul.f32 %v4261, %v4270
      %v4272 = vmul.f32 %v4262, %v4270
      %4275 = vrot.lane.b32.xlu0 %v4271, 127
      %v4276 = vpop.permute.xlu0 %4275
      %4277 = vrot.lane.b32.xlu0 %v4272, 127
      %v4278 = vpop.permute.xlu0 %4277
      %v4281 = vadd.f32 %v4267, %v4276
      %v4282 = vadd.f32 %v4268, %v4278
      %s4283 = sld [smem:[#allocation6 + $0x129]]
      %v4284 = vstv %s4283
      %v4285 = vmul.f32 %v4261, %v4284
      %v4286 = vmul.f32 %v4262, %v4284
      %4289 = vrot.lane.b32.xlu0 %v4285, 126
      %v4290 = vpop.permute.xlu0 %4289
      %4291 = vrot.lane.b32.xlu0 %v4286, 126
      %v4292 = vpop.permute.xlu0 %4291
      %v4295 = vadd.f32 %v4281, %v4290
      %v4296 = vadd.f32 %v4282, %v4292
      %s4297 = sld [smem:[#allocation6 + $0x12a]]
      %v4298 = vstv %s4297
      %v4299 = vmul.f32 %v4261, %v4298
      %v4300 = vmul.f32 %v4262, %v4298
      %4303 = vrot.lane.b32.xlu0 %v4299, 125
      %v4304 = vpop.permute.xlu0 %4303
      %4305 = vrot.lane.b32.xlu0 %v4300, 125
      %v4306 = vpop.permute.xlu0 %4305
      %v4309 = vadd.f32 %v4295, %v4304
      %v4310 = vadd.f32 %v4296, %v4306
      %s4311 = sld [smem:[#allocation6 + $0x12b]]
      %v4312 = vstv %s4311
      %v4313 = vmul.f32 %v4261, %v4312
      %v4314 = vmul.f32 %v4262, %v4312
      %4317 = vrot.lane.b32.xlu0 %v4313, 124
      %v4318 = vpop.permute.xlu0 %4317
      %4319 = vrot.lane.b32.xlu0 %v4314, 124
      %v4320 = vpop.permute.xlu0 %4319
      %v4323 = vadd.f32 %v4309, %v4318
      %v4324 = vadd.f32 %v4310, %v4320
      %s4325 = scalar_lea.vmem %s5, %s3665
      %4326 = vst.msk [vmem:[%s4325] sm:$0xff] %vm1425, %v4323
      %4327 = vst.msk [vmem:[%s4325 + $0x60] sm:$0xff] %vm1425, %v4324
    $region60: #{tpu_custom_call.1} parent=1 // loop_footer
      %s3000 = sadd.s32 1, %s2996
    $region61: #{tpu_custom_call.1} parent=1 // loop_footer_branch
      %2995 = sbr.rel target = $region57
    $region62: #{tpu_custom_call.1} parent=1 // loop_exit
      _
    %s4328 = scalar_lea.vmem %s5, 48
    %v4329 = vld [vmem:[%s4328] sm:$0xff]
    %v4330 = vld [vmem:[%s4328 + $0x8] sm:$0xff]
    %v4331 = vld [vmem:[%s4328 + $0x10] sm:$0xf]
    %v4332 = vld [vmem:[%s4328 + $0x60] sm:$0xff]
    %v4333 = vld [vmem:[%s4328 + $0x68] sm:$0xff]
    %v4334 = vld [vmem:[%s4328 + $0x70] sm:$0xf]
    %v4335 = vsel %vm1425, %v4329, 0.0
    %v4336 = vsel %vm1425, %v4330, 0.0
    %v4337 = vadd.f32 %v4335, %v4336
    %v4338 = vsel %vm1429, %v4331, 0.0
    %v4339 = vadd.f32 %v4337, %v4338
    %v4340 = vsel %vm1425, %v4332, 0.0
    %v4341 = vadd.f32 %v4339, %v4340
    %v4342 = vsel %vm1425, %v4333, 0.0
    %v4343 = vadd.f32 %v4341, %v4342
    %v4344 = vsel %vm1429, %v4334, 0.0
    %v4345 = vadd.f32 %v4343, %v4344
    %4346 = vadd.xlane.f32.xlu0 %v4345
    %v4347 = vpop.xlane.xlu0 %4346
    %v4348 = vrot.slane %v4347, 4
    %v4349 = vadd.f32 %v4347, %v4348
    %v4350 = vrot.slane %v4349, 2
    %v4351 = vadd.f32 %v4349, %v4350
    %v4352 = vrot.slane %v4351, 1
    %v4353 = vadd.f32 %v4351, %v4352
    %s4354 = vtos %v4353
    %v4355 = vrcp.pop 800.0
    %v4356 = vmul.f32 800.0, %v4355
    %v4357 = vsub.f32 1.0, %v4356
    %v4358 = vmul.f32 %v4355, %v4357
    %v4359 = vadd.f32 %v4355, %v4358
    %vm4360 = vweird.f32 %v4355
    %v4361 = vsel %vm4360, %v4355, %v4359
    %s4362 = vtos %v4361
    %s4363 = smul.f32 %s4354, %s4362
    %v4364 = vstv %s4363
    %v4365 = vsub.f32 %v4329, %v4364
    %v4366 = vsub.f32 %v4330, %v4364
    %v4367 = vsub.f32 %v4331, %v4364
    %v4368 = vsub.f32 %v4332, %v4364
    %v4369 = vsub.f32 %v4333, %v4364
    %v4370 = vsub.f32 %v4334, %v4364
    %v4371 = vmul.f32 %v4365, %v4365
    %v4372 = vmul.f32 %v4366, %v4366
    %v4373 = vmul.f32 %v4367, %v4367
    %v4374 = vmul.f32 %v4368, %v4368
    %v4375 = vmul.f32 %v4369, %v4369
    %v4376 = vmul.f32 %v4370, %v4370
    %v4377 = vsel %vm1425, %v4371, 0.0
    %v4378 = vsel %vm1425, %v4372, 0.0
    %v4379 = vadd.f32 %v4377, %v4378
    %v4380 = vsel %vm1429, %v4373, 0.0
    %v4381 = vadd.f32 %v4379, %v4380
    %v4382 = vsel %vm1425, %v4374, 0.0
    %v4383 = vadd.f32 %v4381, %v4382
    %v4384 = vsel %vm1425, %v4375, 0.0
    %v4385 = vadd.f32 %v4383, %v4384
    %v4386 = vsel %vm1429, %v4376, 0.0
    %v4387 = vadd.f32 %v4385, %v4386
    %4388 = vadd.xlane.f32.xlu0 %v4387
    %v4389 = vpop.xlane.xlu0 %4388
    %v4390 = vrot.slane %v4389, 4
    %v4391 = vadd.f32 %v4389, %v4390
    %v4392 = vrot.slane %v4391, 2
    %v4393 = vadd.f32 %v4391, %v4392
    %v4394 = vrot.slane %v4393, 1
    %v4395 = vadd.f32 %v4393, %v4394
    %s4396 = vtos %v4395
    %v4397 = vrcp.pop 800.0
    %v4398 = vmul.f32 800.0, %v4397
    %v4399 = vsub.f32 1.0, %v4398
    %v4400 = vmul.f32 %v4397, %v4399
    %v4401 = vadd.f32 %v4397, %v4400
    %vm4402 = vweird.f32 %v4397
    %v4403 = vsel %vm4402, %v4397, %v4401
    %s4404 = vtos %v4403
    %s4405 = smul.f32 %s4396, %s4404
    %s4406 = sld [smem:[#allocation8 + $0x2]]
    %s4407 = sadd.f32 %s4405, 1e-05
    %v4408 = vstv %s4407
    %v4409 = vrsqrt.pop %v4408
    %v4410 = vmul.f32 %v4409, %v4408
    %v4411 = vmul.f32 %v4410, %v4409
    %v4412 = vmul.f32 0.5, %v4411
    %v4413 = vsub.f32 1.5, %v4412
    %v4414 = vmul.f32 %v4409, %v4413
    %vm4415 = vweird.f32 %v4408
    %vm4416 = vweird.f32 %v4409
    %vm4417 = vmor %vm4415, %vm4416
    %v4418 = vsel %vm4417, %v4409, %v4414
    %s4419 = vtos %v4418
    %s4420 = smul.f32 %s4406, %s4419
    %v4421 = vstv %s4420
    %v4422 = vmul.f32 %v4365, %v4421
    %v4423 = vmul.f32 %v4366, %v4421
    %v4424 = vmul.f32 %v4367, %v4421
    %v4425 = vmul.f32 %v4368, %v4421
    %v4426 = vmul.f32 %v4369, %v4421
    %v4427 = vmul.f32 %v4370, %v4421
    %s4428 = sld [smem:[#allocation10 + $0x2]]
    %v4429 = vstv %s4428
    %v4430 = vadd.f32 %v4422, %v4429
    %v4431 = vadd.f32 %v4423, %v4429
    %v4432 = vadd.f32 %v4424, %v4429
    %v4433 = vadd.f32 %v4425, %v4429
    %v4434 = vadd.f32 %v4426, %v4429
    %v4435 = vadd.f32 %v4427, %v4429
    %v4436 = vmax.f32 %v4430, 0.0
    %v4437 = vmax.f32 %v4431, 0.0
    %v4438 = vmax.f32 %v4432, 0.0
    %v4439 = vmax.f32 %v4433, 0.0
    %v4440 = vmax.f32 %v4434, 0.0
    %v4441 = vmax.f32 %v4435, 0.0
    %4442 = vst.msk [vmem:[%s4328] sm:$0xff] %vm1425, %v4436
    %4443 = vst.msk [vmem:[%s4328 + $0x8] sm:$0xff] %vm1425, %v4437
    %4444 = vst.msk [vmem:[%s4328 + $0x10] sm:$0xf] %vm1429, %v4438
    %4445 = vst.msk [vmem:[%s4328 + $0x60] sm:$0xff] %vm1425, %v4439
    %4446 = vst.msk [vmem:[%s4328 + $0x68] sm:$0xff] %vm1425, %v4440
    %4447 = vst.msk [vmem:[%s4328 + $0x70] sm:$0xf] %vm1429, %v4441
    %s4448 = sld [smem:[#allocation7 + $0x3]]
    loop: start=0, step=1, limit=3
    $region63: #{tpu_custom_call.1} parent=1 // loop_pre_header
      _
    $region64: #{tpu_custom_call.1} parent=1 // loop_header
      %s4450 = sphi 0, %s4454
      %p4451 = scmp.ge.s32.totalorder %s4450, 3
    $region65: #{tpu_custom_call.1} parent=1 // loop_header_branch
      %4453 = sbr.rel (%p4451) target = $region69
    $region66: #{tpu_custom_call.1} parent=1 // loop_body
      %s4455 = smul.u32 %s4450, 8
      %p4456 = scmp.lt.s32.totalorder %s4455, 12
      %s4457 = scalar_select %p4456, %s4455, 12
      %v4458 = vstv %s4448
      %v4459 = vadd.f32 %v4458, 0.0
      %s4460 = scalar_lea.vmem [#allocation2], %s4457
      %v4461 = vld [vmem:[%s4460] sm:$0xff]
      %v4462 = vld [vmem:[%s4460 + $0x60] sm:$0xff]
      %s4463 = sld [smem:[#allocation6 + $0x12c]]
      %v4464 = vstv %s4463
      %v4465 = vmul.f32 %v4461, %v4464
      %v4466 = vmul.f32 %v4462, %v4464
      %v4467 = vadd.f32 %v4459, %v4465
      %v4468 = vadd.f32 %v4459, %v4466
      %s4469 = sld [smem:[#allocation6 + $0x12d]]
      %v4470 = vstv %s4469
      %v4471 = vmul.f32 %v4461, %v4470
      %v4472 = vmul.f32 %v4462, %v4470
      %4475 = vrot.lane.b32.xlu0 %v4471, 127
      %v4476 = vpop.permute.xlu0 %4475
      %4477 = vrot.lane.b32.xlu0 %v4472, 127
      %v4478 = vpop.permute.xlu0 %4477
      %v4481 = vadd.f32 %v4467, %v4476
      %v4482 = vadd.f32 %v4468, %v4478
      %s4483 = sld [smem:[#allocation6 + $0x12e]]
      %v4484 = vstv %s4483
      %v4485 = vmul.f32 %v4461, %v4484
      %v4486 = vmul.f32 %v4462, %v4484
      %4489 = vrot.lane.b32.xlu0 %v4485, 126
      %v4490 = vpop.permute.xlu0 %4489
      %4491 = vrot.lane.b32.xlu0 %v4486, 126
      %v4492 = vpop.permute.xlu0 %4491
      %v4495 = vadd.f32 %v4481, %v4490
      %v4496 = vadd.f32 %v4482, %v4492
      %s4497 = sld [smem:[#allocation6 + $0x12f]]
      %v4498 = vstv %s4497
      %v4499 = vmul.f32 %v4461, %v4498
      %v4500 = vmul.f32 %v4462, %v4498
      %4503 = vrot.lane.b32.xlu0 %v4499, 125
      %v4504 = vpop.permute.xlu0 %4503
      %4505 = vrot.lane.b32.xlu0 %v4500, 125
      %v4506 = vpop.permute.xlu0 %4505
      %v4509 = vadd.f32 %v4495, %v4504
      %v4510 = vadd.f32 %v4496, %v4506
      %s4511 = sld [smem:[#allocation6 + $0x130]]
      %v4512 = vstv %s4511
      %v4513 = vmul.f32 %v4461, %v4512
      %v4514 = vmul.f32 %v4462, %v4512
      %4517 = vrot.lane.b32.xlu0 %v4513, 124
      %v4518 = vpop.permute.xlu0 %4517
      %4519 = vrot.lane.b32.xlu0 %v4514, 124
      %v4520 = vpop.permute.xlu0 %4519
      %v4523 = vadd.f32 %v4509, %v4518
      %v4524 = vadd.f32 %v4510, %v4520
      %s4525 = sadd.s32 %s4457, 1
      %s4526 = scalar_lea.vmem [#allocation2], %s4525
      %v4527 = vld [vmem:[%s4526] sm:$0xff]
      %v4528 = vld [vmem:[%s4526 + $0x60] sm:$0xff]
      %s4529 = sld [smem:[#allocation6 + $0x131]]
      %v4530 = vstv %s4529
      %v4531 = vmul.f32 %v4527, %v4530
      %v4532 = vmul.f32 %v4528, %v4530
      %v4533 = vadd.f32 %v4523, %v4531
      %v4534 = vadd.f32 %v4524, %v4532
      %s4535 = sld [smem:[#allocation6 + $0x132]]
      %v4536 = vstv %s4535
      %v4537 = vmul.f32 %v4527, %v4536
      %v4538 = vmul.f32 %v4528, %v4536
      %4541 = vrot.lane.b32.xlu0 %v4537, 127
      %v4542 = vpop.permute.xlu0 %4541
      %4543 = vrot.lane.b32.xlu0 %v4538, 127
      %v4544 = vpop.permute.xlu0 %4543
      %v4547 = vadd.f32 %v4533, %v4542
      %v4548 = vadd.f32 %v4534, %v4544
      %s4549 = sld [smem:[#allocation6 + $0x133]]
      %v4550 = vstv %s4549
      %v4551 = vmul.f32 %v4527, %v4550
      %v4552 = vmul.f32 %v4528, %v4550
      %4555 = vrot.lane.b32.xlu0 %v4551, 126
      %v4556 = vpop.permute.xlu0 %4555
      %4557 = vrot.lane.b32.xlu0 %v4552, 126
      %v4558 = vpop.permute.xlu0 %4557
      %v4561 = vadd.f32 %v4547, %v4556
      %v4562 = vadd.f32 %v4548, %v4558
      %s4563 = sld [smem:[#allocation6 + $0x134]]
      %v4564 = vstv %s4563
      %v4565 = vmul.f32 %v4527, %v4564
      %v4566 = vmul.f32 %v4528, %v4564
      %4569 = vrot.lane.b32.xlu0 %v4565, 125
      %v4570 = vpop.permute.xlu0 %4569
      %4571 = vrot.lane.b32.xlu0 %v4566, 125
      %v4572 = vpop.permute.xlu0 %4571
      %v4575 = vadd.f32 %v4561, %v4570
      %v4576 = vadd.f32 %v4562, %v4572
      %s4577 = sld [smem:[#allocation6 + $0x135]]
      %v4578 = vstv %s4577
      %v4579 = vmul.f32 %v4527, %v4578
      %v4580 = vmul.f32 %v4528, %v4578
      %4583 = vrot.lane.b32.xlu0 %v4579, 124
      %v4584 = vpop.permute.xlu0 %4583
      %4585 = vrot.lane.b32.xlu0 %v4580, 124
      %v4586 = vpop.permute.xlu0 %4585
      %v4589 = vadd.f32 %v4575, %v4584
      %v4590 = vadd.f32 %v4576, %v4586
      %s4591 = sadd.s32 %s4457, 2
      %s4592 = scalar_lea.vmem [#allocation2], %s4591
      %v4593 = vld [vmem:[%s4592] sm:$0xff]
      %v4594 = vld [vmem:[%s4592 + $0x60] sm:$0xff]
      %s4595 = sld [smem:[#allocation6 + $0x136]]
      %v4596 = vstv %s4595
      %v4597 = vmul.f32 %v4593, %v4596
      %v4598 = vmul.f32 %v4594, %v4596
      %v4599 = vadd.f32 %v4589, %v4597
      %v4600 = vadd.f32 %v4590, %v4598
      %s4601 = sld [smem:[#allocation6 + $0x137]]
      %v4602 = vstv %s4601
      %v4603 = vmul.f32 %v4593, %v4602
      %v4604 = vmul.f32 %v4594, %v4602
      %4607 = vrot.lane.b32.xlu0 %v4603, 127
      %v4608 = vpop.permute.xlu0 %4607
      %4609 = vrot.lane.b32.xlu0 %v4604, 127
      %v4610 = vpop.permute.xlu0 %4609
      %v4613 = vadd.f32 %v4599, %v4608
      %v4614 = vadd.f32 %v4600, %v4610
      %s4615 = sld [smem:[#allocation6 + $0x138]]
      %v4616 = vstv %s4615
      %v4617 = vmul.f32 %v4593, %v4616
      %v4618 = vmul.f32 %v4594, %v4616
      %4621 = vrot.lane.b32.xlu0 %v4617, 126
      %v4622 = vpop.permute.xlu0 %4621
      %4623 = vrot.lane.b32.xlu0 %v4618, 126
      %v4624 = vpop.permute.xlu0 %4623
      %v4627 = vadd.f32 %v4613, %v4622
      %v4628 = vadd.f32 %v4614, %v4624
      %s4629 = sld [smem:[#allocation6 + $0x139]]
      %v4630 = vstv %s4629
      %v4631 = vmul.f32 %v4593, %v4630
      %v4632 = vmul.f32 %v4594, %v4630
      %4635 = vrot.lane.b32.xlu0 %v4631, 125
      %v4636 = vpop.permute.xlu0 %4635
      %4637 = vrot.lane.b32.xlu0 %v4632, 125
      %v4638 = vpop.permute.xlu0 %4637
      %v4641 = vadd.f32 %v4627, %v4636
      %v4642 = vadd.f32 %v4628, %v4638
      %s4643 = sld [smem:[#allocation6 + $0x13a]]
      %v4644 = vstv %s4643
      %v4645 = vmul.f32 %v4593, %v4644
      %v4646 = vmul.f32 %v4594, %v4644
      %4649 = vrot.lane.b32.xlu0 %v4645, 124
      %v4650 = vpop.permute.xlu0 %4649
      %4651 = vrot.lane.b32.xlu0 %v4646, 124
      %v4652 = vpop.permute.xlu0 %4651
      %v4655 = vadd.f32 %v4641, %v4650
      %v4656 = vadd.f32 %v4642, %v4652
      %s4657 = sadd.s32 %s4457, 3
      %s4658 = scalar_lea.vmem [#allocation2], %s4657
      %v4659 = vld [vmem:[%s4658] sm:$0xff]
      %v4660 = vld [vmem:[%s4658 + $0x60] sm:$0xff]
      %s4661 = sld [smem:[#allocation6 + $0x13b]]
      %v4662 = vstv %s4661
      %v4663 = vmul.f32 %v4659, %v4662
      %v4664 = vmul.f32 %v4660, %v4662
      %v4665 = vadd.f32 %v4655, %v4663
      %v4666 = vadd.f32 %v4656, %v4664
      %s4667 = sld [smem:[#allocation6 + $0x13c]]
      %v4668 = vstv %s4667
      %v4669 = vmul.f32 %v4659, %v4668
      %v4670 = vmul.f32 %v4660, %v4668
      %4673 = vrot.lane.b32.xlu0 %v4669, 127
      %v4674 = vpop.permute.xlu0 %4673
      %4675 = vrot.lane.b32.xlu0 %v4670, 127
      %v4676 = vpop.permute.xlu0 %4675
      %v4679 = vadd.f32 %v4665, %v4674
      %v4680 = vadd.f32 %v4666, %v4676
      %s4681 = sld [smem:[#allocation6 + $0x13d]]
      %v4682 = vstv %s4681
      %v4683 = vmul.f32 %v4659, %v4682
      %v4684 = vmul.f32 %v4660, %v4682
      %4687 = vrot.lane.b32.xlu0 %v4683, 126
      %v4688 = vpop.permute.xlu0 %4687
      %4689 = vrot.lane.b32.xlu0 %v4684, 126
      %v4690 = vpop.permute.xlu0 %4689
      %v4693 = vadd.f32 %v4679, %v4688
      %v4694 = vadd.f32 %v4680, %v4690
      %s4695 = sld [smem:[#allocation6 + $0x13e]]
      %v4696 = vstv %s4695
      %v4697 = vmul.f32 %v4659, %v4696
      %v4698 = vmul.f32 %v4660, %v4696
      %4701 = vrot.lane.b32.xlu0 %v4697, 125
      %v4702 = vpop.permute.xlu0 %4701
      %4703 = vrot.lane.b32.xlu0 %v4698, 125
      %v4704 = vpop.permute.xlu0 %4703
      %v4707 = vadd.f32 %v4693, %v4702
      %v4708 = vadd.f32 %v4694, %v4704
      %s4709 = sld [smem:[#allocation6 + $0x13f]]
      %v4710 = vstv %s4709
      %v4711 = vmul.f32 %v4659, %v4710
      %v4712 = vmul.f32 %v4660, %v4710
      %4715 = vrot.lane.b32.xlu0 %v4711, 124
      %v4716 = vpop.permute.xlu0 %4715
      %4717 = vrot.lane.b32.xlu0 %v4712, 124
      %v4718 = vpop.permute.xlu0 %4717
      %v4721 = vadd.f32 %v4707, %v4716
      %v4722 = vadd.f32 %v4708, %v4718
      %s4723 = sadd.s32 %s4457, 4
      %s4724 = scalar_lea.vmem [#allocation2], %s4723
      %v4725 = vld [vmem:[%s4724] sm:$0xff]
      %v4726 = vld [vmem:[%s4724 + $0x60] sm:$0xff]
      %s4727 = sld [smem:[#allocation6 + $0x140]]
      %v4728 = vstv %s4727
      %v4729 = vmul.f32 %v4725, %v4728
      %v4730 = vmul.f32 %v4726, %v4728
      %v4731 = vadd.f32 %v4721, %v4729
      %v4732 = vadd.f32 %v4722, %v4730
      %s4733 = sld [smem:[#allocation6 + $0x141]]
      %v4734 = vstv %s4733
      %v4735 = vmul.f32 %v4725, %v4734
      %v4736 = vmul.f32 %v4726, %v4734
      %4739 = vrot.lane.b32.xlu0 %v4735, 127
      %v4740 = vpop.permute.xlu0 %4739
      %4741 = vrot.lane.b32.xlu0 %v4736, 127
      %v4742 = vpop.permute.xlu0 %4741
      %v4745 = vadd.f32 %v4731, %v4740
      %v4746 = vadd.f32 %v4732, %v4742
      %s4747 = sld [smem:[#allocation6 + $0x142]]
      %v4748 = vstv %s4747
      %v4749 = vmul.f32 %v4725, %v4748
      %v4750 = vmul.f32 %v4726, %v4748
      %4753 = vrot.lane.b32.xlu0 %v4749, 126
      %v4754 = vpop.permute.xlu0 %4753
      %4755 = vrot.lane.b32.xlu0 %v4750, 126
      %v4756 = vpop.permute.xlu0 %4755
      %v4759 = vadd.f32 %v4745, %v4754
      %v4760 = vadd.f32 %v4746, %v4756
      %s4761 = sld [smem:[#allocation6 + $0x143]]
      %v4762 = vstv %s4761
      %v4763 = vmul.f32 %v4725, %v4762
      %v4764 = vmul.f32 %v4726, %v4762
      %4767 = vrot.lane.b32.xlu0 %v4763, 125
      %v4768 = vpop.permute.xlu0 %4767
      %4769 = vrot.lane.b32.xlu0 %v4764, 125
      %v4770 = vpop.permute.xlu0 %4769
      %v4773 = vadd.f32 %v4759, %v4768
      %v4774 = vadd.f32 %v4760, %v4770
      %s4775 = sld [smem:[#allocation6 + $0x144]]
      %v4776 = vstv %s4775
      %v4777 = vmul.f32 %v4725, %v4776
      %v4778 = vmul.f32 %v4726, %v4776
      %4781 = vrot.lane.b32.xlu0 %v4777, 124
      %v4782 = vpop.permute.xlu0 %4781
      %4783 = vrot.lane.b32.xlu0 %v4778, 124
      %v4784 = vpop.permute.xlu0 %4783
      %v4787 = vadd.f32 %v4773, %v4782
      %v4788 = vadd.f32 %v4774, %v4784
      %s4789 = sadd.s32 %s4457, 24
      %s4790 = scalar_lea.vmem [#allocation2], %s4789
      %v4791 = vld [vmem:[%s4790] sm:$0xff]
      %v4792 = vld [vmem:[%s4790 + $0x60] sm:$0xff]
      %s4793 = sld [smem:[#allocation6 + $0x145]]
      %v4794 = vstv %s4793
      %v4795 = vmul.f32 %v4791, %v4794
      %v4796 = vmul.f32 %v4792, %v4794
      %v4797 = vadd.f32 %v4787, %v4795
      %v4798 = vadd.f32 %v4788, %v4796
      %s4799 = sld [smem:[#allocation6 + $0x146]]
      %v4800 = vstv %s4799
      %v4801 = vmul.f32 %v4791, %v4800
      %v4802 = vmul.f32 %v4792, %v4800
      %4805 = vrot.lane.b32.xlu0 %v4801, 127
      %v4806 = vpop.permute.xlu0 %4805
      %4807 = vrot.lane.b32.xlu0 %v4802, 127
      %v4808 = vpop.permute.xlu0 %4807
      %v4811 = vadd.f32 %v4797, %v4806
      %v4812 = vadd.f32 %v4798, %v4808
      %s4813 = sld [smem:[#allocation6 + $0x147]]
      %v4814 = vstv %s4813
      %v4815 = vmul.f32 %v4791, %v4814
      %v4816 = vmul.f32 %v4792, %v4814
      %4819 = vrot.lane.b32.xlu0 %v4815, 126
      %v4820 = vpop.permute.xlu0 %4819
      %4821 = vrot.lane.b32.xlu0 %v4816, 126
      %v4822 = vpop.permute.xlu0 %4821
      %v4825 = vadd.f32 %v4811, %v4820
      %v4826 = vadd.f32 %v4812, %v4822
      %s4827 = sld [smem:[#allocation6 + $0x148]]
      %v4828 = vstv %s4827
      %v4829 = vmul.f32 %v4791, %v4828
      %v4830 = vmul.f32 %v4792, %v4828
      %4833 = vrot.lane.b32.xlu0 %v4829, 125
      %v4834 = vpop.permute.xlu0 %4833
      %4835 = vrot.lane.b32.xlu0 %v4830, 125
      %v4836 = vpop.permute.xlu0 %4835
      %v4839 = vadd.f32 %v4825, %v4834
      %v4840 = vadd.f32 %v4826, %v4836
      %s4841 = sld [smem:[#allocation6 + $0x149]]
      %v4842 = vstv %s4841
      %v4843 = vmul.f32 %v4791, %v4842
      %v4844 = vmul.f32 %v4792, %v4842
      %4847 = vrot.lane.b32.xlu0 %v4843, 124
      %v4848 = vpop.permute.xlu0 %4847
      %4849 = vrot.lane.b32.xlu0 %v4844, 124
      %v4850 = vpop.permute.xlu0 %4849
      %v4853 = vadd.f32 %v4839, %v4848
      %v4854 = vadd.f32 %v4840, %v4850
      %s4855 = sadd.s32 %s4525, 24
      %s4856 = scalar_lea.vmem [#allocation2], %s4855
      %v4857 = vld [vmem:[%s4856] sm:$0xff]
      %v4858 = vld [vmem:[%s4856 + $0x60] sm:$0xff]
      %s4859 = sld [smem:[#allocation6 + $0x14a]]
      %v4860 = vstv %s4859
      %v4861 = vmul.f32 %v4857, %v4860
      %v4862 = vmul.f32 %v4858, %v4860
      %v4863 = vadd.f32 %v4853, %v4861
      %v4864 = vadd.f32 %v4854, %v4862
      %s4865 = sld [smem:[#allocation6 + $0x14b]]
      %v4866 = vstv %s4865
      %v4867 = vmul.f32 %v4857, %v4866
      %v4868 = vmul.f32 %v4858, %v4866
      %4871 = vrot.lane.b32.xlu0 %v4867, 127
      %v4872 = vpop.permute.xlu0 %4871
      %4873 = vrot.lane.b32.xlu0 %v4868, 127
      %v4874 = vpop.permute.xlu0 %4873
      %v4877 = vadd.f32 %v4863, %v4872
      %v4878 = vadd.f32 %v4864, %v4874
      %s4879 = sld [smem:[#allocation6 + $0x14c]]
      %v4880 = vstv %s4879
      %v4881 = vmul.f32 %v4857, %v4880
      %v4882 = vmul.f32 %v4858, %v4880
      %4885 = vrot.lane.b32.xlu0 %v4881, 126
      %v4886 = vpop.permute.xlu0 %4885
      %4887 = vrot.lane.b32.xlu0 %v4882, 126
      %v4888 = vpop.permute.xlu0 %4887
      %v4891 = vadd.f32 %v4877, %v4886
      %v4892 = vadd.f32 %v4878, %v4888
      %s4893 = sld [smem:[#allocation6 + $0x14d]]
      %v4894 = vstv %s4893
      %v4895 = vmul.f32 %v4857, %v4894
      %v4896 = vmul.f32 %v4858, %v4894
      %4899 = vrot.lane.b32.xlu0 %v4895, 125
      %v4900 = vpop.permute.xlu0 %4899
      %4901 = vrot.lane.b32.xlu0 %v4896, 125
      %v4902 = vpop.permute.xlu0 %4901
      %v4905 = vadd.f32 %v4891, %v4900
      %v4906 = vadd.f32 %v4892, %v4902
      %s4907 = sld [smem:[#allocation6 + $0x14e]]
      %v4908 = vstv %s4907
      %v4909 = vmul.f32 %v4857, %v4908
      %v4910 = vmul.f32 %v4858, %v4908
      %4913 = vrot.lane.b32.xlu0 %v4909, 124
      %v4914 = vpop.permute.xlu0 %4913
      %4915 = vrot.lane.b32.xlu0 %v4910, 124
      %v4916 = vpop.permute.xlu0 %4915
      %v4919 = vadd.f32 %v4905, %v4914
      %v4920 = vadd.f32 %v4906, %v4916
      %s4921 = sadd.s32 %s4591, 24
      %s4922 = scalar_lea.vmem [#allocation2], %s4921
      %v4923 = vld [vmem:[%s4922] sm:$0xff]
      %v4924 = vld [vmem:[%s4922 + $0x60] sm:$0xff]
      %s4925 = sld [smem:[#allocation6 + $0x14f]]
      %v4926 = vstv %s4925
      %v4927 = vmul.f32 %v4923, %v4926
      %v4928 = vmul.f32 %v4924, %v4926
      %v4929 = vadd.f32 %v4919, %v4927
      %v4930 = vadd.f32 %v4920, %v4928
      %s4931 = sld [smem:[#allocation6 + $0x150]]
      %v4932 = vstv %s4931
      %v4933 = vmul.f32 %v4923, %v4932
      %v4934 = vmul.f32 %v4924, %v4932
      %4937 = vrot.lane.b32.xlu0 %v4933, 127
      %v4938 = vpop.permute.xlu0 %4937
      %4939 = vrot.lane.b32.xlu0 %v4934, 127
      %v4940 = vpop.permute.xlu0 %4939
      %v4943 = vadd.f32 %v4929, %v4938
      %v4944 = vadd.f32 %v4930, %v4940
      %s4945 = sld [smem:[#allocation6 + $0x151]]
      %v4946 = vstv %s4945
      %v4947 = vmul.f32 %v4923, %v4946
      %v4948 = vmul.f32 %v4924, %v4946
      %4951 = vrot.lane.b32.xlu0 %v4947, 126
      %v4952 = vpop.permute.xlu0 %4951
      %4953 = vrot.lane.b32.xlu0 %v4948, 126
      %v4954 = vpop.permute.xlu0 %4953
      %v4957 = vadd.f32 %v4943, %v4952
      %v4958 = vadd.f32 %v4944, %v4954
      %s4959 = sld [smem:[#allocation6 + $0x152]]
      %v4960 = vstv %s4959
      %v4961 = vmul.f32 %v4923, %v4960
      %v4962 = vmul.f32 %v4924, %v4960
      %4965 = vrot.lane.b32.xlu0 %v4961, 125
      %v4966 = vpop.permute.xlu0 %4965
      %4967 = vrot.lane.b32.xlu0 %v4962, 125
      %v4968 = vpop.permute.xlu0 %4967
      %v4971 = vadd.f32 %v4957, %v4966
      %v4972 = vadd.f32 %v4958, %v4968
      %s4973 = sld [smem:[#allocation6 + $0x153]]
      %v4974 = vstv %s4973
      %v4975 = vmul.f32 %v4923, %v4974
      %v4976 = vmul.f32 %v4924, %v4974
      %4979 = vrot.lane.b32.xlu0 %v4975, 124
      %v4980 = vpop.permute.xlu0 %4979
      %4981 = vrot.lane.b32.xlu0 %v4976, 124
      %v4982 = vpop.permute.xlu0 %4981
      %v4985 = vadd.f32 %v4971, %v4980
      %v4986 = vadd.f32 %v4972, %v4982
      %s4987 = sadd.s32 %s4657, 24
      %s4988 = scalar_lea.vmem [#allocation2], %s4987
      %v4989 = vld [vmem:[%s4988] sm:$0xff]
      %v4990 = vld [vmem:[%s4988 + $0x60] sm:$0xff]
      %s4991 = sld [smem:[#allocation6 + $0x154]]
      %v4992 = vstv %s4991
      %v4993 = vmul.f32 %v4989, %v4992
      %v4994 = vmul.f32 %v4990, %v4992
      %v4995 = vadd.f32 %v4985, %v4993
      %v4996 = vadd.f32 %v4986, %v4994
      %s4997 = sld [smem:[#allocation6 + $0x155]]
      %v4998 = vstv %s4997
      %v4999 = vmul.f32 %v4989, %v4998
      %v5000 = vmul.f32 %v4990, %v4998
      %5003 = vrot.lane.b32.xlu0 %v4999, 127
      %v5004 = vpop.permute.xlu0 %5003
      %5005 = vrot.lane.b32.xlu0 %v5000, 127
      %v5006 = vpop.permute.xlu0 %5005
      %v5009 = vadd.f32 %v4995, %v5004
      %v5010 = vadd.f32 %v4996, %v5006
      %s5011 = sld [smem:[#allocation6 + $0x156]]
      %v5012 = vstv %s5011
      %v5013 = vmul.f32 %v4989, %v5012
      %v5014 = vmul.f32 %v4990, %v5012
      %5017 = vrot.lane.b32.xlu0 %v5013, 126
      %v5018 = vpop.permute.xlu0 %5017
      %5019 = vrot.lane.b32.xlu0 %v5014, 126
      %v5020 = vpop.permute.xlu0 %5019
      %v5023 = vadd.f32 %v5009, %v5018
      %v5024 = vadd.f32 %v5010, %v5020
      %s5025 = sld [smem:[#allocation6 + $0x157]]
      %v5026 = vstv %s5025
      %v5027 = vmul.f32 %v4989, %v5026
      %v5028 = vmul.f32 %v4990, %v5026
      %5031 = vrot.lane.b32.xlu0 %v5027, 125
      %v5032 = vpop.permute.xlu0 %5031
      %5033 = vrot.lane.b32.xlu0 %v5028, 125
      %v5034 = vpop.permute.xlu0 %5033
      %v5037 = vadd.f32 %v5023, %v5032
      %v5038 = vadd.f32 %v5024, %v5034
      %s5039 = sld [smem:[#allocation6 + $0x158]]
      %v5040 = vstv %s5039
      %v5041 = vmul.f32 %v4989, %v5040
      %v5042 = vmul.f32 %v4990, %v5040
      %5045 = vrot.lane.b32.xlu0 %v5041, 124
      %v5046 = vpop.permute.xlu0 %5045
      %5047 = vrot.lane.b32.xlu0 %v5042, 124
      %v5048 = vpop.permute.xlu0 %5047
      %v5051 = vadd.f32 %v5037, %v5046
      %v5052 = vadd.f32 %v5038, %v5048
      %s5053 = sadd.s32 %s4723, 24
      %s5054 = scalar_lea.vmem [#allocation2], %s5053
      %v5055 = vld [vmem:[%s5054] sm:$0xff]
      %v5056 = vld [vmem:[%s5054 + $0x60] sm:$0xff]
      %s5057 = sld [smem:[#allocation6 + $0x159]]
      %v5058 = vstv %s5057
      %v5059 = vmul.f32 %v5055, %v5058
      %v5060 = vmul.f32 %v5056, %v5058
      %v5061 = vadd.f32 %v5051, %v5059
      %v5062 = vadd.f32 %v5052, %v5060
      %s5063 = sld [smem:[#allocation6 + $0x15a]]
      %v5064 = vstv %s5063
      %v5065 = vmul.f32 %v5055, %v5064
      %v5066 = vmul.f32 %v5056, %v5064
      %5069 = vrot.lane.b32.xlu0 %v5065, 127
      %v5070 = vpop.permute.xlu0 %5069
      %5071 = vrot.lane.b32.xlu0 %v5066, 127
      %v5072 = vpop.permute.xlu0 %5071
      %v5075 = vadd.f32 %v5061, %v5070
      %v5076 = vadd.f32 %v5062, %v5072
      %s5077 = sld [smem:[#allocation6 + $0x15b]]
      %v5078 = vstv %s5077
      %v5079 = vmul.f32 %v5055, %v5078
      %v5080 = vmul.f32 %v5056, %v5078
      %5083 = vrot.lane.b32.xlu0 %v5079, 126
      %v5084 = vpop.permute.xlu0 %5083
      %5085 = vrot.lane.b32.xlu0 %v5080, 126
      %v5086 = vpop.permute.xlu0 %5085
      %v5089 = vadd.f32 %v5075, %v5084
      %v5090 = vadd.f32 %v5076, %v5086
      %s5091 = sld [smem:[#allocation6 + $0x15c]]
      %v5092 = vstv %s5091
      %v5093 = vmul.f32 %v5055, %v5092
      %v5094 = vmul.f32 %v5056, %v5092
      %5097 = vrot.lane.b32.xlu0 %v5093, 125
      %v5098 = vpop.permute.xlu0 %5097
      %5099 = vrot.lane.b32.xlu0 %v5094, 125
      %v5100 = vpop.permute.xlu0 %5099
      %v5103 = vadd.f32 %v5089, %v5098
      %v5104 = vadd.f32 %v5090, %v5100
      %s5105 = sld [smem:[#allocation6 + $0x15d]]
      %v5106 = vstv %s5105
      %v5107 = vmul.f32 %v5055, %v5106
      %v5108 = vmul.f32 %v5056, %v5106
      %5111 = vrot.lane.b32.xlu0 %v5107, 124
      %v5112 = vpop.permute.xlu0 %5111
      %5113 = vrot.lane.b32.xlu0 %v5108, 124
      %v5114 = vpop.permute.xlu0 %5113
      %v5117 = vadd.f32 %v5103, %v5112
      %v5118 = vadd.f32 %v5104, %v5114
      %s5119 = sadd.s32 %s4457, 48
      %s5120 = scalar_lea.vmem [#allocation2], %s5119
      %v5121 = vld [vmem:[%s5120] sm:$0xff]
      %v5122 = vld [vmem:[%s5120 + $0x60] sm:$0xff]
      %s5123 = sld [smem:[#allocation6 + $0x15e]]
      %v5124 = vstv %s5123
      %v5125 = vmul.f32 %v5121, %v5124
      %v5126 = vmul.f32 %v5122, %v5124
      %v5127 = vadd.f32 %v5117, %v5125
      %v5128 = vadd.f32 %v5118, %v5126
      %s5129 = sld [smem:[#allocation6 + $0x15f]]
      %v5130 = vstv %s5129
      %v5131 = vmul.f32 %v5121, %v5130
      %v5132 = vmul.f32 %v5122, %v5130
      %5135 = vrot.lane.b32.xlu0 %v5131, 127
      %v5136 = vpop.permute.xlu0 %5135
      %5137 = vrot.lane.b32.xlu0 %v5132, 127
      %v5138 = vpop.permute.xlu0 %5137
      %v5141 = vadd.f32 %v5127, %v5136
      %v5142 = vadd.f32 %v5128, %v5138
      %s5143 = sld [smem:[#allocation6 + $0x160]]
      %v5144 = vstv %s5143
      %v5145 = vmul.f32 %v5121, %v5144
      %v5146 = vmul.f32 %v5122, %v5144
      %5149 = vrot.lane.b32.xlu0 %v5145, 126
      %v5150 = vpop.permute.xlu0 %5149
      %5151 = vrot.lane.b32.xlu0 %v5146, 126
      %v5152 = vpop.permute.xlu0 %5151
      %v5155 = vadd.f32 %v5141, %v5150
      %v5156 = vadd.f32 %v5142, %v5152
      %s5157 = sld [smem:[#allocation6 + $0x161]]
      %v5158 = vstv %s5157
      %v5159 = vmul.f32 %v5121, %v5158
      %v5160 = vmul.f32 %v5122, %v5158
      %5163 = vrot.lane.b32.xlu0 %v5159, 125
      %v5164 = vpop.permute.xlu0 %5163
      %5165 = vrot.lane.b32.xlu0 %v5160, 125
      %v5166 = vpop.permute.xlu0 %5165
      %v5169 = vadd.f32 %v5155, %v5164
      %v5170 = vadd.f32 %v5156, %v5166
      %s5171 = sld [smem:[#allocation6 + $0x162]]
      %v5172 = vstv %s5171
      %v5173 = vmul.f32 %v5121, %v5172
      %v5174 = vmul.f32 %v5122, %v5172
      %5177 = vrot.lane.b32.xlu0 %v5173, 124
      %v5178 = vpop.permute.xlu0 %5177
      %5179 = vrot.lane.b32.xlu0 %v5174, 124
      %v5180 = vpop.permute.xlu0 %5179
      %v5183 = vadd.f32 %v5169, %v5178
      %v5184 = vadd.f32 %v5170, %v5180
      %s5185 = sadd.s32 %s4525, 48
      %s5186 = scalar_lea.vmem [#allocation2], %s5185
      %v5187 = vld [vmem:[%s5186] sm:$0xff]
      %v5188 = vld [vmem:[%s5186 + $0x60] sm:$0xff]
      %s5189 = sld [smem:[#allocation6 + $0x163]]
      %v5190 = vstv %s5189
      %v5191 = vmul.f32 %v5187, %v5190
      %v5192 = vmul.f32 %v5188, %v5190
      %v5193 = vadd.f32 %v5183, %v5191
      %v5194 = vadd.f32 %v5184, %v5192
      %s5195 = sld [smem:[#allocation6 + $0x164]]
      %v5196 = vstv %s5195
      %v5197 = vmul.f32 %v5187, %v5196
      %v5198 = vmul.f32 %v5188, %v5196
      %5201 = vrot.lane.b32.xlu0 %v5197, 127
      %v5202 = vpop.permute.xlu0 %5201
      %5203 = vrot.lane.b32.xlu0 %v5198, 127
      %v5204 = vpop.permute.xlu0 %5203
      %v5207 = vadd.f32 %v5193, %v5202
      %v5208 = vadd.f32 %v5194, %v5204
      %s5209 = sld [smem:[#allocation6 + $0x165]]
      %v5210 = vstv %s5209
      %v5211 = vmul.f32 %v5187, %v5210
      %v5212 = vmul.f32 %v5188, %v5210
      %5215 = vrot.lane.b32.xlu0 %v5211, 126
      %v5216 = vpop.permute.xlu0 %5215
      %5217 = vrot.lane.b32.xlu0 %v5212, 126
      %v5218 = vpop.permute.xlu0 %5217
      %v5221 = vadd.f32 %v5207, %v5216
      %v5222 = vadd.f32 %v5208, %v5218
      %s5223 = sld [smem:[#allocation6 + $0x166]]
      %v5224 = vstv %s5223
      %v5225 = vmul.f32 %v5187, %v5224
      %v5226 = vmul.f32 %v5188, %v5224
      %5229 = vrot.lane.b32.xlu0 %v5225, 125
      %v5230 = vpop.permute.xlu0 %5229
      %5231 = vrot.lane.b32.xlu0 %v5226, 125
      %v5232 = vpop.permute.xlu0 %5231
      %v5235 = vadd.f32 %v5221, %v5230
      %v5236 = vadd.f32 %v5222, %v5232
      %s5237 = sld [smem:[#allocation6 + $0x167]]
      %v5238 = vstv %s5237
      %v5239 = vmul.f32 %v5187, %v5238
      %v5240 = vmul.f32 %v5188, %v5238
      %5243 = vrot.lane.b32.xlu0 %v5239, 124
      %v5244 = vpop.permute.xlu0 %5243
      %5245 = vrot.lane.b32.xlu0 %v5240, 124
      %v5246 = vpop.permute.xlu0 %5245
      %v5249 = vadd.f32 %v5235, %v5244
      %v5250 = vadd.f32 %v5236, %v5246
      %s5251 = sadd.s32 %s4591, 48
      %s5252 = scalar_lea.vmem [#allocation2], %s5251
      %v5253 = vld [vmem:[%s5252] sm:$0xff]
      %v5254 = vld [vmem:[%s5252 + $0x60] sm:$0xff]
      %s5255 = sld [smem:[#allocation6 + $0x168]]
      %v5256 = vstv %s5255
      %v5257 = vmul.f32 %v5253, %v5256
      %v5258 = vmul.f32 %v5254, %v5256
      %v5259 = vadd.f32 %v5249, %v5257
      %v5260 = vadd.f32 %v5250, %v5258
      %s5261 = sld [smem:[#allocation6 + $0x169]]
      %v5262 = vstv %s5261
      %v5263 = vmul.f32 %v5253, %v5262
      %v5264 = vmul.f32 %v5254, %v5262
      %5267 = vrot.lane.b32.xlu0 %v5263, 127
      %v5268 = vpop.permute.xlu0 %5267
      %5269 = vrot.lane.b32.xlu0 %v5264, 127
      %v5270 = vpop.permute.xlu0 %5269
      %v5273 = vadd.f32 %v5259, %v5268
      %v5274 = vadd.f32 %v5260, %v5270
      %s5275 = sld [smem:[#allocation6 + $0x16a]]
      %v5276 = vstv %s5275
      %v5277 = vmul.f32 %v5253, %v5276
      %v5278 = vmul.f32 %v5254, %v5276
      %5281 = vrot.lane.b32.xlu0 %v5277, 126
      %v5282 = vpop.permute.xlu0 %5281
      %5283 = vrot.lane.b32.xlu0 %v5278, 126
      %v5284 = vpop.permute.xlu0 %5283
      %v5287 = vadd.f32 %v5273, %v5282
      %v5288 = vadd.f32 %v5274, %v5284
      %s5289 = sld [smem:[#allocation6 + $0x16b]]
      %v5290 = vstv %s5289
      %v5291 = vmul.f32 %v5253, %v5290
      %v5292 = vmul.f32 %v5254, %v5290
      %5295 = vrot.lane.b32.xlu0 %v5291, 125
      %v5296 = vpop.permute.xlu0 %5295
      %5297 = vrot.lane.b32.xlu0 %v5292, 125
      %v5298 = vpop.permute.xlu0 %5297
      %v5301 = vadd.f32 %v5287, %v5296
      %v5302 = vadd.f32 %v5288, %v5298
      %s5303 = sld [smem:[#allocation6 + $0x16c]]
      %v5304 = vstv %s5303
      %v5305 = vmul.f32 %v5253, %v5304
      %v5306 = vmul.f32 %v5254, %v5304
      %5309 = vrot.lane.b32.xlu0 %v5305, 124
      %v5310 = vpop.permute.xlu0 %5309
      %5311 = vrot.lane.b32.xlu0 %v5306, 124
      %v5312 = vpop.permute.xlu0 %5311
      %v5315 = vadd.f32 %v5301, %v5310
      %v5316 = vadd.f32 %v5302, %v5312
      %s5317 = sadd.s32 %s4657, 48
      %s5318 = scalar_lea.vmem [#allocation2], %s5317
      %v5319 = vld [vmem:[%s5318] sm:$0xff]
      %v5320 = vld [vmem:[%s5318 + $0x60] sm:$0xff]
      %s5321 = sld [smem:[#allocation6 + $0x16d]]
      %v5322 = vstv %s5321
      %v5323 = vmul.f32 %v5319, %v5322
      %v5324 = vmul.f32 %v5320, %v5322
      %v5325 = vadd.f32 %v5315, %v5323
      %v5326 = vadd.f32 %v5316, %v5324
      %s5327 = sld [smem:[#allocation6 + $0x16e]]
      %v5328 = vstv %s5327
      %v5329 = vmul.f32 %v5319, %v5328
      %v5330 = vmul.f32 %v5320, %v5328
      %5333 = vrot.lane.b32.xlu0 %v5329, 127
      %v5334 = vpop.permute.xlu0 %5333
      %5335 = vrot.lane.b32.xlu0 %v5330, 127
      %v5336 = vpop.permute.xlu0 %5335
      %v5339 = vadd.f32 %v5325, %v5334
      %v5340 = vadd.f32 %v5326, %v5336
      %s5341 = sld [smem:[#allocation6 + $0x16f]]
      %v5342 = vstv %s5341
      %v5343 = vmul.f32 %v5319, %v5342
      %v5344 = vmul.f32 %v5320, %v5342
      %5347 = vrot.lane.b32.xlu0 %v5343, 126
      %v5348 = vpop.permute.xlu0 %5347
      %5349 = vrot.lane.b32.xlu0 %v5344, 126
      %v5350 = vpop.permute.xlu0 %5349
      %v5353 = vadd.f32 %v5339, %v5348
      %v5354 = vadd.f32 %v5340, %v5350
      %s5355 = sld [smem:[#allocation6 + $0x170]]
      %v5356 = vstv %s5355
      %v5357 = vmul.f32 %v5319, %v5356
      %v5358 = vmul.f32 %v5320, %v5356
      %5361 = vrot.lane.b32.xlu0 %v5357, 125
      %v5362 = vpop.permute.xlu0 %5361
      %5363 = vrot.lane.b32.xlu0 %v5358, 125
      %v5364 = vpop.permute.xlu0 %5363
      %v5367 = vadd.f32 %v5353, %v5362
      %v5368 = vadd.f32 %v5354, %v5364
      %s5369 = sld [smem:[#allocation6 + $0x171]]
      %v5370 = vstv %s5369
      %v5371 = vmul.f32 %v5319, %v5370
      %v5372 = vmul.f32 %v5320, %v5370
      %5375 = vrot.lane.b32.xlu0 %v5371, 124
      %v5376 = vpop.permute.xlu0 %5375
      %5377 = vrot.lane.b32.xlu0 %v5372, 124
      %v5378 = vpop.permute.xlu0 %5377
      %v5381 = vadd.f32 %v5367, %v5376
      %v5382 = vadd.f32 %v5368, %v5378
      %s5383 = sadd.s32 %s4723, 48
      %s5384 = scalar_lea.vmem [#allocation2], %s5383
      %v5385 = vld [vmem:[%s5384] sm:$0xff]
      %v5386 = vld [vmem:[%s5384 + $0x60] sm:$0xff]
      %s5387 = sld [smem:[#allocation6 + $0x172]]
      %v5388 = vstv %s5387
      %v5389 = vmul.f32 %v5385, %v5388
      %v5390 = vmul.f32 %v5386, %v5388
      %v5391 = vadd.f32 %v5381, %v5389
      %v5392 = vadd.f32 %v5382, %v5390
      %s5393 = sld [smem:[#allocation6 + $0x173]]
      %v5394 = vstv %s5393
      %v5395 = vmul.f32 %v5385, %v5394
      %v5396 = vmul.f32 %v5386, %v5394
      %5399 = vrot.lane.b32.xlu0 %v5395, 127
      %v5400 = vpop.permute.xlu0 %5399
      %5401 = vrot.lane.b32.xlu0 %v5396, 127
      %v5402 = vpop.permute.xlu0 %5401
      %v5405 = vadd.f32 %v5391, %v5400
      %v5406 = vadd.f32 %v5392, %v5402
      %s5407 = sld [smem:[#allocation6 + $0x174]]
      %v5408 = vstv %s5407
      %v5409 = vmul.f32 %v5385, %v5408
      %v5410 = vmul.f32 %v5386, %v5408
      %5413 = vrot.lane.b32.xlu0 %v5409, 126
      %v5414 = vpop.permute.xlu0 %5413
      %5415 = vrot.lane.b32.xlu0 %v5410, 126
      %v5416 = vpop.permute.xlu0 %5415
      %v5419 = vadd.f32 %v5405, %v5414
      %v5420 = vadd.f32 %v5406, %v5416
      %s5421 = sld [smem:[#allocation6 + $0x175]]
      %v5422 = vstv %s5421
      %v5423 = vmul.f32 %v5385, %v5422
      %v5424 = vmul.f32 %v5386, %v5422
      %5427 = vrot.lane.b32.xlu0 %v5423, 125
      %v5428 = vpop.permute.xlu0 %5427
      %5429 = vrot.lane.b32.xlu0 %v5424, 125
      %v5430 = vpop.permute.xlu0 %5429
      %v5433 = vadd.f32 %v5419, %v5428
      %v5434 = vadd.f32 %v5420, %v5430
      %s5435 = sld [smem:[#allocation6 + $0x176]]
      %v5436 = vstv %s5435
      %v5437 = vmul.f32 %v5385, %v5436
      %v5438 = vmul.f32 %v5386, %v5436
      %5441 = vrot.lane.b32.xlu0 %v5437, 124
      %v5442 = vpop.permute.xlu0 %5441
      %5443 = vrot.lane.b32.xlu0 %v5438, 124
      %v5444 = vpop.permute.xlu0 %5443
      %v5447 = vadd.f32 %v5433, %v5442
      %v5448 = vadd.f32 %v5434, %v5444
      %s5449 = sadd.s32 %s4457, 72
      %s5450 = scalar_lea.vmem [#allocation2], %s5449
      %v5451 = vld [vmem:[%s5450] sm:$0xff]
      %v5452 = vld [vmem:[%s5450 + $0x60] sm:$0xff]
      %s5453 = sld [smem:[#allocation6 + $0x177]]
      %v5454 = vstv %s5453
      %v5455 = vmul.f32 %v5451, %v5454
      %v5456 = vmul.f32 %v5452, %v5454
      %v5457 = vadd.f32 %v5447, %v5455
      %v5458 = vadd.f32 %v5448, %v5456
      %s5459 = sld [smem:[#allocation6 + $0x178]]
      %v5460 = vstv %s5459
      %v5461 = vmul.f32 %v5451, %v5460
      %v5462 = vmul.f32 %v5452, %v5460
      %5465 = vrot.lane.b32.xlu0 %v5461, 127
      %v5466 = vpop.permute.xlu0 %5465
      %5467 = vrot.lane.b32.xlu0 %v5462, 127
      %v5468 = vpop.permute.xlu0 %5467
      %v5471 = vadd.f32 %v5457, %v5466
      %v5472 = vadd.f32 %v5458, %v5468
      %s5473 = sld [smem:[#allocation6 + $0x179]]
      %v5474 = vstv %s5473
      %v5475 = vmul.f32 %v5451, %v5474
      %v5476 = vmul.f32 %v5452, %v5474
      %5479 = vrot.lane.b32.xlu0 %v5475, 126
      %v5480 = vpop.permute.xlu0 %5479
      %5481 = vrot.lane.b32.xlu0 %v5476, 126
      %v5482 = vpop.permute.xlu0 %5481
      %v5485 = vadd.f32 %v5471, %v5480
      %v5486 = vadd.f32 %v5472, %v5482
      %s5487 = sld [smem:[#allocation6 + $0x17a]]
      %v5488 = vstv %s5487
      %v5489 = vmul.f32 %v5451, %v5488
      %v5490 = vmul.f32 %v5452, %v5488
      %5493 = vrot.lane.b32.xlu0 %v5489, 125
      %v5494 = vpop.permute.xlu0 %5493
      %5495 = vrot.lane.b32.xlu0 %v5490, 125
      %v5496 = vpop.permute.xlu0 %5495
      %v5499 = vadd.f32 %v5485, %v5494
      %v5500 = vadd.f32 %v5486, %v5496
      %s5501 = sld [smem:[#allocation6 + $0x17b]]
      %v5502 = vstv %s5501
      %v5503 = vmul.f32 %v5451, %v5502
      %v5504 = vmul.f32 %v5452, %v5502
      %5507 = vrot.lane.b32.xlu0 %v5503, 124
      %v5508 = vpop.permute.xlu0 %5507
      %5509 = vrot.lane.b32.xlu0 %v5504, 124
      %v5510 = vpop.permute.xlu0 %5509
      %v5513 = vadd.f32 %v5499, %v5508
      %v5514 = vadd.f32 %v5500, %v5510
      %s5515 = sadd.s32 %s4525, 72
      %s5516 = scalar_lea.vmem [#allocation2], %s5515
      %v5517 = vld [vmem:[%s5516] sm:$0xff]
      %v5518 = vld [vmem:[%s5516 + $0x60] sm:$0xff]
      %s5519 = sld [smem:[#allocation6 + $0x17c]]
      %v5520 = vstv %s5519
      %v5521 = vmul.f32 %v5517, %v5520
      %v5522 = vmul.f32 %v5518, %v5520
      %v5523 = vadd.f32 %v5513, %v5521
      %v5524 = vadd.f32 %v5514, %v5522
      %s5525 = sld [smem:[#allocation6 + $0x17d]]
      %v5526 = vstv %s5525
      %v5527 = vmul.f32 %v5517, %v5526
      %v5528 = vmul.f32 %v5518, %v5526
      %5531 = vrot.lane.b32.xlu0 %v5527, 127
      %v5532 = vpop.permute.xlu0 %5531
      %5533 = vrot.lane.b32.xlu0 %v5528, 127
      %v5534 = vpop.permute.xlu0 %5533
      %v5537 = vadd.f32 %v5523, %v5532
      %v5538 = vadd.f32 %v5524, %v5534
      %s5539 = sld [smem:[#allocation6 + $0x17e]]
      %v5540 = vstv %s5539
      %v5541 = vmul.f32 %v5517, %v5540
      %v5542 = vmul.f32 %v5518, %v5540
      %5545 = vrot.lane.b32.xlu0 %v5541, 126
      %v5546 = vpop.permute.xlu0 %5545
      %5547 = vrot.lane.b32.xlu0 %v5542, 126
      %v5548 = vpop.permute.xlu0 %5547
      %v5551 = vadd.f32 %v5537, %v5546
      %v5552 = vadd.f32 %v5538, %v5548
      %s5553 = sld [smem:[#allocation6 + $0x17f]]
      %v5554 = vstv %s5553
      %v5555 = vmul.f32 %v5517, %v5554
      %v5556 = vmul.f32 %v5518, %v5554
      %5559 = vrot.lane.b32.xlu0 %v5555, 125
      %v5560 = vpop.permute.xlu0 %5559
      %5561 = vrot.lane.b32.xlu0 %v5556, 125
      %v5562 = vpop.permute.xlu0 %5561
      %v5565 = vadd.f32 %v5551, %v5560
      %v5566 = vadd.f32 %v5552, %v5562
      %s5567 = sld [smem:[#allocation6 + $0x180]]
      %v5568 = vstv %s5567
      %v5569 = vmul.f32 %v5517, %v5568
      %v5570 = vmul.f32 %v5518, %v5568
      %5573 = vrot.lane.b32.xlu0 %v5569, 124
      %v5574 = vpop.permute.xlu0 %5573
      %5575 = vrot.lane.b32.xlu0 %v5570, 124
      %v5576 = vpop.permute.xlu0 %5575
      %v5579 = vadd.f32 %v5565, %v5574
      %v5580 = vadd.f32 %v5566, %v5576
      %s5581 = sadd.s32 %s4591, 72
      %s5582 = scalar_lea.vmem [#allocation2], %s5581
      %v5583 = vld [vmem:[%s5582] sm:$0xff]
      %v5584 = vld [vmem:[%s5582 + $0x60] sm:$0xff]
      %s5585 = sld [smem:[#allocation6 + $0x181]]
      %v5586 = vstv %s5585
      %v5587 = vmul.f32 %v5583, %v5586
      %v5588 = vmul.f32 %v5584, %v5586
      %v5589 = vadd.f32 %v5579, %v5587
      %v5590 = vadd.f32 %v5580, %v5588
      %s5591 = sld [smem:[#allocation6 + $0x182]]
      %v5592 = vstv %s5591
      %v5593 = vmul.f32 %v5583, %v5592
      %v5594 = vmul.f32 %v5584, %v5592
      %5597 = vrot.lane.b32.xlu0 %v5593, 127
      %v5598 = vpop.permute.xlu0 %5597
      %5599 = vrot.lane.b32.xlu0 %v5594, 127
      %v5600 = vpop.permute.xlu0 %5599
      %v5603 = vadd.f32 %v5589, %v5598
      %v5604 = vadd.f32 %v5590, %v5600
      %s5605 = sld [smem:[#allocation6 + $0x183]]
      %v5606 = vstv %s5605
      %v5607 = vmul.f32 %v5583, %v5606
      %v5608 = vmul.f32 %v5584, %v5606
      %5611 = vrot.lane.b32.xlu0 %v5607, 126
      %v5612 = vpop.permute.xlu0 %5611
      %5613 = vrot.lane.b32.xlu0 %v5608, 126
      %v5614 = vpop.permute.xlu0 %5613
      %v5617 = vadd.f32 %v5603, %v5612
      %v5618 = vadd.f32 %v5604, %v5614
      %s5619 = sld [smem:[#allocation6 + $0x184]]
      %v5620 = vstv %s5619
      %v5621 = vmul.f32 %v5583, %v5620
      %v5622 = vmul.f32 %v5584, %v5620
      %5625 = vrot.lane.b32.xlu0 %v5621, 125
      %v5626 = vpop.permute.xlu0 %5625
      %5627 = vrot.lane.b32.xlu0 %v5622, 125
      %v5628 = vpop.permute.xlu0 %5627
      %v5631 = vadd.f32 %v5617, %v5626
      %v5632 = vadd.f32 %v5618, %v5628
      %s5633 = sld [smem:[#allocation6 + $0x185]]
      %v5634 = vstv %s5633
      %v5635 = vmul.f32 %v5583, %v5634
      %v5636 = vmul.f32 %v5584, %v5634
      %5639 = vrot.lane.b32.xlu0 %v5635, 124
      %v5640 = vpop.permute.xlu0 %5639
      %5641 = vrot.lane.b32.xlu0 %v5636, 124
      %v5642 = vpop.permute.xlu0 %5641
      %v5645 = vadd.f32 %v5631, %v5640
      %v5646 = vadd.f32 %v5632, %v5642
      %s5647 = sadd.s32 %s4657, 72
      %s5648 = scalar_lea.vmem [#allocation2], %s5647
      %v5649 = vld [vmem:[%s5648] sm:$0xff]
      %v5650 = vld [vmem:[%s5648 + $0x60] sm:$0xff]
      %s5651 = sld [smem:[#allocation6 + $0x186]]
      %v5652 = vstv %s5651
      %v5653 = vmul.f32 %v5649, %v5652
      %v5654 = vmul.f32 %v5650, %v5652
      %v5655 = vadd.f32 %v5645, %v5653
      %v5656 = vadd.f32 %v5646, %v5654
      %s5657 = sld [smem:[#allocation6 + $0x187]]
      %v5658 = vstv %s5657
      %v5659 = vmul.f32 %v5649, %v5658
      %v5660 = vmul.f32 %v5650, %v5658
      %5663 = vrot.lane.b32.xlu0 %v5659, 127
      %v5664 = vpop.permute.xlu0 %5663
      %5665 = vrot.lane.b32.xlu0 %v5660, 127
      %v5666 = vpop.permute.xlu0 %5665
      %v5669 = vadd.f32 %v5655, %v5664
      %v5670 = vadd.f32 %v5656, %v5666
      %s5671 = sld [smem:[#allocation6 + $0x188]]
      %v5672 = vstv %s5671
      %v5673 = vmul.f32 %v5649, %v5672
      %v5674 = vmul.f32 %v5650, %v5672
      %5677 = vrot.lane.b32.xlu0 %v5673, 126
      %v5678 = vpop.permute.xlu0 %5677
      %5679 = vrot.lane.b32.xlu0 %v5674, 126
      %v5680 = vpop.permute.xlu0 %5679
      %v5683 = vadd.f32 %v5669, %v5678
      %v5684 = vadd.f32 %v5670, %v5680
      %s5685 = sld [smem:[#allocation6 + $0x189]]
      %v5686 = vstv %s5685
      %v5687 = vmul.f32 %v5649, %v5686
      %v5688 = vmul.f32 %v5650, %v5686
      %5691 = vrot.lane.b32.xlu0 %v5687, 125
      %v5692 = vpop.permute.xlu0 %5691
      %5693 = vrot.lane.b32.xlu0 %v5688, 125
      %v5694 = vpop.permute.xlu0 %5693
      %v5697 = vadd.f32 %v5683, %v5692
      %v5698 = vadd.f32 %v5684, %v5694
      %s5699 = sld [smem:[#allocation6 + $0x18a]]
      %v5700 = vstv %s5699
      %v5701 = vmul.f32 %v5649, %v5700
      %v5702 = vmul.f32 %v5650, %v5700
      %5705 = vrot.lane.b32.xlu0 %v5701, 124
      %v5706 = vpop.permute.xlu0 %5705
      %5707 = vrot.lane.b32.xlu0 %v5702, 124
      %v5708 = vpop.permute.xlu0 %5707
      %v5711 = vadd.f32 %v5697, %v5706
      %v5712 = vadd.f32 %v5698, %v5708
      %s5713 = sadd.s32 %s4723, 72
      %s5714 = scalar_lea.vmem [#allocation2], %s5713
      %v5715 = vld [vmem:[%s5714] sm:$0xff]
      %v5716 = vld [vmem:[%s5714 + $0x60] sm:$0xff]
      %s5717 = sld [smem:[#allocation6 + $0x18b]]
      %v5718 = vstv %s5717
      %v5719 = vmul.f32 %v5715, %v5718
      %v5720 = vmul.f32 %v5716, %v5718
      %v5721 = vadd.f32 %v5711, %v5719
      %v5722 = vadd.f32 %v5712, %v5720
      %s5723 = sld [smem:[#allocation6 + $0x18c]]
      %v5724 = vstv %s5723
      %v5725 = vmul.f32 %v5715, %v5724
      %v5726 = vmul.f32 %v5716, %v5724
      %5729 = vrot.lane.b32.xlu0 %v5725, 127
      %v5730 = vpop.permute.xlu0 %5729
      %5731 = vrot.lane.b32.xlu0 %v5726, 127
      %v5732 = vpop.permute.xlu0 %5731
      %v5735 = vadd.f32 %v5721, %v5730
      %v5736 = vadd.f32 %v5722, %v5732
      %s5737 = sld [smem:[#allocation6 + $0x18d]]
      %v5738 = vstv %s5737
      %v5739 = vmul.f32 %v5715, %v5738
      %v5740 = vmul.f32 %v5716, %v5738
      %5743 = vrot.lane.b32.xlu0 %v5739, 126
      %v5744 = vpop.permute.xlu0 %5743
      %5745 = vrot.lane.b32.xlu0 %v5740, 126
      %v5746 = vpop.permute.xlu0 %5745
      %v5749 = vadd.f32 %v5735, %v5744
      %v5750 = vadd.f32 %v5736, %v5746
      %s5751 = sld [smem:[#allocation6 + $0x18e]]
      %v5752 = vstv %s5751
      %v5753 = vmul.f32 %v5715, %v5752
      %v5754 = vmul.f32 %v5716, %v5752
      %5757 = vrot.lane.b32.xlu0 %v5753, 125
      %v5758 = vpop.permute.xlu0 %5757
      %5759 = vrot.lane.b32.xlu0 %v5754, 125
      %v5760 = vpop.permute.xlu0 %5759
      %v5763 = vadd.f32 %v5749, %v5758
      %v5764 = vadd.f32 %v5750, %v5760
      %s5765 = sld [smem:[#allocation6 + $0x18f]]
      %v5766 = vstv %s5765
      %v5767 = vmul.f32 %v5715, %v5766
      %v5768 = vmul.f32 %v5716, %v5766
      %5771 = vrot.lane.b32.xlu0 %v5767, 124
      %v5772 = vpop.permute.xlu0 %5771
      %5773 = vrot.lane.b32.xlu0 %v5768, 124
      %v5774 = vpop.permute.xlu0 %5773
      %v5777 = vadd.f32 %v5763, %v5772
      %v5778 = vadd.f32 %v5764, %v5774
      %s5779 = scalar_lea.vmem %s5, %s5449
      %5780 = vst.msk [vmem:[%s5779] sm:$0xff] %vm1425, %v5777
      %5781 = vst.msk [vmem:[%s5779 + $0x60] sm:$0xff] %vm1425, %v5778
    $region67: #{tpu_custom_call.1} parent=1 // loop_footer
      %s4454 = sadd.s32 1, %s4450
    $region68: #{tpu_custom_call.1} parent=1 // loop_footer_branch
      %4449 = sbr.rel target = $region64
    $region69: #{tpu_custom_call.1} parent=1 // loop_exit
      _
    %s5782 = scalar_lea.vmem %s5, 72
    %v5783 = vld [vmem:[%s5782] sm:$0xff]
    %v5784 = vld [vmem:[%s5782 + $0x8] sm:$0xff]
    %v5785 = vld [vmem:[%s5782 + $0x10] sm:$0xf]
    %v5786 = vld [vmem:[%s5782 + $0x60] sm:$0xff]
    %v5787 = vld [vmem:[%s5782 + $0x68] sm:$0xff]
    %v5788 = vld [vmem:[%s5782 + $0x70] sm:$0xf]
    %v5789 = vsel %vm1425, %v5783, 0.0
    %v5790 = vsel %vm1425, %v5784, 0.0
    %v5791 = vadd.f32 %v5789, %v5790
    %v5792 = vsel %vm1429, %v5785, 0.0
    %v5793 = vadd.f32 %v5791, %v5792
    %v5794 = vsel %vm1425, %v5786, 0.0
    %v5795 = vadd.f32 %v5793, %v5794
    %v5796 = vsel %vm1425, %v5787, 0.0
    %v5797 = vadd.f32 %v5795, %v5796
    %v5798 = vsel %vm1429, %v5788, 0.0
    %v5799 = vadd.f32 %v5797, %v5798
    %5800 = vadd.xlane.f32.xlu0 %v5799
    %v5801 = vpop.xlane.xlu0 %5800
    %v5802 = vrot.slane %v5801, 4
    %v5803 = vadd.f32 %v5801, %v5802
    %v5804 = vrot.slane %v5803, 2
    %v5805 = vadd.f32 %v5803, %v5804
    %v5806 = vrot.slane %v5805, 1
    %v5807 = vadd.f32 %v5805, %v5806
    %s5808 = vtos %v5807
    %v5809 = vrcp.pop 800.0
    %v5810 = vmul.f32 800.0, %v5809
    %v5811 = vsub.f32 1.0, %v5810
    %v5812 = vmul.f32 %v5809, %v5811
    %v5813 = vadd.f32 %v5809, %v5812
    %vm5814 = vweird.f32 %v5809
    %v5815 = vsel %vm5814, %v5809, %v5813
    %s5816 = vtos %v5815
    %s5817 = smul.f32 %s5808, %s5816
    %v5818 = vstv %s5817
    %v5819 = vsub.f32 %v5783, %v5818
    %v5820 = vsub.f32 %v5784, %v5818
    %v5821 = vsub.f32 %v5785, %v5818
    %v5822 = vsub.f32 %v5786, %v5818
    %v5823 = vsub.f32 %v5787, %v5818
    %v5824 = vsub.f32 %v5788, %v5818
    %v5825 = vmul.f32 %v5819, %v5819
    %v5826 = vmul.f32 %v5820, %v5820
    %v5827 = vmul.f32 %v5821, %v5821
    %v5828 = vmul.f32 %v5822, %v5822
    %v5829 = vmul.f32 %v5823, %v5823
    %v5830 = vmul.f32 %v5824, %v5824
    %v5831 = vsel %vm1425, %v5825, 0.0
    %v5832 = vsel %vm1425, %v5826, 0.0
    %v5833 = vadd.f32 %v5831, %v5832
    %v5834 = vsel %vm1429, %v5827, 0.0
    %v5835 = vadd.f32 %v5833, %v5834
    %v5836 = vsel %vm1425, %v5828, 0.0
    %v5837 = vadd.f32 %v5835, %v5836
    %v5838 = vsel %vm1425, %v5829, 0.0
    %v5839 = vadd.f32 %v5837, %v5838
    %v5840 = vsel %vm1429, %v5830, 0.0
    %v5841 = vadd.f32 %v5839, %v5840
    %5842 = vadd.xlane.f32.xlu0 %v5841
    %v5843 = vpop.xlane.xlu0 %5842
    %v5844 = vrot.slane %v5843, 4
    %v5845 = vadd.f32 %v5843, %v5844
    %v5846 = vrot.slane %v5845, 2
    %v5847 = vadd.f32 %v5845, %v5846
    %v5848 = vrot.slane %v5847, 1
    %v5849 = vadd.f32 %v5847, %v5848
    %s5850 = vtos %v5849
    %v5851 = vrcp.pop 800.0
    %v5852 = vmul.f32 800.0, %v5851
    %v5853 = vsub.f32 1.0, %v5852
    %v5854 = vmul.f32 %v5851, %v5853
    %v5855 = vadd.f32 %v5851, %v5854
    %vm5856 = vweird.f32 %v5851
    %v5857 = vsel %vm5856, %v5851, %v5855
    %s5858 = vtos %v5857
    %s5859 = smul.f32 %s5850, %s5858
    %s5860 = sld [smem:[#allocation8 + $0x3]]
    %s5861 = sadd.f32 %s5859, 1e-05
    %v5862 = vstv %s5861
    %v5863 = vrsqrt.pop %v5862
    %v5864 = vmul.f32 %v5863, %v5862
    %v5865 = vmul.f32 %v5864, %v5863
    %v5866 = vmul.f32 0.5, %v5865
    %v5867 = vsub.f32 1.5, %v5866
    %v5868 = vmul.f32 %v5863, %v5867
    %vm5869 = vweird.f32 %v5862
    %vm5870 = vweird.f32 %v5863
    %vm5871 = vmor %vm5869, %vm5870
    %v5872 = vsel %vm5871, %v5863, %v5868
    %s5873 = vtos %v5872
    %s5874 = smul.f32 %s5860, %s5873
    %v5875 = vstv %s5874
    %v5876 = vmul.f32 %v5819, %v5875
    %v5877 = vmul.f32 %v5820, %v5875
    %v5878 = vmul.f32 %v5821, %v5875
    %v5879 = vmul.f32 %v5822, %v5875
    %v5880 = vmul.f32 %v5823, %v5875
    %v5881 = vmul.f32 %v5824, %v5875
    %s5882 = sld [smem:[#allocation10 + $0x3]]
    %v5883 = vstv %s5882
    %v5884 = vadd.f32 %v5876, %v5883
    %v5885 = vadd.f32 %v5877, %v5883
    %v5886 = vadd.f32 %v5878, %v5883
    %v5887 = vadd.f32 %v5879, %v5883
    %v5888 = vadd.f32 %v5880, %v5883
    %v5889 = vadd.f32 %v5881, %v5883
    %v5890 = vmax.f32 %v5884, 0.0
    %v5891 = vmax.f32 %v5885, 0.0
    %v5892 = vmax.f32 %v5886, 0.0
    %v5893 = vmax.f32 %v5887, 0.0
    %v5894 = vmax.f32 %v5888, 0.0
    %v5895 = vmax.f32 %v5889, 0.0
    %5896 = vst.msk [vmem:[%s5782] sm:$0xff] %vm1425, %v5890
    %5897 = vst.msk [vmem:[%s5782 + $0x8] sm:$0xff] %vm1425, %v5891
    %5898 = vst.msk [vmem:[%s5782 + $0x10] sm:$0xf] %vm1429, %v5892
    %5899 = vst.msk [vmem:[%s5782 + $0x60] sm:$0xff] %vm1425, %v5893
    %5900 = vst.msk [vmem:[%s5782 + $0x68] sm:$0xff] %vm1425, %v5894
    %5901 = vst.msk [vmem:[%s5782 + $0x70] sm:$0xf] %vm1429, %v5895
    // Predicated region
    $region70: #{tpu_custom_call.1} parent=1 // pred_check
      _
    $region71: #{tpu_custom_call.1} parent=1 // pred_check_branch
      %5903 = sbr.rel (0) target = $region73
    $region72: #{tpu_custom_call.1} parent=1 // pred_region
      _
    $region73: #{tpu_custom_call.1} parent=1 // pred_fallthru
      _
    // Predicated region
    $region74: #{tpu_custom_call.1} parent=1 // pred_check
      _
    $region75: #{tpu_custom_call.1} parent=1 // pred_check_branch
      %5905 = sbr.rel (0) target = $region77
    $region76: #{tpu_custom_call.1} parent=1 // pred_region
      _
    $region77: #{tpu_custom_call.1} parent=1 // pred_fallthru
      _
    %5906 = vsyncpa [#allocation3], 1
    %5907 = vsyncpa [#allocation4], 1
    %5908 = vsyncpa [#allocation5], 1
    %5909 = vsyncpa [#allocation9], 1

</llo_original>
